<compile_context>
chip_gen: v7x
topology: tpu7x:2x2x1
jax: 0.10.0
libtpu: 0.0.40
codegen_flags: <defaults>
</compile_context>

<pallas_src>
import functools

import jax
import jax.numpy as jnp
from jax.experimental import pallas as pl
from jax.experimental.pallas import tpu as pltpu

D_IN = 1536   # 768 * 2 (concatenated entity-start states from BERT)
D_FC = 768
D_H1 = 512
D_H2 = 256
D_OUT = 256


# ----------------------------------------------------------------------------
# Kernels
# ----------------------------------------------------------------------------
def _fused_mlp_kernel_bf16(x_ref,
                           wfc_ref, bfc_ref,
                           w1_ref, b1_ref,
                           w2_ref, b2_ref,
                           w3_ref, b3_ref,
                           o_ref):
    bf16 = jnp.bfloat16
    f32 = jnp.float32
    # fc: Linear(1536 -> 768) + ReLU   (Dropout(0.5) identity in eval)
    h = jnp.dot(x_ref[...], wfc_ref[...], preferred_element_type=f32)
    h = jnp.maximum(h + bfc_ref[...], 0.0)
    # mlp layer 1: Linear(768 -> 512) + ReLU
    h = jnp.dot(h.astype(bf16), w1_ref[...], preferred_element_type=f32)
    h = jnp.maximum(h + b1_ref[...], 0.0)
    # mlp layer 2: Linear(512 -> 256) + ReLU
    h = jnp.dot(h.astype(bf16), w2_ref[...], preferred_element_type=f32)
    h = jnp.maximum(h + b2_ref[...], 0.0)
    # mlp layer 3: Linear(256 -> 256), no activation
    h = jnp.dot(h.astype(bf16), w3_ref[...], preferred_element_type=f32)
    o_ref[...] = (h + b3_ref[...]).astype(o_ref.dtype)


def _fused_mlp_kernel_int8(x_ref,
                           wfc_ref, sfc_ref, bfc_ref,
                           w1_ref, s1_ref, b1_ref,
                           w2_ref, b2_ref,
                           w3_ref, b3_ref,
                           o_ref,
                           wfc_bf_ref, w1_bf_ref):
    bf16 = jnp.bfloat16
    f32 = jnp.float32

    # Dequantize the two big int8 weight blocks into bf16 scratch once per
    # pallas_call (grid axis is "arbitrary" for this path, so step 0 always
    # runs first on the core that owns the scratch).
    @pl.when(pl.program_id(0) == 0)
    def _():
        wfc_bf_ref[...] = wfc_ref[...].astype(f32).astype(bf16)
        w1_bf_ref[...] = w1_ref[...].astype(f32).astype(bf16)

    # fc: Linear(1536 -> 768) + ReLU.  Per-output-channel scale applied after
    # the dot (x @ (Wq * diag(s)) == (x @ Wq) * s).
    h = jnp.dot(x_ref[...], wfc_bf_ref[...], preferred_element_type=f32)
    h = jnp.maximum(h * sfc_ref[...] + bfc_ref[...], 0.0)
    # mlp layer 1: Linear(768 -> 512) + ReLU
    h = jnp.dot(h.astype(bf16), w1_bf_ref[...], preferred_element_type=f32)
    h = jnp.maximum(h * s1_ref[...] + b1_ref[...], 0.0)
    # mlp layer 2: Linear(512 -> 256) + ReLU (bf16 weights)
    h = jnp.dot(h.astype(bf16), w2_ref[...], preferred_element_type=f32)
    h = jnp.maximum(h + b2_ref[...], 0.0)
    # mlp layer 3: Linear(256 -> 256), no activation
    h = jnp.dot(h.astype(bf16), w3_ref[...], preferred_element_type=f32)
    o_ref[...] = (h + b3_ref[...]).astype(o_ref.dtype)


# ----------------------------------------------------------------------------
# Wrapper
# ----------------------------------------------------------------------------
def _round_up(n, m):
    return (n + m - 1) // m * m


def _device_kind():
    try:
        return jax.devices()[0].device_kind.lower()
    except Exception:
        return ""


def _is_v7(kind):
    return ("v7" in kind) or ("7x" in kind)


def _choose_tile(B, is_v7):
    """MXU-aligned batch-row tile, per the generation-specific review."""
    if B <= 128:
        return 128                 # single step; never split a tiny weight-bound call
    if is_v7:
        if B <= 512:
            return 128             # >=2 parallel steps so both TensorCores engage
        return 256
    # v5e / v6e: single TensorCore, bigger tiles amortize per-step overhead
    if B < 2048:
        return 256
    return 512


@functools.partial(jax.jit, static_argnames=("out_dtype",))
def my_model_forward(x, params, out_dtype=jnp.bfloat16):
    """MyModel.forward(inputs, is_classname=False) in eval mode.

    x: [B, 1536] (f32 or bf16).  params: kernel-layout weights from
    to_kernel_params().  Returns [B, 256] in out_dtype (bf16 by default).
    """
    B = x.shape[0]
    kind = _device_kind()
    is_v7 = _is_v7(kind)
    use_int8 = params["wfc"].dtype == jnp.int8

    tile = _choose_tile(B, is_v7)
    Bp = _round_up(B, tile)

    # Cast to bf16 first (halves the pad traffic), pad only if needed.
    x_bf = x if x.dtype == jnp.bfloat16 else x.astype(jnp.bfloat16)
    x_p = x_bf if Bp == B else jnp.pad(x_bf, ((0, Bp - B), (0, 0)))

    grid = (Bp // tile,)
    if use_int8:
        # Step-0 scratch init must not be split across cores.
        semantics = ("arbitrary",)
    else:
        semantics = ("arbitrary",) if grid[0] == 1 else ("parallel",)

    x_spec = pl.BlockSpec((tile, D_IN), lambda i: (i, 0))
    out_spec = pl.BlockSpec((tile, D_OUT), lambda i: (i, 0))
    # Resident blocks: constant index map -> each weight/bias DMA'd once.
    res = lambda shape: pl.BlockSpec(shape, lambda i: (0, 0))

    if use_int8:
        kernel = _fused_mlp_kernel_int8
        in_specs = [
            x_spec,
            res((D_IN, D_FC)), res((1, D_FC)), res((1, D_FC)),
            res((D_FC, D_H1)), res((1, D_H1)), res((1, D_H1)),
            res((D_H1, D_H2)), res((1, D_H2)),
            res((D_H2, D_OUT)), res((1, D_OUT)),
        ]
        args = (x_p,
                params["wfc"], params["sfc"], params["bfc"],
                params["w1"], params["s1"], params["b1"],
                params["w2"], params["b2"],
                params["w3"], params["b3"])
        scratch = [pltpu.VMEM((D_IN, D_FC), jnp.bfloat16),
                   pltpu.VMEM((D_FC, D_H1), jnp.bfloat16)]
    else:
        kernel = _fused_mlp_kernel_bf16
        in_specs = [
            x_spec,
            res((D_IN, D_FC)), res((1, D_FC)),
            res((D_FC, D_H1)), res((1, D_H1)),
            res((D_H1, D_H2)), res((1, D_H2)),
            res((D_H2, D_OUT)), res((1, D_OUT)),
        ]
        args = (x_p,
                params["wfc"], params["bfc"],
                params["w1"], params["b1"],
                params["w2"], params["b2"],
                params["w3"], params["b3"])
        scratch = []

    out = pl.pallas_call(
        kernel,
        out_shape=jax.ShapeDtypeStruct((Bp, D_OUT), out_dtype),
        grid_spec=pltpu.PrefetchScalarGridSpec(
            num_scalar_prefetch=0,
            grid=grid,
            in_specs=in_specs,
            out_specs=out_spec,
            scratch_shapes=scratch,
        ),
        compiler_params=pltpu.CompilerParams(
            dimension_semantics=semantics,
            # ~9-11 MiB live; 32 MiB leaves headroom even on v7x (64 MiB phys).
            vmem_limit_bytes=32 << 20,
        ),
    )(*args)

    return out if Bp == B else out[:B]


# ----------------------------------------------------------------------------
# Parameter construction / references
# ----------------------------------------------------------------------------
def init_params(key):
    """Deterministic f32 init mimicking nn.Linear (weight stored [in, out])."""
    def linear(key, fan_in, fan_out):
        kw, kb = jax.random.split(key)
        bound = 1.0 / jnp.sqrt(fan_in)
        w = jax.random.uniform(kw, (fan_out, fan_in), jnp.float32, -bound, bound)
        b = jax.random.uniform(kb, (fan_out,), jnp.float32, -bound, bound)
        return w.T, b.reshape(1, fan_out)

    k0, k1, k2, k3 = jax.random.split(key, 4)
    wfc, bfc = linear(k0, D_IN, D_FC)
    w1, b1 = linear(k1, D_FC, D_H1)
    w2, b2 = linear(k2, D_H1, D_H2)
    w3, b3 = linear(k3, D_H2, D_OUT)
    return dict(wfc=wfc, bfc=bfc, w1=w1, b1=b1, w2=w2, b2=b2, w3=w3, b3=b3)


def to_kernel_params(params_f32, int8_big_weights):
    """Kernel-side params: biases f32, small weights bf16; big weights either
    bf16 (v7x) or int8 + per-output-channel f32 scale (v5e/v6e)."""
    p = {k: params_f32[k] for k in ("bfc", "b1", "b2", "b3")}
    p["w2"] = params_f32["w2"].astype(jnp.bfloat16)
    p["w3"] = params_f32["w3"].astype(jnp.bfloat16)
    if int8_big_weights:
        for wk, sk in (("wfc", "sfc"), ("w1", "s1")):
            w = params_f32[wk]
            scale = jnp.max(jnp.abs(w), axis=0, keepdims=True) / 127.0
            scale = jnp.where(scale == 0.0, 1.0, scale)
            q = jnp.clip(jnp.round(w / scale), -127.0, 127.0).astype(jnp.int8)
            p[wk] = q
            p[sk] = scale.astype(jnp.float32)
    else:
        p["wfc"] = params_f32["wfc"].astype(jnp.bfloat16)
        p["w1"] = params_f32["w1"].astype(jnp.bfloat16)
    return p


def reference_forward_f32(x, p):
    """Pure-JAX f32 reference of the eval-mode forward pass."""
    h = jnp.maximum(x @ p["wfc"] + p["bfc"], 0.0)
    h = jnp.maximum(h @ p["w1"] + p["b1"], 0.0)
    h = jnp.maximum(h @ p["w2"] + p["b2"], 0.0)
    return h @ p["w3"] + p["b3"]


def reference_forward_kernel_math(x, params):
    """Pure-JAX reference replicating the kernel's bf16/int8+f32-acc recipe."""
    bf16, f32 = jnp.bfloat16, jnp.float32

    def dot_bf16(a, w):
        wv = w.astype(f32).astype(bf16) if w.dtype == jnp.int8 else w
        return jnp.dot(a.astype(bf16), wv, preferred_element_type=f32)

    h = dot_bf16(x, params["wfc"])
    if "sfc" in params:
        h = h * params["sfc"]
    h = jnp.maximum(h + params["bfc"], 0.0)
    h = dot_bf16(h, params["w1"])
    if "s1" in params:
        h = h * params["s1"]
    h = jnp.maximum(h + params["b1"], 0.0)
    h = jnp.maximum(dot_bf16(h, params["w2"]) + params["b2"], 0.0)
    return dot_bf16(h, params["w3"]) + params["b3"]


# ----------------------------------------------------------------------------
if __name__ == "__main__":
    key = jax.random.PRNGKey(0)
    kx, kp, kx2 = jax.random.split(key, 3)

    kind = _device_kind()
    is_v7 = _is_v7(kind)

    params_f32 = init_params(kp)
    # int8-stored big weights on v5e/v6e (halves the dominant weight HBM
    # stream); bf16 weights on v7x (no integer MXU path there).
    params = to_kernel_params(params_f32, int8_big_weights=not is_v7)

    # Small batch (e.g. N*K support instances); inputs correspond to the
    # non-classname path: concatenated entity-start states, dim = 768*2.
    B = 8
    x = jax.random.normal(kx, (B, D_IN), jnp.float32)

    out = jax.block_until_ready(my_model_forward(x, params))
    assert out.shape == (B, D_OUT)
    assert out.dtype == jnp.bfloat16

    # Tight check vs a pure-JAX version of the same reduced-precision recipe.
    ref_k = reference_forward_kernel_math(x, params)
    assert jnp.allclose(out.astype(jnp.float32), ref_k, atol=5e-2, rtol=5e-2), \
        "mismatch vs kernel-math reference (B=8)"

    # Loose check vs the full-f32 model (quantization error ~1%).
    ref_f32 = reference_forward_f32(x, params_f32)
    rel = jnp.linalg.norm(out.astype(jnp.float32) - ref_f32) / jnp.linalg.norm(ref_f32)
    assert rel < 0.05, f"relative error vs f32 reference too large: {rel}"

    # Exercise the multi-tile / padded grid path (and the step-0 dequant
    # scratch reuse across grid steps on the int8 path).
    B2 = 300
    x2 = jax.random.normal(kx2, (B2, D_IN), jnp.float32)
    out2 = jax.block_until_ready(my_model_forward(x2, params))
    assert out2.shape == (B2, D_OUT)
    ref_k2 = reference_forward_kernel_math(x2, params)
    assert jnp.allclose(out2.astype(jnp.float32), ref_k2, atol=5e-2, rtol=5e-2), \
        "mismatch vs kernel-math reference (B=300)"

    # TODO(synk): the BERT encoder/tokenizer path (self.coder), the unused
    # nn.LSTM, the is_classname=True branch (mlp-only on 768-d CLS states),
    # and the loss()/accuracy() helpers are outside this fused forward kernel.
    print("KERNEL_OK")
</pallas_src>

<mosaic_0001>
module attributes {stable_mosaic.version = 11 : i64} {
  func.func @_fused_mlp_kernel_int8(%arg0: i32, %arg1: memref<128x1536xbf16, #tpu.memory_space<vmem>>, %arg2: memref<1536x768xi8, #tpu.memory_space<vmem>>, %arg3: memref<1x768xf32, #tpu.memory_space<vmem>>, %arg4: memref<1x768xf32, #tpu.memory_space<vmem>>, %arg5: memref<768x512xi8, #tpu.memory_space<vmem>>, %arg6: memref<1x512xf32, #tpu.memory_space<vmem>>, %arg7: memref<1x512xf32, #tpu.memory_space<vmem>>, %arg8: memref<512x256xbf16, #tpu.memory_space<vmem>>, %arg9: memref<1x256xf32, #tpu.memory_space<vmem>>, %arg10: memref<256x256xbf16, #tpu.memory_space<vmem>>, %arg11: memref<1x256xf32, #tpu.memory_space<vmem>>, %arg12: memref<128x256xbf16, #tpu.memory_space<vmem>>, %arg13: memref<1536x768xbf16, #tpu.memory_space<vmem>>, %arg14: memref<768x512xbf16, #tpu.memory_space<vmem>>) attributes {dimension_semantics = [#tpu.dimension_semantics<arbitrary>], iteration_bounds = array<i64: 1>, scalar_prefetch = 0 : i64, scratch_operands = 2 : i64, tpu.core_type = #tpu.core_type<tc>, window_params = [{transform_indices = @transform_0, window_bounds = array<i64: 128, 1536>}, {pipeline_mode = #tpu.pipeline_mode<synchronous>, transform_indices = @transform_1, window_bounds = array<i64: 1536, 768>}, {pipeline_mode = #tpu.pipeline_mode<synchronous>, transform_indices = @transform_2, window_bounds = array<i64: 1, 768>}, {pipeline_mode = #tpu.pipeline_mode<synchronous>, transform_indices = @transform_3, window_bounds = array<i64: 1, 768>}, {pipeline_mode = #tpu.pipeline_mode<synchronous>, transform_indices = @transform_4, window_bounds = array<i64: 768, 512>}, {pipeline_mode = #tpu.pipeline_mode<synchronous>, transform_indices = @transform_5, window_bounds = array<i64: 1, 512>}, {pipeline_mode = #tpu.pipeline_mode<synchronous>, transform_indices = @transform_6, window_bounds = array<i64: 1, 512>}, {pipeline_mode = #tpu.pipeline_mode<synchronous>, transform_indices = @transform_7, window_bounds = array<i64: 512, 256>}, {pipeline_mode = #tpu.pipeline_mode<synchronous>, transform_indices = @transform_8, window_bounds = array<i64: 1, 256>}, {pipeline_mode = #tpu.pipeline_mode<synchronous>, transform_indices = @transform_9, window_bounds = array<i64: 256, 256>}, {pipeline_mode = #tpu.pipeline_mode<synchronous>, transform_indices = @transform_10, window_bounds = array<i64: 1, 256>}, {transform_indices = @transform_11, window_bounds = array<i64: 128, 256>}]} {
    %c0_i32 = arith.constant 0 : i32
    %0 = arith.cmpi eq, %arg0, %c0_i32 : i32
    %1 = arith.extui %0 : i1 to i32
    %c0_i32_0 = arith.constant 0 : i32
    %2 = arith.cmpi ne, %1, %c0_i32_0 : i32
    scf.if %2 {
      %c0_30 = arith.constant 0 : index
      %c0_31 = arith.constant 0 : index
      %41 = vector.load %arg2[%c0_30, %c0_31] : memref<1536x768xi8, #tpu.memory_space<vmem>>, vector<1536x768xi8>
      %42 = arith.sitofp %41 : vector<1536x768xi8> to vector<1536x768xf32>
      %43 = arith.truncf %42 : vector<1536x768xf32> to vector<1536x768xbf16>
      %c0_32 = arith.constant 0 : index
      %c0_33 = arith.constant 0 : index
      %44 = vector.load %arg13[%c0_32, %c0_33] : memref<1536x768xbf16, #tpu.memory_space<vmem>>, vector<1536x768xbf16>
      tpu.vector_store %arg13[%c0_32, %c0_33], %43 {strides = array<i32>} : memref<1536x768xbf16, #tpu.memory_space<vmem>>, vector<1536x768xbf16>,
      %c0_34 = arith.constant 0 : index
      %c0_35 = arith.constant 0 : index
      %45 = vector.load %arg5[%c0_34, %c0_35] : memref<768x512xi8, #tpu.memory_space<vmem>>, vector<768x512xi8>
      %46 = arith.sitofp %45 : vector<768x512xi8> to vector<768x512xf32>
      %47 = arith.truncf %46 : vector<768x512xf32> to vector<768x512xbf16>
      %c0_36 = arith.constant 0 : index
      %c0_37 = arith.constant 0 : index
      %48 = vector.load %arg14[%c0_36, %c0_37] : memref<768x512xbf16, #tpu.memory_space<vmem>>, vector<768x512xbf16>
      tpu.vector_store %arg14[%c0_36, %c0_37], %47 {strides = array<i32>} : memref<768x512xbf16, #tpu.memory_space<vmem>>, vector<768x512xbf16>,
    } else {
    }
    %c0 = arith.constant 0 : index
    %c0_1 = arith.constant 0 : index
    %3 = vector.load %arg1[%c0, %c0_1] : memref<128x1536xbf16, #tpu.memory_space<vmem>>, vector<128x1536xbf16>
    %c0_2 = arith.constant 0 : index
    %c0_3 = arith.constant 0 : index
    %4 = vector.load %arg13[%c0_2, %c0_3] : memref<1536x768xbf16, #tpu.memory_space<vmem>>, vector<1536x768xbf16>
    %cst = arith.constant dense<0.000000e+00> : vector<128x768xf32>
    %5 = tpu.matmul %3, %4, %cst {dimension_numbers = #tpu.dot_dimension_numbers<[1], [0], [0], [1], [0, 0, 1, 1], [], []>} : vector<128x1536xbf16>, vector<1536x768xbf16>, vector<128x768xf32> -> vector<128x768xf32>
    %c0_4 = arith.constant 0 : index
    %c0_5 = arith.constant 0 : index
    %6 = vector.load %arg3[%c0_4, %c0_5] : memref<1x768xf32, #tpu.memory_space<vmem>>, vector<1x768xf32>
    %7 = vector.broadcast %6 : vector<1x768xf32> to vector<128x768xf32>
    %8 = arith.mulf %5, %7 : vector<128x768xf32>
    %c0_6 = arith.constant 0 : index
    %c0_7 = arith.constant 0 : index
    %9 = vector.load %arg4[%c0_6, %c0_7] : memref<1x768xf32, #tpu.memory_space<vmem>>, vector<1x768xf32>
    %10 = vector.broadcast %9 : vector<1x768xf32> to vector<128x768xf32>
    %11 = arith.addf %8, %10 : vector<128x768xf32>
    %cst_8 = arith.constant 0.000000e+00 : f32
    %12 = vector.broadcast %cst_8 : f32 to vector<128x768xf32>
    %13 = arith.maximumf %11, %12 : vector<128x768xf32>
    %14 = arith.truncf %13 : vector<128x768xf32> to vector<128x768xbf16>
    %c0_9 = arith.constant 0 : index
    %c0_10 = arith.constant 0 : index
    %15 = vector.load %arg14[%c0_9, %c0_10] : memref<768x512xbf16, #tpu.memory_space<vmem>>, vector<768x512xbf16>
    %cst_11 = arith.constant dense<0.000000e+00> : vector<128x512xf32>
    %16 = tpu.matmul %14, %15, %cst_11 {dimension_numbers = #tpu.dot_dimension_numbers<[1], [0], [0], [1], [0, 0, 1, 1], [], []>} : vector<128x768xbf16>, vector<768x512xbf16>, vector<128x512xf32> -> vector<128x512xf32>
    %c0_12 = arith.constant 0 : index
    %c0_13 = arith.constant 0 : index
    %17 = vector.load %arg6[%c0_12, %c0_13] : memref<1x512xf32, #tpu.memory_space<vmem>>, vector<1x512xf32>
    %18 = vector.broadcast %17 : vector<1x512xf32> to vector<128x512xf32>
    %19 = arith.mulf %16, %18 : vector<128x512xf32>
    %c0_14 = arith.constant 0 : index
    %c0_15 = arith.constant 0 : index
    %20 = vector.load %arg7[%c0_14, %c0_15] : memref<1x512xf32, #tpu.memory_space<vmem>>, vector<1x512xf32>
    %21 = vector.broadcast %20 : vector<1x512xf32> to vector<128x512xf32>
    %22 = arith.addf %19, %21 : vector<128x512xf32>
    %cst_16 = arith.constant 0.000000e+00 : f32
    %23 = vector.broadcast %cst_16 : f32 to vector<128x512xf32>
    %24 = arith.maximumf %22, %23 : vector<128x512xf32>
    %25 = arith.truncf %24 : vector<128x512xf32> to vector<128x512xbf16>
    %c0_17 = arith.constant 0 : index
    %c0_18 = arith.constant 0 : index
    %26 = vector.load %arg8[%c0_17, %c0_18] : memref<512x256xbf16, #tpu.memory_space<vmem>>, vector<512x256xbf16>
    %cst_19 = arith.constant dense<0.000000e+00> : vector<128x256xf32>
    %27 = tpu.matmul %25, %26, %cst_19 {dimension_numbers = #tpu.dot_dimension_numbers<[1], [0], [0], [1], [0, 0, 1, 1], [], []>} : vector<128x512xbf16>, vector<512x256xbf16>, vector<128x256xf32> -> vector<128x256xf32>
    %c0_20 = arith.constant 0 : index
    %c0_21 = arith.constant 0 : index
    %28 = vector.load %arg9[%c0_20, %c0_21] : memref<1x256xf32, #tpu.memory_space<vmem>>, vector<1x256xf32>
    %29 = vector.broadcast %28 : vector<1x256xf32> to vector<128x256xf32>
    %30 = arith.addf %27, %29 : vector<128x256xf32>
    %cst_22 = arith.constant 0.000000e+00 : f32
    %31 = vector.broadcast %cst_22 : f32 to vector<128x256xf32>
    %32 = arith.maximumf %30, %31 : vector<128x256xf32>
    %33 = arith.truncf %32 : vector<128x256xf32> to vector<128x256xbf16>
    %c0_23 = arith.constant 0 : index
    %c0_24 = arith.constant 0 : index
    %34 = vector.load %arg10[%c0_23, %c0_24] : memref<256x256xbf16, #tpu.memory_space<vmem>>, vector<256x256xbf16>
    %cst_25 = arith.constant dense<0.000000e+00> : vector<128x256xf32>
    %35 = tpu.matmul %33, %34, %cst_25 {dimension_numbers = #tpu.dot_dimension_numbers<[1], [0], [0], [1], [0, 0, 1, 1], [], []>} : vector<128x256xbf16>, vector<256x256xbf16>, vector<128x256xf32> -> vector<128x256xf32>
    %c0_26 = arith.constant 0 : index
    %c0_27 = arith.constant 0 : index
    %36 = vector.load %arg11[%c0_26, %c0_27] : memref<1x256xf32, #tpu.memory_space<vmem>>, vector<1x256xf32>
    %37 = vector.broadcast %36 : vector<1x256xf32> to vector<128x256xf32>
    %38 = arith.addf %35, %37 : vector<128x256xf32>
    %39 = arith.truncf %38 : vector<128x256xf32> to vector<128x256xbf16>
    %c0_28 = arith.constant 0 : index
    %c0_29 = arith.constant 0 : index
    %40 = vector.load %arg12[%c0_28, %c0_29] : memref<128x256xbf16, #tpu.memory_space<vmem>>, vector<128x256xbf16>
    tpu.vector_store %arg12[%c0_28, %c0_29], %39 {strides = array<i32>} : memref<128x256xbf16, #tpu.memory_space<vmem>>, vector<128x256xbf16>,
    return
  }
  func.func @transform_0(%arg0: i32) -> (i32, i32) {
    %c0_i32 = arith.constant 0 : i32
    %c0_i32_0 = arith.constant 0 : i32
    return %arg0, %c0_i32 : i32, i32
  }
  func.func @transform_1(%arg0: i32) -> (i32, i32) {
    %c0_i32 = arith.constant 0 : i32
    %c0_i32_0 = arith.constant 0 : i32
    %c0_i32_1 = arith.constant 0 : i32
    return %c0_i32, %c0_i32_0 : i32, i32
  }
  func.func @transform_2(%arg0: i32) -> (i32, i32) {
    %c0_i32 = arith.constant 0 : i32
    %c0_i32_0 = arith.constant 0 : i32
    %c0_i32_1 = arith.constant 0 : i32
    return %c0_i32, %c0_i32_0 : i32, i32
  }
  func.func @transform_3(%arg0: i32) -> (i32, i32) {
    %c0_i32 = arith.constant 0 : i32
    %c0_i32_0 = arith.constant 0 : i32
    %c0_i32_1 = arith.constant 0 : i32
    return %c0_i32, %c0_i32_0 : i32, i32
  }
  func.func @transform_4(%arg0: i32) -> (i32, i32) {
    %c0_i32 = arith.constant 0 : i32
    %c0_i32_0 = arith.constant 0 : i32
    %c0_i32_1 = arith.constant 0 : i32
    return %c0_i32, %c0_i32_0 : i32, i32
  }
  func.func @transform_5(%arg0: i32) -> (i32, i32) {
    %c0_i32 = arith.constant 0 : i32
    %c0_i32_0 = arith.constant 0 : i32
    %c0_i32_1 = arith.constant 0 : i32
    return %c0_i32, %c0_i32_0 : i32, i32
  }
  func.func @transform_6(%arg0: i32) -> (i32, i32) {
    %c0_i32 = arith.constant 0 : i32
    %c0_i32_0 = arith.constant 0 : i32
    %c0_i32_1 = arith.constant 0 : i32
    return %c0_i32, %c0_i32_0 : i32, i32
  }
  func.func @transform_7(%arg0: i32) -> (i32, i32) {
    %c0_i32 = arith.constant 0 : i32
    %c0_i32_0 = arith.constant 0 : i32
    %c0_i32_1 = arith.constant 0 : i32
    return %c0_i32, %c0_i32_0 : i32, i32
  }
  func.func @transform_8(%arg0: i32) -> (i32, i32) {
    %c0_i32 = arith.constant 0 : i32
    %c0_i32_0 = arith.constant 0 : i32
    %c0_i32_1 = arith.constant 0 : i32
    return %c0_i32, %c0_i32_0 : i32, i32
  }
  func.func @transform_9(%arg0: i32) -> (i32, i32) {
    %c0_i32 = arith.constant 0 : i32
    %c0_i32_0 = arith.constant 0 : i32
    %c0_i32_1 = arith.constant 0 : i32
    return %c0_i32, %c0_i32_0 : i32, i32
  }
  func.func @transform_10(%arg0: i32) -> (i32, i32) {
    %c0_i32 = arith.constant 0 : i32
    %c0_i32_0 = arith.constant 0 : i32
    %c0_i32_1 = arith.constant 0 : i32
    return %c0_i32, %c0_i32_0 : i32, i32
  }
  func.func @transform_11(%arg0: i32) -> (i32, i32) {
    %c0_i32 = arith.constant 0 : i32
    %c0_i32_0 = arith.constant 0 : i32
    return %arg0, %c0_i32 : i32, i32
  }
}

</mosaic_0001>

<llo_original>
// kernel: my_model_forward.1
$region0: #{my_model_forward.1}
  #allocation0 [shape = 'u32[]', space=smem, size = 0x4, offset = 0x4, fixed_abs, tag = 'smem constant byte address 0x4 - core index']
  #allocation1 [shape = 'u32[144,128]{1,0:T(1,128)}', space=vmem, size = 0x12000, scoped, tag = 'internal scratch']
  #allocation2 [shape = 'bf16[1536,768]{1,0:T(16,128)(2,1)}', space=vmem, size = 0x240000, scoped, tag = 'scratch operand']
  #allocation3 [shape = 'bf16[768,512]{1,0:T(16,128)(2,1)}', space=vmem, size = 0xc0000, scoped, tag = 'scratch operand']
  %s0 = inlined_call_operand.vmem [shape: bf16[128,1536], index: 0, kind: input, shape index: {}]
  %s1 = inlined_call_operand.hbm [shape: s8[1536,768], index: 1, kind: input, shape index: {}]
  %s2 = inlined_call_operand.hbm [shape: f32[1,768], index: 2, kind: input, shape index: {}]
  %s3 = inlined_call_operand.hbm [shape: f32[1,768], index: 3, kind: input, shape index: {}]
  %s4 = inlined_call_operand.hbm [shape: s8[768,512], index: 4, kind: input, shape index: {}]
  %s5 = inlined_call_operand.hbm [shape: f32[1,512], index: 5, kind: input, shape index: {}]
  %s6 = inlined_call_operand.hbm [shape: f32[1,512], index: 6, kind: input, shape index: {}]
  %s7 = inlined_call_operand.hbm [shape: bf16[512,256], index: 7, kind: input, shape index: {}]
  %s8 = inlined_call_operand.hbm [shape: f32[1,256], index: 8, kind: input, shape index: {}]
  %s9 = inlined_call_operand.hbm [shape: bf16[256,256], index: 9, kind: input, shape index: {}]
  %s10 = inlined_call_operand.hbm [shape: f32[1,256], index: 10, kind: input, shape index: {}]
  %s11 = inlined_call_operand.vmem [shape: bf16[128,256], index: 11, kind: output, shape index: {}]
  %s12 = sld [smem:[#allocation0]]
  $region98: #{my_model_forward.1} parent=0
    _
  %s14 = ssub.s32 1, %s12
  %s15 = scalar_select 0, %s14, %s12
  $region1: #{my_model_forward.1} parent=0
    #allocation4 [shape = 'u8[1179648]{0}', space=vmem, size = 0x120000, scoped, tag = 'input window, operand 1, single buffered']
    #allocation5 [shape = 's32[1]{0}', space=sflag, size = 0x4, scoped, tag = 'scoped memory for my_model_forward.1']
    #allocation6 [shape = 'u8[3072]{0}', space=vmem, size = 0xc00, scoped, tag = 'input window, operand 2, single buffered']
    #allocation7 [shape = 's32[1]{0}', space=sflag, size = 0x4, scoped, tag = 'scoped memory for my_model_forward.1']
    #allocation8 [shape = 'u8[3072]{0}', space=vmem, size = 0xc00, scoped, tag = 'input window, operand 3, single buffered']
    #allocation9 [shape = 'u8[393216]{0}', space=vmem, size = 0x60000, scoped, tag = 'input window, operand 4, single buffered']
    #allocation10 [shape = 's32[1]{0}', space=sflag, size = 0x4, scoped, tag = 'scoped memory for my_model_forward.1']
    #allocation11 [shape = 'u8[2048]{0}', space=vmem, size = 0x800, scoped, tag = 'input window, operand 5, single buffered']
    #allocation12 [shape = 'u8[2048]{0}', space=vmem, size = 0x800, scoped, tag = 'input window, operand 6, single buffered']
    #allocation13 [shape = 's32[1]{0}', space=sflag, size = 0x4, scoped, tag = 'scoped memory for my_model_forward.1']
    #allocation14 [shape = 'u8[262144]{0}', space=vmem, size = 0x40000, scoped, tag = 'input window, operand 7, single buffered']
    #allocation15 [shape = 'u8[1024]{0}', space=vmem, size = 0x400, scoped, tag = 'input window, operand 8, single buffered']
    #allocation16 [shape = 's32[1]{0}', space=sflag, size = 0x4, scoped, tag = 'scoped memory for my_model_forward.1']
    #allocation17 [shape = 'u8[131072]{0}', space=vmem, size = 0x20000, scoped, tag = 'input window, operand 9, single buffered']
    #allocation18 [shape = 'u8[1024]{0}', space=vmem, size = 0x400, scoped, tag = 'input window, operand 10, single buffered']
    #allocation19 [shape = 's32[1]{0}', space=sflag, size = 0x4, scoped, tag = 'scoped memory for my_model_forward.1']
    %16 = vsyncpa [#allocation5], 0
    %17 = vsyncpa [#allocation7], 0
    %18 = vsyncpa [#allocation10], 0
    %19 = vsyncpa [#allocation13], 0
    %20 = vsyncpa [#allocation16], 0
    %21 = vsyncpa [#allocation19], 0
    // Predicated region
    $region2: #{my_model_forward.1} parent=1 // pred_check
      _
    $region3: #{my_model_forward.1} parent=1 // pred_check_branch
      %23 = sbr.rel (0) target = $region5
    $region4: #{my_model_forward.1} parent=1 // pred_region
      _
    $region5: #{my_model_forward.1} parent=1 // pred_fallthru
      _
    // Predicated region
    $region6: #{my_model_forward.1} parent=1 // pred_check
      _
    $region7: #{my_model_forward.1} parent=1 // pred_check_branch
      %25 = sbr.rel (0) target = $region9
    $region8: #{my_model_forward.1} parent=1 // pred_region
      %s27 = ssub.s32 36864, 36864
      %28 = vsyncadd [#allocation5], %s27
      %s29 = sshll.u32 [#allocation4], 4
      %s30 = int_to_ptr.vmem [resolvable:$true] %s29
      %35 = dma.hbm_to_vmem [thread:$0]  %s1, 36864, %s30, [#allocation5], 768, 768, 48
    $region9: #{my_model_forward.1} parent=1 // pred_fallthru
      _
    // Predicated region
    $region10: #{my_model_forward.1} parent=1 // pred_check
      _
    $region11: #{my_model_forward.1} parent=1 // pred_check_branch
      %37 = sbr.rel (0) target = $region13
    $region12: #{my_model_forward.1} parent=1 // pred_region
      %s39 = ssub.s32 96, 96
      %40 = vsyncadd [#allocation7], %s39
      %s42 = sshll.u32 [#allocation6], 4
      %s43 = int_to_ptr.vmem [resolvable:$true] %s42
      %45 = dma.hbm_to_vmem [thread:$0]  %s2, 96, %s43, [#allocation7]
    $region13: #{my_model_forward.1} parent=1 // pred_fallthru
      _
    // Predicated region
    $region14: #{my_model_forward.1} parent=1 // pred_check
      _
    $region15: #{my_model_forward.1} parent=1 // pred_check_branch
      %47 = sbr.rel (0) target = $region17
    $region16: #{my_model_forward.1} parent=1 // pred_region
      %s49 = ssub.s32 96, 96
      %50 = vsyncadd [#allocation7], %s49
      %s52 = sshll.u32 [#allocation8], 4
      %s53 = int_to_ptr.vmem [resolvable:$true] %s52
      %55 = dma.hbm_to_vmem [thread:$0]  %s3, 96, %s53, [#allocation7]
    $region17: #{my_model_forward.1} parent=1 // pred_fallthru
      _
    // Predicated region
    $region18: #{my_model_forward.1} parent=1 // pred_check
      _
    $region19: #{my_model_forward.1} parent=1 // pred_check_branch
      %57 = sbr.rel (0) target = $region21
    $region20: #{my_model_forward.1} parent=1 // pred_region
      %s59 = ssub.s32 12288, 12288
      %60 = vsyncadd [#allocation10], %s59
      %s61 = sshll.u32 [#allocation9], 4
      %s62 = int_to_ptr.vmem [resolvable:$true] %s61
      %67 = dma.hbm_to_vmem [thread:$0]  %s4, 12288, %s62, [#allocation10], 512, 512, 32
    $region21: #{my_model_forward.1} parent=1 // pred_fallthru
      _
    // Predicated region
    $region22: #{my_model_forward.1} parent=1 // pred_check
      _
    $region23: #{my_model_forward.1} parent=1 // pred_check_branch
      %69 = sbr.rel (0) target = $region25
    $region24: #{my_model_forward.1} parent=1 // pred_region
      %s71 = ssub.s32 64, 64
      %72 = vsyncadd [#allocation10], %s71
      %s74 = sshll.u32 [#allocation11], 4
      %s75 = int_to_ptr.vmem [resolvable:$true] %s74
      %77 = dma.hbm_to_vmem [thread:$0]  %s5, 64, %s75, [#allocation10]
    $region25: #{my_model_forward.1} parent=1 // pred_fallthru
      _
    // Predicated region
    $region26: #{my_model_forward.1} parent=1 // pred_check
      _
    $region27: #{my_model_forward.1} parent=1 // pred_check_branch
      %79 = sbr.rel (0) target = $region29
    $region28: #{my_model_forward.1} parent=1 // pred_region
      %s81 = ssub.s32 64, 64
      %82 = vsyncadd [#allocation13], %s81
      %s84 = sshll.u32 [#allocation12], 4
      %s85 = int_to_ptr.vmem [resolvable:$true] %s84
      %87 = dma.hbm_to_vmem [thread:$0]  %s6, 64, %s85, [#allocation13]
    $region29: #{my_model_forward.1} parent=1 // pred_fallthru
      _
    // Predicated region
    $region30: #{my_model_forward.1} parent=1 // pred_check
      _
    $region31: #{my_model_forward.1} parent=1 // pred_check_branch
      %89 = sbr.rel (0) target = $region33
    $region32: #{my_model_forward.1} parent=1 // pred_region
      %s91 = ssub.s32 8192, 8192
      %92 = vsyncadd [#allocation13], %s91
      %s93 = sshll.u32 [#allocation14], 4
      %s94 = int_to_ptr.vmem [resolvable:$true] %s93
      %99 = dma.hbm_to_vmem [thread:$0]  %s7, 8192, %s94, [#allocation13], 128, 128, 8
    $region33: #{my_model_forward.1} parent=1 // pred_fallthru
      _
    // Predicated region
    $region34: #{my_model_forward.1} parent=1 // pred_check
      _
    $region35: #{my_model_forward.1} parent=1 // pred_check_branch
      %101 = sbr.rel (0) target = $region37
    $region36: #{my_model_forward.1} parent=1 // pred_region
      %s103 = ssub.s32 32, 32
      %104 = vsyncadd [#allocation16], %s103
      %s106 = sshll.u32 [#allocation15], 4
      %s107 = int_to_ptr.vmem [resolvable:$true] %s106
      %109 = dma.hbm_to_vmem [thread:$0]  %s8, 32, %s107, [#allocation16]
    $region37: #{my_model_forward.1} parent=1 // pred_fallthru
      _
    // Predicated region
    $region38: #{my_model_forward.1} parent=1 // pred_check
      _
    $region39: #{my_model_forward.1} parent=1 // pred_check_branch
      %111 = sbr.rel (0) target = $region41
    $region40: #{my_model_forward.1} parent=1 // pred_region
      %s113 = ssub.s32 4096, 4096
      %114 = vsyncadd [#allocation16], %s113
      %s115 = sshll.u32 [#allocation17], 4
      %s116 = int_to_ptr.vmem [resolvable:$true] %s115
      %121 = dma.hbm_to_vmem [thread:$0]  %s9, 4096, %s116, [#allocation16], 128, 128, 8
    $region41: #{my_model_forward.1} parent=1 // pred_fallthru
      _
    // Predicated region
    $region42: #{my_model_forward.1} parent=1 // pred_check
      _
    $region43: #{my_model_forward.1} parent=1 // pred_check_branch
      %123 = sbr.rel (0) target = $region45
    $region44: #{my_model_forward.1} parent=1 // pred_region
      %s125 = ssub.s32 32, 32
      %126 = vsyncadd [#allocation19], %s125
      %s128 = sshll.u32 [#allocation18], 4
      %s129 = int_to_ptr.vmem [resolvable:$true] %s128
      %131 = dma.hbm_to_vmem [thread:$0]  %s10, 32, %s129, [#allocation19]
    $region45: #{my_model_forward.1} parent=1 // pred_fallthru
      _
    // Predicated region
    $region46: #{my_model_forward.1} parent=1 // pred_check
      _
    $region47: #{my_model_forward.1} parent=1 // pred_check_branch
      %133 = sbr.rel (0) target = $region49
    $region48: #{my_model_forward.1} parent=1 // pred_region
      %134 = dma.done [#allocation5], 36864
    $region49: #{my_model_forward.1} parent=1 // pred_fallthru
      _
    // Predicated region
    $region50: #{my_model_forward.1} parent=1 // pred_check
      _
    $region51: #{my_model_forward.1} parent=1 // pred_check_branch
      %136 = sbr.rel (0) target = $region53
    $region52: #{my_model_forward.1} parent=1 // pred_region
      %137 = dma.done [#allocation7], 96
    $region53: #{my_model_forward.1} parent=1 // pred_fallthru
      _
    // Predicated region
    $region54: #{my_model_forward.1} parent=1 // pred_check
      _
    $region55: #{my_model_forward.1} parent=1 // pred_check_branch
      %139 = sbr.rel (0) target = $region57
    $region56: #{my_model_forward.1} parent=1 // pred_region
      %140 = dma.done [#allocation7], 96
    $region57: #{my_model_forward.1} parent=1 // pred_fallthru
      _
    // Predicated region
    $region58: #{my_model_forward.1} parent=1 // pred_check
      _
    $region59: #{my_model_forward.1} parent=1 // pred_check_branch
      %142 = sbr.rel (0) target = $region61
    $region60: #{my_model_forward.1} parent=1 // pred_region
      %143 = dma.done [#allocation10], 12288
    $region61: #{my_model_forward.1} parent=1 // pred_fallthru
      _
    // Predicated region
    $region62: #{my_model_forward.1} parent=1 // pred_check
      _
    $region63: #{my_model_forward.1} parent=1 // pred_check_branch
      %145 = sbr.rel (0) target = $region65
    $region64: #{my_model_forward.1} parent=1 // pred_region
      %146 = dma.done [#allocation10], 64
    $region65: #{my_model_forward.1} parent=1 // pred_fallthru
      _
    // Predicated region
    $region66: #{my_model_forward.1} parent=1 // pred_check
      _
    $region67: #{my_model_forward.1} parent=1 // pred_check_branch
      %148 = sbr.rel (0) target = $region69
    $region68: #{my_model_forward.1} parent=1 // pred_region
      %149 = dma.done [#allocation13], 64
    $region69: #{my_model_forward.1} parent=1 // pred_fallthru
      _
    // Predicated region
    $region70: #{my_model_forward.1} parent=1 // pred_check
      _
    $region71: #{my_model_forward.1} parent=1 // pred_check_branch
      %151 = sbr.rel (0) target = $region73
    $region72: #{my_model_forward.1} parent=1 // pred_region
      %152 = dma.done [#allocation13], 8192
    $region73: #{my_model_forward.1} parent=1 // pred_fallthru
      _
    // Predicated region
    $region74: #{my_model_forward.1} parent=1 // pred_check
      _
    $region75: #{my_model_forward.1} parent=1 // pred_check_branch
      %154 = sbr.rel (0) target = $region77
    $region76: #{my_model_forward.1} parent=1 // pred_region
      %155 = dma.done [#allocation16], 32
    $region77: #{my_model_forward.1} parent=1 // pred_fallthru
      _
    // Predicated region
    $region78: #{my_model_forward.1} parent=1 // pred_check
      _
    $region79: #{my_model_forward.1} parent=1 // pred_check_branch
      %157 = sbr.rel (0) target = $region81
    $region80: #{my_model_forward.1} parent=1 // pred_region
      %158 = dma.done [#allocation16], 4096
    $region81: #{my_model_forward.1} parent=1 // pred_fallthru
      _
    // Predicated region
    $region82: #{my_model_forward.1} parent=1 // pred_check
      _
    $region83: #{my_model_forward.1} parent=1 // pred_check_branch
      %160 = sbr.rel (0) target = $region85
    $region84: #{my_model_forward.1} parent=1 // pred_region
      %161 = dma.done [#allocation19], 32
    $region85: #{my_model_forward.1} parent=1 // pred_fallthru
      _
    %p162 = scmp.eq.s32.totalorder 0, 0
    // Predicated region
    $region86: #{my_model_forward.1} parent=1 // pred_check
      %p163 = pneg %p162
    $region87: #{my_model_forward.1} parent=1 // pred_check_branch
      %165 = sbr.rel (%p163) target = $region89
    $region88: #{my_model_forward.1} parent=1 // pred_region
      %v166 = vld [vmem:[#allocation4] sm:$0xff]
      %v167 = vld [vmem:[#allocation4 + $0x8] sm:$0xff]
      %v168 = vld [vmem:[#allocation4 + $0x10] sm:$0xff]
      %v169 = vld [vmem:[#allocation4 + $0x18] sm:$0xff]
      %v170 = vld [vmem:[#allocation4 + $0x20] sm:$0xff]
      %v171 = vld [vmem:[#allocation4 + $0x28] sm:$0xff]
      %v172 = vld [vmem:[#allocation4 + $0x30] sm:$0xff]
      %v173 = vld [vmem:[#allocation4 + $0x38] sm:$0xff]
      %v174 = vld [vmem:[#allocation4 + $0x40] sm:$0xff]
      %v175 = vld [vmem:[#allocation4 + $0x48] sm:$0xff]
      %v176 = vld [vmem:[#allocation4 + $0x50] sm:$0xff]
      %v177 = vld [vmem:[#allocation4 + $0x58] sm:$0xff]
      %v178 = vld [vmem:[#allocation4 + $0x60] sm:$0xff]
      %v179 = vld [vmem:[#allocation4 + $0x68] sm:$0xff]
      %v180 = vld [vmem:[#allocation4 + $0x70] sm:$0xff]
      %v181 = vld [vmem:[#allocation4 + $0x78] sm:$0xff]
      %v182 = vld [vmem:[#allocation4 + $0x80] sm:$0xff]
      %v183 = vld [vmem:[#allocation4 + $0x88] sm:$0xff]
      %v184 = vld [vmem:[#allocation4 + $0x90] sm:$0xff]
      %v185 = vld [vmem:[#allocation4 + $0x98] sm:$0xff]
      %v186 = vld [vmem:[#allocation4 + $0xa0] sm:$0xff]
      %v187 = vld [vmem:[#allocation4 + $0xa8] sm:$0xff]
      %v188 = vld [vmem:[#allocation4 + $0xb0] sm:$0xff]
      %v189 = vld [vmem:[#allocation4 + $0xb8] sm:$0xff]
      %v190 = vld [vmem:[#allocation4 + $0xc0] sm:$0xff]
      %v191 = vld [vmem:[#allocation4 + $0xc8] sm:$0xff]
      %v192 = vld [vmem:[#allocation4 + $0xd0] sm:$0xff]
      %v193 = vld [vmem:[#allocation4 + $0xd8] sm:$0xff]
      %v194 = vld [vmem:[#allocation4 + $0xe0] sm:$0xff]
      %v195 = vld [vmem:[#allocation4 + $0xe8] sm:$0xff]
      %v196 = vld [vmem:[#allocation4 + $0xf0] sm:$0xff]
      %v197 = vld [vmem:[#allocation4 + $0xf8] sm:$0xff]
      %v198 = vld [vmem:[#allocation4 + $0x100] sm:$0xff]
      %v199 = vld [vmem:[#allocation4 + $0x108] sm:$0xff]
      %v200 = vld [vmem:[#allocation4 + $0x110] sm:$0xff]
      %v201 = vld [vmem:[#allocation4 + $0x118] sm:$0xff]
      %v202 = vld [vmem:[#allocation4 + $0x120] sm:$0xff]
      %v203 = vld [vmem:[#allocation4 + $0x128] sm:$0xff]
      %v204 = vld [vmem:[#allocation4 + $0x130] sm:$0xff]
      %v205 = vld [vmem:[#allocation4 + $0x138] sm:$0xff]
      %v206 = vld [vmem:[#allocation4 + $0x140] sm:$0xff]
      %v207 = vld [vmem:[#allocation4 + $0x148] sm:$0xff]
      %v208 = vld [vmem:[#allocation4 + $0x150] sm:$0xff]
      %v209 = vld [vmem:[#allocation4 + $0x158] sm:$0xff]
      %v210 = vld [vmem:[#allocation4 + $0x160] sm:$0xff]
      %v211 = vld [vmem:[#allocation4 + $0x168] sm:$0xff]
      %v212 = vld [vmem:[#allocation4 + $0x170] sm:$0xff]
      %v213 = vld [vmem:[#allocation4 + $0x178] sm:$0xff]
      %v214 = vld [vmem:[#allocation4 + $0x180] sm:$0xff]
      %v215 = vld [vmem:[#allocation4 + $0x188] sm:$0xff]
      %v216 = vld [vmem:[#allocation4 + $0x190] sm:$0xff]
      %v217 = vld [vmem:[#allocation4 + $0x198] sm:$0xff]
      %v218 = vld [vmem:[#allocation4 + $0x1a0] sm:$0xff]
      %v219 = vld [vmem:[#allocation4 + $0x1a8] sm:$0xff]
      %v220 = vld [vmem:[#allocation4 + $0x1b0] sm:$0xff]
      %v221 = vld [vmem:[#allocation4 + $0x1b8] sm:$0xff]
      %v222 = vld [vmem:[#allocation4 + $0x1c0] sm:$0xff]
      %v223 = vld [vmem:[#allocation4 + $0x1c8] sm:$0xff]
      %v224 = vld [vmem:[#allocation4 + $0x1d0] sm:$0xff]
      %v225 = vld [vmem:[#allocation4 + $0x1d8] sm:$0xff]
      %v226 = vld [vmem:[#allocation4 + $0x1e0] sm:$0xff]
      %v227 = vld [vmem:[#allocation4 + $0x1e8] sm:$0xff]
      %v228 = vld [vmem:[#allocation4 + $0x1f0] sm:$0xff]
      %v229 = vld [vmem:[#allocation4 + $0x1f8] sm:$0xff]
      %v230 = vld [vmem:[#allocation4 + $0x200] sm:$0xff]
      %v231 = vld [vmem:[#allocation4 + $0x208] sm:$0xff]
      %v232 = vld [vmem:[#allocation4 + $0x210] sm:$0xff]
      %v233 = vld [vmem:[#allocation4 + $0x218] sm:$0xff]
      %v234 = vld [vmem:[#allocation4 + $0x220] sm:$0xff]
      %v235 = vld [vmem:[#allocation4 + $0x228] sm:$0xff]
      %v236 = vld [vmem:[#allocation4 + $0x230] sm:$0xff]
      %v237 = vld [vmem:[#allocation4 + $0x238] sm:$0xff]
      %v238 = vld [vmem:[#allocation4 + $0x240] sm:$0xff]
      %v239 = vld [vmem:[#allocation4 + $0x248] sm:$0xff]
      %v240 = vld [vmem:[#allocation4 + $0x250] sm:$0xff]
      %v241 = vld [vmem:[#allocation4 + $0x258] sm:$0xff]
      %v242 = vld [vmem:[#allocation4 + $0x260] sm:$0xff]
      %v243 = vld [vmem:[#allocation4 + $0x268] sm:$0xff]
      %v244 = vld [vmem:[#allocation4 + $0x270] sm:$0xff]
      %v245 = vld [vmem:[#allocation4 + $0x278] sm:$0xff]
      %v246 = vld [vmem:[#allocation4 + $0x280] sm:$0xff]
      %v247 = vld [vmem:[#allocation4 + $0x288] sm:$0xff]
      %v248 = vld [vmem:[#allocation4 + $0x290] sm:$0xff]
      %v249 = vld [vmem:[#allocation4 + $0x298] sm:$0xff]
      %v250 = vld [vmem:[#allocation4 + $0x2a0] sm:$0xff]
      %v251 = vld [vmem:[#allocation4 + $0x2a8] sm:$0xff]
      %v252 = vld [vmem:[#allocation4 + $0x2b0] sm:$0xff]
      %v253 = vld [vmem:[#allocation4 + $0x2b8] sm:$0xff]
      %v254 = vld [vmem:[#allocation4 + $0x2c0] sm:$0xff]
      %v255 = vld [vmem:[#allocation4 + $0x2c8] sm:$0xff]
      %v256 = vld [vmem:[#allocation4 + $0x2d0] sm:$0xff]
      %v257 = vld [vmem:[#allocation4 + $0x2d8] sm:$0xff]
      %v258 = vld [vmem:[#allocation4 + $0x2e0] sm:$0xff]
      %v259 = vld [vmem:[#allocation4 + $0x2e8] sm:$0xff]
      %v260 = vld [vmem:[#allocation4 + $0x2f0] sm:$0xff]
      %v261 = vld [vmem:[#allocation4 + $0x2f8] sm:$0xff]
      %v262 = vld [vmem:[#allocation4 + $0x300] sm:$0xff]
      %v263 = vld [vmem:[#allocation4 + $0x308] sm:$0xff]
      %v264 = vld [vmem:[#allocation4 + $0x310] sm:$0xff]
      %v265 = vld [vmem:[#allocation4 + $0x318] sm:$0xff]
      %v266 = vld [vmem:[#allocation4 + $0x320] sm:$0xff]
      %v267 = vld [vmem:[#allocation4 + $0x328] sm:$0xff]
      %v268 = vld [vmem:[#allocation4 + $0x330] sm:$0xff]
      %v269 = vld [vmem:[#allocation4 + $0x338] sm:$0xff]
      %v270 = vld [vmem:[#allocation4 + $0x340] sm:$0xff]
      %v271 = vld [vmem:[#allocation4 + $0x348] sm:$0xff]
      %v272 = vld [vmem:[#allocation4 + $0x350] sm:$0xff]
      %v273 = vld [vmem:[#allocation4 + $0x358] sm:$0xff]
      %v274 = vld [vmem:[#allocation4 + $0x360] sm:$0xff]
      %v275 = vld [vmem:[#allocation4 + $0x368] sm:$0xff]
      %v276 = vld [vmem:[#allocation4 + $0x370] sm:$0xff]
      %v277 = vld [vmem:[#allocation4 + $0x378] sm:$0xff]
      %v278 = vld [vmem:[#allocation4 + $0x380] sm:$0xff]
      %v279 = vld [vmem:[#allocation4 + $0x388] sm:$0xff]
      %v280 = vld [vmem:[#allocation4 + $0x390] sm:$0xff]
      %v281 = vld [vmem:[#allocation4 + $0x398] sm:$0xff]
      %v282 = vld [vmem:[#allocation4 + $0x3a0] sm:$0xff]
      %v283 = vld [vmem:[#allocation4 + $0x3a8] sm:$0xff]
      %v284 = vld [vmem:[#allocation4 + $0x3b0] sm:$0xff]
      %v285 = vld [vmem:[#allocation4 + $0x3b8] sm:$0xff]
      %v286 = vld [vmem:[#allocation4 + $0x3c0] sm:$0xff]
      %v287 = vld [vmem:[#allocation4 + $0x3c8] sm:$0xff]
      %v288 = vld [vmem:[#allocation4 + $0x3d0] sm:$0xff]
      %v289 = vld [vmem:[#allocation4 + $0x3d8] sm:$0xff]
      %v290 = vld [vmem:[#allocation4 + $0x3e0] sm:$0xff]
      %v291 = vld [vmem:[#allocation4 + $0x3e8] sm:$0xff]
      %v292 = vld [vmem:[#allocation4 + $0x3f0] sm:$0xff]
      %v293 = vld [vmem:[#allocation4 + $0x3f8] sm:$0xff]
      %v294 = vld [vmem:[#allocation4 + $0x400] sm:$0xff]
      %v295 = vld [vmem:[#allocation4 + $0x408] sm:$0xff]
      %v296 = vld [vmem:[#allocation4 + $0x410] sm:$0xff]
      %v297 = vld [vmem:[#allocation4 + $0x418] sm:$0xff]
      %v298 = vld [vmem:[#allocation4 + $0x420] sm:$0xff]
      %v299 = vld [vmem:[#allocation4 + $0x428] sm:$0xff]
      %v300 = vld [vmem:[#allocation4 + $0x430] sm:$0xff]
      %v301 = vld [vmem:[#allocation4 + $0x438] sm:$0xff]
      %v302 = vld [vmem:[#allocation4 + $0x440] sm:$0xff]
      %v303 = vld [vmem:[#allocation4 + $0x448] sm:$0xff]
      %v304 = vld [vmem:[#allocation4 + $0x450] sm:$0xff]
      %v305 = vld [vmem:[#allocation4 + $0x458] sm:$0xff]
      %v306 = vld [vmem:[#allocation4 + $0x460] sm:$0xff]
      %v307 = vld [vmem:[#allocation4 + $0x468] sm:$0xff]
      %v308 = vld [vmem:[#allocation4 + $0x470] sm:$0xff]
      %v309 = vld [vmem:[#allocation4 + $0x478] sm:$0xff]
      %v310 = vld [vmem:[#allocation4 + $0x480] sm:$0xff]
      %v311 = vld [vmem:[#allocation4 + $0x488] sm:$0xff]
      %v312 = vld [vmem:[#allocation4 + $0x490] sm:$0xff]
      %v313 = vld [vmem:[#allocation4 + $0x498] sm:$0xff]
      %v314 = vld [vmem:[#allocation4 + $0x4a0] sm:$0xff]
      %v315 = vld [vmem:[#allocation4 + $0x4a8] sm:$0xff]
      %v316 = vld [vmem:[#allocation4 + $0x4b0] sm:$0xff]
      %v317 = vld [vmem:[#allocation4 + $0x4b8] sm:$0xff]
      %v318 = vld [vmem:[#allocation4 + $0x4c0] sm:$0xff]
      %v319 = vld [vmem:[#allocation4 + $0x4c8] sm:$0xff]
      %v320 = vld [vmem:[#allocation4 + $0x4d0] sm:$0xff]
      %v321 = vld [vmem:[#allocation4 + $0x4d8] sm:$0xff]
      %v322 = vld [vmem:[#allocation4 + $0x4e0] sm:$0xff]
      %v323 = vld [vmem:[#allocation4 + $0x4e8] sm:$0xff]
      %v324 = vld [vmem:[#allocation4 + $0x4f0] sm:$0xff]
      %v325 = vld [vmem:[#allocation4 + $0x4f8] sm:$0xff]
      %v326 = vld [vmem:[#allocation4 + $0x500] sm:$0xff]
      %v327 = vld [vmem:[#allocation4 + $0x508] sm:$0xff]
      %v328 = vld [vmem:[#allocation4 + $0x510] sm:$0xff]
      %v329 = vld [vmem:[#allocation4 + $0x518] sm:$0xff]
      %v330 = vld [vmem:[#allocation4 + $0x520] sm:$0xff]
      %v331 = vld [vmem:[#allocation4 + $0x528] sm:$0xff]
      %v332 = vld [vmem:[#allocation4 + $0x530] sm:$0xff]
      %v333 = vld [vmem:[#allocation4 + $0x538] sm:$0xff]
      %v334 = vld [vmem:[#allocation4 + $0x540] sm:$0xff]
      %v335 = vld [vmem:[#allocation4 + $0x548] sm:$0xff]
      %v336 = vld [vmem:[#allocation4 + $0x550] sm:$0xff]
      %v337 = vld [vmem:[#allocation4 + $0x558] sm:$0xff]
      %v338 = vld [vmem:[#allocation4 + $0x560] sm:$0xff]
      %v339 = vld [vmem:[#allocation4 + $0x568] sm:$0xff]
      %v340 = vld [vmem:[#allocation4 + $0x570] sm:$0xff]
      %v341 = vld [vmem:[#allocation4 + $0x578] sm:$0xff]
      %v342 = vld [vmem:[#allocation4 + $0x580] sm:$0xff]
      %v343 = vld [vmem:[#allocation4 + $0x588] sm:$0xff]
      %v344 = vld [vmem:[#allocation4 + $0x590] sm:$0xff]
      %v345 = vld [vmem:[#allocation4 + $0x598] sm:$0xff]
      %v346 = vld [vmem:[#allocation4 + $0x5a0] sm:$0xff]
      %v347 = vld [vmem:[#allocation4 + $0x5a8] sm:$0xff]
      %v348 = vld [vmem:[#allocation4 + $0x5b0] sm:$0xff]
      %v349 = vld [vmem:[#allocation4 + $0x5b8] sm:$0xff]
      %v350 = vld [vmem:[#allocation4 + $0x5c0] sm:$0xff]
      %v351 = vld [vmem:[#allocation4 + $0x5c8] sm:$0xff]
      %v352 = vld [vmem:[#allocation4 + $0x5d0] sm:$0xff]
      %v353 = vld [vmem:[#allocation4 + $0x5d8] sm:$0xff]
      %v354 = vld [vmem:[#allocation4 + $0x5e0] sm:$0xff]
      %v355 = vld [vmem:[#allocation4 + $0x5e8] sm:$0xff]
      %v356 = vld [vmem:[#allocation4 + $0x5f0] sm:$0xff]
      %v357 = vld [vmem:[#allocation4 + $0x5f8] sm:$0xff]
      %v358 = vld [vmem:[#allocation4 + $0x600] sm:$0xff]
      %v359 = vld [vmem:[#allocation4 + $0x608] sm:$0xff]
      %v360 = vld [vmem:[#allocation4 + $0x610] sm:$0xff]
      %v361 = vld [vmem:[#allocation4 + $0x618] sm:$0xff]
      %v362 = vld [vmem:[#allocation4 + $0x620] sm:$0xff]
      %v363 = vld [vmem:[#allocation4 + $0x628] sm:$0xff]
      %v364 = vld [vmem:[#allocation4 + $0x630] sm:$0xff]
      %v365 = vld [vmem:[#allocation4 + $0x638] sm:$0xff]
      %v366 = vld [vmem:[#allocation4 + $0x640] sm:$0xff]
      %v367 = vld [vmem:[#allocation4 + $0x648] sm:$0xff]
      %v368 = vld [vmem:[#allocation4 + $0x650] sm:$0xff]
      %v369 = vld [vmem:[#allocation4 + $0x658] sm:$0xff]
      %v370 = vld [vmem:[#allocation4 + $0x660] sm:$0xff]
      %v371 = vld [vmem:[#allocation4 + $0x668] sm:$0xff]
      %v372 = vld [vmem:[#allocation4 + $0x670] sm:$0xff]
      %v373 = vld [vmem:[#allocation4 + $0x678] sm:$0xff]
      %v374 = vld [vmem:[#allocation4 + $0x680] sm:$0xff]
      %v375 = vld [vmem:[#allocation4 + $0x688] sm:$0xff]
      %v376 = vld [vmem:[#allocation4 + $0x690] sm:$0xff]
      %v377 = vld [vmem:[#allocation4 + $0x698] sm:$0xff]
      %v378 = vld [vmem:[#allocation4 + $0x6a0] sm:$0xff]
      %v379 = vld [vmem:[#allocation4 + $0x6a8] sm:$0xff]
      %v380 = vld [vmem:[#allocation4 + $0x6b0] sm:$0xff]
      %v381 = vld [vmem:[#allocation4 + $0x6b8] sm:$0xff]
      %v382 = vld [vmem:[#allocation4 + $0x6c0] sm:$0xff]
      %v383 = vld [vmem:[#allocation4 + $0x6c8] sm:$0xff]
      %v384 = vld [vmem:[#allocation4 + $0x6d0] sm:$0xff]
      %v385 = vld [vmem:[#allocation4 + $0x6d8] sm:$0xff]
      %v386 = vld [vmem:[#allocation4 + $0x6e0] sm:$0xff]
      %v387 = vld [vmem:[#allocation4 + $0x6e8] sm:$0xff]
      %v388 = vld [vmem:[#allocation4 + $0x6f0] sm:$0xff]
      %v389 = vld [vmem:[#allocation4 + $0x6f8] sm:$0xff]
      %v390 = vld [vmem:[#allocation4 + $0x700] sm:$0xff]
      %v391 = vld [vmem:[#allocation4 + $0x708] sm:$0xff]
      %v392 = vld [vmem:[#allocation4 + $0x710] sm:$0xff]
      %v393 = vld [vmem:[#allocation4 + $0x718] sm:$0xff]
      %v394 = vld [vmem:[#allocation4 + $0x720] sm:$0xff]
      %v395 = vld [vmem:[#allocation4 + $0x728] sm:$0xff]
      %v396 = vld [vmem:[#allocation4 + $0x730] sm:$0xff]
      %v397 = vld [vmem:[#allocation4 + $0x738] sm:$0xff]
      %v398 = vld [vmem:[#allocation4 + $0x740] sm:$0xff]
      %v399 = vld [vmem:[#allocation4 + $0x748] sm:$0xff]
      %v400 = vld [vmem:[#allocation4 + $0x750] sm:$0xff]
      %v401 = vld [vmem:[#allocation4 + $0x758] sm:$0xff]
      %v402 = vld [vmem:[#allocation4 + $0x760] sm:$0xff]
      %v403 = vld [vmem:[#allocation4 + $0x768] sm:$0xff]
      %v404 = vld [vmem:[#allocation4 + $0x770] sm:$0xff]
      %v405 = vld [vmem:[#allocation4 + $0x778] sm:$0xff]
      %v406 = vld [vmem:[#allocation4 + $0x780] sm:$0xff]
      %v407 = vld [vmem:[#allocation4 + $0x788] sm:$0xff]
      %v408 = vld [vmem:[#allocation4 + $0x790] sm:$0xff]
      %v409 = vld [vmem:[#allocation4 + $0x798] sm:$0xff]
      %v410 = vld [vmem:[#allocation4 + $0x7a0] sm:$0xff]
      %v411 = vld [vmem:[#allocation4 + $0x7a8] sm:$0xff]
      %v412 = vld [vmem:[#allocation4 + $0x7b0] sm:$0xff]
      %v413 = vld [vmem:[#allocation4 + $0x7b8] sm:$0xff]
      %v414 = vld [vmem:[#allocation4 + $0x7c0] sm:$0xff]
      %v415 = vld [vmem:[#allocation4 + $0x7c8] sm:$0xff]
      %v416 = vld [vmem:[#allocation4 + $0x7d0] sm:$0xff]
      %v417 = vld [vmem:[#allocation4 + $0x7d8] sm:$0xff]
      %v418 = vld [vmem:[#allocation4 + $0x7e0] sm:$0xff]
      %v419 = vld [vmem:[#allocation4 + $0x7e8] sm:$0xff]
      %v420 = vld [vmem:[#allocation4 + $0x7f0] sm:$0xff]
      %v421 = vld [vmem:[#allocation4 + $0x7f8] sm:$0xff]
      %v422 = vld [vmem:[#allocation4 + $0x800] sm:$0xff]
      %v423 = vld [vmem:[#allocation4 + $0x808] sm:$0xff]
      %v424 = vld [vmem:[#allocation4 + $0x810] sm:$0xff]
      %v425 = vld [vmem:[#allocation4 + $0x818] sm:$0xff]
      %v426 = vld [vmem:[#allocation4 + $0x820] sm:$0xff]
      %v427 = vld [vmem:[#allocation4 + $0x828] sm:$0xff]
      %v428 = vld [vmem:[#allocation4 + $0x830] sm:$0xff]
      %v429 = vld [vmem:[#allocation4 + $0x838] sm:$0xff]
      %v430 = vld [vmem:[#allocation4 + $0x840] sm:$0xff]
      %v431 = vld [vmem:[#allocation4 + $0x848] sm:$0xff]
      %v432 = vld [vmem:[#allocation4 + $0x850] sm:$0xff]
      %v433 = vld [vmem:[#allocation4 + $0x858] sm:$0xff]
      %v434 = vld [vmem:[#allocation4 + $0x860] sm:$0xff]
      %v435 = vld [vmem:[#allocation4 + $0x868] sm:$0xff]
      %v436 = vld [vmem:[#allocation4 + $0x870] sm:$0xff]
      %v437 = vld [vmem:[#allocation4 + $0x878] sm:$0xff]
      %v438 = vld [vmem:[#allocation4 + $0x880] sm:$0xff]
      %v439 = vld [vmem:[#allocation4 + $0x888] sm:$0xff]
      %v440 = vld [vmem:[#allocation4 + $0x890] sm:$0xff]
      %v441 = vld [vmem:[#allocation4 + $0x898] sm:$0xff]
      %v442 = vld [vmem:[#allocation4 + $0x8a0] sm:$0xff]
      %v443 = vld [vmem:[#allocation4 + $0x8a8] sm:$0xff]
      %v444 = vld [vmem:[#allocation4 + $0x8b0] sm:$0xff]
      %v445 = vld [vmem:[#allocation4 + $0x8b8] sm:$0xff]
      %v446 = vld [vmem:[#allocation4 + $0x8c0] sm:$0xff]
      %v447 = vld [vmem:[#allocation4 + $0x8c8] sm:$0xff]
      %v448 = vld [vmem:[#allocation4 + $0x8d0] sm:$0xff]
      %v449 = vld [vmem:[#allocation4 + $0x8d8] sm:$0xff]
      %v450 = vld [vmem:[#allocation4 + $0x8e0] sm:$0xff]
      %v451 = vld [vmem:[#allocation4 + $0x8e8] sm:$0xff]
      %v452 = vld [vmem:[#allocation4 + $0x8f0] sm:$0xff]
      %v453 = vld [vmem:[#allocation4 + $0x8f8] sm:$0xff]
      %v454 = vunpack.c.l.s8.bf16 %v166
      %v455 = vunpack.c.l.s8.bf16 %v167
      %v456 = vunpack.c.l.s8.bf16 %v168
      %v457 = vunpack.c.l.s8.bf16 %v169
      %v458 = vunpack.c.l.s8.bf16 %v170
      %v459 = vunpack.c.l.s8.bf16 %v171
      %v460 = vunpack.c.h.s8.bf16 %v166
      %v461 = vunpack.c.h.s8.bf16 %v167
      %v462 = vunpack.c.h.s8.bf16 %v168
      %v463 = vunpack.c.h.s8.bf16 %v169
      %v464 = vunpack.c.h.s8.bf16 %v170
      %v465 = vunpack.c.h.s8.bf16 %v171
      %v466 = vunpack.c.l.s8.bf16 %v172
      %v467 = vunpack.c.l.s8.bf16 %v173
      %v468 = vunpack.c.l.s8.bf16 %v174
      %v469 = vunpack.c.l.s8.bf16 %v175
      %v470 = vunpack.c.l.s8.bf16 %v176
      %v471 = vunpack.c.l.s8.bf16 %v177
      %v472 = vunpack.c.h.s8.bf16 %v172
      %v473 = vunpack.c.h.s8.bf16 %v173
      %v474 = vunpack.c.h.s8.bf16 %v174
      %v475 = vunpack.c.h.s8.bf16 %v175
      %v476 = vunpack.c.h.s8.bf16 %v176
      %v477 = vunpack.c.h.s8.bf16 %v177
      %v478 = vunpack.c.l.s8.bf16 %v178
      %v479 = vunpack.c.l.s8.bf16 %v179
      %v480 = vunpack.c.l.s8.bf16 %v180
      %v481 = vunpack.c.l.s8.bf16 %v181
      %v482 = vunpack.c.l.s8.bf16 %v182
      %v483 = vunpack.c.l.s8.bf16 %v183
      %v484 = vunpack.c.h.s8.bf16 %v178
      %v485 = vunpack.c.h.s8.bf16 %v179
      %v486 = vunpack.c.h.s8.bf16 %v180
      %v487 = vunpack.c.h.s8.bf16 %v181
      %v488 = vunpack.c.h.s8.bf16 %v182
      %v489 = vunpack.c.h.s8.bf16 %v183
      %v490 = vunpack.c.l.s8.bf16 %v184
      %v491 = vunpack.c.l.s8.bf16 %v185
      %v492 = vunpack.c.l.s8.bf16 %v186
      %v493 = vunpack.c.l.s8.bf16 %v187
      %v494 = vunpack.c.l.s8.bf16 %v188
      %v495 = vunpack.c.l.s8.bf16 %v189
      %v496 = vunpack.c.h.s8.bf16 %v184
      %v497 = vunpack.c.h.s8.bf16 %v185
      %v498 = vunpack.c.h.s8.bf16 %v186
      %v499 = vunpack.c.h.s8.bf16 %v187
      %v500 = vunpack.c.h.s8.bf16 %v188
      %v501 = vunpack.c.h.s8.bf16 %v189
      %v502 = vunpack.c.l.s8.bf16 %v190
      %v503 = vunpack.c.l.s8.bf16 %v191
      %v504 = vunpack.c.l.s8.bf16 %v192
      %v505 = vunpack.c.l.s8.bf16 %v193
      %v506 = vunpack.c.l.s8.bf16 %v194
      %v507 = vunpack.c.l.s8.bf16 %v195
      %v508 = vunpack.c.h.s8.bf16 %v190
      %v509 = vunpack.c.h.s8.bf16 %v191
      %v510 = vunpack.c.h.s8.bf16 %v192
      %v511 = vunpack.c.h.s8.bf16 %v193
      %v512 = vunpack.c.h.s8.bf16 %v194
      %v513 = vunpack.c.h.s8.bf16 %v195
      %v514 = vunpack.c.l.s8.bf16 %v196
      %v515 = vunpack.c.l.s8.bf16 %v197
      %v516 = vunpack.c.l.s8.bf16 %v198
      %v517 = vunpack.c.l.s8.bf16 %v199
      %v518 = vunpack.c.l.s8.bf16 %v200
      %v519 = vunpack.c.l.s8.bf16 %v201
      %v520 = vunpack.c.h.s8.bf16 %v196
      %v521 = vunpack.c.h.s8.bf16 %v197
      %v522 = vunpack.c.h.s8.bf16 %v198
      %v523 = vunpack.c.h.s8.bf16 %v199
      %v524 = vunpack.c.h.s8.bf16 %v200
      %v525 = vunpack.c.h.s8.bf16 %v201
      %v526 = vunpack.c.l.s8.bf16 %v202
      %v527 = vunpack.c.l.s8.bf16 %v203
      %v528 = vunpack.c.l.s8.bf16 %v204
      %v529 = vunpack.c.l.s8.bf16 %v205
      %v530 = vunpack.c.l.s8.bf16 %v206
      %v531 = vunpack.c.l.s8.bf16 %v207
      %v532 = vunpack.c.h.s8.bf16 %v202
      %v533 = vunpack.c.h.s8.bf16 %v203
      %v534 = vunpack.c.h.s8.bf16 %v204
      %v535 = vunpack.c.h.s8.bf16 %v205
      %v536 = vunpack.c.h.s8.bf16 %v206
      %v537 = vunpack.c.h.s8.bf16 %v207
      %v538 = vunpack.c.l.s8.bf16 %v208
      %v539 = vunpack.c.l.s8.bf16 %v209
      %v540 = vunpack.c.l.s8.bf16 %v210
      %v541 = vunpack.c.l.s8.bf16 %v211
      %v542 = vunpack.c.l.s8.bf16 %v212
      %v543 = vunpack.c.l.s8.bf16 %v213
      %v544 = vunpack.c.h.s8.bf16 %v208
      %v545 = vunpack.c.h.s8.bf16 %v209
      %v546 = vunpack.c.h.s8.bf16 %v210
      %v547 = vunpack.c.h.s8.bf16 %v211
      %v548 = vunpack.c.h.s8.bf16 %v212
      %v549 = vunpack.c.h.s8.bf16 %v213
      %v550 = vunpack.c.l.s8.bf16 %v214
      %v551 = vunpack.c.l.s8.bf16 %v215
      %v552 = vunpack.c.l.s8.bf16 %v216
      %v553 = vunpack.c.l.s8.bf16 %v217
      %v554 = vunpack.c.l.s8.bf16 %v218
      %v555 = vunpack.c.l.s8.bf16 %v219
      %v556 = vunpack.c.h.s8.bf16 %v214
      %v557 = vunpack.c.h.s8.bf16 %v215
      %v558 = vunpack.c.h.s8.bf16 %v216
      %v559 = vunpack.c.h.s8.bf16 %v217
      %v560 = vunpack.c.h.s8.bf16 %v218
      %v561 = vunpack.c.h.s8.bf16 %v219
      %v562 = vunpack.c.l.s8.bf16 %v220
      %v563 = vunpack.c.l.s8.bf16 %v221
      %v564 = vunpack.c.l.s8.bf16 %v222
      %v565 = vunpack.c.l.s8.bf16 %v223
      %v566 = vunpack.c.l.s8.bf16 %v224
      %v567 = vunpack.c.l.s8.bf16 %v225
      %v568 = vunpack.c.h.s8.bf16 %v220
      %v569 = vunpack.c.h.s8.bf16 %v221
      %v570 = vunpack.c.h.s8.bf16 %v222
      %v571 = vunpack.c.h.s8.bf16 %v223
      %v572 = vunpack.c.h.s8.bf16 %v224
      %v573 = vunpack.c.h.s8.bf16 %v225
      %v574 = vunpack.c.l.s8.bf16 %v226
      %v575 = vunpack.c.l.s8.bf16 %v227
      %v576 = vunpack.c.l.s8.bf16 %v228
      %v577 = vunpack.c.l.s8.bf16 %v229
      %v578 = vunpack.c.l.s8.bf16 %v230
      %v579 = vunpack.c.l.s8.bf16 %v231
      %v580 = vunpack.c.h.s8.bf16 %v226
      %v581 = vunpack.c.h.s8.bf16 %v227
      %v582 = vunpack.c.h.s8.bf16 %v228
      %v583 = vunpack.c.h.s8.bf16 %v229
      %v584 = vunpack.c.h.s8.bf16 %v230
      %v585 = vunpack.c.h.s8.bf16 %v231
      %v586 = vunpack.c.l.s8.bf16 %v232
      %v587 = vunpack.c.l.s8.bf16 %v233
      %v588 = vunpack.c.l.s8.bf16 %v234
      %v589 = vunpack.c.l.s8.bf16 %v235
      %v590 = vunpack.c.l.s8.bf16 %v236
      %v591 = vunpack.c.l.s8.bf16 %v237
      %v592 = vunpack.c.h.s8.bf16 %v232
      %v593 = vunpack.c.h.s8.bf16 %v233
      %v594 = vunpack.c.h.s8.bf16 %v234
      %v595 = vunpack.c.h.s8.bf16 %v235
      %v596 = vunpack.c.h.s8.bf16 %v236
      %v597 = vunpack.c.h.s8.bf16 %v237
      %v598 = vunpack.c.l.s8.bf16 %v238
      %v599 = vunpack.c.l.s8.bf16 %v239
      %v600 = vunpack.c.l.s8.bf16 %v240
      %v601 = vunpack.c.l.s8.bf16 %v241
      %v602 = vunpack.c.l.s8.bf16 %v242
      %v603 = vunpack.c.l.s8.bf16 %v243
      %v604 = vunpack.c.h.s8.bf16 %v238
      %v605 = vunpack.c.h.s8.bf16 %v239
      %v606 = vunpack.c.h.s8.bf16 %v240
      %v607 = vunpack.c.h.s8.bf16 %v241
      %v608 = vunpack.c.h.s8.bf16 %v242
      %v609 = vunpack.c.h.s8.bf16 %v243
      %v610 = vunpack.c.l.s8.bf16 %v244
      %v611 = vunpack.c.l.s8.bf16 %v245
      %v612 = vunpack.c.l.s8.bf16 %v246
      %v613 = vunpack.c.l.s8.bf16 %v247
      %v614 = vunpack.c.l.s8.bf16 %v248
      %v615 = vunpack.c.l.s8.bf16 %v249
      %v616 = vunpack.c.h.s8.bf16 %v244
      %v617 = vunpack.c.h.s8.bf16 %v245
      %v618 = vunpack.c.h.s8.bf16 %v246
      %v619 = vunpack.c.h.s8.bf16 %v247
      %v620 = vunpack.c.h.s8.bf16 %v248
      %v621 = vunpack.c.h.s8.bf16 %v249
      %v622 = vunpack.c.l.s8.bf16 %v250
      %v623 = vunpack.c.l.s8.bf16 %v251
      %v624 = vunpack.c.l.s8.bf16 %v252
      %v625 = vunpack.c.l.s8.bf16 %v253
      %v626 = vunpack.c.l.s8.bf16 %v254
      %v627 = vunpack.c.l.s8.bf16 %v255
      %v628 = vunpack.c.h.s8.bf16 %v250
      %v629 = vunpack.c.h.s8.bf16 %v251
      %v630 = vunpack.c.h.s8.bf16 %v252
      %v631 = vunpack.c.h.s8.bf16 %v253
      %v632 = vunpack.c.h.s8.bf16 %v254
      %v633 = vunpack.c.h.s8.bf16 %v255
      %v634 = vunpack.c.l.s8.bf16 %v256
      %v635 = vunpack.c.l.s8.bf16 %v257
      %v636 = vunpack.c.l.s8.bf16 %v258
      %v637 = vunpack.c.l.s8.bf16 %v259
      %v638 = vunpack.c.l.s8.bf16 %v260
      %v639 = vunpack.c.l.s8.bf16 %v261
      %v640 = vunpack.c.h.s8.bf16 %v256
      %v641 = vunpack.c.h.s8.bf16 %v257
      %v642 = vunpack.c.h.s8.bf16 %v258
      %v643 = vunpack.c.h.s8.bf16 %v259
      %v644 = vunpack.c.h.s8.bf16 %v260
      %v645 = vunpack.c.h.s8.bf16 %v261
      %v646 = vunpack.c.l.s8.bf16 %v262
      %v647 = vunpack.c.l.s8.bf16 %v263
      %v648 = vunpack.c.l.s8.bf16 %v264
      %v649 = vunpack.c.l.s8.bf16 %v265
      %v650 = vunpack.c.l.s8.bf16 %v266
      %v651 = vunpack.c.l.s8.bf16 %v267
      %v652 = vunpack.c.h.s8.bf16 %v262
      %v653 = vunpack.c.h.s8.bf16 %v263
      %v654 = vunpack.c.h.s8.bf16 %v264
      %v655 = vunpack.c.h.s8.bf16 %v265
      %v656 = vunpack.c.h.s8.bf16 %v266
      %v657 = vunpack.c.h.s8.bf16 %v267
      %v658 = vunpack.c.l.s8.bf16 %v268
      %v659 = vunpack.c.l.s8.bf16 %v269
      %v660 = vunpack.c.l.s8.bf16 %v270
      %v661 = vunpack.c.l.s8.bf16 %v271
      %v662 = vunpack.c.l.s8.bf16 %v272
      %v663 = vunpack.c.l.s8.bf16 %v273
      %v664 = vunpack.c.h.s8.bf16 %v268
      %v665 = vunpack.c.h.s8.bf16 %v269
      %v666 = vunpack.c.h.s8.bf16 %v270
      %v667 = vunpack.c.h.s8.bf16 %v271
      %v668 = vunpack.c.h.s8.bf16 %v272
      %v669 = vunpack.c.h.s8.bf16 %v273
      %v670 = vunpack.c.l.s8.bf16 %v274
      %v671 = vunpack.c.l.s8.bf16 %v275
      %v672 = vunpack.c.l.s8.bf16 %v276
      %v673 = vunpack.c.l.s8.bf16 %v277
      %v674 = vunpack.c.l.s8.bf16 %v278
      %v675 = vunpack.c.l.s8.bf16 %v279
      %v676 = vunpack.c.h.s8.bf16 %v274
      %v677 = vunpack.c.h.s8.bf16 %v275
      %v678 = vunpack.c.h.s8.bf16 %v276
      %v679 = vunpack.c.h.s8.bf16 %v277
      %v680 = vunpack.c.h.s8.bf16 %v278
      %v681 = vunpack.c.h.s8.bf16 %v279
      %v682 = vunpack.c.l.s8.bf16 %v280
      %v683 = vunpack.c.l.s8.bf16 %v281
      %v684 = vunpack.c.l.s8.bf16 %v282
      %v685 = vunpack.c.l.s8.bf16 %v283
      %v686 = vunpack.c.l.s8.bf16 %v284
      %v687 = vunpack.c.l.s8.bf16 %v285
      %v688 = vunpack.c.h.s8.bf16 %v280
      %v689 = vunpack.c.h.s8.bf16 %v281
      %v690 = vunpack.c.h.s8.bf16 %v282
      %v691 = vunpack.c.h.s8.bf16 %v283
      %v692 = vunpack.c.h.s8.bf16 %v284
      %v693 = vunpack.c.h.s8.bf16 %v285
      %v694 = vunpack.c.l.s8.bf16 %v286
      %v695 = vunpack.c.l.s8.bf16 %v287
      %v696 = vunpack.c.l.s8.bf16 %v288
      %v697 = vunpack.c.l.s8.bf16 %v289
      %v698 = vunpack.c.l.s8.bf16 %v290
      %v699 = vunpack.c.l.s8.bf16 %v291
      %v700 = vunpack.c.h.s8.bf16 %v286
      %v701 = vunpack.c.h.s8.bf16 %v287
      %v702 = vunpack.c.h.s8.bf16 %v288
      %v703 = vunpack.c.h.s8.bf16 %v289
      %v704 = vunpack.c.h.s8.bf16 %v290
      %v705 = vunpack.c.h.s8.bf16 %v291
      %v706 = vunpack.c.l.s8.bf16 %v292
      %v707 = vunpack.c.l.s8.bf16 %v293
      %v708 = vunpack.c.l.s8.bf16 %v294
      %v709 = vunpack.c.l.s8.bf16 %v295
      %v710 = vunpack.c.l.s8.bf16 %v296
      %v711 = vunpack.c.l.s8.bf16 %v297
      %v712 = vunpack.c.h.s8.bf16 %v292
      %v713 = vunpack.c.h.s8.bf16 %v293
      %v714 = vunpack.c.h.s8.bf16 %v294
      %v715 = vunpack.c.h.s8.bf16 %v295
      %v716 = vunpack.c.h.s8.bf16 %v296
      %v717 = vunpack.c.h.s8.bf16 %v297
      %v718 = vunpack.c.l.s8.bf16 %v298
      %v719 = vunpack.c.l.s8.bf16 %v299
      %v720 = vunpack.c.l.s8.bf16 %v300
      %v721 = vunpack.c.l.s8.bf16 %v301
      %v722 = vunpack.c.l.s8.bf16 %v302
      %v723 = vunpack.c.l.s8.bf16 %v303
      %v724 = vunpack.c.h.s8.bf16 %v298
      %v725 = vunpack.c.h.s8.bf16 %v299
      %v726 = vunpack.c.h.s8.bf16 %v300
      %v727 = vunpack.c.h.s8.bf16 %v301
      %v728 = vunpack.c.h.s8.bf16 %v302
      %v729 = vunpack.c.h.s8.bf16 %v303
      %v730 = vunpack.c.l.s8.bf16 %v304
      %v731 = vunpack.c.l.s8.bf16 %v305
      %v732 = vunpack.c.l.s8.bf16 %v306
      %v733 = vunpack.c.l.s8.bf16 %v307
      %v734 = vunpack.c.l.s8.bf16 %v308
      %v735 = vunpack.c.l.s8.bf16 %v309
      %v736 = vunpack.c.h.s8.bf16 %v304
      %v737 = vunpack.c.h.s8.bf16 %v305
      %v738 = vunpack.c.h.s8.bf16 %v306
      %v739 = vunpack.c.h.s8.bf16 %v307
      %v740 = vunpack.c.h.s8.bf16 %v308
      %v741 = vunpack.c.h.s8.bf16 %v309
      %v742 = vunpack.c.l.s8.bf16 %v310
      %v743 = vunpack.c.l.s8.bf16 %v311
      %v744 = vunpack.c.l.s8.bf16 %v312
      %v745 = vunpack.c.l.s8.bf16 %v313
      %v746 = vunpack.c.l.s8.bf16 %v314
      %v747 = vunpack.c.l.s8.bf16 %v315
      %v748 = vunpack.c.h.s8.bf16 %v310
      %v749 = vunpack.c.h.s8.bf16 %v311
      %v750 = vunpack.c.h.s8.bf16 %v312
      %v751 = vunpack.c.h.s8.bf16 %v313
      %v752 = vunpack.c.h.s8.bf16 %v314
      %v753 = vunpack.c.h.s8.bf16 %v315
      %v754 = vunpack.c.l.s8.bf16 %v316
      %v755 = vunpack.c.l.s8.bf16 %v317
      %v756 = vunpack.c.l.s8.bf16 %v318
      %v757 = vunpack.c.l.s8.bf16 %v319
      %v758 = vunpack.c.l.s8.bf16 %v320
      %v759 = vunpack.c.l.s8.bf16 %v321
      %v760 = vunpack.c.h.s8.bf16 %v316
      %v761 = vunpack.c.h.s8.bf16 %v317
      %v762 = vunpack.c.h.s8.bf16 %v318
      %v763 = vunpack.c.h.s8.bf16 %v319
      %v764 = vunpack.c.h.s8.bf16 %v320
      %v765 = vunpack.c.h.s8.bf16 %v321
      %v766 = vunpack.c.l.s8.bf16 %v322
      %v767 = vunpack.c.l.s8.bf16 %v323
      %v768 = vunpack.c.l.s8.bf16 %v324
      %v769 = vunpack.c.l.s8.bf16 %v325
      %v770 = vunpack.c.l.s8.bf16 %v326
      %v771 = vunpack.c.l.s8.bf16 %v327
      %v772 = vunpack.c.h.s8.bf16 %v322
      %v773 = vunpack.c.h.s8.bf16 %v323
      %v774 = vunpack.c.h.s8.bf16 %v324
      %v775 = vunpack.c.h.s8.bf16 %v325
      %v776 = vunpack.c.h.s8.bf16 %v326
      %v777 = vunpack.c.h.s8.bf16 %v327
      %v778 = vunpack.c.l.s8.bf16 %v328
      %v779 = vunpack.c.l.s8.bf16 %v329
      %v780 = vunpack.c.l.s8.bf16 %v330
      %v781 = vunpack.c.l.s8.bf16 %v331
      %v782 = vunpack.c.l.s8.bf16 %v332
      %v783 = vunpack.c.l.s8.bf16 %v333
      %v784 = vunpack.c.h.s8.bf16 %v328
      %v785 = vunpack.c.h.s8.bf16 %v329
      %v786 = vunpack.c.h.s8.bf16 %v330
      %v787 = vunpack.c.h.s8.bf16 %v331
      %v788 = vunpack.c.h.s8.bf16 %v332
      %v789 = vunpack.c.h.s8.bf16 %v333
      %v790 = vunpack.c.l.s8.bf16 %v334
      %v791 = vunpack.c.l.s8.bf16 %v335
      %v792 = vunpack.c.l.s8.bf16 %v336
      %v793 = vunpack.c.l.s8.bf16 %v337
      %v794 = vunpack.c.l.s8.bf16 %v338
      %v795 = vunpack.c.l.s8.bf16 %v339
      %v796 = vunpack.c.h.s8.bf16 %v334
      %v797 = vunpack.c.h.s8.bf16 %v335
      %v798 = vunpack.c.h.s8.bf16 %v336
      %v799 = vunpack.c.h.s8.bf16 %v337
      %v800 = vunpack.c.h.s8.bf16 %v338
      %v801 = vunpack.c.h.s8.bf16 %v339
      %v802 = vunpack.c.l.s8.bf16 %v340
      %v803 = vunpack.c.l.s8.bf16 %v341
      %v804 = vunpack.c.l.s8.bf16 %v342
      %v805 = vunpack.c.l.s8.bf16 %v343
      %v806 = vunpack.c.l.s8.bf16 %v344
      %v807 = vunpack.c.l.s8.bf16 %v345
      %v808 = vunpack.c.h.s8.bf16 %v340
      %v809 = vunpack.c.h.s8.bf16 %v341
      %v810 = vunpack.c.h.s8.bf16 %v342
      %v811 = vunpack.c.h.s8.bf16 %v343
      %v812 = vunpack.c.h.s8.bf16 %v344
      %v813 = vunpack.c.h.s8.bf16 %v345
      %v814 = vunpack.c.l.s8.bf16 %v346
      %v815 = vunpack.c.l.s8.bf16 %v347
      %v816 = vunpack.c.l.s8.bf16 %v348
      %v817 = vunpack.c.l.s8.bf16 %v349
      %v818 = vunpack.c.l.s8.bf16 %v350
      %v819 = vunpack.c.l.s8.bf16 %v351
      %v820 = vunpack.c.h.s8.bf16 %v346
      %v821 = vunpack.c.h.s8.bf16 %v347
      %v822 = vunpack.c.h.s8.bf16 %v348
      %v823 = vunpack.c.h.s8.bf16 %v349
      %v824 = vunpack.c.h.s8.bf16 %v350
      %v825 = vunpack.c.h.s8.bf16 %v351
      %v826 = vunpack.c.l.s8.bf16 %v352
      %v827 = vunpack.c.l.s8.bf16 %v353
      %v828 = vunpack.c.l.s8.bf16 %v354
      %v829 = vunpack.c.l.s8.bf16 %v355
      %v830 = vunpack.c.l.s8.bf16 %v356
      %v831 = vunpack.c.l.s8.bf16 %v357
      %v832 = vunpack.c.h.s8.bf16 %v352
      %v833 = vunpack.c.h.s8.bf16 %v353
      %v834 = vunpack.c.h.s8.bf16 %v354
      %v835 = vunpack.c.h.s8.bf16 %v355
      %v836 = vunpack.c.h.s8.bf16 %v356
      %v837 = vunpack.c.h.s8.bf16 %v357
      %v838 = vunpack.c.l.s8.bf16 %v358
      %v839 = vunpack.c.l.s8.bf16 %v359
      %v840 = vunpack.c.l.s8.bf16 %v360
      %v841 = vunpack.c.l.s8.bf16 %v361
      %v842 = vunpack.c.l.s8.bf16 %v362
      %v843 = vunpack.c.l.s8.bf16 %v363
      %v844 = vunpack.c.h.s8.bf16 %v358
      %v845 = vunpack.c.h.s8.bf16 %v359
      %v846 = vunpack.c.h.s8.bf16 %v360
      %v847 = vunpack.c.h.s8.bf16 %v361
      %v848 = vunpack.c.h.s8.bf16 %v362
      %v849 = vunpack.c.h.s8.bf16 %v363
      %v850 = vunpack.c.l.s8.bf16 %v364
      %v851 = vunpack.c.l.s8.bf16 %v365
      %v852 = vunpack.c.l.s8.bf16 %v366
      %v853 = vunpack.c.l.s8.bf16 %v367
      %v854 = vunpack.c.l.s8.bf16 %v368
      %v855 = vunpack.c.l.s8.bf16 %v369
      %v856 = vunpack.c.h.s8.bf16 %v364
      %v857 = vunpack.c.h.s8.bf16 %v365
      %v858 = vunpack.c.h.s8.bf16 %v366
      %v859 = vunpack.c.h.s8.bf16 %v367
      %v860 = vunpack.c.h.s8.bf16 %v368
      %v861 = vunpack.c.h.s8.bf16 %v369
      %v862 = vunpack.c.l.s8.bf16 %v370
      %v863 = vunpack.c.l.s8.bf16 %v371
      %v864 = vunpack.c.l.s8.bf16 %v372
      %v865 = vunpack.c.l.s8.bf16 %v373
      %v866 = vunpack.c.l.s8.bf16 %v374
      %v867 = vunpack.c.l.s8.bf16 %v375
      %v868 = vunpack.c.h.s8.bf16 %v370
      %v869 = vunpack.c.h.s8.bf16 %v371
      %v870 = vunpack.c.h.s8.bf16 %v372
      %v871 = vunpack.c.h.s8.bf16 %v373
      %v872 = vunpack.c.h.s8.bf16 %v374
      %v873 = vunpack.c.h.s8.bf16 %v375
      %v874 = vunpack.c.l.s8.bf16 %v376
      %v875 = vunpack.c.l.s8.bf16 %v377
      %v876 = vunpack.c.l.s8.bf16 %v378
      %v877 = vunpack.c.l.s8.bf16 %v379
      %v878 = vunpack.c.l.s8.bf16 %v380
      %v879 = vunpack.c.l.s8.bf16 %v381
      %v880 = vunpack.c.h.s8.bf16 %v376
      %v881 = vunpack.c.h.s8.bf16 %v377
      %v882 = vunpack.c.h.s8.bf16 %v378
      %v883 = vunpack.c.h.s8.bf16 %v379
      %v884 = vunpack.c.h.s8.bf16 %v380
      %v885 = vunpack.c.h.s8.bf16 %v381
      %v886 = vunpack.c.l.s8.bf16 %v382
      %v887 = vunpack.c.l.s8.bf16 %v383
      %v888 = vunpack.c.l.s8.bf16 %v384
      %v889 = vunpack.c.l.s8.bf16 %v385
      %v890 = vunpack.c.l.s8.bf16 %v386
      %v891 = vunpack.c.l.s8.bf16 %v387
      %v892 = vunpack.c.h.s8.bf16 %v382
      %v893 = vunpack.c.h.s8.bf16 %v383
      %v894 = vunpack.c.h.s8.bf16 %v384
      %v895 = vunpack.c.h.s8.bf16 %v385
      %v896 = vunpack.c.h.s8.bf16 %v386
      %v897 = vunpack.c.h.s8.bf16 %v387
      %v898 = vunpack.c.l.s8.bf16 %v388
      %v899 = vunpack.c.l.s8.bf16 %v389
      %v900 = vunpack.c.l.s8.bf16 %v390
      %v901 = vunpack.c.l.s8.bf16 %v391
      %v902 = vunpack.c.l.s8.bf16 %v392
      %v903 = vunpack.c.l.s8.bf16 %v393
      %v904 = vunpack.c.h.s8.bf16 %v388
      %v905 = vunpack.c.h.s8.bf16 %v389
      %v906 = vunpack.c.h.s8.bf16 %v390
      %v907 = vunpack.c.h.s8.bf16 %v391
      %v908 = vunpack.c.h.s8.bf16 %v392
      %v909 = vunpack.c.h.s8.bf16 %v393
      %v910 = vunpack.c.l.s8.bf16 %v394
      %v911 = vunpack.c.l.s8.bf16 %v395
      %v912 = vunpack.c.l.s8.bf16 %v396
      %v913 = vunpack.c.l.s8.bf16 %v397
      %v914 = vunpack.c.l.s8.bf16 %v398
      %v915 = vunpack.c.l.s8.bf16 %v399
      %v916 = vunpack.c.h.s8.bf16 %v394
      %v917 = vunpack.c.h.s8.bf16 %v395
      %v918 = vunpack.c.h.s8.bf16 %v396
      %v919 = vunpack.c.h.s8.bf16 %v397
      %v920 = vunpack.c.h.s8.bf16 %v398
      %v921 = vunpack.c.h.s8.bf16 %v399
      %v922 = vunpack.c.l.s8.bf16 %v400
      %v923 = vunpack.c.l.s8.bf16 %v401
      %v924 = vunpack.c.l.s8.bf16 %v402
      %v925 = vunpack.c.l.s8.bf16 %v403
      %v926 = vunpack.c.l.s8.bf16 %v404
      %v927 = vunpack.c.l.s8.bf16 %v405
      %v928 = vunpack.c.h.s8.bf16 %v400
      %v929 = vunpack.c.h.s8.bf16 %v401
      %v930 = vunpack.c.h.s8.bf16 %v402
      %v931 = vunpack.c.h.s8.bf16 %v403
      %v932 = vunpack.c.h.s8.bf16 %v404
      %v933 = vunpack.c.h.s8.bf16 %v405
      %v934 = vunpack.c.l.s8.bf16 %v406
      %v935 = vunpack.c.l.s8.bf16 %v407
      %v936 = vunpack.c.l.s8.bf16 %v408
      %v937 = vunpack.c.l.s8.bf16 %v409
      %v938 = vunpack.c.l.s8.bf16 %v410
      %v939 = vunpack.c.l.s8.bf16 %v411
      %v940 = vunpack.c.h.s8.bf16 %v406
      %v941 = vunpack.c.h.s8.bf16 %v407
      %v942 = vunpack.c.h.s8.bf16 %v408
      %v943 = vunpack.c.h.s8.bf16 %v409
      %v944 = vunpack.c.h.s8.bf16 %v410
      %v945 = vunpack.c.h.s8.bf16 %v411
      %v946 = vunpack.c.l.s8.bf16 %v412
      %v947 = vunpack.c.l.s8.bf16 %v413
      %v948 = vunpack.c.l.s8.bf16 %v414
      %v949 = vunpack.c.l.s8.bf16 %v415
      %v950 = vunpack.c.l.s8.bf16 %v416
      %v951 = vunpack.c.l.s8.bf16 %v417
      %v952 = vunpack.c.h.s8.bf16 %v412
      %v953 = vunpack.c.h.s8.bf16 %v413
      %v954 = vunpack.c.h.s8.bf16 %v414
      %v955 = vunpack.c.h.s8.bf16 %v415
      %v956 = vunpack.c.h.s8.bf16 %v416
      %v957 = vunpack.c.h.s8.bf16 %v417
      %v958 = vunpack.c.l.s8.bf16 %v418
      %v959 = vunpack.c.l.s8.bf16 %v419
      %v960 = vunpack.c.l.s8.bf16 %v420
      %v961 = vunpack.c.l.s8.bf16 %v421
      %v962 = vunpack.c.l.s8.bf16 %v422
      %v963 = vunpack.c.l.s8.bf16 %v423
      %v964 = vunpack.c.h.s8.bf16 %v418
      %v965 = vunpack.c.h.s8.bf16 %v419
      %v966 = vunpack.c.h.s8.bf16 %v420
      %v967 = vunpack.c.h.s8.bf16 %v421
      %v968 = vunpack.c.h.s8.bf16 %v422
      %v969 = vunpack.c.h.s8.bf16 %v423
      %v970 = vunpack.c.l.s8.bf16 %v424
      %v971 = vunpack.c.l.s8.bf16 %v425
      %v972 = vunpack.c.l.s8.bf16 %v426
      %v973 = vunpack.c.l.s8.bf16 %v427
      %v974 = vunpack.c.l.s8.bf16 %v428
      %v975 = vunpack.c.l.s8.bf16 %v429
      %v976 = vunpack.c.h.s8.bf16 %v424
      %v977 = vunpack.c.h.s8.bf16 %v425
      %v978 = vunpack.c.h.s8.bf16 %v426
      %v979 = vunpack.c.h.s8.bf16 %v427
      %v980 = vunpack.c.h.s8.bf16 %v428
      %v981 = vunpack.c.h.s8.bf16 %v429
      %v982 = vunpack.c.l.s8.bf16 %v430
      %v983 = vunpack.c.l.s8.bf16 %v431
      %v984 = vunpack.c.l.s8.bf16 %v432
      %v985 = vunpack.c.l.s8.bf16 %v433
      %v986 = vunpack.c.l.s8.bf16 %v434
      %v987 = vunpack.c.l.s8.bf16 %v435
      %v988 = vunpack.c.h.s8.bf16 %v430
      %v989 = vunpack.c.h.s8.bf16 %v431
      %v990 = vunpack.c.h.s8.bf16 %v432
      %v991 = vunpack.c.h.s8.bf16 %v433
      %v992 = vunpack.c.h.s8.bf16 %v434
      %v993 = vunpack.c.h.s8.bf16 %v435
      %v994 = vunpack.c.l.s8.bf16 %v436
      %v995 = vunpack.c.l.s8.bf16 %v437
      %v996 = vunpack.c.l.s8.bf16 %v438
      %v997 = vunpack.c.l.s8.bf16 %v439
      %v998 = vunpack.c.l.s8.bf16 %v440
      %v999 = vunpack.c.l.s8.bf16 %v441
      %v1000 = vunpack.c.h.s8.bf16 %v436
      %v1001 = vunpack.c.h.s8.bf16 %v437
      %v1002 = vunpack.c.h.s8.bf16 %v438
      %v1003 = vunpack.c.h.s8.bf16 %v439
      %v1004 = vunpack.c.h.s8.bf16 %v440
      %v1005 = vunpack.c.h.s8.bf16 %v441
      %v1006 = vunpack.c.l.s8.bf16 %v442
      %v1007 = vunpack.c.l.s8.bf16 %v443
      %v1008 = vunpack.c.l.s8.bf16 %v444
      %v1009 = vunpack.c.l.s8.bf16 %v445
      %v1010 = vunpack.c.l.s8.bf16 %v446
      %v1011 = vunpack.c.l.s8.bf16 %v447
      %v1012 = vunpack.c.h.s8.bf16 %v442
      %v1013 = vunpack.c.h.s8.bf16 %v443
      %v1014 = vunpack.c.h.s8.bf16 %v444
      %v1015 = vunpack.c.h.s8.bf16 %v445
      %v1016 = vunpack.c.h.s8.bf16 %v446
      %v1017 = vunpack.c.h.s8.bf16 %v447
      %v1018 = vunpack.c.l.s8.bf16 %v448
      %v1019 = vunpack.c.l.s8.bf16 %v449
      %v1020 = vunpack.c.l.s8.bf16 %v450
      %v1021 = vunpack.c.l.s8.bf16 %v451
      %v1022 = vunpack.c.l.s8.bf16 %v452
      %v1023 = vunpack.c.l.s8.bf16 %v453
      %v1024 = vunpack.c.h.s8.bf16 %v448
      %v1025 = vunpack.c.h.s8.bf16 %v449
      %v1026 = vunpack.c.h.s8.bf16 %v450
      %v1027 = vunpack.c.h.s8.bf16 %v451
      %v1028 = vunpack.c.h.s8.bf16 %v452
      %v1029 = vunpack.c.h.s8.bf16 %v453
      %1030 = vst [vmem:[#allocation2] sm:$0xff] %v454
      %1031 = vst [vmem:[#allocation2 + $0x8] sm:$0xff] %v455
      %1032 = vst [vmem:[#allocation2 + $0x10] sm:$0xff] %v456
      %1033 = vst [vmem:[#allocation2 + $0x18] sm:$0xff] %v457
      %1034 = vst [vmem:[#allocation2 + $0x20] sm:$0xff] %v458
      %1035 = vst [vmem:[#allocation2 + $0x28] sm:$0xff] %v459
      %1036 = vst [vmem:[#allocation2 + $0x30] sm:$0xff] %v460
      %1037 = vst [vmem:[#allocation2 + $0x38] sm:$0xff] %v461
      %1038 = vst [vmem:[#allocation2 + $0x40] sm:$0xff] %v462
      %1039 = vst [vmem:[#allocation2 + $0x48] sm:$0xff] %v463
      %1040 = vst [vmem:[#allocation2 + $0x50] sm:$0xff] %v464
      %1041 = vst [vmem:[#allocation2 + $0x58] sm:$0xff] %v465
      %1042 = vst [vmem:[#allocation2 + $0x60] sm:$0xff] %v466
      %1043 = vst [vmem:[#allocation2 + $0x68] sm:$0xff] %v467
      %1044 = vst [vmem:[#allocation2 + $0x70] sm:$0xff] %v468
      %1045 = vst [vmem:[#allocation2 + $0x78] sm:$0xff] %v469
      %1046 = vst [vmem:[#allocation2 + $0x80] sm:$0xff] %v470
      %1047 = vst [vmem:[#allocation2 + $0x88] sm:$0xff] %v471
      %1048 = vst [vmem:[#allocation2 + $0x90] sm:$0xff] %v472
      %1049 = vst [vmem:[#allocation2 + $0x98] sm:$0xff] %v473
      %1050 = vst [vmem:[#allocation2 + $0xa0] sm:$0xff] %v474
      %1051 = vst [vmem:[#allocation2 + $0xa8] sm:$0xff] %v475
      %1052 = vst [vmem:[#allocation2 + $0xb0] sm:$0xff] %v476
      %1053 = vst [vmem:[#allocation2 + $0xb8] sm:$0xff] %v477
      %1054 = vst [vmem:[#allocation2 + $0xc0] sm:$0xff] %v478
      %1055 = vst [vmem:[#allocation2 + $0xc8] sm:$0xff] %v479
      %1056 = vst [vmem:[#allocation2 + $0xd0] sm:$0xff] %v480
      %1057 = vst [vmem:[#allocation2 + $0xd8] sm:$0xff] %v481
      %1058 = vst [vmem:[#allocation2 + $0xe0] sm:$0xff] %v482
      %1059 = vst [vmem:[#allocation2 + $0xe8] sm:$0xff] %v483
      %1060 = vst [vmem:[#allocation2 + $0xf0] sm:$0xff] %v484
      %1061 = vst [vmem:[#allocation2 + $0xf8] sm:$0xff] %v485
      %1062 = vst [vmem:[#allocation2 + $0x100] sm:$0xff] %v486
      %1063 = vst [vmem:[#allocation2 + $0x108] sm:$0xff] %v487
      %1064 = vst [vmem:[#allocation2 + $0x110] sm:$0xff] %v488
      %1065 = vst [vmem:[#allocation2 + $0x118] sm:$0xff] %v489
      %1066 = vst [vmem:[#allocation2 + $0x120] sm:$0xff] %v490
      %1067 = vst [vmem:[#allocation2 + $0x128] sm:$0xff] %v491
      %1068 = vst [vmem:[#allocation2 + $0x130] sm:$0xff] %v492
      %1069 = vst [vmem:[#allocation2 + $0x138] sm:$0xff] %v493
      %1070 = vst [vmem:[#allocation2 + $0x140] sm:$0xff] %v494
      %1071 = vst [vmem:[#allocation2 + $0x148] sm:$0xff] %v495
      %1072 = vst [vmem:[#allocation2 + $0x150] sm:$0xff] %v496
      %1073 = vst [vmem:[#allocation2 + $0x158] sm:$0xff] %v497
      %1074 = vst [vmem:[#allocation2 + $0x160] sm:$0xff] %v498
      %1075 = vst [vmem:[#allocation2 + $0x168] sm:$0xff] %v499
      %1076 = vst [vmem:[#allocation2 + $0x170] sm:$0xff] %v500
      %1077 = vst [vmem:[#allocation2 + $0x178] sm:$0xff] %v501
      %1078 = vst [vmem:[#allocation2 + $0x180] sm:$0xff] %v502
      %1079 = vst [vmem:[#allocation2 + $0x188] sm:$0xff] %v503
      %1080 = vst [vmem:[#allocation2 + $0x190] sm:$0xff] %v504
      %1081 = vst [vmem:[#allocation2 + $0x198] sm:$0xff] %v505
      %1082 = vst [vmem:[#allocation2 + $0x1a0] sm:$0xff] %v506
      %1083 = vst [vmem:[#allocation2 + $0x1a8] sm:$0xff] %v507
      %1084 = vst [vmem:[#allocation2 + $0x1b0] sm:$0xff] %v508
      %1085 = vst [vmem:[#allocation2 + $0x1b8] sm:$0xff] %v509
      %1086 = vst [vmem:[#allocation2 + $0x1c0] sm:$0xff] %v510
      %1087 = vst [vmem:[#allocation2 + $0x1c8] sm:$0xff] %v511
      %1088 = vst [vmem:[#allocation2 + $0x1d0] sm:$0xff] %v512
      %1089 = vst [vmem:[#allocation2 + $0x1d8] sm:$0xff] %v513
      %1090 = vst [vmem:[#allocation2 + $0x1e0] sm:$0xff] %v514
      %1091 = vst [vmem:[#allocation2 + $0x1e8] sm:$0xff] %v515
      %1092 = vst [vmem:[#allocation2 + $0x1f0] sm:$0xff] %v516
      %1093 = vst [vmem:[#allocation2 + $0x1f8] sm:$0xff] %v517
      %1094 = vst [vmem:[#allocation2 + $0x200] sm:$0xff] %v518
      %1095 = vst [vmem:[#allocation2 + $0x208] sm:$0xff] %v519
      %1096 = vst [vmem:[#allocation2 + $0x210] sm:$0xff] %v520
      %1097 = vst [vmem:[#allocation2 + $0x218] sm:$0xff] %v521
      %1098 = vst [vmem:[#allocation2 + $0x220] sm:$0xff] %v522
      %1099 = vst [vmem:[#allocation2 + $0x228] sm:$0xff] %v523
      %1100 = vst [vmem:[#allocation2 + $0x230] sm:$0xff] %v524
      %1101 = vst [vmem:[#allocation2 + $0x238] sm:$0xff] %v525
      %1102 = vst [vmem:[#allocation2 + $0x240] sm:$0xff] %v526
      %1103 = vst [vmem:[#allocation2 + $0x248] sm:$0xff] %v527
      %1104 = vst [vmem:[#allocation2 + $0x250] sm:$0xff] %v528
      %1105 = vst [vmem:[#allocation2 + $0x258] sm:$0xff] %v529
      %1106 = vst [vmem:[#allocation2 + $0x260] sm:$0xff] %v530
      %1107 = vst [vmem:[#allocation2 + $0x268] sm:$0xff] %v531
      %1108 = vst [vmem:[#allocation2 + $0x270] sm:$0xff] %v532
      %1109 = vst [vmem:[#allocation2 + $0x278] sm:$0xff] %v533
      %1110 = vst [vmem:[#allocation2 + $0x280] sm:$0xff] %v534
      %1111 = vst [vmem:[#allocation2 + $0x288] sm:$0xff] %v535
      %1112 = vst [vmem:[#allocation2 + $0x290] sm:$0xff] %v536
      %1113 = vst [vmem:[#allocation2 + $0x298] sm:$0xff] %v537
      %1114 = vst [vmem:[#allocation2 + $0x2a0] sm:$0xff] %v538
      %1115 = vst [vmem:[#allocation2 + $0x2a8] sm:$0xff] %v539
      %1116 = vst [vmem:[#allocation2 + $0x2b0] sm:$0xff] %v540
      %1117 = vst [vmem:[#allocation2 + $0x2b8] sm:$0xff] %v541
      %1118 = vst [vmem:[#allocation2 + $0x2c0] sm:$0xff] %v542
      %1119 = vst [vmem:[#allocation2 + $0x2c8] sm:$0xff] %v543
      %1120 = vst [vmem:[#allocation2 + $0x2d0] sm:$0xff] %v544
      %1121 = vst [vmem:[#allocation2 + $0x2d8] sm:$0xff] %v545
      %1122 = vst [vmem:[#allocation2 + $0x2e0] sm:$0xff] %v546
      %1123 = vst [vmem:[#allocation2 + $0x2e8] sm:$0xff] %v547
      %1124 = vst [vmem:[#allocation2 + $0x2f0] sm:$0xff] %v548
      %1125 = vst [vmem:[#allocation2 + $0x2f8] sm:$0xff] %v549
      %1126 = vst [vmem:[#allocation2 + $0x300] sm:$0xff] %v550
      %1127 = vst [vmem:[#allocation2 + $0x308] sm:$0xff] %v551
      %1128 = vst [vmem:[#allocation2 + $0x310] sm:$0xff] %v552
      %1129 = vst [vmem:[#allocation2 + $0x318] sm:$0xff] %v553
      %1130 = vst [vmem:[#allocation2 + $0x320] sm:$0xff] %v554
      %1131 = vst [vmem:[#allocation2 + $0x328] sm:$0xff] %v555
      %1132 = vst [vmem:[#allocation2 + $0x330] sm:$0xff] %v556
      %1133 = vst [vmem:[#allocation2 + $0x338] sm:$0xff] %v557
      %1134 = vst [vmem:[#allocation2 + $0x340] sm:$0xff] %v558
      %1135 = vst [vmem:[#allocation2 + $0x348] sm:$0xff] %v559
      %1136 = vst [vmem:[#allocation2 + $0x350] sm:$0xff] %v560
      %1137 = vst [vmem:[#allocation2 + $0x358] sm:$0xff] %v561
      %1138 = vst [vmem:[#allocation2 + $0x360] sm:$0xff] %v562
      %1139 = vst [vmem:[#allocation2 + $0x368] sm:$0xff] %v563
      %1140 = vst [vmem:[#allocation2 + $0x370] sm:$0xff] %v564
      %1141 = vst [vmem:[#allocation2 + $0x378] sm:$0xff] %v565
      %1142 = vst [vmem:[#allocation2 + $0x380] sm:$0xff] %v566
      %1143 = vst [vmem:[#allocation2 + $0x388] sm:$0xff] %v567
      %1144 = vst [vmem:[#allocation2 + $0x390] sm:$0xff] %v568
      %1145 = vst [vmem:[#allocation2 + $0x398] sm:$0xff] %v569
      %1146 = vst [vmem:[#allocation2 + $0x3a0] sm:$0xff] %v570
      %1147 = vst [vmem:[#allocation2 + $0x3a8] sm:$0xff] %v571
      %1148 = vst [vmem:[#allocation2 + $0x3b0] sm:$0xff] %v572
      %1149 = vst [vmem:[#allocation2 + $0x3b8] sm:$0xff] %v573
      %1150 = vst [vmem:[#allocation2 + $0x3c0] sm:$0xff] %v574
      %1151 = vst [vmem:[#allocation2 + $0x3c8] sm:$0xff] %v575
      %1152 = vst [vmem:[#allocation2 + $0x3d0] sm:$0xff] %v576
      %1153 = vst [vmem:[#allocation2 + $0x3d8] sm:$0xff] %v577
      %1154 = vst [vmem:[#allocation2 + $0x3e0] sm:$0xff] %v578
      %1155 = vst [vmem:[#allocation2 + $0x3e8] sm:$0xff] %v579
      %1156 = vst [vmem:[#allocation2 + $0x3f0] sm:$0xff] %v580
      %1157 = vst [vmem:[#allocation2 + $0x3f8] sm:$0xff] %v581
      %1158 = vst [vmem:[#allocation2 + $0x400] sm:$0xff] %v582
      %1159 = vst [vmem:[#allocation2 + $0x408] sm:$0xff] %v583
      %1160 = vst [vmem:[#allocation2 + $0x410] sm:$0xff] %v584
      %1161 = vst [vmem:[#allocation2 + $0x418] sm:$0xff] %v585
      %1162 = vst [vmem:[#allocation2 + $0x420] sm:$0xff] %v586
      %1163 = vst [vmem:[#allocation2 + $0x428] sm:$0xff] %v587
      %1164 = vst [vmem:[#allocation2 + $0x430] sm:$0xff] %v588
      %1165 = vst [vmem:[#allocation2 + $0x438] sm:$0xff] %v589
      %1166 = vst [vmem:[#allocation2 + $0x440] sm:$0xff] %v590
      %1167 = vst [vmem:[#allocation2 + $0x448] sm:$0xff] %v591
      %1168 = vst [vmem:[#allocation2 + $0x450] sm:$0xff] %v592
      %1169 = vst [vmem:[#allocation2 + $0x458] sm:$0xff] %v593
      %1170 = vst [vmem:[#allocation2 + $0x460] sm:$0xff] %v594
      %1171 = vst [vmem:[#allocation2 + $0x468] sm:$0xff] %v595
      %1172 = vst [vmem:[#allocation2 + $0x470] sm:$0xff] %v596
      %1173 = vst [vmem:[#allocation2 + $0x478] sm:$0xff] %v597
      %1174 = vst [vmem:[#allocation2 + $0x480] sm:$0xff] %v598
      %1175 = vst [vmem:[#allocation2 + $0x488] sm:$0xff] %v599
      %1176 = vst [vmem:[#allocation2 + $0x490] sm:$0xff] %v600
      %1177 = vst [vmem:[#allocation2 + $0x498] sm:$0xff] %v601
      %1178 = vst [vmem:[#allocation2 + $0x4a0] sm:$0xff] %v602
      %1179 = vst [vmem:[#allocation2 + $0x4a8] sm:$0xff] %v603
      %1180 = vst [vmem:[#allocation2 + $0x4b0] sm:$0xff] %v604
      %1181 = vst [vmem:[#allocation2 + $0x4b8] sm:$0xff] %v605
      %1182 = vst [vmem:[#allocation2 + $0x4c0] sm:$0xff] %v606
      %1183 = vst [vmem:[#allocation2 + $0x4c8] sm:$0xff] %v607
      %1184 = vst [vmem:[#allocation2 + $0x4d0] sm:$0xff] %v608
      %1185 = vst [vmem:[#allocation2 + $0x4d8] sm:$0xff] %v609
      %1186 = vst [vmem:[#allocation2 + $0x4e0] sm:$0xff] %v610
      %1187 = vst [vmem:[#allocation2 + $0x4e8] sm:$0xff] %v611
      %1188 = vst [vmem:[#allocation2 + $0x4f0] sm:$0xff] %v612
      %1189 = vst [vmem:[#allocation2 + $0x4f8] sm:$0xff] %v613
      %1190 = vst [vmem:[#allocation2 + $0x500] sm:$0xff] %v614
      %1191 = vst [vmem:[#allocation2 + $0x508] sm:$0xff] %v615
      %1192 = vst [vmem:[#allocation2 + $0x510] sm:$0xff] %v616
      %1193 = vst [vmem:[#allocation2 + $0x518] sm:$0xff] %v617
      %1194 = vst [vmem:[#allocation2 + $0x520] sm:$0xff] %v618
      %1195 = vst [vmem:[#allocation2 + $0x528] sm:$0xff] %v619
      %1196 = vst [vmem:[#allocation2 + $0x530] sm:$0xff] %v620
      %1197 = vst [vmem:[#allocation2 + $0x538] sm:$0xff] %v621
      %1198 = vst [vmem:[#allocation2 + $0x540] sm:$0xff] %v622
      %1199 = vst [vmem:[#allocation2 + $0x548] sm:$0xff] %v623
      %1200 = vst [vmem:[#allocation2 + $0x550] sm:$0xff] %v624
      %1201 = vst [vmem:[#allocation2 + $0x558] sm:$0xff] %v625
      %1202 = vst [vmem:[#allocation2 + $0x560] sm:$0xff] %v626
      %1203 = vst [vmem:[#allocation2 + $0x568] sm:$0xff] %v627
      %1204 = vst [vmem:[#allocation2 + $0x570] sm:$0xff] %v628
      %1205 = vst [vmem:[#allocation2 + $0x578] sm:$0xff] %v629
      %1206 = vst [vmem:[#allocation2 + $0x580] sm:$0xff] %v630
      %1207 = vst [vmem:[#allocation2 + $0x588] sm:$0xff] %v631
      %1208 = vst [vmem:[#allocation2 + $0x590] sm:$0xff] %v632
      %1209 = vst [vmem:[#allocation2 + $0x598] sm:$0xff] %v633
      %1210 = vst [vmem:[#allocation2 + $0x5a0] sm:$0xff] %v634
      %1211 = vst [vmem:[#allocation2 + $0x5a8] sm:$0xff] %v635
      %1212 = vst [vmem:[#allocation2 + $0x5b0] sm:$0xff] %v636
      %1213 = vst [vmem:[#allocation2 + $0x5b8] sm:$0xff] %v637
      %1214 = vst [vmem:[#allocation2 + $0x5c0] sm:$0xff] %v638
      %1215 = vst [vmem:[#allocation2 + $0x5c8] sm:$0xff] %v639
      %1216 = vst [vmem:[#allocation2 + $0x5d0] sm:$0xff] %v640
      %1217 = vst [vmem:[#allocation2 + $0x5d8] sm:$0xff] %v641
      %1218 = vst [vmem:[#allocation2 + $0x5e0] sm:$0xff] %v642
      %1219 = vst [vmem:[#allocation2 + $0x5e8] sm:$0xff] %v643
      %1220 = vst [vmem:[#allocation2 + $0x5f0] sm:$0xff] %v644
      %1221 = vst [vmem:[#allocation2 + $0x5f8] sm:$0xff] %v645
      %1222 = vst [vmem:[#allocation2 + $0x600] sm:$0xff] %v646
      %1223 = vst [vmem:[#allocation2 + $0x608] sm:$0xff] %v647
      %1224 = vst [vmem:[#allocation2 + $0x610] sm:$0xff] %v648
      %1225 = vst [vmem:[#allocation2 + $0x618] sm:$0xff] %v649
      %1226 = vst [vmem:[#allocation2 + $0x620] sm:$0xff] %v650
      %1227 = vst [vmem:[#allocation2 + $0x628] sm:$0xff] %v651
      %1228 = vst [vmem:[#allocation2 + $0x630] sm:$0xff] %v652
      %1229 = vst [vmem:[#allocation2 + $0x638] sm:$0xff] %v653
      %1230 = vst [vmem:[#allocation2 + $0x640] sm:$0xff] %v654
      %1231 = vst [vmem:[#allocation2 + $0x648] sm:$0xff] %v655
      %1232 = vst [vmem:[#allocation2 + $0x650] sm:$0xff] %v656
      %1233 = vst [vmem:[#allocation2 + $0x658] sm:$0xff] %v657
      %1234 = vst [vmem:[#allocation2 + $0x660] sm:$0xff] %v658
      %1235 = vst [vmem:[#allocation2 + $0x668] sm:$0xff] %v659
      %1236 = vst [vmem:[#allocation2 + $0x670] sm:$0xff] %v660
      %1237 = vst [vmem:[#allocation2 + $0x678] sm:$0xff] %v661
      %1238 = vst [vmem:[#allocation2 + $0x680] sm:$0xff] %v662
      %1239 = vst [vmem:[#allocation2 + $0x688] sm:$0xff] %v663
      %1240 = vst [vmem:[#allocation2 + $0x690] sm:$0xff] %v664
      %1241 = vst [vmem:[#allocation2 + $0x698] sm:$0xff] %v665
      %1242 = vst [vmem:[#allocation2 + $0x6a0] sm:$0xff] %v666
      %1243 = vst [vmem:[#allocation2 + $0x6a8] sm:$0xff] %v667
      %1244 = vst [vmem:[#allocation2 + $0x6b0] sm:$0xff] %v668
      %1245 = vst [vmem:[#allocation2 + $0x6b8] sm:$0xff] %v669
      %1246 = vst [vmem:[#allocation2 + $0x6c0] sm:$0xff] %v670
      %1247 = vst [vmem:[#allocation2 + $0x6c8] sm:$0xff] %v671
      %1248 = vst [vmem:[#allocation2 + $0x6d0] sm:$0xff] %v672
      %1249 = vst [vmem:[#allocation2 + $0x6d8] sm:$0xff] %v673
      %1250 = vst [vmem:[#allocation2 + $0x6e0] sm:$0xff] %v674
      %1251 = vst [vmem:[#allocation2 + $0x6e8] sm:$0xff] %v675
      %1252 = vst [vmem:[#allocation2 + $0x6f0] sm:$0xff] %v676
      %1253 = vst [vmem:[#allocation2 + $0x6f8] sm:$0xff] %v677
      %1254 = vst [vmem:[#allocation2 + $0x700] sm:$0xff] %v678
      %1255 = vst [vmem:[#allocation2 + $0x708] sm:$0xff] %v679
      %1256 = vst [vmem:[#allocation2 + $0x710] sm:$0xff] %v680
      %1257 = vst [vmem:[#allocation2 + $0x718] sm:$0xff] %v681
      %1258 = vst [vmem:[#allocation2 + $0x720] sm:$0xff] %v682
      %1259 = vst [vmem:[#allocation2 + $0x728] sm:$0xff] %v683
      %1260 = vst [vmem:[#allocation2 + $0x730] sm:$0xff] %v684
      %1261 = vst [vmem:[#allocation2 + $0x738] sm:$0xff] %v685
      %1262 = vst [vmem:[#allocation2 + $0x740] sm:$0xff] %v686
      %1263 = vst [vmem:[#allocation2 + $0x748] sm:$0xff] %v687
      %1264 = vst [vmem:[#allocation2 + $0x750] sm:$0xff] %v688
      %1265 = vst [vmem:[#allocation2 + $0x758] sm:$0xff] %v689
      %1266 = vst [vmem:[#allocation2 + $0x760] sm:$0xff] %v690
      %1267 = vst [vmem:[#allocation2 + $0x768] sm:$0xff] %v691
      %1268 = vst [vmem:[#allocation2 + $0x770] sm:$0xff] %v692
      %1269 = vst [vmem:[#allocation2 + $0x778] sm:$0xff] %v693
      %1270 = vst [vmem:[#allocation2 + $0x780] sm:$0xff] %v694
      %1271 = vst [vmem:[#allocation2 + $0x788] sm:$0xff] %v695
      %1272 = vst [vmem:[#allocation2 + $0x790] sm:$0xff] %v696
      %1273 = vst [vmem:[#allocation2 + $0x798] sm:$0xff] %v697
      %1274 = vst [vmem:[#allocation2 + $0x7a0] sm:$0xff] %v698
      %1275 = vst [vmem:[#allocation2 + $0x7a8] sm:$0xff] %v699
      %1276 = vst [vmem:[#allocation2 + $0x7b0] sm:$0xff] %v700
      %1277 = vst [vmem:[#allocation2 + $0x7b8] sm:$0xff] %v701
      %1278 = vst [vmem:[#allocation2 + $0x7c0] sm:$0xff] %v702
      %1279 = vst [vmem:[#allocation2 + $0x7c8] sm:$0xff] %v703
      %1280 = vst [vmem:[#allocation2 + $0x7d0] sm:$0xff] %v704
      %1281 = vst [vmem:[#allocation2 + $0x7d8] sm:$0xff] %v705
      %1282 = vst [vmem:[#allocation2 + $0x7e0] sm:$0xff] %v706
      %1283 = vst [vmem:[#allocation2 + $0x7e8] sm:$0xff] %v707
      %1284 = vst [vmem:[#allocation2 + $0x7f0] sm:$0xff] %v708
      %1285 = vst [vmem:[#allocation2 + $0x7f8] sm:$0xff] %v709
      %1286 = vst [vmem:[#allocation2 + $0x800] sm:$0xff] %v710
      %1287 = vst [vmem:[#allocation2 + $0x808] sm:$0xff] %v711
      %1288 = vst [vmem:[#allocation2 + $0x810] sm:$0xff] %v712
      %1289 = vst [vmem:[#allocation2 + $0x818] sm:$0xff] %v713
      %1290 = vst [vmem:[#allocation2 + $0x820] sm:$0xff] %v714
      %1291 = vst [vmem:[#allocation2 + $0x828] sm:$0xff] %v715
      %1292 = vst [vmem:[#allocation2 + $0x830] sm:$0xff] %v716
      %1293 = vst [vmem:[#allocation2 + $0x838] sm:$0xff] %v717
      %1294 = vst [vmem:[#allocation2 + $0x840] sm:$0xff] %v718
      %1295 = vst [vmem:[#allocation2 + $0x848] sm:$0xff] %v719
      %1296 = vst [vmem:[#allocation2 + $0x850] sm:$0xff] %v720
      %1297 = vst [vmem:[#allocation2 + $0x858] sm:$0xff] %v721
      %1298 = vst [vmem:[#allocation2 + $0x860] sm:$0xff] %v722
      %1299 = vst [vmem:[#allocation2 + $0x868] sm:$0xff] %v723
      %1300 = vst [vmem:[#allocation2 + $0x870] sm:$0xff] %v724
      %1301 = vst [vmem:[#allocation2 + $0x878] sm:$0xff] %v725
      %1302 = vst [vmem:[#allocation2 + $0x880] sm:$0xff] %v726
      %1303 = vst [vmem:[#allocation2 + $0x888] sm:$0xff] %v727
      %1304 = vst [vmem:[#allocation2 + $0x890] sm:$0xff] %v728
      %1305 = vst [vmem:[#allocation2 + $0x898] sm:$0xff] %v729
      %1306 = vst [vmem:[#allocation2 + $0x8a0] sm:$0xff] %v730
      %1307 = vst [vmem:[#allocation2 + $0x8a8] sm:$0xff] %v731
      %1308 = vst [vmem:[#allocation2 + $0x8b0] sm:$0xff] %v732
      %1309 = vst [vmem:[#allocation2 + $0x8b8] sm:$0xff] %v733
      %1310 = vst [vmem:[#allocation2 + $0x8c0] sm:$0xff] %v734
      %1311 = vst [vmem:[#allocation2 + $0x8c8] sm:$0xff] %v735
      %1312 = vst [vmem:[#allocation2 + $0x8d0] sm:$0xff] %v736
      %1313 = vst [vmem:[#allocation2 + $0x8d8] sm:$0xff] %v737
      %1314 = vst [vmem:[#allocation2 + $0x8e0] sm:$0xff] %v738
      %1315 = vst [vmem:[#allocation2 + $0x8e8] sm:$0xff] %v739
      %1316 = vst [vmem:[#allocation2 + $0x8f0] sm:$0xff] %v740
      %1317 = vst [vmem:[#allocation2 + $0x8f8] sm:$0xff] %v741
      %1318 = vst [vmem:[#allocation2 + $0x900] sm:$0xff] %v742
      %1319 = vst [vmem:[#allocation2 + $0x908] sm:$0xff] %v743
      %1320 = vst [vmem:[#allocation2 + $0x910] sm:$0xff] %v744
      %1321 = vst [vmem:[#allocation2 + $0x918] sm:$0xff] %v745
      %1322 = vst [vmem:[#allocation2 + $0x920] sm:$0xff] %v746
      %1323 = vst [vmem:[#allocation2 + $0x928] sm:$0xff] %v747
      %1324 = vst [vmem:[#allocation2 + $0x930] sm:$0xff] %v748
      %1325 = vst [vmem:[#allocation2 + $0x938] sm:$0xff] %v749
      %1326 = vst [vmem:[#allocation2 + $0x940] sm:$0xff] %v750
      %1327 = vst [vmem:[#allocation2 + $0x948] sm:$0xff] %v751
      %1328 = vst [vmem:[#allocation2 + $0x950] sm:$0xff] %v752
      %1329 = vst [vmem:[#allocation2 + $0x958] sm:$0xff] %v753
      %1330 = vst [vmem:[#allocation2 + $0x960] sm:$0xff] %v754
      %1331 = vst [vmem:[#allocation2 + $0x968] sm:$0xff] %v755
      %1332 = vst [vmem:[#allocation2 + $0x970] sm:$0xff] %v756
      %1333 = vst [vmem:[#allocation2 + $0x978] sm:$0xff] %v757
      %1334 = vst [vmem:[#allocation2 + $0x980] sm:$0xff] %v758
      %1335 = vst [vmem:[#allocation2 + $0x988] sm:$0xff] %v759
      %1336 = vst [vmem:[#allocation2 + $0x990] sm:$0xff] %v760
      %1337 = vst [vmem:[#allocation2 + $0x998] sm:$0xff] %v761
      %1338 = vst [vmem:[#allocation2 + $0x9a0] sm:$0xff] %v762
      %1339 = vst [vmem:[#allocation2 + $0x9a8] sm:$0xff] %v763
      %1340 = vst [vmem:[#allocation2 + $0x9b0] sm:$0xff] %v764
      %1341 = vst [vmem:[#allocation2 + $0x9b8] sm:$0xff] %v765
      %1342 = vst [vmem:[#allocation2 + $0x9c0] sm:$0xff] %v766
      %1343 = vst [vmem:[#allocation2 + $0x9c8] sm:$0xff] %v767
      %1344 = vst [vmem:[#allocation2 + $0x9d0] sm:$0xff] %v768
      %1345 = vst [vmem:[#allocation2 + $0x9d8] sm:$0xff] %v769
      %1346 = vst [vmem:[#allocation2 + $0x9e0] sm:$0xff] %v770
      %1347 = vst [vmem:[#allocation2 + $0x9e8] sm:$0xff] %v771
      %1348 = vst [vmem:[#allocation2 + $0x9f0] sm:$0xff] %v772
      %1349 = vst [vmem:[#allocation2 + $0x9f8] sm:$0xff] %v773
      %1350 = vst [vmem:[#allocation2 + $0xa00] sm:$0xff] %v774
      %1351 = vst [vmem:[#allocation2 + $0xa08] sm:$0xff] %v775
      %1352 = vst [vmem:[#allocation2 + $0xa10] sm:$0xff] %v776
      %1353 = vst [vmem:[#allocation2 + $0xa18] sm:$0xff] %v777
      %1354 = vst [vmem:[#allocation2 + $0xa20] sm:$0xff] %v778
      %1355 = vst [vmem:[#allocation2 + $0xa28] sm:$0xff] %v779
      %1356 = vst [vmem:[#allocation2 + $0xa30] sm:$0xff] %v780
      %1357 = vst [vmem:[#allocation2 + $0xa38] sm:$0xff] %v781
      %1358 = vst [vmem:[#allocation2 + $0xa40] sm:$0xff] %v782
      %1359 = vst [vmem:[#allocation2 + $0xa48] sm:$0xff] %v783
      %1360 = vst [vmem:[#allocation2 + $0xa50] sm:$0xff] %v784
      %1361 = vst [vmem:[#allocation2 + $0xa58] sm:$0xff] %v785
      %1362 = vst [vmem:[#allocation2 + $0xa60] sm:$0xff] %v786
      %1363 = vst [vmem:[#allocation2 + $0xa68] sm:$0xff] %v787
      %1364 = vst [vmem:[#allocation2 + $0xa70] sm:$0xff] %v788
      %1365 = vst [vmem:[#allocation2 + $0xa78] sm:$0xff] %v789
      %1366 = vst [vmem:[#allocation2 + $0xa80] sm:$0xff] %v790
      %1367 = vst [vmem:[#allocation2 + $0xa88] sm:$0xff] %v791
      %1368 = vst [vmem:[#allocation2 + $0xa90] sm:$0xff] %v792
      %1369 = vst [vmem:[#allocation2 + $0xa98] sm:$0xff] %v793
      %1370 = vst [vmem:[#allocation2 + $0xaa0] sm:$0xff] %v794
      %1371 = vst [vmem:[#allocation2 + $0xaa8] sm:$0xff] %v795
      %1372 = vst [vmem:[#allocation2 + $0xab0] sm:$0xff] %v796
      %1373 = vst [vmem:[#allocation2 + $0xab8] sm:$0xff] %v797
      %1374 = vst [vmem:[#allocation2 + $0xac0] sm:$0xff] %v798
      %1375 = vst [vmem:[#allocation2 + $0xac8] sm:$0xff] %v799
      %1376 = vst [vmem:[#allocation2 + $0xad0] sm:$0xff] %v800
      %1377 = vst [vmem:[#allocation2 + $0xad8] sm:$0xff] %v801
      %1378 = vst [vmem:[#allocation2 + $0xae0] sm:$0xff] %v802
      %1379 = vst [vmem:[#allocation2 + $0xae8] sm:$0xff] %v803
      %1380 = vst [vmem:[#allocation2 + $0xaf0] sm:$0xff] %v804
      %1381 = vst [vmem:[#allocation2 + $0xaf8] sm:$0xff] %v805
      %1382 = vst [vmem:[#allocation2 + $0xb00] sm:$0xff] %v806
      %1383 = vst [vmem:[#allocation2 + $0xb08] sm:$0xff] %v807
      %1384 = vst [vmem:[#allocation2 + $0xb10] sm:$0xff] %v808
      %1385 = vst [vmem:[#allocation2 + $0xb18] sm:$0xff] %v809
      %1386 = vst [vmem:[#allocation2 + $0xb20] sm:$0xff] %v810
      %1387 = vst [vmem:[#allocation2 + $0xb28] sm:$0xff] %v811
      %1388 = vst [vmem:[#allocation2 + $0xb30] sm:$0xff] %v812
      %1389 = vst [vmem:[#allocation2 + $0xb38] sm:$0xff] %v813
      %1390 = vst [vmem:[#allocation2 + $0xb40] sm:$0xff] %v814
      %1391 = vst [vmem:[#allocation2 + $0xb48] sm:$0xff] %v815
      %1392 = vst [vmem:[#allocation2 + $0xb50] sm:$0xff] %v816
      %1393 = vst [vmem:[#allocation2 + $0xb58] sm:$0xff] %v817
      %1394 = vst [vmem:[#allocation2 + $0xb60] sm:$0xff] %v818
      %1395 = vst [vmem:[#allocation2 + $0xb68] sm:$0xff] %v819
      %1396 = vst [vmem:[#allocation2 + $0xb70] sm:$0xff] %v820
      %1397 = vst [vmem:[#allocation2 + $0xb78] sm:$0xff] %v821
      %1398 = vst [vmem:[#allocation2 + $0xb80] sm:$0xff] %v822
      %1399 = vst [vmem:[#allocation2 + $0xb88] sm:$0xff] %v823
      %1400 = vst [vmem:[#allocation2 + $0xb90] sm:$0xff] %v824
      %1401 = vst [vmem:[#allocation2 + $0xb98] sm:$0xff] %v825
      %1402 = vst [vmem:[#allocation2 + $0xba0] sm:$0xff] %v826
      %1403 = vst [vmem:[#allocation2 + $0xba8] sm:$0xff] %v827
      %1404 = vst [vmem:[#allocation2 + $0xbb0] sm:$0xff] %v828
      %1405 = vst [vmem:[#allocation2 + $0xbb8] sm:$0xff] %v829
      %1406 = vst [vmem:[#allocation2 + $0xbc0] sm:$0xff] %v830
      %1407 = vst [vmem:[#allocation2 + $0xbc8] sm:$0xff] %v831
      %1408 = vst [vmem:[#allocation2 + $0xbd0] sm:$0xff] %v832
      %1409 = vst [vmem:[#allocation2 + $0xbd8] sm:$0xff] %v833
      %1410 = vst [vmem:[#allocation2 + $0xbe0] sm:$0xff] %v834
      %1411 = vst [vmem:[#allocation2 + $0xbe8] sm:$0xff] %v835
      %1412 = vst [vmem:[#allocation2 + $0xbf0] sm:$0xff] %v836
      %1413 = vst [vmem:[#allocation2 + $0xbf8] sm:$0xff] %v837
      %1414 = vst [vmem:[#allocation2 + $0xc00] sm:$0xff] %v838
      %1415 = vst [vmem:[#allocation2 + $0xc08] sm:$0xff] %v839
      %1416 = vst [vmem:[#allocation2 + $0xc10] sm:$0xff] %v840
      %1417 = vst [vmem:[#allocation2 + $0xc18] sm:$0xff] %v841
      %1418 = vst [vmem:[#allocation2 + $0xc20] sm:$0xff] %v842
      %1419 = vst [vmem:[#allocation2 + $0xc28] sm:$0xff] %v843
      %1420 = vst [vmem:[#allocation2 + $0xc30] sm:$0xff] %v844
      %1421 = vst [vmem:[#allocation2 + $0xc38] sm:$0xff] %v845
      %1422 = vst [vmem:[#allocation2 + $0xc40] sm:$0xff] %v846
      %1423 = vst [vmem:[#allocation2 + $0xc48] sm:$0xff] %v847
      %1424 = vst [vmem:[#allocation2 + $0xc50] sm:$0xff] %v848
      %1425 = vst [vmem:[#allocation2 + $0xc58] sm:$0xff] %v849
      %1426 = vst [vmem:[#allocation2 + $0xc60] sm:$0xff] %v850
      %1427 = vst [vmem:[#allocation2 + $0xc68] sm:$0xff] %v851
      %1428 = vst [vmem:[#allocation2 + $0xc70] sm:$0xff] %v852
      %1429 = vst [vmem:[#allocation2 + $0xc78] sm:$0xff] %v853
      %1430 = vst [vmem:[#allocation2 + $0xc80] sm:$0xff] %v854
      %1431 = vst [vmem:[#allocation2 + $0xc88] sm:$0xff] %v855
      %1432 = vst [vmem:[#allocation2 + $0xc90] sm:$0xff] %v856
      %1433 = vst [vmem:[#allocation2 + $0xc98] sm:$0xff] %v857
      %1434 = vst [vmem:[#allocation2 + $0xca0] sm:$0xff] %v858
      %1435 = vst [vmem:[#allocation2 + $0xca8] sm:$0xff] %v859
      %1436 = vst [vmem:[#allocation2 + $0xcb0] sm:$0xff] %v860
      %1437 = vst [vmem:[#allocation2 + $0xcb8] sm:$0xff] %v861
      %1438 = vst [vmem:[#allocation2 + $0xcc0] sm:$0xff] %v862
      %1439 = vst [vmem:[#allocation2 + $0xcc8] sm:$0xff] %v863
      %1440 = vst [vmem:[#allocation2 + $0xcd0] sm:$0xff] %v864
      %1441 = vst [vmem:[#allocation2 + $0xcd8] sm:$0xff] %v865
      %1442 = vst [vmem:[#allocation2 + $0xce0] sm:$0xff] %v866
      %1443 = vst [vmem:[#allocation2 + $0xce8] sm:$0xff] %v867
      %1444 = vst [vmem:[#allocation2 + $0xcf0] sm:$0xff] %v868
      %1445 = vst [vmem:[#allocation2 + $0xcf8] sm:$0xff] %v869
      %1446 = vst [vmem:[#allocation2 + $0xd00] sm:$0xff] %v870
      %1447 = vst [vmem:[#allocation2 + $0xd08] sm:$0xff] %v871
      %1448 = vst [vmem:[#allocation2 + $0xd10] sm:$0xff] %v872
      %1449 = vst [vmem:[#allocation2 + $0xd18] sm:$0xff] %v873
      %1450 = vst [vmem:[#allocation2 + $0xd20] sm:$0xff] %v874
      %1451 = vst [vmem:[#allocation2 + $0xd28] sm:$0xff] %v875
      %1452 = vst [vmem:[#allocation2 + $0xd30] sm:$0xff] %v876
      %1453 = vst [vmem:[#allocation2 + $0xd38] sm:$0xff] %v877
      %1454 = vst [vmem:[#allocation2 + $0xd40] sm:$0xff] %v878
      %1455 = vst [vmem:[#allocation2 + $0xd48] sm:$0xff] %v879
      %1456 = vst [vmem:[#allocation2 + $0xd50] sm:$0xff] %v880
      %1457 = vst [vmem:[#allocation2 + $0xd58] sm:$0xff] %v881
      %1458 = vst [vmem:[#allocation2 + $0xd60] sm:$0xff] %v882
      %1459 = vst [vmem:[#allocation2 + $0xd68] sm:$0xff] %v883
      %1460 = vst [vmem:[#allocation2 + $0xd70] sm:$0xff] %v884
      %1461 = vst [vmem:[#allocation2 + $0xd78] sm:$0xff] %v885
      %1462 = vst [vmem:[#allocation2 + $0xd80] sm:$0xff] %v886
      %1463 = vst [vmem:[#allocation2 + $0xd88] sm:$0xff] %v887
      %1464 = vst [vmem:[#allocation2 + $0xd90] sm:$0xff] %v888
      %1465 = vst [vmem:[#allocation2 + $0xd98] sm:$0xff] %v889
      %1466 = vst [vmem:[#allocation2 + $0xda0] sm:$0xff] %v890
      %1467 = vst [vmem:[#allocation2 + $0xda8] sm:$0xff] %v891
      %1468 = vst [vmem:[#allocation2 + $0xdb0] sm:$0xff] %v892
      %1469 = vst [vmem:[#allocation2 + $0xdb8] sm:$0xff] %v893
      %1470 = vst [vmem:[#allocation2 + $0xdc0] sm:$0xff] %v894
      %1471 = vst [vmem:[#allocation2 + $0xdc8] sm:$0xff] %v895
      %1472 = vst [vmem:[#allocation2 + $0xdd0] sm:$0xff] %v896
      %1473 = vst [vmem:[#allocation2 + $0xdd8] sm:$0xff] %v897
      %1474 = vst [vmem:[#allocation2 + $0xde0] sm:$0xff] %v898
      %1475 = vst [vmem:[#allocation2 + $0xde8] sm:$0xff] %v899
      %1476 = vst [vmem:[#allocation2 + $0xdf0] sm:$0xff] %v900
      %1477 = vst [vmem:[#allocation2 + $0xdf8] sm:$0xff] %v901
      %1478 = vst [vmem:[#allocation2 + $0xe00] sm:$0xff] %v902
      %1479 = vst [vmem:[#allocation2 + $0xe08] sm:$0xff] %v903
      %1480 = vst [vmem:[#allocation2 + $0xe10] sm:$0xff] %v904
      %1481 = vst [vmem:[#allocation2 + $0xe18] sm:$0xff] %v905
      %1482 = vst [vmem:[#allocation2 + $0xe20] sm:$0xff] %v906
      %1483 = vst [vmem:[#allocation2 + $0xe28] sm:$0xff] %v907
      %1484 = vst [vmem:[#allocation2 + $0xe30] sm:$0xff] %v908
      %1485 = vst [vmem:[#allocation2 + $0xe38] sm:$0xff] %v909
      %1486 = vst [vmem:[#allocation2 + $0xe40] sm:$0xff] %v910
      %1487 = vst [vmem:[#allocation2 + $0xe48] sm:$0xff] %v911
      %1488 = vst [vmem:[#allocation2 + $0xe50] sm:$0xff] %v912
      %1489 = vst [vmem:[#allocation2 + $0xe58] sm:$0xff] %v913
      %1490 = vst [vmem:[#allocation2 + $0xe60] sm:$0xff] %v914
      %1491 = vst [vmem:[#allocation2 + $0xe68] sm:$0xff] %v915
      %1492 = vst [vmem:[#allocation2 + $0xe70] sm:$0xff] %v916
      %1493 = vst [vmem:[#allocation2 + $0xe78] sm:$0xff] %v917
      %1494 = vst [vmem:[#allocation2 + $0xe80] sm:$0xff] %v918
      %1495 = vst [vmem:[#allocation2 + $0xe88] sm:$0xff] %v919
      %1496 = vst [vmem:[#allocation2 + $0xe90] sm:$0xff] %v920
      %1497 = vst [vmem:[#allocation2 + $0xe98] sm:$0xff] %v921
      %1498 = vst [vmem:[#allocation2 + $0xea0] sm:$0xff] %v922
      %1499 = vst [vmem:[#allocation2 + $0xea8] sm:$0xff] %v923
      %1500 = vst [vmem:[#allocation2 + $0xeb0] sm:$0xff] %v924
      %1501 = vst [vmem:[#allocation2 + $0xeb8] sm:$0xff] %v925
      %1502 = vst [vmem:[#allocation2 + $0xec0] sm:$0xff] %v926
      %1503 = vst [vmem:[#allocation2 + $0xec8] sm:$0xff] %v927
      %1504 = vst [vmem:[#allocation2 + $0xed0] sm:$0xff] %v928
      %1505 = vst [vmem:[#allocation2 + $0xed8] sm:$0xff] %v929
      %1506 = vst [vmem:[#allocation2 + $0xee0] sm:$0xff] %v930
      %1507 = vst [vmem:[#allocation2 + $0xee8] sm:$0xff] %v931
      %1508 = vst [vmem:[#allocation2 + $0xef0] sm:$0xff] %v932
      %1509 = vst [vmem:[#allocation2 + $0xef8] sm:$0xff] %v933
      %1510 = vst [vmem:[#allocation2 + $0xf00] sm:$0xff] %v934
      %1511 = vst [vmem:[#allocation2 + $0xf08] sm:$0xff] %v935
      %1512 = vst [vmem:[#allocation2 + $0xf10] sm:$0xff] %v936
      %1513 = vst [vmem:[#allocation2 + $0xf18] sm:$0xff] %v937
      %1514 = vst [vmem:[#allocation2 + $0xf20] sm:$0xff] %v938
      %1515 = vst [vmem:[#allocation2 + $0xf28] sm:$0xff] %v939
      %1516 = vst [vmem:[#allocation2 + $0xf30] sm:$0xff] %v940
      %1517 = vst [vmem:[#allocation2 + $0xf38] sm:$0xff] %v941
      %1518 = vst [vmem:[#allocation2 + $0xf40] sm:$0xff] %v942
      %1519 = vst [vmem:[#allocation2 + $0xf48] sm:$0xff] %v943
      %1520 = vst [vmem:[#allocation2 + $0xf50] sm:$0xff] %v944
      %1521 = vst [vmem:[#allocation2 + $0xf58] sm:$0xff] %v945
      %1522 = vst [vmem:[#allocation2 + $0xf60] sm:$0xff] %v946
      %1523 = vst [vmem:[#allocation2 + $0xf68] sm:$0xff] %v947
      %1524 = vst [vmem:[#allocation2 + $0xf70] sm:$0xff] %v948
      %1525 = vst [vmem:[#allocation2 + $0xf78] sm:$0xff] %v949
      %1526 = vst [vmem:[#allocation2 + $0xf80] sm:$0xff] %v950
      %1527 = vst [vmem:[#allocation2 + $0xf88] sm:$0xff] %v951
      %1528 = vst [vmem:[#allocation2 + $0xf90] sm:$0xff] %v952
      %1529 = vst [vmem:[#allocation2 + $0xf98] sm:$0xff] %v953
      %1530 = vst [vmem:[#allocation2 + $0xfa0] sm:$0xff] %v954
      %1531 = vst [vmem:[#allocation2 + $0xfa8] sm:$0xff] %v955
      %1532 = vst [vmem:[#allocation2 + $0xfb0] sm:$0xff] %v956
      %1533 = vst [vmem:[#allocation2 + $0xfb8] sm:$0xff] %v957
      %1534 = vst [vmem:[#allocation2 + $0xfc0] sm:$0xff] %v958
      %1535 = vst [vmem:[#allocation2 + $0xfc8] sm:$0xff] %v959
      %1536 = vst [vmem:[#allocation2 + $0xfd0] sm:$0xff] %v960
      %1537 = vst [vmem:[#allocation2 + $0xfd8] sm:$0xff] %v961
      %1538 = vst [vmem:[#allocation2 + $0xfe0] sm:$0xff] %v962
      %1539 = vst [vmem:[#allocation2 + $0xfe8] sm:$0xff] %v963
      %1540 = vst [vmem:[#allocation2 + $0xff0] sm:$0xff] %v964
      %1541 = vst [vmem:[#allocation2 + $0xff8] sm:$0xff] %v965
      %1542 = vst [vmem:[#allocation2 + $0x1000] sm:$0xff] %v966
      %1543 = vst [vmem:[#allocation2 + $0x1008] sm:$0xff] %v967
      %1544 = vst [vmem:[#allocation2 + $0x1010] sm:$0xff] %v968
      %1545 = vst [vmem:[#allocation2 + $0x1018] sm:$0xff] %v969
      %1546 = vst [vmem:[#allocation2 + $0x1020] sm:$0xff] %v970
      %1547 = vst [vmem:[#allocation2 + $0x1028] sm:$0xff] %v971
      %1548 = vst [vmem:[#allocation2 + $0x1030] sm:$0xff] %v972
      %1549 = vst [vmem:[#allocation2 + $0x1038] sm:$0xff] %v973
      %1550 = vst [vmem:[#allocation2 + $0x1040] sm:$0xff] %v974
      %1551 = vst [vmem:[#allocation2 + $0x1048] sm:$0xff] %v975
      %1552 = vst [vmem:[#allocation2 + $0x1050] sm:$0xff] %v976
      %1553 = vst [vmem:[#allocation2 + $0x1058] sm:$0xff] %v977
      %1554 = vst [vmem:[#allocation2 + $0x1060] sm:$0xff] %v978
      %1555 = vst [vmem:[#allocation2 + $0x1068] sm:$0xff] %v979
      %1556 = vst [vmem:[#allocation2 + $0x1070] sm:$0xff] %v980
      %1557 = vst [vmem:[#allocation2 + $0x1078] sm:$0xff] %v981
      %1558 = vst [vmem:[#allocation2 + $0x1080] sm:$0xff] %v982
      %1559 = vst [vmem:[#allocation2 + $0x1088] sm:$0xff] %v983
      %1560 = vst [vmem:[#allocation2 + $0x1090] sm:$0xff] %v984
      %1561 = vst [vmem:[#allocation2 + $0x1098] sm:$0xff] %v985
      %1562 = vst [vmem:[#allocation2 + $0x10a0] sm:$0xff] %v986
      %1563 = vst [vmem:[#allocation2 + $0x10a8] sm:$0xff] %v987
      %1564 = vst [vmem:[#allocation2 + $0x10b0] sm:$0xff] %v988
      %1565 = vst [vmem:[#allocation2 + $0x10b8] sm:$0xff] %v989
      %1566 = vst [vmem:[#allocation2 + $0x10c0] sm:$0xff] %v990
      %1567 = vst [vmem:[#allocation2 + $0x10c8] sm:$0xff] %v991
      %1568 = vst [vmem:[#allocation2 + $0x10d0] sm:$0xff] %v992
      %1569 = vst [vmem:[#allocation2 + $0x10d8] sm:$0xff] %v993
      %1570 = vst [vmem:[#allocation2 + $0x10e0] sm:$0xff] %v994
      %1571 = vst [vmem:[#allocation2 + $0x10e8] sm:$0xff] %v995
      %1572 = vst [vmem:[#allocation2 + $0x10f0] sm:$0xff] %v996
      %1573 = vst [vmem:[#allocation2 + $0x10f8] sm:$0xff] %v997
      %1574 = vst [vmem:[#allocation2 + $0x1100] sm:$0xff] %v998
      %1575 = vst [vmem:[#allocation2 + $0x1108] sm:$0xff] %v999
      %1576 = vst [vmem:[#allocation2 + $0x1110] sm:$0xff] %v1000
      %1577 = vst [vmem:[#allocation2 + $0x1118] sm:$0xff] %v1001
      %1578 = vst [vmem:[#allocation2 + $0x1120] sm:$0xff] %v1002
      %1579 = vst [vmem:[#allocation2 + $0x1128] sm:$0xff] %v1003
      %1580 = vst [vmem:[#allocation2 + $0x1130] sm:$0xff] %v1004
      %1581 = vst [vmem:[#allocation2 + $0x1138] sm:$0xff] %v1005
      %1582 = vst [vmem:[#allocation2 + $0x1140] sm:$0xff] %v1006
      %1583 = vst [vmem:[#allocation2 + $0x1148] sm:$0xff] %v1007
      %1584 = vst [vmem:[#allocation2 + $0x1150] sm:$0xff] %v1008
      %1585 = vst [vmem:[#allocation2 + $0x1158] sm:$0xff] %v1009
      %1586 = vst [vmem:[#allocation2 + $0x1160] sm:$0xff] %v1010
      %1587 = vst [vmem:[#allocation2 + $0x1168] sm:$0xff] %v1011
      %1588 = vst [vmem:[#allocation2 + $0x1170] sm:$0xff] %v1012
      %1589 = vst [vmem:[#allocation2 + $0x1178] sm:$0xff] %v1013
      %1590 = vst [vmem:[#allocation2 + $0x1180] sm:$0xff] %v1014
      %1591 = vst [vmem:[#allocation2 + $0x1188] sm:$0xff] %v1015
      %1592 = vst [vmem:[#allocation2 + $0x1190] sm:$0xff] %v1016
      %1593 = vst [vmem:[#allocation2 + $0x1198] sm:$0xff] %v1017
      %1594 = vst [vmem:[#allocation2 + $0x11a0] sm:$0xff] %v1018
      %1595 = vst [vmem:[#allocation2 + $0x11a8] sm:$0xff] %v1019
      %1596 = vst [vmem:[#allocation2 + $0x11b0] sm:$0xff] %v1020
      %1597 = vst [vmem:[#allocation2 + $0x11b8] sm:$0xff] %v1021
      %1598 = vst [vmem:[#allocation2 + $0x11c0] sm:$0xff] %v1022
      %1599 = vst [vmem:[#allocation2 + $0x11c8] sm:$0xff] %v1023
      %1600 = vst [vmem:[#allocation2 + $0x11d0] sm:$0xff] %v1024
      %1601 = vst [vmem:[#allocation2 + $0x11d8] sm:$0xff] %v1025
      %1602 = vst [vmem:[#allocation2 + $0x11e0] sm:$0xff] %v1026
      %1603 = vst [vmem:[#allocation2 + $0x11e8] sm:$0xff] %v1027
      %1604 = vst [vmem:[#allocation2 + $0x11f0] sm:$0xff] %v1028
      %1605 = vst [vmem:[#allocation2 + $0x11f8] sm:$0xff] %v1029
      %v1606 = vld [vmem:[#allocation9] sm:$0xff]
      %v1607 = vld [vmem:[#allocation9 + $0x8] sm:$0xff]
      %v1608 = vld [vmem:[#allocation9 + $0x10] sm:$0xff]
      %v1609 = vld [vmem:[#allocation9 + $0x18] sm:$0xff]
      %v1610 = vld [vmem:[#allocation9 + $0x20] sm:$0xff]
      %v1611 = vld [vmem:[#allocation9 + $0x28] sm:$0xff]
      %v1612 = vld [vmem:[#allocation9 + $0x30] sm:$0xff]
      %v1613 = vld [vmem:[#allocation9 + $0x38] sm:$0xff]
      %v1614 = vld [vmem:[#allocation9 + $0x40] sm:$0xff]
      %v1615 = vld [vmem:[#allocation9 + $0x48] sm:$0xff]
      %v1616 = vld [vmem:[#allocation9 + $0x50] sm:$0xff]
      %v1617 = vld [vmem:[#allocation9 + $0x58] sm:$0xff]
      %v1618 = vld [vmem:[#allocation9 + $0x60] sm:$0xff]
      %v1619 = vld [vmem:[#allocation9 + $0x68] sm:$0xff]
      %v1620 = vld [vmem:[#allocation9 + $0x70] sm:$0xff]
      %v1621 = vld [vmem:[#allocation9 + $0x78] sm:$0xff]
      %v1622 = vld [vmem:[#allocation9 + $0x80] sm:$0xff]
      %v1623 = vld [vmem:[#allocation9 + $0x88] sm:$0xff]
      %v1624 = vld [vmem:[#allocation9 + $0x90] sm:$0xff]
      %v1625 = vld [vmem:[#allocation9 + $0x98] sm:$0xff]
      %v1626 = vld [vmem:[#allocation9 + $0xa0] sm:$0xff]
      %v1627 = vld [vmem:[#allocation9 + $0xa8] sm:$0xff]
      %v1628 = vld [vmem:[#allocation9 + $0xb0] sm:$0xff]
      %v1629 = vld [vmem:[#allocation9 + $0xb8] sm:$0xff]
      %v1630 = vld [vmem:[#allocation9 + $0xc0] sm:$0xff]
      %v1631 = vld [vmem:[#allocation9 + $0xc8] sm:$0xff]
      %v1632 = vld [vmem:[#allocation9 + $0xd0] sm:$0xff]
      %v1633 = vld [vmem:[#allocation9 + $0xd8] sm:$0xff]
      %v1634 = vld [vmem:[#allocation9 + $0xe0] sm:$0xff]
      %v1635 = vld [vmem:[#allocation9 + $0xe8] sm:$0xff]
      %v1636 = vld [vmem:[#allocation9 + $0xf0] sm:$0xff]
      %v1637 = vld [vmem:[#allocation9 + $0xf8] sm:$0xff]
      %v1638 = vld [vmem:[#allocation9 + $0x100] sm:$0xff]
      %v1639 = vld [vmem:[#allocation9 + $0x108] sm:$0xff]
      %v1640 = vld [vmem:[#allocation9 + $0x110] sm:$0xff]
      %v1641 = vld [vmem:[#allocation9 + $0x118] sm:$0xff]
      %v1642 = vld [vmem:[#allocation9 + $0x120] sm:$0xff]
      %v1643 = vld [vmem:[#allocation9 + $0x128] sm:$0xff]
      %v1644 = vld [vmem:[#allocation9 + $0x130] sm:$0xff]
      %v1645 = vld [vmem:[#allocation9 + $0x138] sm:$0xff]
      %v1646 = vld [vmem:[#allocation9 + $0x140] sm:$0xff]
      %v1647 = vld [vmem:[#allocation9 + $0x148] sm:$0xff]
      %v1648 = vld [vmem:[#allocation9 + $0x150] sm:$0xff]
      %v1649 = vld [vmem:[#allocation9 + $0x158] sm:$0xff]
      %v1650 = vld [vmem:[#allocation9 + $0x160] sm:$0xff]
      %v1651 = vld [vmem:[#allocation9 + $0x168] sm:$0xff]
      %v1652 = vld [vmem:[#allocation9 + $0x170] sm:$0xff]
      %v1653 = vld [vmem:[#allocation9 + $0x178] sm:$0xff]
      %v1654 = vld [vmem:[#allocation9 + $0x180] sm:$0xff]
      %v1655 = vld [vmem:[#allocation9 + $0x188] sm:$0xff]
      %v1656 = vld [vmem:[#allocation9 + $0x190] sm:$0xff]
      %v1657 = vld [vmem:[#allocation9 + $0x198] sm:$0xff]
      %v1658 = vld [vmem:[#allocation9 + $0x1a0] sm:$0xff]
      %v1659 = vld [vmem:[#allocation9 + $0x1a8] sm:$0xff]
      %v1660 = vld [vmem:[#allocation9 + $0x1b0] sm:$0xff]
      %v1661 = vld [vmem:[#allocation9 + $0x1b8] sm:$0xff]
      %v1662 = vld [vmem:[#allocation9 + $0x1c0] sm:$0xff]
      %v1663 = vld [vmem:[#allocation9 + $0x1c8] sm:$0xff]
      %v1664 = vld [vmem:[#allocation9 + $0x1d0] sm:$0xff]
      %v1665 = vld [vmem:[#allocation9 + $0x1d8] sm:$0xff]
      %v1666 = vld [vmem:[#allocation9 + $0x1e0] sm:$0xff]
      %v1667 = vld [vmem:[#allocation9 + $0x1e8] sm:$0xff]
      %v1668 = vld [vmem:[#allocation9 + $0x1f0] sm:$0xff]
      %v1669 = vld [vmem:[#allocation9 + $0x1f8] sm:$0xff]
      %v1670 = vld [vmem:[#allocation9 + $0x200] sm:$0xff]
      %v1671 = vld [vmem:[#allocation9 + $0x208] sm:$0xff]
      %v1672 = vld [vmem:[#allocation9 + $0x210] sm:$0xff]
      %v1673 = vld [vmem:[#allocation9 + $0x218] sm:$0xff]
      %v1674 = vld [vmem:[#allocation9 + $0x220] sm:$0xff]
      %v1675 = vld [vmem:[#allocation9 + $0x228] sm:$0xff]
      %v1676 = vld [vmem:[#allocation9 + $0x230] sm:$0xff]
      %v1677 = vld [vmem:[#allocation9 + $0x238] sm:$0xff]
      %v1678 = vld [vmem:[#allocation9 + $0x240] sm:$0xff]
      %v1679 = vld [vmem:[#allocation9 + $0x248] sm:$0xff]
      %v1680 = vld [vmem:[#allocation9 + $0x250] sm:$0xff]
      %v1681 = vld [vmem:[#allocation9 + $0x258] sm:$0xff]
      %v1682 = vld [vmem:[#allocation9 + $0x260] sm:$0xff]
      %v1683 = vld [vmem:[#allocation9 + $0x268] sm:$0xff]
      %v1684 = vld [vmem:[#allocation9 + $0x270] sm:$0xff]
      %v1685 = vld [vmem:[#allocation9 + $0x278] sm:$0xff]
      %v1686 = vld [vmem:[#allocation9 + $0x280] sm:$0xff]
      %v1687 = vld [vmem:[#allocation9 + $0x288] sm:$0xff]
      %v1688 = vld [vmem:[#allocation9 + $0x290] sm:$0xff]
      %v1689 = vld [vmem:[#allocation9 + $0x298] sm:$0xff]
      %v1690 = vld [vmem:[#allocation9 + $0x2a0] sm:$0xff]
      %v1691 = vld [vmem:[#allocation9 + $0x2a8] sm:$0xff]
      %v1692 = vld [vmem:[#allocation9 + $0x2b0] sm:$0xff]
      %v1693 = vld [vmem:[#allocation9 + $0x2b8] sm:$0xff]
      %v1694 = vld [vmem:[#allocation9 + $0x2c0] sm:$0xff]
      %v1695 = vld [vmem:[#allocation9 + $0x2c8] sm:$0xff]
      %v1696 = vld [vmem:[#allocation9 + $0x2d0] sm:$0xff]
      %v1697 = vld [vmem:[#allocation9 + $0x2d8] sm:$0xff]
      %v1698 = vld [vmem:[#allocation9 + $0x2e0] sm:$0xff]
      %v1699 = vld [vmem:[#allocation9 + $0x2e8] sm:$0xff]
      %v1700 = vld [vmem:[#allocation9 + $0x2f0] sm:$0xff]
      %v1701 = vld [vmem:[#allocation9 + $0x2f8] sm:$0xff]
      %v1702 = vunpack.c.l.s8.bf16 %v1606
      %v1703 = vunpack.c.l.s8.bf16 %v1607
      %v1704 = vunpack.c.l.s8.bf16 %v1608
      %v1705 = vunpack.c.l.s8.bf16 %v1609
      %v1706 = vunpack.c.h.s8.bf16 %v1606
      %v1707 = vunpack.c.h.s8.bf16 %v1607
      %v1708 = vunpack.c.h.s8.bf16 %v1608
      %v1709 = vunpack.c.h.s8.bf16 %v1609
      %v1710 = vunpack.c.l.s8.bf16 %v1610
      %v1711 = vunpack.c.l.s8.bf16 %v1611
      %v1712 = vunpack.c.l.s8.bf16 %v1612
      %v1713 = vunpack.c.l.s8.bf16 %v1613
      %v1714 = vunpack.c.h.s8.bf16 %v1610
      %v1715 = vunpack.c.h.s8.bf16 %v1611
      %v1716 = vunpack.c.h.s8.bf16 %v1612
      %v1717 = vunpack.c.h.s8.bf16 %v1613
      %v1718 = vunpack.c.l.s8.bf16 %v1614
      %v1719 = vunpack.c.l.s8.bf16 %v1615
      %v1720 = vunpack.c.l.s8.bf16 %v1616
      %v1721 = vunpack.c.l.s8.bf16 %v1617
      %v1722 = vunpack.c.h.s8.bf16 %v1614
      %v1723 = vunpack.c.h.s8.bf16 %v1615
      %v1724 = vunpack.c.h.s8.bf16 %v1616
      %v1725 = vunpack.c.h.s8.bf16 %v1617
      %v1726 = vunpack.c.l.s8.bf16 %v1618
      %v1727 = vunpack.c.l.s8.bf16 %v1619
      %v1728 = vunpack.c.l.s8.bf16 %v1620
      %v1729 = vunpack.c.l.s8.bf16 %v1621
      %v1730 = vunpack.c.h.s8.bf16 %v1618
      %v1731 = vunpack.c.h.s8.bf16 %v1619
      %v1732 = vunpack.c.h.s8.bf16 %v1620
      %v1733 = vunpack.c.h.s8.bf16 %v1621
      %v1734 = vunpack.c.l.s8.bf16 %v1622
      %v1735 = vunpack.c.l.s8.bf16 %v1623
      %v1736 = vunpack.c.l.s8.bf16 %v1624
      %v1737 = vunpack.c.l.s8.bf16 %v1625
      %v1738 = vunpack.c.h.s8.bf16 %v1622
      %v1739 = vunpack.c.h.s8.bf16 %v1623
      %v1740 = vunpack.c.h.s8.bf16 %v1624
      %v1741 = vunpack.c.h.s8.bf16 %v1625
      %v1742 = vunpack.c.l.s8.bf16 %v1626
      %v1743 = vunpack.c.l.s8.bf16 %v1627
      %v1744 = vunpack.c.l.s8.bf16 %v1628
      %v1745 = vunpack.c.l.s8.bf16 %v1629
      %v1746 = vunpack.c.h.s8.bf16 %v1626
      %v1747 = vunpack.c.h.s8.bf16 %v1627
      %v1748 = vunpack.c.h.s8.bf16 %v1628
      %v1749 = vunpack.c.h.s8.bf16 %v1629
      %v1750 = vunpack.c.l.s8.bf16 %v1630
      %v1751 = vunpack.c.l.s8.bf16 %v1631
      %v1752 = vunpack.c.l.s8.bf16 %v1632
      %v1753 = vunpack.c.l.s8.bf16 %v1633
      %v1754 = vunpack.c.h.s8.bf16 %v1630
      %v1755 = vunpack.c.h.s8.bf16 %v1631
      %v1756 = vunpack.c.h.s8.bf16 %v1632
      %v1757 = vunpack.c.h.s8.bf16 %v1633
      %v1758 = vunpack.c.l.s8.bf16 %v1634
      %v1759 = vunpack.c.l.s8.bf16 %v1635
      %v1760 = vunpack.c.l.s8.bf16 %v1636
      %v1761 = vunpack.c.l.s8.bf16 %v1637
      %v1762 = vunpack.c.h.s8.bf16 %v1634
      %v1763 = vunpack.c.h.s8.bf16 %v1635
      %v1764 = vunpack.c.h.s8.bf16 %v1636
      %v1765 = vunpack.c.h.s8.bf16 %v1637
      %v1766 = vunpack.c.l.s8.bf16 %v1638
      %v1767 = vunpack.c.l.s8.bf16 %v1639
      %v1768 = vunpack.c.l.s8.bf16 %v1640
      %v1769 = vunpack.c.l.s8.bf16 %v1641
      %v1770 = vunpack.c.h.s8.bf16 %v1638
      %v1771 = vunpack.c.h.s8.bf16 %v1639
      %v1772 = vunpack.c.h.s8.bf16 %v1640
      %v1773 = vunpack.c.h.s8.bf16 %v1641
      %v1774 = vunpack.c.l.s8.bf16 %v1642
      %v1775 = vunpack.c.l.s8.bf16 %v1643
      %v1776 = vunpack.c.l.s8.bf16 %v1644
      %v1777 = vunpack.c.l.s8.bf16 %v1645
      %v1778 = vunpack.c.h.s8.bf16 %v1642
      %v1779 = vunpack.c.h.s8.bf16 %v1643
      %v1780 = vunpack.c.h.s8.bf16 %v1644
      %v1781 = vunpack.c.h.s8.bf16 %v1645
      %v1782 = vunpack.c.l.s8.bf16 %v1646
      %v1783 = vunpack.c.l.s8.bf16 %v1647
      %v1784 = vunpack.c.l.s8.bf16 %v1648
      %v1785 = vunpack.c.l.s8.bf16 %v1649
      %v1786 = vunpack.c.h.s8.bf16 %v1646
      %v1787 = vunpack.c.h.s8.bf16 %v1647
      %v1788 = vunpack.c.h.s8.bf16 %v1648
      %v1789 = vunpack.c.h.s8.bf16 %v1649
      %v1790 = vunpack.c.l.s8.bf16 %v1650
      %v1791 = vunpack.c.l.s8.bf16 %v1651
      %v1792 = vunpack.c.l.s8.bf16 %v1652
      %v1793 = vunpack.c.l.s8.bf16 %v1653
      %v1794 = vunpack.c.h.s8.bf16 %v1650
      %v1795 = vunpack.c.h.s8.bf16 %v1651
      %v1796 = vunpack.c.h.s8.bf16 %v1652
      %v1797 = vunpack.c.h.s8.bf16 %v1653
      %v1798 = vunpack.c.l.s8.bf16 %v1654
      %v1799 = vunpack.c.l.s8.bf16 %v1655
      %v1800 = vunpack.c.l.s8.bf16 %v1656
      %v1801 = vunpack.c.l.s8.bf16 %v1657
      %v1802 = vunpack.c.h.s8.bf16 %v1654
      %v1803 = vunpack.c.h.s8.bf16 %v1655
      %v1804 = vunpack.c.h.s8.bf16 %v1656
      %v1805 = vunpack.c.h.s8.bf16 %v1657
      %v1806 = vunpack.c.l.s8.bf16 %v1658
      %v1807 = vunpack.c.l.s8.bf16 %v1659
      %v1808 = vunpack.c.l.s8.bf16 %v1660
      %v1809 = vunpack.c.l.s8.bf16 %v1661
      %v1810 = vunpack.c.h.s8.bf16 %v1658
      %v1811 = vunpack.c.h.s8.bf16 %v1659
      %v1812 = vunpack.c.h.s8.bf16 %v1660
      %v1813 = vunpack.c.h.s8.bf16 %v1661
      %v1814 = vunpack.c.l.s8.bf16 %v1662
      %v1815 = vunpack.c.l.s8.bf16 %v1663
      %v1816 = vunpack.c.l.s8.bf16 %v1664
      %v1817 = vunpack.c.l.s8.bf16 %v1665
      %v1818 = vunpack.c.h.s8.bf16 %v1662
      %v1819 = vunpack.c.h.s8.bf16 %v1663
      %v1820 = vunpack.c.h.s8.bf16 %v1664
      %v1821 = vunpack.c.h.s8.bf16 %v1665
      %v1822 = vunpack.c.l.s8.bf16 %v1666
      %v1823 = vunpack.c.l.s8.bf16 %v1667
      %v1824 = vunpack.c.l.s8.bf16 %v1668
      %v1825 = vunpack.c.l.s8.bf16 %v1669
      %v1826 = vunpack.c.h.s8.bf16 %v1666
      %v1827 = vunpack.c.h.s8.bf16 %v1667
      %v1828 = vunpack.c.h.s8.bf16 %v1668
      %v1829 = vunpack.c.h.s8.bf16 %v1669
      %v1830 = vunpack.c.l.s8.bf16 %v1670
      %v1831 = vunpack.c.l.s8.bf16 %v1671
      %v1832 = vunpack.c.l.s8.bf16 %v1672
      %v1833 = vunpack.c.l.s8.bf16 %v1673
      %v1834 = vunpack.c.h.s8.bf16 %v1670
      %v1835 = vunpack.c.h.s8.bf16 %v1671
      %v1836 = vunpack.c.h.s8.bf16 %v1672
      %v1837 = vunpack.c.h.s8.bf16 %v1673
      %v1838 = vunpack.c.l.s8.bf16 %v1674
      %v1839 = vunpack.c.l.s8.bf16 %v1675
      %v1840 = vunpack.c.l.s8.bf16 %v1676
      %v1841 = vunpack.c.l.s8.bf16 %v1677
      %v1842 = vunpack.c.h.s8.bf16 %v1674
      %v1843 = vunpack.c.h.s8.bf16 %v1675
      %v1844 = vunpack.c.h.s8.bf16 %v1676
      %v1845 = vunpack.c.h.s8.bf16 %v1677
      %v1846 = vunpack.c.l.s8.bf16 %v1678
      %v1847 = vunpack.c.l.s8.bf16 %v1679
      %v1848 = vunpack.c.l.s8.bf16 %v1680
      %v1849 = vunpack.c.l.s8.bf16 %v1681
      %v1850 = vunpack.c.h.s8.bf16 %v1678
      %v1851 = vunpack.c.h.s8.bf16 %v1679
      %v1852 = vunpack.c.h.s8.bf16 %v1680
      %v1853 = vunpack.c.h.s8.bf16 %v1681
      %v1854 = vunpack.c.l.s8.bf16 %v1682
      %v1855 = vunpack.c.l.s8.bf16 %v1683
      %v1856 = vunpack.c.l.s8.bf16 %v1684
      %v1857 = vunpack.c.l.s8.bf16 %v1685
      %v1858 = vunpack.c.h.s8.bf16 %v1682
      %v1859 = vunpack.c.h.s8.bf16 %v1683
      %v1860 = vunpack.c.h.s8.bf16 %v1684
      %v1861 = vunpack.c.h.s8.bf16 %v1685
      %v1862 = vunpack.c.l.s8.bf16 %v1686
      %v1863 = vunpack.c.l.s8.bf16 %v1687
      %v1864 = vunpack.c.l.s8.bf16 %v1688
      %v1865 = vunpack.c.l.s8.bf16 %v1689
      %v1866 = vunpack.c.h.s8.bf16 %v1686
      %v1867 = vunpack.c.h.s8.bf16 %v1687
      %v1868 = vunpack.c.h.s8.bf16 %v1688
      %v1869 = vunpack.c.h.s8.bf16 %v1689
      %v1870 = vunpack.c.l.s8.bf16 %v1690
      %v1871 = vunpack.c.l.s8.bf16 %v1691
      %v1872 = vunpack.c.l.s8.bf16 %v1692
      %v1873 = vunpack.c.l.s8.bf16 %v1693
      %v1874 = vunpack.c.h.s8.bf16 %v1690
      %v1875 = vunpack.c.h.s8.bf16 %v1691
      %v1876 = vunpack.c.h.s8.bf16 %v1692
      %v1877 = vunpack.c.h.s8.bf16 %v1693
      %v1878 = vunpack.c.l.s8.bf16 %v1694
      %v1879 = vunpack.c.l.s8.bf16 %v1695
      %v1880 = vunpack.c.l.s8.bf16 %v1696
      %v1881 = vunpack.c.l.s8.bf16 %v1697
      %v1882 = vunpack.c.h.s8.bf16 %v1694
      %v1883 = vunpack.c.h.s8.bf16 %v1695
      %v1884 = vunpack.c.h.s8.bf16 %v1696
      %v1885 = vunpack.c.h.s8.bf16 %v1697
      %v1886 = vunpack.c.l.s8.bf16 %v1698
      %v1887 = vunpack.c.l.s8.bf16 %v1699
      %v1888 = vunpack.c.l.s8.bf16 %v1700
      %v1889 = vunpack.c.l.s8.bf16 %v1701
      %v1890 = vunpack.c.h.s8.bf16 %v1698
      %v1891 = vunpack.c.h.s8.bf16 %v1699
      %v1892 = vunpack.c.h.s8.bf16 %v1700
      %v1893 = vunpack.c.h.s8.bf16 %v1701
      %1894 = vst [vmem:[#allocation3] sm:$0xff] %v1702
      %1895 = vst [vmem:[#allocation3 + $0x8] sm:$0xff] %v1703
      %1896 = vst [vmem:[#allocation3 + $0x10] sm:$0xff] %v1704
      %1897 = vst [vmem:[#allocation3 + $0x18] sm:$0xff] %v1705
      %1898 = vst [vmem:[#allocation3 + $0x20] sm:$0xff] %v1706
      %1899 = vst [vmem:[#allocation3 + $0x28] sm:$0xff] %v1707
      %1900 = vst [vmem:[#allocation3 + $0x30] sm:$0xff] %v1708
      %1901 = vst [vmem:[#allocation3 + $0x38] sm:$0xff] %v1709
      %1902 = vst [vmem:[#allocation3 + $0x40] sm:$0xff] %v1710
      %1903 = vst [vmem:[#allocation3 + $0x48] sm:$0xff] %v1711
      %1904 = vst [vmem:[#allocation3 + $0x50] sm:$0xff] %v1712
      %1905 = vst [vmem:[#allocation3 + $0x58] sm:$0xff] %v1713
      %1906 = vst [vmem:[#allocation3 + $0x60] sm:$0xff] %v1714
      %1907 = vst [vmem:[#allocation3 + $0x68] sm:$0xff] %v1715
      %1908 = vst [vmem:[#allocation3 + $0x70] sm:$0xff] %v1716
      %1909 = vst [vmem:[#allocation3 + $0x78] sm:$0xff] %v1717
      %1910 = vst [vmem:[#allocation3 + $0x80] sm:$0xff] %v1718
      %1911 = vst [vmem:[#allocation3 + $0x88] sm:$0xff] %v1719
      %1912 = vst [vmem:[#allocation3 + $0x90] sm:$0xff] %v1720
      %1913 = vst [vmem:[#allocation3 + $0x98] sm:$0xff] %v1721
      %1914 = vst [vmem:[#allocation3 + $0xa0] sm:$0xff] %v1722
      %1915 = vst [vmem:[#allocation3 + $0xa8] sm:$0xff] %v1723
      %1916 = vst [vmem:[#allocation3 + $0xb0] sm:$0xff] %v1724
      %1917 = vst [vmem:[#allocation3 + $0xb8] sm:$0xff] %v1725
      %1918 = vst [vmem:[#allocation3 + $0xc0] sm:$0xff] %v1726
      %1919 = vst [vmem:[#allocation3 + $0xc8] sm:$0xff] %v1727
      %1920 = vst [vmem:[#allocation3 + $0xd0] sm:$0xff] %v1728
      %1921 = vst [vmem:[#allocation3 + $0xd8] sm:$0xff] %v1729
      %1922 = vst [vmem:[#allocation3 + $0xe0] sm:$0xff] %v1730
      %1923 = vst [vmem:[#allocation3 + $0xe8] sm:$0xff] %v1731
      %1924 = vst [vmem:[#allocation3 + $0xf0] sm:$0xff] %v1732
      %1925 = vst [vmem:[#allocation3 + $0xf8] sm:$0xff] %v1733
      %1926 = vst [vmem:[#allocation3 + $0x100] sm:$0xff] %v1734
      %1927 = vst [vmem:[#allocation3 + $0x108] sm:$0xff] %v1735
      %1928 = vst [vmem:[#allocation3 + $0x110] sm:$0xff] %v1736
      %1929 = vst [vmem:[#allocation3 + $0x118] sm:$0xff] %v1737
      %1930 = vst [vmem:[#allocation3 + $0x120] sm:$0xff] %v1738
      %1931 = vst [vmem:[#allocation3 + $0x128] sm:$0xff] %v1739
      %1932 = vst [vmem:[#allocation3 + $0x130] sm:$0xff] %v1740
      %1933 = vst [vmem:[#allocation3 + $0x138] sm:$0xff] %v1741
      %1934 = vst [vmem:[#allocation3 + $0x140] sm:$0xff] %v1742
      %1935 = vst [vmem:[#allocation3 + $0x148] sm:$0xff] %v1743
      %1936 = vst [vmem:[#allocation3 + $0x150] sm:$0xff] %v1744
      %1937 = vst [vmem:[#allocation3 + $0x158] sm:$0xff] %v1745
      %1938 = vst [vmem:[#allocation3 + $0x160] sm:$0xff] %v1746
      %1939 = vst [vmem:[#allocation3 + $0x168] sm:$0xff] %v1747
      %1940 = vst [vmem:[#allocation3 + $0x170] sm:$0xff] %v1748
      %1941 = vst [vmem:[#allocation3 + $0x178] sm:$0xff] %v1749
      %1942 = vst [vmem:[#allocation3 + $0x180] sm:$0xff] %v1750
      %1943 = vst [vmem:[#allocation3 + $0x188] sm:$0xff] %v1751
      %1944 = vst [vmem:[#allocation3 + $0x190] sm:$0xff] %v1752
      %1945 = vst [vmem:[#allocation3 + $0x198] sm:$0xff] %v1753
      %1946 = vst [vmem:[#allocation3 + $0x1a0] sm:$0xff] %v1754
      %1947 = vst [vmem:[#allocation3 + $0x1a8] sm:$0xff] %v1755
      %1948 = vst [vmem:[#allocation3 + $0x1b0] sm:$0xff] %v1756
      %1949 = vst [vmem:[#allocation3 + $0x1b8] sm:$0xff] %v1757
      %1950 = vst [vmem:[#allocation3 + $0x1c0] sm:$0xff] %v1758
      %1951 = vst [vmem:[#allocation3 + $0x1c8] sm:$0xff] %v1759
      %1952 = vst [vmem:[#allocation3 + $0x1d0] sm:$0xff] %v1760
      %1953 = vst [vmem:[#allocation3 + $0x1d8] sm:$0xff] %v1761
      %1954 = vst [vmem:[#allocation3 + $0x1e0] sm:$0xff] %v1762
      %1955 = vst [vmem:[#allocation3 + $0x1e8] sm:$0xff] %v1763
      %1956 = vst [vmem:[#allocation3 + $0x1f0] sm:$0xff] %v1764
      %1957 = vst [vmem:[#allocation3 + $0x1f8] sm:$0xff] %v1765
      %1958 = vst [vmem:[#allocation3 + $0x200] sm:$0xff] %v1766
      %1959 = vst [vmem:[#allocation3 + $0x208] sm:$0xff] %v1767
      %1960 = vst [vmem:[#allocation3 + $0x210] sm:$0xff] %v1768
      %1961 = vst [vmem:[#allocation3 + $0x218] sm:$0xff] %v1769
      %1962 = vst [vmem:[#allocation3 + $0x220] sm:$0xff] %v1770
      %1963 = vst [vmem:[#allocation3 + $0x228] sm:$0xff] %v1771
      %1964 = vst [vmem:[#allocation3 + $0x230] sm:$0xff] %v1772
      %1965 = vst [vmem:[#allocation3 + $0x238] sm:$0xff] %v1773
      %1966 = vst [vmem:[#allocation3 + $0x240] sm:$0xff] %v1774
      %1967 = vst [vmem:[#allocation3 + $0x248] sm:$0xff] %v1775
      %1968 = vst [vmem:[#allocation3 + $0x250] sm:$0xff] %v1776
      %1969 = vst [vmem:[#allocation3 + $0x258] sm:$0xff] %v1777
      %1970 = vst [vmem:[#allocation3 + $0x260] sm:$0xff] %v1778
      %1971 = vst [vmem:[#allocation3 + $0x268] sm:$0xff] %v1779
      %1972 = vst [vmem:[#allocation3 + $0x270] sm:$0xff] %v1780
      %1973 = vst [vmem:[#allocation3 + $0x278] sm:$0xff] %v1781
      %1974 = vst [vmem:[#allocation3 + $0x280] sm:$0xff] %v1782
      %1975 = vst [vmem:[#allocation3 + $0x288] sm:$0xff] %v1783
      %1976 = vst [vmem:[#allocation3 + $0x290] sm:$0xff] %v1784
      %1977 = vst [vmem:[#allocation3 + $0x298] sm:$0xff] %v1785
      %1978 = vst [vmem:[#allocation3 + $0x2a0] sm:$0xff] %v1786
      %1979 = vst [vmem:[#allocation3 + $0x2a8] sm:$0xff] %v1787
      %1980 = vst [vmem:[#allocation3 + $0x2b0] sm:$0xff] %v1788
      %1981 = vst [vmem:[#allocation3 + $0x2b8] sm:$0xff] %v1789
      %1982 = vst [vmem:[#allocation3 + $0x2c0] sm:$0xff] %v1790
      %1983 = vst [vmem:[#allocation3 + $0x2c8] sm:$0xff] %v1791
      %1984 = vst [vmem:[#allocation3 + $0x2d0] sm:$0xff] %v1792
      %1985 = vst [vmem:[#allocation3 + $0x2d8] sm:$0xff] %v1793
      %1986 = vst [vmem:[#allocation3 + $0x2e0] sm:$0xff] %v1794
      %1987 = vst [vmem:[#allocation3 + $0x2e8] sm:$0xff] %v1795
      %1988 = vst [vmem:[#allocation3 + $0x2f0] sm:$0xff] %v1796
      %1989 = vst [vmem:[#allocation3 + $0x2f8] sm:$0xff] %v1797
      %1990 = vst [vmem:[#allocation3 + $0x300] sm:$0xff] %v1798
      %1991 = vst [vmem:[#allocation3 + $0x308] sm:$0xff] %v1799
      %1992 = vst [vmem:[#allocation3 + $0x310] sm:$0xff] %v1800
      %1993 = vst [vmem:[#allocation3 + $0x318] sm:$0xff] %v1801
      %1994 = vst [vmem:[#allocation3 + $0x320] sm:$0xff] %v1802
      %1995 = vst [vmem:[#allocation3 + $0x328] sm:$0xff] %v1803
      %1996 = vst [vmem:[#allocation3 + $0x330] sm:$0xff] %v1804
      %1997 = vst [vmem:[#allocation3 + $0x338] sm:$0xff] %v1805
      %1998 = vst [vmem:[#allocation3 + $0x340] sm:$0xff] %v1806
      %1999 = vst [vmem:[#allocation3 + $0x348] sm:$0xff] %v1807
      %2000 = vst [vmem:[#allocation3 + $0x350] sm:$0xff] %v1808
      %2001 = vst [vmem:[#allocation3 + $0x358] sm:$0xff] %v1809
      %2002 = vst [vmem:[#allocation3 + $0x360] sm:$0xff] %v1810
      %2003 = vst [vmem:[#allocation3 + $0x368] sm:$0xff] %v1811
      %2004 = vst [vmem:[#allocation3 + $0x370] sm:$0xff] %v1812
      %2005 = vst [vmem:[#allocation3 + $0x378] sm:$0xff] %v1813
      %2006 = vst [vmem:[#allocation3 + $0x380] sm:$0xff] %v1814
      %2007 = vst [vmem:[#allocation3 + $0x388] sm:$0xff] %v1815
      %2008 = vst [vmem:[#allocation3 + $0x390] sm:$0xff] %v1816
      %2009 = vst [vmem:[#allocation3 + $0x398] sm:$0xff] %v1817
      %2010 = vst [vmem:[#allocation3 + $0x3a0] sm:$0xff] %v1818
      %2011 = vst [vmem:[#allocation3 + $0x3a8] sm:$0xff] %v1819
      %2012 = vst [vmem:[#allocation3 + $0x3b0] sm:$0xff] %v1820
      %2013 = vst [vmem:[#allocation3 + $0x3b8] sm:$0xff] %v1821
      %2014 = vst [vmem:[#allocation3 + $0x3c0] sm:$0xff] %v1822
      %2015 = vst [vmem:[#allocation3 + $0x3c8] sm:$0xff] %v1823
      %2016 = vst [vmem:[#allocation3 + $0x3d0] sm:$0xff] %v1824
      %2017 = vst [vmem:[#allocation3 + $0x3d8] sm:$0xff] %v1825
      %2018 = vst [vmem:[#allocation3 + $0x3e0] sm:$0xff] %v1826
      %2019 = vst [vmem:[#allocation3 + $0x3e8] sm:$0xff] %v1827
      %2020 = vst [vmem:[#allocation3 + $0x3f0] sm:$0xff] %v1828
      %2021 = vst [vmem:[#allocation3 + $0x3f8] sm:$0xff] %v1829
      %2022 = vst [vmem:[#allocation3 + $0x400] sm:$0xff] %v1830
      %2023 = vst [vmem:[#allocation3 + $0x408] sm:$0xff] %v1831
      %2024 = vst [vmem:[#allocation3 + $0x410] sm:$0xff] %v1832
      %2025 = vst [vmem:[#allocation3 + $0x418] sm:$0xff] %v1833
      %2026 = vst [vmem:[#allocation3 + $0x420] sm:$0xff] %v1834
      %2027 = vst [vmem:[#allocation3 + $0x428] sm:$0xff] %v1835
      %2028 = vst [vmem:[#allocation3 + $0x430] sm:$0xff] %v1836
      %2029 = vst [vmem:[#allocation3 + $0x438] sm:$0xff] %v1837
      %2030 = vst [vmem:[#allocation3 + $0x440] sm:$0xff] %v1838
      %2031 = vst [vmem:[#allocation3 + $0x448] sm:$0xff] %v1839
      %2032 = vst [vmem:[#allocation3 + $0x450] sm:$0xff] %v1840
      %2033 = vst [vmem:[#allocation3 + $0x458] sm:$0xff] %v1841
      %2034 = vst [vmem:[#allocation3 + $0x460] sm:$0xff] %v1842
      %2035 = vst [vmem:[#allocation3 + $0x468] sm:$0xff] %v1843
      %2036 = vst [vmem:[#allocation3 + $0x470] sm:$0xff] %v1844
      %2037 = vst [vmem:[#allocation3 + $0x478] sm:$0xff] %v1845
      %2038 = vst [vmem:[#allocation3 + $0x480] sm:$0xff] %v1846
      %2039 = vst [vmem:[#allocation3 + $0x488] sm:$0xff] %v1847
      %2040 = vst [vmem:[#allocation3 + $0x490] sm:$0xff] %v1848
      %2041 = vst [vmem:[#allocation3 + $0x498] sm:$0xff] %v1849
      %2042 = vst [vmem:[#allocation3 + $0x4a0] sm:$0xff] %v1850
      %2043 = vst [vmem:[#allocation3 + $0x4a8] sm:$0xff] %v1851
      %2044 = vst [vmem:[#allocation3 + $0x4b0] sm:$0xff] %v1852
      %2045 = vst [vmem:[#allocation3 + $0x4b8] sm:$0xff] %v1853
      %2046 = vst [vmem:[#allocation3 + $0x4c0] sm:$0xff] %v1854
      %2047 = vst [vmem:[#allocation3 + $0x4c8] sm:$0xff] %v1855
      %2048 = vst [vmem:[#allocation3 + $0x4d0] sm:$0xff] %v1856
      %2049 = vst [vmem:[#allocation3 + $0x4d8] sm:$0xff] %v1857
      %2050 = vst [vmem:[#allocation3 + $0x4e0] sm:$0xff] %v1858
      %2051 = vst [vmem:[#allocation3 + $0x4e8] sm:$0xff] %v1859
      %2052 = vst [vmem:[#allocation3 + $0x4f0] sm:$0xff] %v1860
      %2053 = vst [vmem:[#allocation3 + $0x4f8] sm:$0xff] %v1861
      %2054 = vst [vmem:[#allocation3 + $0x500] sm:$0xff] %v1862
      %2055 = vst [vmem:[#allocation3 + $0x508] sm:$0xff] %v1863
      %2056 = vst [vmem:[#allocation3 + $0x510] sm:$0xff] %v1864
      %2057 = vst [vmem:[#allocation3 + $0x518] sm:$0xff] %v1865
      %2058 = vst [vmem:[#allocation3 + $0x520] sm:$0xff] %v1866
      %2059 = vst [vmem:[#allocation3 + $0x528] sm:$0xff] %v1867
      %2060 = vst [vmem:[#allocation3 + $0x530] sm:$0xff] %v1868
      %2061 = vst [vmem:[#allocation3 + $0x538] sm:$0xff] %v1869
      %2062 = vst [vmem:[#allocation3 + $0x540] sm:$0xff] %v1870
      %2063 = vst [vmem:[#allocation3 + $0x548] sm:$0xff] %v1871
      %2064 = vst [vmem:[#allocation3 + $0x550] sm:$0xff] %v1872
      %2065 = vst [vmem:[#allocation3 + $0x558] sm:$0xff] %v1873
      %2066 = vst [vmem:[#allocation3 + $0x560] sm:$0xff] %v1874
      %2067 = vst [vmem:[#allocation3 + $0x568] sm:$0xff] %v1875
      %2068 = vst [vmem:[#allocation3 + $0x570] sm:$0xff] %v1876
      %2069 = vst [vmem:[#allocation3 + $0x578] sm:$0xff] %v1877
      %2070 = vst [vmem:[#allocation3 + $0x580] sm:$0xff] %v1878
      %2071 = vst [vmem:[#allocation3 + $0x588] sm:$0xff] %v1879
      %2072 = vst [vmem:[#allocation3 + $0x590] sm:$0xff] %v1880
      %2073 = vst [vmem:[#allocation3 + $0x598] sm:$0xff] %v1881
      %2074 = vst [vmem:[#allocation3 + $0x5a0] sm:$0xff] %v1882
      %2075 = vst [vmem:[#allocation3 + $0x5a8] sm:$0xff] %v1883
      %2076 = vst [vmem:[#allocation3 + $0x5b0] sm:$0xff] %v1884
      %2077 = vst [vmem:[#allocation3 + $0x5b8] sm:$0xff] %v1885
      %2078 = vst [vmem:[#allocation3 + $0x5c0] sm:$0xff] %v1886
      %2079 = vst [vmem:[#allocation3 + $0x5c8] sm:$0xff] %v1887
      %2080 = vst [vmem:[#allocation3 + $0x5d0] sm:$0xff] %v1888
      %2081 = vst [vmem:[#allocation3 + $0x5d8] sm:$0xff] %v1889
      %2082 = vst [vmem:[#allocation3 + $0x5e0] sm:$0xff] %v1890
      %2083 = vst [vmem:[#allocation3 + $0x5e8] sm:$0xff] %v1891
      %2084 = vst [vmem:[#allocation3 + $0x5f0] sm:$0xff] %v1892
      %2085 = vst [vmem:[#allocation3 + $0x5f8] sm:$0xff] %v1893
    $region89: #{my_model_forward.1} parent=1 // pred_fallthru
      _
    %v2086 = vld [vmem:[%s0] sm:$0xff]
    %v2087 = vld [vmem:[%s0 + $0x8] sm:$0xff]
    %v2088 = vld [vmem:[%s0 + $0x10] sm:$0xff]
    %v2089 = vld [vmem:[%s0 + $0x18] sm:$0xff]
    %v2090 = vld [vmem:[%s0 + $0x20] sm:$0xff]
    %v2091 = vld [vmem:[%s0 + $0x28] sm:$0xff]
    %v2092 = vld [vmem:[%s0 + $0x30] sm:$0xff]
    %v2093 = vld [vmem:[%s0 + $0x38] sm:$0xff]
    %v2094 = vld [vmem:[%s0 + $0x40] sm:$0xff]
    %v2095 = vld [vmem:[%s0 + $0x48] sm:$0xff]
    %v2096 = vld [vmem:[%s0 + $0x50] sm:$0xff]
    %v2097 = vld [vmem:[%s0 + $0x58] sm:$0xff]
    %v2098 = vld [vmem:[%s0 + $0x60] sm:$0xff]
    %v2099 = vld [vmem:[%s0 + $0x68] sm:$0xff]
    %v2100 = vld [vmem:[%s0 + $0x70] sm:$0xff]
    %v2101 = vld [vmem:[%s0 + $0x78] sm:$0xff]
    %v2102 = vld [vmem:[%s0 + $0x80] sm:$0xff]
    %v2103 = vld [vmem:[%s0 + $0x88] sm:$0xff]
    %v2104 = vld [vmem:[%s0 + $0x90] sm:$0xff]
    %v2105 = vld [vmem:[%s0 + $0x98] sm:$0xff]
    %v2106 = vld [vmem:[%s0 + $0xa0] sm:$0xff]
    %v2107 = vld [vmem:[%s0 + $0xa8] sm:$0xff]
    %v2108 = vld [vmem:[%s0 + $0xb0] sm:$0xff]
    %v2109 = vld [vmem:[%s0 + $0xb8] sm:$0xff]
    %v2110 = vld [vmem:[%s0 + $0xc0] sm:$0xff]
    %v2111 = vld [vmem:[%s0 + $0xc8] sm:$0xff]
    %v2112 = vld [vmem:[%s0 + $0xd0] sm:$0xff]
    %v2113 = vld [vmem:[%s0 + $0xd8] sm:$0xff]
    %v2114 = vld [vmem:[%s0 + $0xe0] sm:$0xff]
    %v2115 = vld [vmem:[%s0 + $0xe8] sm:$0xff]
    %v2116 = vld [vmem:[%s0 + $0xf0] sm:$0xff]
    %v2117 = vld [vmem:[%s0 + $0xf8] sm:$0xff]
    %v2118 = vld [vmem:[%s0 + $0x100] sm:$0xff]
    %v2119 = vld [vmem:[%s0 + $0x108] sm:$0xff]
    %v2120 = vld [vmem:[%s0 + $0x110] sm:$0xff]
    %v2121 = vld [vmem:[%s0 + $0x118] sm:$0xff]
    %v2122 = vld [vmem:[%s0 + $0x120] sm:$0xff]
    %v2123 = vld [vmem:[%s0 + $0x128] sm:$0xff]
    %v2124 = vld [vmem:[%s0 + $0x130] sm:$0xff]
    %v2125 = vld [vmem:[%s0 + $0x138] sm:$0xff]
    %v2126 = vld [vmem:[%s0 + $0x140] sm:$0xff]
    %v2127 = vld [vmem:[%s0 + $0x148] sm:$0xff]
    %v2128 = vld [vmem:[%s0 + $0x150] sm:$0xff]
    %v2129 = vld [vmem:[%s0 + $0x158] sm:$0xff]
    %v2130 = vld [vmem:[%s0 + $0x160] sm:$0xff]
    %v2131 = vld [vmem:[%s0 + $0x168] sm:$0xff]
    %v2132 = vld [vmem:[%s0 + $0x170] sm:$0xff]
    %v2133 = vld [vmem:[%s0 + $0x178] sm:$0xff]
    %v2134 = vld [vmem:[%s0 + $0x180] sm:$0xff]
    %v2135 = vld [vmem:[%s0 + $0x188] sm:$0xff]
    %v2136 = vld [vmem:[%s0 + $0x190] sm:$0xff]
    %v2137 = vld [vmem:[%s0 + $0x198] sm:$0xff]
    %v2138 = vld [vmem:[%s0 + $0x1a0] sm:$0xff]
    %v2139 = vld [vmem:[%s0 + $0x1a8] sm:$0xff]
    %v2140 = vld [vmem:[%s0 + $0x1b0] sm:$0xff]
    %v2141 = vld [vmem:[%s0 + $0x1b8] sm:$0xff]
    %v2142 = vld [vmem:[%s0 + $0x1c0] sm:$0xff]
    %v2143 = vld [vmem:[%s0 + $0x1c8] sm:$0xff]
    %v2144 = vld [vmem:[%s0 + $0x1d0] sm:$0xff]
    %v2145 = vld [vmem:[%s0 + $0x1d8] sm:$0xff]
    %v2146 = vld [vmem:[%s0 + $0x1e0] sm:$0xff]
    %v2147 = vld [vmem:[%s0 + $0x1e8] sm:$0xff]
    %v2148 = vld [vmem:[%s0 + $0x1f0] sm:$0xff]
    %v2149 = vld [vmem:[%s0 + $0x1f8] sm:$0xff]
    %v2150 = vld [vmem:[%s0 + $0x200] sm:$0xff]
    %v2151 = vld [vmem:[%s0 + $0x208] sm:$0xff]
    %v2152 = vld [vmem:[%s0 + $0x210] sm:$0xff]
    %v2153 = vld [vmem:[%s0 + $0x218] sm:$0xff]
    %v2154 = vld [vmem:[%s0 + $0x220] sm:$0xff]
    %v2155 = vld [vmem:[%s0 + $0x228] sm:$0xff]
    %v2156 = vld [vmem:[%s0 + $0x230] sm:$0xff]
    %v2157 = vld [vmem:[%s0 + $0x238] sm:$0xff]
    %v2158 = vld [vmem:[%s0 + $0x240] sm:$0xff]
    %v2159 = vld [vmem:[%s0 + $0x248] sm:$0xff]
    %v2160 = vld [vmem:[%s0 + $0x250] sm:$0xff]
    %v2161 = vld [vmem:[%s0 + $0x258] sm:$0xff]
    %v2162 = vld [vmem:[%s0 + $0x260] sm:$0xff]
    %v2163 = vld [vmem:[%s0 + $0x268] sm:$0xff]
    %v2164 = vld [vmem:[%s0 + $0x270] sm:$0xff]
    %v2165 = vld [vmem:[%s0 + $0x278] sm:$0xff]
    %v2166 = vld [vmem:[%s0 + $0x280] sm:$0xff]
    %v2167 = vld [vmem:[%s0 + $0x288] sm:$0xff]
    %v2168 = vld [vmem:[%s0 + $0x290] sm:$0xff]
    %v2169 = vld [vmem:[%s0 + $0x298] sm:$0xff]
    %v2170 = vld [vmem:[%s0 + $0x2a0] sm:$0xff]
    %v2171 = vld [vmem:[%s0 + $0x2a8] sm:$0xff]
    %v2172 = vld [vmem:[%s0 + $0x2b0] sm:$0xff]
    %v2173 = vld [vmem:[%s0 + $0x2b8] sm:$0xff]
    %v2174 = vld [vmem:[%s0 + $0x2c0] sm:$0xff]
    %v2175 = vld [vmem:[%s0 + $0x2c8] sm:$0xff]
    %v2176 = vld [vmem:[%s0 + $0x2d0] sm:$0xff]
    %v2177 = vld [vmem:[%s0 + $0x2d8] sm:$0xff]
    %v2178 = vld [vmem:[%s0 + $0x2e0] sm:$0xff]
    %v2179 = vld [vmem:[%s0 + $0x2e8] sm:$0xff]
    %v2180 = vld [vmem:[%s0 + $0x2f0] sm:$0xff]
    %v2181 = vld [vmem:[%s0 + $0x2f8] sm:$0xff]
    %v2182 = vld [vmem:[#allocation2] sm:$0xff]
    %v2183 = vld [vmem:[#allocation2 + $0x8] sm:$0xff]
    %v2184 = vld [vmem:[#allocation2 + $0x10] sm:$0xff]
    %v2185 = vld [vmem:[#allocation2 + $0x18] sm:$0xff]
    %v2186 = vld [vmem:[#allocation2 + $0x20] sm:$0xff]
    %v2187 = vld [vmem:[#allocation2 + $0x28] sm:$0xff]
    %v2188 = vld [vmem:[#allocation2 + $0x30] sm:$0xff]
    %v2189 = vld [vmem:[#allocation2 + $0x38] sm:$0xff]
    %v2190 = vld [vmem:[#allocation2 + $0x40] sm:$0xff]
    %v2191 = vld [vmem:[#allocation2 + $0x48] sm:$0xff]
    %v2192 = vld [vmem:[#allocation2 + $0x50] sm:$0xff]
    %v2193 = vld [vmem:[#allocation2 + $0x58] sm:$0xff]
    %v2194 = vld [vmem:[#allocation2 + $0x60] sm:$0xff]
    %v2195 = vld [vmem:[#allocation2 + $0x68] sm:$0xff]
    %v2196 = vld [vmem:[#allocation2 + $0x70] sm:$0xff]
    %v2197 = vld [vmem:[#allocation2 + $0x78] sm:$0xff]
    %v2198 = vld [vmem:[#allocation2 + $0x80] sm:$0xff]
    %v2199 = vld [vmem:[#allocation2 + $0x88] sm:$0xff]
    %v2200 = vld [vmem:[#allocation2 + $0x90] sm:$0xff]
    %v2201 = vld [vmem:[#allocation2 + $0x98] sm:$0xff]
    %v2202 = vld [vmem:[#allocation2 + $0xa0] sm:$0xff]
    %v2203 = vld [vmem:[#allocation2 + $0xa8] sm:$0xff]
    %v2204 = vld [vmem:[#allocation2 + $0xb0] sm:$0xff]
    %v2205 = vld [vmem:[#allocation2 + $0xb8] sm:$0xff]
    %v2206 = vld [vmem:[#allocation2 + $0xc0] sm:$0xff]
    %v2207 = vld [vmem:[#allocation2 + $0xc8] sm:$0xff]
    %v2208 = vld [vmem:[#allocation2 + $0xd0] sm:$0xff]
    %v2209 = vld [vmem:[#allocation2 + $0xd8] sm:$0xff]
    %v2210 = vld [vmem:[#allocation2 + $0xe0] sm:$0xff]
    %v2211 = vld [vmem:[#allocation2 + $0xe8] sm:$0xff]
    %v2212 = vld [vmem:[#allocation2 + $0xf0] sm:$0xff]
    %v2213 = vld [vmem:[#allocation2 + $0xf8] sm:$0xff]
    %v2214 = vld [vmem:[#allocation2 + $0x100] sm:$0xff]
    %v2215 = vld [vmem:[#allocation2 + $0x108] sm:$0xff]
    %v2216 = vld [vmem:[#allocation2 + $0x110] sm:$0xff]
    %v2217 = vld [vmem:[#allocation2 + $0x118] sm:$0xff]
    %v2218 = vld [vmem:[#allocation2 + $0x120] sm:$0xff]
    %v2219 = vld [vmem:[#allocation2 + $0x128] sm:$0xff]
    %v2220 = vld [vmem:[#allocation2 + $0x130] sm:$0xff]
    %v2221 = vld [vmem:[#allocation2 + $0x138] sm:$0xff]
    %v2222 = vld [vmem:[#allocation2 + $0x140] sm:$0xff]
    %v2223 = vld [vmem:[#allocation2 + $0x148] sm:$0xff]
    %v2224 = vld [vmem:[#allocation2 + $0x150] sm:$0xff]
    %v2225 = vld [vmem:[#allocation2 + $0x158] sm:$0xff]
    %v2226 = vld [vmem:[#allocation2 + $0x160] sm:$0xff]
    %v2227 = vld [vmem:[#allocation2 + $0x168] sm:$0xff]
    %v2228 = vld [vmem:[#allocation2 + $0x170] sm:$0xff]
    %v2229 = vld [vmem:[#allocation2 + $0x178] sm:$0xff]
    %v2230 = vld [vmem:[#allocation2 + $0x180] sm:$0xff]
    %v2231 = vld [vmem:[#allocation2 + $0x188] sm:$0xff]
    %v2232 = vld [vmem:[#allocation2 + $0x190] sm:$0xff]
    %v2233 = vld [vmem:[#allocation2 + $0x198] sm:$0xff]
    %v2234 = vld [vmem:[#allocation2 + $0x1a0] sm:$0xff]
    %v2235 = vld [vmem:[#allocation2 + $0x1a8] sm:$0xff]
    %v2236 = vld [vmem:[#allocation2 + $0x1b0] sm:$0xff]
    %v2237 = vld [vmem:[#allocation2 + $0x1b8] sm:$0xff]
    %v2238 = vld [vmem:[#allocation2 + $0x1c0] sm:$0xff]
    %v2239 = vld [vmem:[#allocation2 + $0x1c8] sm:$0xff]
    %v2240 = vld [vmem:[#allocation2 + $0x1d0] sm:$0xff]
    %v2241 = vld [vmem:[#allocation2 + $0x1d8] sm:$0xff]
    %v2242 = vld [vmem:[#allocation2 + $0x1e0] sm:$0xff]
    %v2243 = vld [vmem:[#allocation2 + $0x1e8] sm:$0xff]
    %v2244 = vld [vmem:[#allocation2 + $0x1f0] sm:$0xff]
    %v2245 = vld [vmem:[#allocation2 + $0x1f8] sm:$0xff]
    %v2246 = vld [vmem:[#allocation2 + $0x200] sm:$0xff]
    %v2247 = vld [vmem:[#allocation2 + $0x208] sm:$0xff]
    %v2248 = vld [vmem:[#allocation2 + $0x210] sm:$0xff]
    %v2249 = vld [vmem:[#allocation2 + $0x218] sm:$0xff]
    %v2250 = vld [vmem:[#allocation2 + $0x220] sm:$0xff]
    %v2251 = vld [vmem:[#allocation2 + $0x228] sm:$0xff]
    %v2252 = vld [vmem:[#allocation2 + $0x230] sm:$0xff]
    %v2253 = vld [vmem:[#allocation2 + $0x238] sm:$0xff]
    %v2254 = vld [vmem:[#allocation2 + $0x240] sm:$0xff]
    %v2255 = vld [vmem:[#allocation2 + $0x248] sm:$0xff]
    %v2256 = vld [vmem:[#allocation2 + $0x250] sm:$0xff]
    %v2257 = vld [vmem:[#allocation2 + $0x258] sm:$0xff]
    %v2258 = vld [vmem:[#allocation2 + $0x260] sm:$0xff]
    %v2259 = vld [vmem:[#allocation2 + $0x268] sm:$0xff]
    %v2260 = vld [vmem:[#allocation2 + $0x270] sm:$0xff]
    %v2261 = vld [vmem:[#allocation2 + $0x278] sm:$0xff]
    %v2262 = vld [vmem:[#allocation2 + $0x280] sm:$0xff]
    %v2263 = vld [vmem:[#allocation2 + $0x288] sm:$0xff]
    %v2264 = vld [vmem:[#allocation2 + $0x290] sm:$0xff]
    %v2265 = vld [vmem:[#allocation2 + $0x298] sm:$0xff]
    %v2266 = vld [vmem:[#allocation2 + $0x2a0] sm:$0xff]
    %v2267 = vld [vmem:[#allocation2 + $0x2a8] sm:$0xff]
    %v2268 = vld [vmem:[#allocation2 + $0x2b0] sm:$0xff]
    %v2269 = vld [vmem:[#allocation2 + $0x2b8] sm:$0xff]
    %v2270 = vld [vmem:[#allocation2 + $0x2c0] sm:$0xff]
    %v2271 = vld [vmem:[#allocation2 + $0x2c8] sm:$0xff]
    %v2272 = vld [vmem:[#allocation2 + $0x2d0] sm:$0xff]
    %v2273 = vld [vmem:[#allocation2 + $0x2d8] sm:$0xff]
    %v2274 = vld [vmem:[#allocation2 + $0x2e0] sm:$0xff]
    %v2275 = vld [vmem:[#allocation2 + $0x2e8] sm:$0xff]
    %v2276 = vld [vmem:[#allocation2 + $0x2f0] sm:$0xff]
    %v2277 = vld [vmem:[#allocation2 + $0x2f8] sm:$0xff]
    %v2278 = vld [vmem:[#allocation2 + $0x300] sm:$0xff]
    %v2279 = vld [vmem:[#allocation2 + $0x308] sm:$0xff]
    %v2280 = vld [vmem:[#allocation2 + $0x310] sm:$0xff]
    %v2281 = vld [vmem:[#allocation2 + $0x318] sm:$0xff]
    %v2282 = vld [vmem:[#allocation2 + $0x320] sm:$0xff]
    %v2283 = vld [vmem:[#allocation2 + $0x328] sm:$0xff]
    %v2284 = vld [vmem:[#allocation2 + $0x330] sm:$0xff]
    %v2285 = vld [vmem:[#allocation2 + $0x338] sm:$0xff]
    %v2286 = vld [vmem:[#allocation2 + $0x340] sm:$0xff]
    %v2287 = vld [vmem:[#allocation2 + $0x348] sm:$0xff]
    %v2288 = vld [vmem:[#allocation2 + $0x350] sm:$0xff]
    %v2289 = vld [vmem:[#allocation2 + $0x358] sm:$0xff]
    %v2290 = vld [vmem:[#allocation2 + $0x360] sm:$0xff]
    %v2291 = vld [vmem:[#allocation2 + $0x368] sm:$0xff]
    %v2292 = vld [vmem:[#allocation2 + $0x370] sm:$0xff]
    %v2293 = vld [vmem:[#allocation2 + $0x378] sm:$0xff]
    %v2294 = vld [vmem:[#allocation2 + $0x380] sm:$0xff]
    %v2295 = vld [vmem:[#allocation2 + $0x388] sm:$0xff]
    %v2296 = vld [vmem:[#allocation2 + $0x390] sm:$0xff]
    %v2297 = vld [vmem:[#allocation2 + $0x398] sm:$0xff]
    %v2298 = vld [vmem:[#allocation2 + $0x3a0] sm:$0xff]
    %v2299 = vld [vmem:[#allocation2 + $0x3a8] sm:$0xff]
    %v2300 = vld [vmem:[#allocation2 + $0x3b0] sm:$0xff]
    %v2301 = vld [vmem:[#allocation2 + $0x3b8] sm:$0xff]
    %v2302 = vld [vmem:[#allocation2 + $0x3c0] sm:$0xff]
    %v2303 = vld [vmem:[#allocation2 + $0x3c8] sm:$0xff]
    %v2304 = vld [vmem:[#allocation2 + $0x3d0] sm:$0xff]
    %v2305 = vld [vmem:[#allocation2 + $0x3d8] sm:$0xff]
    %v2306 = vld [vmem:[#allocation2 + $0x3e0] sm:$0xff]
    %v2307 = vld [vmem:[#allocation2 + $0x3e8] sm:$0xff]
    %v2308 = vld [vmem:[#allocation2 + $0x3f0] sm:$0xff]
    %v2309 = vld [vmem:[#allocation2 + $0x3f8] sm:$0xff]
    %v2310 = vld [vmem:[#allocation2 + $0x400] sm:$0xff]
    %v2311 = vld [vmem:[#allocation2 + $0x408] sm:$0xff]
    %v2312 = vld [vmem:[#allocation2 + $0x410] sm:$0xff]
    %v2313 = vld [vmem:[#allocation2 + $0x418] sm:$0xff]
    %v2314 = vld [vmem:[#allocation2 + $0x420] sm:$0xff]
    %v2315 = vld [vmem:[#allocation2 + $0x428] sm:$0xff]
    %v2316 = vld [vmem:[#allocation2 + $0x430] sm:$0xff]
    %v2317 = vld [vmem:[#allocation2 + $0x438] sm:$0xff]
    %v2318 = vld [vmem:[#allocation2 + $0x440] sm:$0xff]
    %v2319 = vld [vmem:[#allocation2 + $0x448] sm:$0xff]
    %v2320 = vld [vmem:[#allocation2 + $0x450] sm:$0xff]
    %v2321 = vld [vmem:[#allocation2 + $0x458] sm:$0xff]
    %v2322 = vld [vmem:[#allocation2 + $0x460] sm:$0xff]
    %v2323 = vld [vmem:[#allocation2 + $0x468] sm:$0xff]
    %v2324 = vld [vmem:[#allocation2 + $0x470] sm:$0xff]
    %v2325 = vld [vmem:[#allocation2 + $0x478] sm:$0xff]
    %v2326 = vld [vmem:[#allocation2 + $0x480] sm:$0xff]
    %v2327 = vld [vmem:[#allocation2 + $0x488] sm:$0xff]
    %v2328 = vld [vmem:[#allocation2 + $0x490] sm:$0xff]
    %v2329 = vld [vmem:[#allocation2 + $0x498] sm:$0xff]
    %v2330 = vld [vmem:[#allocation2 + $0x4a0] sm:$0xff]
    %v2331 = vld [vmem:[#allocation2 + $0x4a8] sm:$0xff]
    %v2332 = vld [vmem:[#allocation2 + $0x4b0] sm:$0xff]
    %v2333 = vld [vmem:[#allocation2 + $0x4b8] sm:$0xff]
    %v2334 = vld [vmem:[#allocation2 + $0x4c0] sm:$0xff]
    %v2335 = vld [vmem:[#allocation2 + $0x4c8] sm:$0xff]
    %v2336 = vld [vmem:[#allocation2 + $0x4d0] sm:$0xff]
    %v2337 = vld [vmem:[#allocation2 + $0x4d8] sm:$0xff]
    %v2338 = vld [vmem:[#allocation2 + $0x4e0] sm:$0xff]
    %v2339 = vld [vmem:[#allocation2 + $0x4e8] sm:$0xff]
    %v2340 = vld [vmem:[#allocation2 + $0x4f0] sm:$0xff]
    %v2341 = vld [vmem:[#allocation2 + $0x4f8] sm:$0xff]
    %v2342 = vld [vmem:[#allocation2 + $0x500] sm:$0xff]
    %v2343 = vld [vmem:[#allocation2 + $0x508] sm:$0xff]
    %v2344 = vld [vmem:[#allocation2 + $0x510] sm:$0xff]
    %v2345 = vld [vmem:[#allocation2 + $0x518] sm:$0xff]
    %v2346 = vld [vmem:[#allocation2 + $0x520] sm:$0xff]
    %v2347 = vld [vmem:[#allocation2 + $0x528] sm:$0xff]
    %v2348 = vld [vmem:[#allocation2 + $0x530] sm:$0xff]
    %v2349 = vld [vmem:[#allocation2 + $0x538] sm:$0xff]
    %v2350 = vld [vmem:[#allocation2 + $0x540] sm:$0xff]
    %v2351 = vld [vmem:[#allocation2 + $0x548] sm:$0xff]
    %v2352 = vld [vmem:[#allocation2 + $0x550] sm:$0xff]
    %v2353 = vld [vmem:[#allocation2 + $0x558] sm:$0xff]
    %v2354 = vld [vmem:[#allocation2 + $0x560] sm:$0xff]
    %v2355 = vld [vmem:[#allocation2 + $0x568] sm:$0xff]
    %v2356 = vld [vmem:[#allocation2 + $0x570] sm:$0xff]
    %v2357 = vld [vmem:[#allocation2 + $0x578] sm:$0xff]
    %v2358 = vld [vmem:[#allocation2 + $0x580] sm:$0xff]
    %v2359 = vld [vmem:[#allocation2 + $0x588] sm:$0xff]
    %v2360 = vld [vmem:[#allocation2 + $0x590] sm:$0xff]
    %v2361 = vld [vmem:[#allocation2 + $0x598] sm:$0xff]
    %v2362 = vld [vmem:[#allocation2 + $0x5a0] sm:$0xff]
    %v2363 = vld [vmem:[#allocation2 + $0x5a8] sm:$0xff]
    %v2364 = vld [vmem:[#allocation2 + $0x5b0] sm:$0xff]
    %v2365 = vld [vmem:[#allocation2 + $0x5b8] sm:$0xff]
    %v2366 = vld [vmem:[#allocation2 + $0x5c0] sm:$0xff]
    %v2367 = vld [vmem:[#allocation2 + $0x5c8] sm:$0xff]
    %v2368 = vld [vmem:[#allocation2 + $0x5d0] sm:$0xff]
    %v2369 = vld [vmem:[#allocation2 + $0x5d8] sm:$0xff]
    %v2370 = vld [vmem:[#allocation2 + $0x5e0] sm:$0xff]
    %v2371 = vld [vmem:[#allocation2 + $0x5e8] sm:$0xff]
    %v2372 = vld [vmem:[#allocation2 + $0x5f0] sm:$0xff]
    %v2373 = vld [vmem:[#allocation2 + $0x5f8] sm:$0xff]
    %v2374 = vld [vmem:[#allocation2 + $0x600] sm:$0xff]
    %v2375 = vld [vmem:[#allocation2 + $0x608] sm:$0xff]
    %v2376 = vld [vmem:[#allocation2 + $0x610] sm:$0xff]
    %v2377 = vld [vmem:[#allocation2 + $0x618] sm:$0xff]
    %v2378 = vld [vmem:[#allocation2 + $0x620] sm:$0xff]
    %v2379 = vld [vmem:[#allocation2 + $0x628] sm:$0xff]
    %v2380 = vld [vmem:[#allocation2 + $0x630] sm:$0xff]
    %v2381 = vld [vmem:[#allocation2 + $0x638] sm:$0xff]
    %v2382 = vld [vmem:[#allocation2 + $0x640] sm:$0xff]
    %v2383 = vld [vmem:[#allocation2 + $0x648] sm:$0xff]
    %v2384 = vld [vmem:[#allocation2 + $0x650] sm:$0xff]
    %v2385 = vld [vmem:[#allocation2 + $0x658] sm:$0xff]
    %v2386 = vld [vmem:[#allocation2 + $0x660] sm:$0xff]
    %v2387 = vld [vmem:[#allocation2 + $0x668] sm:$0xff]
    %v2388 = vld [vmem:[#allocation2 + $0x670] sm:$0xff]
    %v2389 = vld [vmem:[#allocation2 + $0x678] sm:$0xff]
    %v2390 = vld [vmem:[#allocation2 + $0x680] sm:$0xff]
    %v2391 = vld [vmem:[#allocation2 + $0x688] sm:$0xff]
    %v2392 = vld [vmem:[#allocation2 + $0x690] sm:$0xff]
    %v2393 = vld [vmem:[#allocation2 + $0x698] sm:$0xff]
    %v2394 = vld [vmem:[#allocation2 + $0x6a0] sm:$0xff]
    %v2395 = vld [vmem:[#allocation2 + $0x6a8] sm:$0xff]
    %v2396 = vld [vmem:[#allocation2 + $0x6b0] sm:$0xff]
    %v2397 = vld [vmem:[#allocation2 + $0x6b8] sm:$0xff]
    %v2398 = vld [vmem:[#allocation2 + $0x6c0] sm:$0xff]
    %v2399 = vld [vmem:[#allocation2 + $0x6c8] sm:$0xff]
    %v2400 = vld [vmem:[#allocation2 + $0x6d0] sm:$0xff]
    %v2401 = vld [vmem:[#allocation2 + $0x6d8] sm:$0xff]
    %v2402 = vld [vmem:[#allocation2 + $0x6e0] sm:$0xff]
    %v2403 = vld [vmem:[#allocation2 + $0x6e8] sm:$0xff]
    %v2404 = vld [vmem:[#allocation2 + $0x6f0] sm:$0xff]
    %v2405 = vld [vmem:[#allocation2 + $0x6f8] sm:$0xff]
    %v2406 = vld [vmem:[#allocation2 + $0x700] sm:$0xff]
    %v2407 = vld [vmem:[#allocation2 + $0x708] sm:$0xff]
    %v2408 = vld [vmem:[#allocation2 + $0x710] sm:$0xff]
    %v2409 = vld [vmem:[#allocation2 + $0x718] sm:$0xff]
    %v2410 = vld [vmem:[#allocation2 + $0x720] sm:$0xff]
    %v2411 = vld [vmem:[#allocation2 + $0x728] sm:$0xff]
    %v2412 = vld [vmem:[#allocation2 + $0x730] sm:$0xff]
    %v2413 = vld [vmem:[#allocation2 + $0x738] sm:$0xff]
    %v2414 = vld [vmem:[#allocation2 + $0x740] sm:$0xff]
    %v2415 = vld [vmem:[#allocation2 + $0x748] sm:$0xff]
    %v2416 = vld [vmem:[#allocation2 + $0x750] sm:$0xff]
    %v2417 = vld [vmem:[#allocation2 + $0x758] sm:$0xff]
    %v2418 = vld [vmem:[#allocation2 + $0x760] sm:$0xff]
    %v2419 = vld [vmem:[#allocation2 + $0x768] sm:$0xff]
    %v2420 = vld [vmem:[#allocation2 + $0x770] sm:$0xff]
    %v2421 = vld [vmem:[#allocation2 + $0x778] sm:$0xff]
    %v2422 = vld [vmem:[#allocation2 + $0x780] sm:$0xff]
    %v2423 = vld [vmem:[#allocation2 + $0x788] sm:$0xff]
    %v2424 = vld [vmem:[#allocation2 + $0x790] sm:$0xff]
    %v2425 = vld [vmem:[#allocation2 + $0x798] sm:$0xff]
    %v2426 = vld [vmem:[#allocation2 + $0x7a0] sm:$0xff]
    %v2427 = vld [vmem:[#allocation2 + $0x7a8] sm:$0xff]
    %v2428 = vld [vmem:[#allocation2 + $0x7b0] sm:$0xff]
    %v2429 = vld [vmem:[#allocation2 + $0x7b8] sm:$0xff]
    %v2430 = vld [vmem:[#allocation2 + $0x7c0] sm:$0xff]
    %v2431 = vld [vmem:[#allocation2 + $0x7c8] sm:$0xff]
    %v2432 = vld [vmem:[#allocation2 + $0x7d0] sm:$0xff]
    %v2433 = vld [vmem:[#allocation2 + $0x7d8] sm:$0xff]
    %v2434 = vld [vmem:[#allocation2 + $0x7e0] sm:$0xff]
    %v2435 = vld [vmem:[#allocation2 + $0x7e8] sm:$0xff]
    %v2436 = vld [vmem:[#allocation2 + $0x7f0] sm:$0xff]
    %v2437 = vld [vmem:[#allocation2 + $0x7f8] sm:$0xff]
    %v2438 = vld [vmem:[#allocation2 + $0x800] sm:$0xff]
    %v2439 = vld [vmem:[#allocation2 + $0x808] sm:$0xff]
    %v2440 = vld [vmem:[#allocation2 + $0x810] sm:$0xff]
    %v2441 = vld [vmem:[#allocation2 + $0x818] sm:$0xff]
    %v2442 = vld [vmem:[#allocation2 + $0x820] sm:$0xff]
    %v2443 = vld [vmem:[#allocation2 + $0x828] sm:$0xff]
    %v2444 = vld [vmem:[#allocation2 + $0x830] sm:$0xff]
    %v2445 = vld [vmem:[#allocation2 + $0x838] sm:$0xff]
    %v2446 = vld [vmem:[#allocation2 + $0x840] sm:$0xff]
    %v2447 = vld [vmem:[#allocation2 + $0x848] sm:$0xff]
    %v2448 = vld [vmem:[#allocation2 + $0x850] sm:$0xff]
    %v2449 = vld [vmem:[#allocation2 + $0x858] sm:$0xff]
    %v2450 = vld [vmem:[#allocation2 + $0x860] sm:$0xff]
    %v2451 = vld [vmem:[#allocation2 + $0x868] sm:$0xff]
    %v2452 = vld [vmem:[#allocation2 + $0x870] sm:$0xff]
    %v2453 = vld [vmem:[#allocation2 + $0x878] sm:$0xff]
    %v2454 = vld [vmem:[#allocation2 + $0x880] sm:$0xff]
    %v2455 = vld [vmem:[#allocation2 + $0x888] sm:$0xff]
    %v2456 = vld [vmem:[#allocation2 + $0x890] sm:$0xff]
    %v2457 = vld [vmem:[#allocation2 + $0x898] sm:$0xff]
    %v2458 = vld [vmem:[#allocation2 + $0x8a0] sm:$0xff]
    %v2459 = vld [vmem:[#allocation2 + $0x8a8] sm:$0xff]
    %v2460 = vld [vmem:[#allocation2 + $0x8b0] sm:$0xff]
    %v2461 = vld [vmem:[#allocation2 + $0x8b8] sm:$0xff]
    %v2462 = vld [vmem:[#allocation2 + $0x8c0] sm:$0xff]
    %v2463 = vld [vmem:[#allocation2 + $0x8c8] sm:$0xff]
    %v2464 = vld [vmem:[#allocation2 + $0x8d0] sm:$0xff]
    %v2465 = vld [vmem:[#allocation2 + $0x8d8] sm:$0xff]
    %v2466 = vld [vmem:[#allocation2 + $0x8e0] sm:$0xff]
    %v2467 = vld [vmem:[#allocation2 + $0x8e8] sm:$0xff]
    %v2468 = vld [vmem:[#allocation2 + $0x8f0] sm:$0xff]
    %v2469 = vld [vmem:[#allocation2 + $0x8f8] sm:$0xff]
    %v2470 = vld [vmem:[#allocation2 + $0x900] sm:$0xff]
    %v2471 = vld [vmem:[#allocation2 + $0x908] sm:$0xff]
    %v2472 = vld [vmem:[#allocation2 + $0x910] sm:$0xff]
    %v2473 = vld [vmem:[#allocation2 + $0x918] sm:$0xff]
    %v2474 = vld [vmem:[#allocation2 + $0x920] sm:$0xff]
    %v2475 = vld [vmem:[#allocation2 + $0x928] sm:$0xff]
    %v2476 = vld [vmem:[#allocation2 + $0x930] sm:$0xff]
    %v2477 = vld [vmem:[#allocation2 + $0x938] sm:$0xff]
    %v2478 = vld [vmem:[#allocation2 + $0x940] sm:$0xff]
    %v2479 = vld [vmem:[#allocation2 + $0x948] sm:$0xff]
    %v2480 = vld [vmem:[#allocation2 + $0x950] sm:$0xff]
    %v2481 = vld [vmem:[#allocation2 + $0x958] sm:$0xff]
    %v2482 = vld [vmem:[#allocation2 + $0x960] sm:$0xff]
    %v2483 = vld [vmem:[#allocation2 + $0x968] sm:$0xff]
    %v2484 = vld [vmem:[#allocation2 + $0x970] sm:$0xff]
    %v2485 = vld [vmem:[#allocation2 + $0x978] sm:$0xff]
    %v2486 = vld [vmem:[#allocation2 + $0x980] sm:$0xff]
    %v2487 = vld [vmem:[#allocation2 + $0x988] sm:$0xff]
    %v2488 = vld [vmem:[#allocation2 + $0x990] sm:$0xff]
    %v2489 = vld [vmem:[#allocation2 + $0x998] sm:$0xff]
    %v2490 = vld [vmem:[#allocation2 + $0x9a0] sm:$0xff]
    %v2491 = vld [vmem:[#allocation2 + $0x9a8] sm:$0xff]
    %v2492 = vld [vmem:[#allocation2 + $0x9b0] sm:$0xff]
    %v2493 = vld [vmem:[#allocation2 + $0x9b8] sm:$0xff]
    %v2494 = vld [vmem:[#allocation2 + $0x9c0] sm:$0xff]
    %v2495 = vld [vmem:[#allocation2 + $0x9c8] sm:$0xff]
    %v2496 = vld [vmem:[#allocation2 + $0x9d0] sm:$0xff]
    %v2497 = vld [vmem:[#allocation2 + $0x9d8] sm:$0xff]
    %v2498 = vld [vmem:[#allocation2 + $0x9e0] sm:$0xff]
    %v2499 = vld [vmem:[#allocation2 + $0x9e8] sm:$0xff]
    %v2500 = vld [vmem:[#allocation2 + $0x9f0] sm:$0xff]
    %v2501 = vld [vmem:[#allocation2 + $0x9f8] sm:$0xff]
    %v2502 = vld [vmem:[#allocation2 + $0xa00] sm:$0xff]
    %v2503 = vld [vmem:[#allocation2 + $0xa08] sm:$0xff]
    %v2504 = vld [vmem:[#allocation2 + $0xa10] sm:$0xff]
    %v2505 = vld [vmem:[#allocation2 + $0xa18] sm:$0xff]
    %v2506 = vld [vmem:[#allocation2 + $0xa20] sm:$0xff]
    %v2507 = vld [vmem:[#allocation2 + $0xa28] sm:$0xff]
    %v2508 = vld [vmem:[#allocation2 + $0xa30] sm:$0xff]
    %v2509 = vld [vmem:[#allocation2 + $0xa38] sm:$0xff]
    %v2510 = vld [vmem:[#allocation2 + $0xa40] sm:$0xff]
    %v2511 = vld [vmem:[#allocation2 + $0xa48] sm:$0xff]
    %v2512 = vld [vmem:[#allocation2 + $0xa50] sm:$0xff]
    %v2513 = vld [vmem:[#allocation2 + $0xa58] sm:$0xff]
    %v2514 = vld [vmem:[#allocation2 + $0xa60] sm:$0xff]
    %v2515 = vld [vmem:[#allocation2 + $0xa68] sm:$0xff]
    %v2516 = vld [vmem:[#allocation2 + $0xa70] sm:$0xff]
    %v2517 = vld [vmem:[#allocation2 + $0xa78] sm:$0xff]
    %v2518 = vld [vmem:[#allocation2 + $0xa80] sm:$0xff]
    %v2519 = vld [vmem:[#allocation2 + $0xa88] sm:$0xff]
    %v2520 = vld [vmem:[#allocation2 + $0xa90] sm:$0xff]
    %v2521 = vld [vmem:[#allocation2 + $0xa98] sm:$0xff]
    %v2522 = vld [vmem:[#allocation2 + $0xaa0] sm:$0xff]
    %v2523 = vld [vmem:[#allocation2 + $0xaa8] sm:$0xff]
    %v2524 = vld [vmem:[#allocation2 + $0xab0] sm:$0xff]
    %v2525 = vld [vmem:[#allocation2 + $0xab8] sm:$0xff]
    %v2526 = vld [vmem:[#allocation2 + $0xac0] sm:$0xff]
    %v2527 = vld [vmem:[#allocation2 + $0xac8] sm:$0xff]
    %v2528 = vld [vmem:[#allocation2 + $0xad0] sm:$0xff]
    %v2529 = vld [vmem:[#allocation2 + $0xad8] sm:$0xff]
    %v2530 = vld [vmem:[#allocation2 + $0xae0] sm:$0xff]
    %v2531 = vld [vmem:[#allocation2 + $0xae8] sm:$0xff]
    %v2532 = vld [vmem:[#allocation2 + $0xaf0] sm:$0xff]
    %v2533 = vld [vmem:[#allocation2 + $0xaf8] sm:$0xff]
    %v2534 = vld [vmem:[#allocation2 + $0xb00] sm:$0xff]
    %v2535 = vld [vmem:[#allocation2 + $0xb08] sm:$0xff]
    %v2536 = vld [vmem:[#allocation2 + $0xb10] sm:$0xff]
    %v2537 = vld [vmem:[#allocation2 + $0xb18] sm:$0xff]
    %v2538 = vld [vmem:[#allocation2 + $0xb20] sm:$0xff]
    %v2539 = vld [vmem:[#allocation2 + $0xb28] sm:$0xff]
    %v2540 = vld [vmem:[#allocation2 + $0xb30] sm:$0xff]
    %v2541 = vld [vmem:[#allocation2 + $0xb38] sm:$0xff]
    %v2542 = vld [vmem:[#allocation2 + $0xb40] sm:$0xff]
    %v2543 = vld [vmem:[#allocation2 + $0xb48] sm:$0xff]
    %v2544 = vld [vmem:[#allocation2 + $0xb50] sm:$0xff]
    %v2545 = vld [vmem:[#allocation2 + $0xb58] sm:$0xff]
    %v2546 = vld [vmem:[#allocation2 + $0xb60] sm:$0xff]
    %v2547 = vld [vmem:[#allocation2 + $0xb68] sm:$0xff]
    %v2548 = vld [vmem:[#allocation2 + $0xb70] sm:$0xff]
    %v2549 = vld [vmem:[#allocation2 + $0xb78] sm:$0xff]
    %v2550 = vld [vmem:[#allocation2 + $0xb80] sm:$0xff]
    %v2551 = vld [vmem:[#allocation2 + $0xb88] sm:$0xff]
    %v2552 = vld [vmem:[#allocation2 + $0xb90] sm:$0xff]
    %v2553 = vld [vmem:[#allocation2 + $0xb98] sm:$0xff]
    %v2554 = vld [vmem:[#allocation2 + $0xba0] sm:$0xff]
    %v2555 = vld [vmem:[#allocation2 + $0xba8] sm:$0xff]
    %v2556 = vld [vmem:[#allocation2 + $0xbb0] sm:$0xff]
    %v2557 = vld [vmem:[#allocation2 + $0xbb8] sm:$0xff]
    %v2558 = vld [vmem:[#allocation2 + $0xbc0] sm:$0xff]
    %v2559 = vld [vmem:[#allocation2 + $0xbc8] sm:$0xff]
    %v2560 = vld [vmem:[#allocation2 + $0xbd0] sm:$0xff]
    %v2561 = vld [vmem:[#allocation2 + $0xbd8] sm:$0xff]
    %v2562 = vld [vmem:[#allocation2 + $0xbe0] sm:$0xff]
    %v2563 = vld [vmem:[#allocation2 + $0xbe8] sm:$0xff]
    %v2564 = vld [vmem:[#allocation2 + $0xbf0] sm:$0xff]
    %v2565 = vld [vmem:[#allocation2 + $0xbf8] sm:$0xff]
    %v2566 = vld [vmem:[#allocation2 + $0xc00] sm:$0xff]
    %v2567 = vld [vmem:[#allocation2 + $0xc08] sm:$0xff]
    %v2568 = vld [vmem:[#allocation2 + $0xc10] sm:$0xff]
    %v2569 = vld [vmem:[#allocation2 + $0xc18] sm:$0xff]
    %v2570 = vld [vmem:[#allocation2 + $0xc20] sm:$0xff]
    %v2571 = vld [vmem:[#allocation2 + $0xc28] sm:$0xff]
    %v2572 = vld [vmem:[#allocation2 + $0xc30] sm:$0xff]
    %v2573 = vld [vmem:[#allocation2 + $0xc38] sm:$0xff]
    %v2574 = vld [vmem:[#allocation2 + $0xc40] sm:$0xff]
    %v2575 = vld [vmem:[#allocation2 + $0xc48] sm:$0xff]
    %v2576 = vld [vmem:[#allocation2 + $0xc50] sm:$0xff]
    %v2577 = vld [vmem:[#allocation2 + $0xc58] sm:$0xff]
    %v2578 = vld [vmem:[#allocation2 + $0xc60] sm:$0xff]
    %v2579 = vld [vmem:[#allocation2 + $0xc68] sm:$0xff]
    %v2580 = vld [vmem:[#allocation2 + $0xc70] sm:$0xff]
    %v2581 = vld [vmem:[#allocation2 + $0xc78] sm:$0xff]
    %v2582 = vld [vmem:[#allocation2 + $0xc80] sm:$0xff]
    %v2583 = vld [vmem:[#allocation2 + $0xc88] sm:$0xff]
    %v2584 = vld [vmem:[#allocation2 + $0xc90] sm:$0xff]
    %v2585 = vld [vmem:[#allocation2 + $0xc98] sm:$0xff]
    %v2586 = vld [vmem:[#allocation2 + $0xca0] sm:$0xff]
    %v2587 = vld [vmem:[#allocation2 + $0xca8] sm:$0xff]
    %v2588 = vld [vmem:[#allocation2 + $0xcb0] sm:$0xff]
    %v2589 = vld [vmem:[#allocation2 + $0xcb8] sm:$0xff]
    %v2590 = vld [vmem:[#allocation2 + $0xcc0] sm:$0xff]
    %v2591 = vld [vmem:[#allocation2 + $0xcc8] sm:$0xff]
    %v2592 = vld [vmem:[#allocation2 + $0xcd0] sm:$0xff]
    %v2593 = vld [vmem:[#allocation2 + $0xcd8] sm:$0xff]
    %v2594 = vld [vmem:[#allocation2 + $0xce0] sm:$0xff]
    %v2595 = vld [vmem:[#allocation2 + $0xce8] sm:$0xff]
    %v2596 = vld [vmem:[#allocation2 + $0xcf0] sm:$0xff]
    %v2597 = vld [vmem:[#allocation2 + $0xcf8] sm:$0xff]
    %v2598 = vld [vmem:[#allocation2 + $0xd00] sm:$0xff]
    %v2599 = vld [vmem:[#allocation2 + $0xd08] sm:$0xff]
    %v2600 = vld [vmem:[#allocation2 + $0xd10] sm:$0xff]
    %v2601 = vld [vmem:[#allocation2 + $0xd18] sm:$0xff]
    %v2602 = vld [vmem:[#allocation2 + $0xd20] sm:$0xff]
    %v2603 = vld [vmem:[#allocation2 + $0xd28] sm:$0xff]
    %v2604 = vld [vmem:[#allocation2 + $0xd30] sm:$0xff]
    %v2605 = vld [vmem:[#allocation2 + $0xd38] sm:$0xff]
    %v2606 = vld [vmem:[#allocation2 + $0xd40] sm:$0xff]
    %v2607 = vld [vmem:[#allocation2 + $0xd48] sm:$0xff]
    %v2608 = vld [vmem:[#allocation2 + $0xd50] sm:$0xff]
    %v2609 = vld [vmem:[#allocation2 + $0xd58] sm:$0xff]
    %v2610 = vld [vmem:[#allocation2 + $0xd60] sm:$0xff]
    %v2611 = vld [vmem:[#allocation2 + $0xd68] sm:$0xff]
    %v2612 = vld [vmem:[#allocation2 + $0xd70] sm:$0xff]
    %v2613 = vld [vmem:[#allocation2 + $0xd78] sm:$0xff]
    %v2614 = vld [vmem:[#allocation2 + $0xd80] sm:$0xff]
    %v2615 = vld [vmem:[#allocation2 + $0xd88] sm:$0xff]
    %v2616 = vld [vmem:[#allocation2 + $0xd90] sm:$0xff]
    %v2617 = vld [vmem:[#allocation2 + $0xd98] sm:$0xff]
    %v2618 = vld [vmem:[#allocation2 + $0xda0] sm:$0xff]
    %v2619 = vld [vmem:[#allocation2 + $0xda8] sm:$0xff]
    %v2620 = vld [vmem:[#allocation2 + $0xdb0] sm:$0xff]
    %v2621 = vld [vmem:[#allocation2 + $0xdb8] sm:$0xff]
    %v2622 = vld [vmem:[#allocation2 + $0xdc0] sm:$0xff]
    %v2623 = vld [vmem:[#allocation2 + $0xdc8] sm:$0xff]
    %v2624 = vld [vmem:[#allocation2 + $0xdd0] sm:$0xff]
    %v2625 = vld [vmem:[#allocation2 + $0xdd8] sm:$0xff]
    %v2626 = vld [vmem:[#allocation2 + $0xde0] sm:$0xff]
    %v2627 = vld [vmem:[#allocation2 + $0xde8] sm:$0xff]
    %v2628 = vld [vmem:[#allocation2 + $0xdf0] sm:$0xff]
    %v2629 = vld [vmem:[#allocation2 + $0xdf8] sm:$0xff]
    %v2630 = vld [vmem:[#allocation2 + $0xe00] sm:$0xff]
    %v2631 = vld [vmem:[#allocation2 + $0xe08] sm:$0xff]
    %v2632 = vld [vmem:[#allocation2 + $0xe10] sm:$0xff]
    %v2633 = vld [vmem:[#allocation2 + $0xe18] sm:$0xff]
    %v2634 = vld [vmem:[#allocation2 + $0xe20] sm:$0xff]
    %v2635 = vld [vmem:[#allocation2 + $0xe28] sm:$0xff]
    %v2636 = vld [vmem:[#allocation2 + $0xe30] sm:$0xff]
    %v2637 = vld [vmem:[#allocation2 + $0xe38] sm:$0xff]
    %v2638 = vld [vmem:[#allocation2 + $0xe40] sm:$0xff]
    %v2639 = vld [vmem:[#allocation2 + $0xe48] sm:$0xff]
    %v2640 = vld [vmem:[#allocation2 + $0xe50] sm:$0xff]
    %v2641 = vld [vmem:[#allocation2 + $0xe58] sm:$0xff]
    %v2642 = vld [vmem:[#allocation2 + $0xe60] sm:$0xff]
    %v2643 = vld [vmem:[#allocation2 + $0xe68] sm:$0xff]
    %v2644 = vld [vmem:[#allocation2 + $0xe70] sm:$0xff]
    %v2645 = vld [vmem:[#allocation2 + $0xe78] sm:$0xff]
    %v2646 = vld [vmem:[#allocation2 + $0xe80] sm:$0xff]
    %v2647 = vld [vmem:[#allocation2 + $0xe88] sm:$0xff]
    %v2648 = vld [vmem:[#allocation2 + $0xe90] sm:$0xff]
    %v2649 = vld [vmem:[#allocation2 + $0xe98] sm:$0xff]
    %v2650 = vld [vmem:[#allocation2 + $0xea0] sm:$0xff]
    %v2651 = vld [vmem:[#allocation2 + $0xea8] sm:$0xff]
    %v2652 = vld [vmem:[#allocation2 + $0xeb0] sm:$0xff]
    %v2653 = vld [vmem:[#allocation2 + $0xeb8] sm:$0xff]
    %v2654 = vld [vmem:[#allocation2 + $0xec0] sm:$0xff]
    %v2655 = vld [vmem:[#allocation2 + $0xec8] sm:$0xff]
    %v2656 = vld [vmem:[#allocation2 + $0xed0] sm:$0xff]
    %v2657 = vld [vmem:[#allocation2 + $0xed8] sm:$0xff]
    %v2658 = vld [vmem:[#allocation2 + $0xee0] sm:$0xff]
    %v2659 = vld [vmem:[#allocation2 + $0xee8] sm:$0xff]
    %v2660 = vld [vmem:[#allocation2 + $0xef0] sm:$0xff]
    %v2661 = vld [vmem:[#allocation2 + $0xef8] sm:$0xff]
    %v2662 = vld [vmem:[#allocation2 + $0xf00] sm:$0xff]
    %v2663 = vld [vmem:[#allocation2 + $0xf08] sm:$0xff]
    %v2664 = vld [vmem:[#allocation2 + $0xf10] sm:$0xff]
    %v2665 = vld [vmem:[#allocation2 + $0xf18] sm:$0xff]
    %v2666 = vld [vmem:[#allocation2 + $0xf20] sm:$0xff]
    %v2667 = vld [vmem:[#allocation2 + $0xf28] sm:$0xff]
    %v2668 = vld [vmem:[#allocation2 + $0xf30] sm:$0xff]
    %v2669 = vld [vmem:[#allocation2 + $0xf38] sm:$0xff]
    %v2670 = vld [vmem:[#allocation2 + $0xf40] sm:$0xff]
    %v2671 = vld [vmem:[#allocation2 + $0xf48] sm:$0xff]
    %v2672 = vld [vmem:[#allocation2 + $0xf50] sm:$0xff]
    %v2673 = vld [vmem:[#allocation2 + $0xf58] sm:$0xff]
    %v2674 = vld [vmem:[#allocation2 + $0xf60] sm:$0xff]
    %v2675 = vld [vmem:[#allocation2 + $0xf68] sm:$0xff]
    %v2676 = vld [vmem:[#allocation2 + $0xf70] sm:$0xff]
    %v2677 = vld [vmem:[#allocation2 + $0xf78] sm:$0xff]
    %v2678 = vld [vmem:[#allocation2 + $0xf80] sm:$0xff]
    %v2679 = vld [vmem:[#allocation2 + $0xf88] sm:$0xff]
    %v2680 = vld [vmem:[#allocation2 + $0xf90] sm:$0xff]
    %v2681 = vld [vmem:[#allocation2 + $0xf98] sm:$0xff]
    %v2682 = vld [vmem:[#allocation2 + $0xfa0] sm:$0xff]
    %v2683 = vld [vmem:[#allocation2 + $0xfa8] sm:$0xff]
    %v2684 = vld [vmem:[#allocation2 + $0xfb0] sm:$0xff]
    %v2685 = vld [vmem:[#allocation2 + $0xfb8] sm:$0xff]
    %v2686 = vld [vmem:[#allocation2 + $0xfc0] sm:$0xff]
    %v2687 = vld [vmem:[#allocation2 + $0xfc8] sm:$0xff]
    %v2688 = vld [vmem:[#allocation2 + $0xfd0] sm:$0xff]
    %v2689 = vld [vmem:[#allocation2 + $0xfd8] sm:$0xff]
    %v2690 = vld [vmem:[#allocation2 + $0xfe0] sm:$0xff]
    %v2691 = vld [vmem:[#allocation2 + $0xfe8] sm:$0xff]
    %v2692 = vld [vmem:[#allocation2 + $0xff0] sm:$0xff]
    %v2693 = vld [vmem:[#allocation2 + $0xff8] sm:$0xff]
    %v2694 = vld [vmem:[#allocation2 + $0x1000] sm:$0xff]
    %v2695 = vld [vmem:[#allocation2 + $0x1008] sm:$0xff]
    %v2696 = vld [vmem:[#allocation2 + $0x1010] sm:$0xff]
    %v2697 = vld [vmem:[#allocation2 + $0x1018] sm:$0xff]
    %v2698 = vld [vmem:[#allocation2 + $0x1020] sm:$0xff]
    %v2699 = vld [vmem:[#allocation2 + $0x1028] sm:$0xff]
    %v2700 = vld [vmem:[#allocation2 + $0x1030] sm:$0xff]
    %v2701 = vld [vmem:[#allocation2 + $0x1038] sm:$0xff]
    %v2702 = vld [vmem:[#allocation2 + $0x1040] sm:$0xff]
    %v2703 = vld [vmem:[#allocation2 + $0x1048] sm:$0xff]
    %v2704 = vld [vmem:[#allocation2 + $0x1050] sm:$0xff]
    %v2705 = vld [vmem:[#allocation2 + $0x1058] sm:$0xff]
    %v2706 = vld [vmem:[#allocation2 + $0x1060] sm:$0xff]
    %v2707 = vld [vmem:[#allocation2 + $0x1068] sm:$0xff]
    %v2708 = vld [vmem:[#allocation2 + $0x1070] sm:$0xff]
    %v2709 = vld [vmem:[#allocation2 + $0x1078] sm:$0xff]
    %v2710 = vld [vmem:[#allocation2 + $0x1080] sm:$0xff]
    %v2711 = vld [vmem:[#allocation2 + $0x1088] sm:$0xff]
    %v2712 = vld [vmem:[#allocation2 + $0x1090] sm:$0xff]
    %v2713 = vld [vmem:[#allocation2 + $0x1098] sm:$0xff]
    %v2714 = vld [vmem:[#allocation2 + $0x10a0] sm:$0xff]
    %v2715 = vld [vmem:[#allocation2 + $0x10a8] sm:$0xff]
    %v2716 = vld [vmem:[#allocation2 + $0x10b0] sm:$0xff]
    %v2717 = vld [vmem:[#allocation2 + $0x10b8] sm:$0xff]
    %v2718 = vld [vmem:[#allocation2 + $0x10c0] sm:$0xff]
    %v2719 = vld [vmem:[#allocation2 + $0x10c8] sm:$0xff]
    %v2720 = vld [vmem:[#allocation2 + $0x10d0] sm:$0xff]
    %v2721 = vld [vmem:[#allocation2 + $0x10d8] sm:$0xff]
    %v2722 = vld [vmem:[#allocation2 + $0x10e0] sm:$0xff]
    %v2723 = vld [vmem:[#allocation2 + $0x10e8] sm:$0xff]
    %v2724 = vld [vmem:[#allocation2 + $0x10f0] sm:$0xff]
    %v2725 = vld [vmem:[#allocation2 + $0x10f8] sm:$0xff]
    %v2726 = vld [vmem:[#allocation2 + $0x1100] sm:$0xff]
    %v2727 = vld [vmem:[#allocation2 + $0x1108] sm:$0xff]
    %v2728 = vld [vmem:[#allocation2 + $0x1110] sm:$0xff]
    %v2729 = vld [vmem:[#allocation2 + $0x1118] sm:$0xff]
    %v2730 = vld [vmem:[#allocation2 + $0x1120] sm:$0xff]
    %v2731 = vld [vmem:[#allocation2 + $0x1128] sm:$0xff]
    %v2732 = vld [vmem:[#allocation2 + $0x1130] sm:$0xff]
    %v2733 = vld [vmem:[#allocation2 + $0x1138] sm:$0xff]
    %v2734 = vld [vmem:[#allocation2 + $0x1140] sm:$0xff]
    %v2735 = vld [vmem:[#allocation2 + $0x1148] sm:$0xff]
    %v2736 = vld [vmem:[#allocation2 + $0x1150] sm:$0xff]
    %v2737 = vld [vmem:[#allocation2 + $0x1158] sm:$0xff]
    %v2738 = vld [vmem:[#allocation2 + $0x1160] sm:$0xff]
    %v2739 = vld [vmem:[#allocation2 + $0x1168] sm:$0xff]
    %v2740 = vld [vmem:[#allocation2 + $0x1170] sm:$0xff]
    %v2741 = vld [vmem:[#allocation2 + $0x1178] sm:$0xff]
    %v2742 = vld [vmem:[#allocation2 + $0x1180] sm:$0xff]
    %v2743 = vld [vmem:[#allocation2 + $0x1188] sm:$0xff]
    %v2744 = vld [vmem:[#allocation2 + $0x1190] sm:$0xff]
    %v2745 = vld [vmem:[#allocation2 + $0x1198] sm:$0xff]
    %v2746 = vld [vmem:[#allocation2 + $0x11a0] sm:$0xff]
    %v2747 = vld [vmem:[#allocation2 + $0x11a8] sm:$0xff]
    %v2748 = vld [vmem:[#allocation2 + $0x11b0] sm:$0xff]
    %v2749 = vld [vmem:[#allocation2 + $0x11b8] sm:$0xff]
    %v2750 = vld [vmem:[#allocation2 + $0x11c0] sm:$0xff]
    %v2751 = vld [vmem:[#allocation2 + $0x11c8] sm:$0xff]
    %v2752 = vld [vmem:[#allocation2 + $0x11d0] sm:$0xff]
    %v2753 = vld [vmem:[#allocation2 + $0x11d8] sm:$0xff]
    %v2754 = vld [vmem:[#allocation2 + $0x11e0] sm:$0xff]
    %v2755 = vld [vmem:[#allocation2 + $0x11e8] sm:$0xff]
    %v2756 = vld [vmem:[#allocation2 + $0x11f0] sm:$0xff]
    %v2757 = vld [vmem:[#allocation2 + $0x11f8] sm:$0xff]
    %v2854 = vunpack.c.l.b16 %v2086
    %v2855 = vunpack.c.h.b16 %v2086
    %v2856 = vunpack.c.l.b16 %v2087
    %v2857 = vunpack.c.h.b16 %v2087
    %v2858 = vunpack.c.l.b16 %v2088
    %v2859 = vunpack.c.h.b16 %v2088
    %v2860 = vunpack.c.l.b16 %v2089
    %v2861 = vunpack.c.h.b16 %v2089
    %v2862 = vunpack.c.l.b16 %v2090
    %v2863 = vunpack.c.h.b16 %v2090
    %v2864 = vunpack.c.l.b16 %v2091
    %v2865 = vunpack.c.h.b16 %v2091
    %v2866 = vunpack.c.l.b16 %v2092
    %v2867 = vunpack.c.h.b16 %v2092
    %v2868 = vunpack.c.l.b16 %v2093
    %v2869 = vunpack.c.h.b16 %v2093
    %v2870 = vunpack.c.l.b16 %v2094
    %v2871 = vunpack.c.h.b16 %v2094
    %v2872 = vunpack.c.l.b16 %v2095
    %v2873 = vunpack.c.h.b16 %v2095
    %v2874 = vunpack.c.l.b16 %v2096
    %v2875 = vunpack.c.h.b16 %v2096
    %v2876 = vunpack.c.l.b16 %v2097
    %v2877 = vunpack.c.h.b16 %v2097
    %v2878 = vunpack.c.l.b16 %v2098
    %v2879 = vunpack.c.h.b16 %v2098
    %v2880 = vunpack.c.l.b16 %v2099
    %v2881 = vunpack.c.h.b16 %v2099
    %v2882 = vunpack.c.l.b16 %v2100
    %v2883 = vunpack.c.h.b16 %v2100
    %v2884 = vunpack.c.l.b16 %v2101
    %v2885 = vunpack.c.h.b16 %v2101
    %v2886 = vunpack.c.l.b16 %v2102
    %v2887 = vunpack.c.h.b16 %v2102
    %v2888 = vunpack.c.l.b16 %v2103
    %v2889 = vunpack.c.h.b16 %v2103
    %v2890 = vunpack.c.l.b16 %v2104
    %v2891 = vunpack.c.h.b16 %v2104
    %v2892 = vunpack.c.l.b16 %v2105
    %v2893 = vunpack.c.h.b16 %v2105
    %v2894 = vunpack.c.l.b16 %v2106
    %v2895 = vunpack.c.h.b16 %v2106
    %v2896 = vunpack.c.l.b16 %v2107
    %v2897 = vunpack.c.h.b16 %v2107
    %v2898 = vunpack.c.l.b16 %v2108
    %v2899 = vunpack.c.h.b16 %v2108
    %v2900 = vunpack.c.l.b16 %v2109
    %v2901 = vunpack.c.h.b16 %v2109
    %v2902 = vunpack.c.l.b16 %v2110
    %v2903 = vunpack.c.h.b16 %v2110
    %v2904 = vunpack.c.l.b16 %v2111
    %v2905 = vunpack.c.h.b16 %v2111
    %v2906 = vunpack.c.l.b16 %v2112
    %v2907 = vunpack.c.h.b16 %v2112
    %v2908 = vunpack.c.l.b16 %v2113
    %v2909 = vunpack.c.h.b16 %v2113
    %v2910 = vunpack.c.l.b16 %v2114
    %v2911 = vunpack.c.h.b16 %v2114
    %v2912 = vunpack.c.l.b16 %v2115
    %v2913 = vunpack.c.h.b16 %v2115
    %v2914 = vunpack.c.l.b16 %v2116
    %v2915 = vunpack.c.h.b16 %v2116
    %v2916 = vunpack.c.l.b16 %v2117
    %v2917 = vunpack.c.h.b16 %v2117
    %v2918 = vunpack.c.l.b16 %v2118
    %v2919 = vunpack.c.h.b16 %v2118
    %v2920 = vunpack.c.l.b16 %v2119
    %v2921 = vunpack.c.h.b16 %v2119
    %v2922 = vunpack.c.l.b16 %v2120
    %v2923 = vunpack.c.h.b16 %v2120
    %v2924 = vunpack.c.l.b16 %v2121
    %v2925 = vunpack.c.h.b16 %v2121
    %v2926 = vunpack.c.l.b16 %v2122
    %v2927 = vunpack.c.h.b16 %v2122
    %v2928 = vunpack.c.l.b16 %v2123
    %v2929 = vunpack.c.h.b16 %v2123
    %v2930 = vunpack.c.l.b16 %v2124
    %v2931 = vunpack.c.h.b16 %v2124
    %v2932 = vunpack.c.l.b16 %v2125
    %v2933 = vunpack.c.h.b16 %v2125
    %v2934 = vunpack.c.l.b16 %v2126
    %v2935 = vunpack.c.h.b16 %v2126
    %v2936 = vunpack.c.l.b16 %v2127
    %v2937 = vunpack.c.h.b16 %v2127
    %v2938 = vunpack.c.l.b16 %v2128
    %v2939 = vunpack.c.h.b16 %v2128
    %v2940 = vunpack.c.l.b16 %v2129
    %v2941 = vunpack.c.h.b16 %v2129
    %v2942 = vunpack.c.l.b16 %v2130
    %v2943 = vunpack.c.h.b16 %v2130
    %v2944 = vunpack.c.l.b16 %v2131
    %v2945 = vunpack.c.h.b16 %v2131
    %v2946 = vunpack.c.l.b16 %v2132
    %v2947 = vunpack.c.h.b16 %v2132
    %v2948 = vunpack.c.l.b16 %v2133
    %v2949 = vunpack.c.h.b16 %v2133
    %v2950 = vunpack.c.l.b16 %v2134
    %v2951 = vunpack.c.h.b16 %v2134
    %v2952 = vunpack.c.l.b16 %v2135
    %v2953 = vunpack.c.h.b16 %v2135
    %v2954 = vunpack.c.l.b16 %v2136
    %v2955 = vunpack.c.h.b16 %v2136
    %v2956 = vunpack.c.l.b16 %v2137
    %v2957 = vunpack.c.h.b16 %v2137
    %v2958 = vunpack.c.l.b16 %v2138
    %v2959 = vunpack.c.h.b16 %v2138
    %v2960 = vunpack.c.l.b16 %v2139
    %v2961 = vunpack.c.h.b16 %v2139
    %v2962 = vunpack.c.l.b16 %v2140
    %v2963 = vunpack.c.h.b16 %v2140
    %v2964 = vunpack.c.l.b16 %v2141
    %v2965 = vunpack.c.h.b16 %v2141
    %v2966 = vunpack.c.l.b16 %v2142
    %v2967 = vunpack.c.h.b16 %v2142
    %v2968 = vunpack.c.l.b16 %v2143
    %v2969 = vunpack.c.h.b16 %v2143
    %v2970 = vunpack.c.l.b16 %v2144
    %v2971 = vunpack.c.h.b16 %v2144
    %v2972 = vunpack.c.l.b16 %v2145
    %v2973 = vunpack.c.h.b16 %v2145
    %v2974 = vunpack.c.l.b16 %v2146
    %v2975 = vunpack.c.h.b16 %v2146
    %v2976 = vunpack.c.l.b16 %v2147
    %v2977 = vunpack.c.h.b16 %v2147
    %v2978 = vunpack.c.l.b16 %v2148
    %v2979 = vunpack.c.h.b16 %v2148
    %v2980 = vunpack.c.l.b16 %v2149
    %v2981 = vunpack.c.h.b16 %v2149
    %v2982 = vunpack.c.l.b16 %v2150
    %v2983 = vunpack.c.h.b16 %v2150
    %v2984 = vunpack.c.l.b16 %v2151
    %v2985 = vunpack.c.h.b16 %v2151
    %v2986 = vunpack.c.l.b16 %v2152
    %v2987 = vunpack.c.h.b16 %v2152
    %v2988 = vunpack.c.l.b16 %v2153
    %v2989 = vunpack.c.h.b16 %v2153
    %v2990 = vunpack.c.l.b16 %v2154
    %v2991 = vunpack.c.h.b16 %v2154
    %v2992 = vunpack.c.l.b16 %v2155
    %v2993 = vunpack.c.h.b16 %v2155
    %v2994 = vunpack.c.l.b16 %v2156
    %v2995 = vunpack.c.h.b16 %v2156
    %v2996 = vunpack.c.l.b16 %v2157
    %v2997 = vunpack.c.h.b16 %v2157
    %v2998 = vunpack.c.l.b16 %v2158
    %v2999 = vunpack.c.h.b16 %v2158
    %v3000 = vunpack.c.l.b16 %v2159
    %v3001 = vunpack.c.h.b16 %v2159
    %v3002 = vunpack.c.l.b16 %v2160
    %v3003 = vunpack.c.h.b16 %v2160
    %v3004 = vunpack.c.l.b16 %v2161
    %v3005 = vunpack.c.h.b16 %v2161
    %v3006 = vunpack.c.l.b16 %v2162
    %v3007 = vunpack.c.h.b16 %v2162
    %v3008 = vunpack.c.l.b16 %v2163
    %v3009 = vunpack.c.h.b16 %v2163
    %v3010 = vunpack.c.l.b16 %v2164
    %v3011 = vunpack.c.h.b16 %v2164
    %v3012 = vunpack.c.l.b16 %v2165
    %v3013 = vunpack.c.h.b16 %v2165
    %v3014 = vunpack.c.l.b16 %v2166
    %v3015 = vunpack.c.h.b16 %v2166
    %v3016 = vunpack.c.l.b16 %v2167
    %v3017 = vunpack.c.h.b16 %v2167
    %v3018 = vunpack.c.l.b16 %v2168
    %v3019 = vunpack.c.h.b16 %v2168
    %v3020 = vunpack.c.l.b16 %v2169
    %v3021 = vunpack.c.h.b16 %v2169
    %v3022 = vunpack.c.l.b16 %v2170
    %v3023 = vunpack.c.h.b16 %v2170
    %v3024 = vunpack.c.l.b16 %v2171
    %v3025 = vunpack.c.h.b16 %v2171
    %v3026 = vunpack.c.l.b16 %v2172
    %v3027 = vunpack.c.h.b16 %v2172
    %v3028 = vunpack.c.l.b16 %v2173
    %v3029 = vunpack.c.h.b16 %v2173
    %v3030 = vunpack.c.l.b16 %v2174
    %v3031 = vunpack.c.h.b16 %v2174
    %v3032 = vunpack.c.l.b16 %v2175
    %v3033 = vunpack.c.h.b16 %v2175
    %v3034 = vunpack.c.l.b16 %v2176
    %v3035 = vunpack.c.h.b16 %v2176
    %v3036 = vunpack.c.l.b16 %v2177
    %v3037 = vunpack.c.h.b16 %v2177
    %v3038 = vunpack.c.l.b16 %v2178
    %v3039 = vunpack.c.h.b16 %v2178
    %v3040 = vunpack.c.l.b16 %v2179
    %v3041 = vunpack.c.h.b16 %v2179
    %v3042 = vunpack.c.l.b16 %v2180
    %v3043 = vunpack.c.h.b16 %v2180
    %v3044 = vunpack.c.l.b16 %v2181
    %v3045 = vunpack.c.h.b16 %v2181
    %v3046 = vpack.c.b16 %v2866, %v2854
    %v3047 = vpack.c.b16 %v2867, %v2855
    %v3048 = vpack.c.b16 %v2868, %v2856
    %v3049 = vpack.c.b16 %v2869, %v2857
    %v3050 = vpack.c.b16 %v2870, %v2858
    %v3051 = vpack.c.b16 %v2871, %v2859
    %v3052 = vpack.c.b16 %v2872, %v2860
    %v3053 = vpack.c.b16 %v2873, %v2861
    %v3054 = vpack.c.b16 %v2874, %v2862
    %v3055 = vpack.c.b16 %v2875, %v2863
    %v3056 = vpack.c.b16 %v2876, %v2864
    %v3057 = vpack.c.b16 %v2877, %v2865
    %v3058 = vpack.c.b16 %v2890, %v2878
    %v3059 = vpack.c.b16 %v2891, %v2879
    %v3060 = vpack.c.b16 %v2892, %v2880
    %v3061 = vpack.c.b16 %v2893, %v2881
    %v3062 = vpack.c.b16 %v2894, %v2882
    %v3063 = vpack.c.b16 %v2895, %v2883
    %v3064 = vpack.c.b16 %v2896, %v2884
    %v3065 = vpack.c.b16 %v2897, %v2885
    %v3066 = vpack.c.b16 %v2898, %v2886
    %v3067 = vpack.c.b16 %v2899, %v2887
    %v3068 = vpack.c.b16 %v2900, %v2888
    %v3069 = vpack.c.b16 %v2901, %v2889
    %v3070 = vpack.c.b16 %v2914, %v2902
    %v3071 = vpack.c.b16 %v2915, %v2903
    %v3072 = vpack.c.b16 %v2916, %v2904
    %v3073 = vpack.c.b16 %v2917, %v2905
    %v3074 = vpack.c.b16 %v2918, %v2906
    %v3075 = vpack.c.b16 %v2919, %v2907
    %v3076 = vpack.c.b16 %v2920, %v2908
    %v3077 = vpack.c.b16 %v2921, %v2909
    %v3078 = vpack.c.b16 %v2922, %v2910
    %v3079 = vpack.c.b16 %v2923, %v2911
    %v3080 = vpack.c.b16 %v2924, %v2912
    %v3081 = vpack.c.b16 %v2925, %v2913
    %v3082 = vpack.c.b16 %v2938, %v2926
    %v3083 = vpack.c.b16 %v2939, %v2927
    %v3084 = vpack.c.b16 %v2940, %v2928
    %v3085 = vpack.c.b16 %v2941, %v2929
    %v3086 = vpack.c.b16 %v2942, %v2930
    %v3087 = vpack.c.b16 %v2943, %v2931
    %v3088 = vpack.c.b16 %v2944, %v2932
    %v3089 = vpack.c.b16 %v2945, %v2933
    %v3090 = vpack.c.b16 %v2946, %v2934
    %v3091 = vpack.c.b16 %v2947, %v2935
    %v3092 = vpack.c.b16 %v2948, %v2936
    %v3093 = vpack.c.b16 %v2949, %v2937
    %v3094 = vpack.c.b16 %v2962, %v2950
    %v3095 = vpack.c.b16 %v2963, %v2951
    %v3096 = vpack.c.b16 %v2964, %v2952
    %v3097 = vpack.c.b16 %v2965, %v2953
    %v3098 = vpack.c.b16 %v2966, %v2954
    %v3099 = vpack.c.b16 %v2967, %v2955
    %v3100 = vpack.c.b16 %v2968, %v2956
    %v3101 = vpack.c.b16 %v2969, %v2957
    %v3102 = vpack.c.b16 %v2970, %v2958
    %v3103 = vpack.c.b16 %v2971, %v2959
    %v3104 = vpack.c.b16 %v2972, %v2960
    %v3105 = vpack.c.b16 %v2973, %v2961
    %v3106 = vpack.c.b16 %v2986, %v2974
    %v3107 = vpack.c.b16 %v2987, %v2975
    %v3108 = vpack.c.b16 %v2988, %v2976
    %v3109 = vpack.c.b16 %v2989, %v2977
    %v3110 = vpack.c.b16 %v2990, %v2978
    %v3111 = vpack.c.b16 %v2991, %v2979
    %v3112 = vpack.c.b16 %v2992, %v2980
    %v3113 = vpack.c.b16 %v2993, %v2981
    %v3114 = vpack.c.b16 %v2994, %v2982
    %v3115 = vpack.c.b16 %v2995, %v2983
    %v3116 = vpack.c.b16 %v2996, %v2984
    %v3117 = vpack.c.b16 %v2997, %v2985
    %v3118 = vpack.c.b16 %v3010, %v2998
    %v3119 = vpack.c.b16 %v3011, %v2999
    %v3120 = vpack.c.b16 %v3012, %v3000
    %v3121 = vpack.c.b16 %v3013, %v3001
    %v3122 = vpack.c.b16 %v3014, %v3002
    %v3123 = vpack.c.b16 %v3015, %v3003
    %v3124 = vpack.c.b16 %v3016, %v3004
    %v3125 = vpack.c.b16 %v3017, %v3005
    %v3126 = vpack.c.b16 %v3018, %v3006
    %v3127 = vpack.c.b16 %v3019, %v3007
    %v3128 = vpack.c.b16 %v3020, %v3008
    %v3129 = vpack.c.b16 %v3021, %v3009
    %v3130 = vpack.c.b16 %v3034, %v3022
    %v3131 = vpack.c.b16 %v3035, %v3023
    %v3132 = vpack.c.b16 %v3036, %v3024
    %v3133 = vpack.c.b16 %v3037, %v3025
    %v3134 = vpack.c.b16 %v3038, %v3026
    %v3135 = vpack.c.b16 %v3039, %v3027
    %v3136 = vpack.c.b16 %v3040, %v3028
    %v3137 = vpack.c.b16 %v3041, %v3029
    %v3138 = vpack.c.b16 %v3042, %v3030
    %v3139 = vpack.c.b16 %v3043, %v3031
    %v3140 = vpack.c.b16 %v3044, %v3032
    %v3141 = vpack.c.b16 %v3045, %v3033
    %3238 = vmatprep.subr.bf16.mxu0 %v2183
    %3239 = vmatpush1.bf16.msra.mxu0 %v2182
    %3240 = vmatprep.subr.bf16.mxu0 %v2189
    %3241 = vmatpush1.bf16.msra.mxu0 %v2188
    %3242 = vmatprep.subr.bf16.mxu0 %v2195
    %3243 = vmatpush1.bf16.msra.mxu0 %v2194
    %3244 = vmatprep.subr.bf16.mxu0 %v2201
    %3245 = vmatpush1.bf16.msra.mxu0 %v2200
    %3246 = vmatprep.subr.bf16.mxu0 %v2207
    %3247 = vmatpush1.bf16.msra.mxu0 %v2206
    %3248 = vmatprep.subr.bf16.mxu0 %v2213
    %3249 = vmatpush1.bf16.msra.mxu0 %v2212
    %3250 = vmatprep.subr.bf16.mxu0 %v2219
    %3251 = vmatpush1.bf16.msra.mxu0 %v2218
    %3252 = vmatprep.subr.bf16.mxu0 %v2225
    %3253 = vmatpush1.bf16.msra.mxu0 %v2224
    %3254 = vmatprep.subr.bf16.mxu0 %v2231
    %3255 = vmatpush1.bf16.msra.mxu0 %v2230
    %3256 = vmatprep.subr.bf16.mxu0 %v2237
    %3257 = vmatpush1.bf16.msra.mxu0 %v2236
    %3258 = vmatprep.subr.bf16.mxu0 %v2243
    %3259 = vmatpush1.bf16.msra.mxu0 %v2242
    %3260 = vmatprep.subr.bf16.mxu0 %v2249
    %3261 = vmatpush1.bf16.msra.mxu0 %v2248
    %3262 = vmatprep.subr.bf16.mxu0 %v2255
    %3263 = vmatpush1.bf16.msra.mxu0 %v2254
    %3264 = vmatprep.subr.bf16.mxu0 %v2261
    %3265 = vmatpush1.bf16.msra.mxu0 %v2260
    %3266 = vmatprep.subr.bf16.mxu0 %v2267
    %3267 = vmatpush1.bf16.msra.mxu0 %v2266
    %3268 = vmatprep.subr.bf16.mxu0 %v2273
    %3269 = vmatpush1.bf16.msra.mxu0 %v2272
    %3270 = vmatprep.mubr.bf16.mxu0 %v3047
    %3271 = vmatmul.mubr.bf16.gmra.mrb[0].mxu0 %v3046
    %v3272 = vpop.f32.mrb[0].mxu0
    %v3273 = vadd.f32 0.0, %v3272
    %v3274 = vpop.f32.mrb[0].mxu0
    %v3275 = vadd.f32 0.0, %v3274
    %v3276 = vpop.f32.mrb[0].mxu0
    %v3277 = vadd.f32 0.0, %v3276
    %v3278 = vpop.f32.mrb[0].mxu0
    %v3279 = vadd.f32 0.0, %v3278
    %3280 = vmatprep.mubr.bf16.mxu0 %v3059
    %3281 = vmatmul.mubr.bf16.gmra.mrb[0].mxu0 %v3058
    %v3282 = vpop.f32.mrb[0].mxu0
    %v3283 = vadd.f32 0.0, %v3282
    %v3284 = vpop.f32.mrb[0].mxu0
    %v3285 = vadd.f32 0.0, %v3284
    %v3286 = vpop.f32.mrb[0].mxu0
    %v3287 = vadd.f32 0.0, %v3286
    %v3288 = vpop.f32.mrb[0].mxu0
    %v3289 = vadd.f32 0.0, %v3288
    %3290 = vmatprep.mubr.bf16.mxu0 %v3071
    %3291 = vmatmul.mubr.bf16.gmra.mrb[0].mxu0 %v3070
    %v3292 = vpop.f32.mrb[0].mxu0
    %v3293 = vadd.f32 0.0, %v3292
    %v3294 = vpop.f32.mrb[0].mxu0
    %v3295 = vadd.f32 0.0, %v3294
    %v3296 = vpop.f32.mrb[0].mxu0
    %v3297 = vadd.f32 0.0, %v3296
    %v3298 = vpop.f32.mrb[0].mxu0
    %v3299 = vadd.f32 0.0, %v3298
    %3300 = vmatprep.mubr.bf16.mxu0 %v3083
    %3301 = vmatmul.mubr.bf16.gmra.mrb[0].mxu0 %v3082
    %v3302 = vpop.f32.mrb[0].mxu0
    %v3303 = vadd.f32 0.0, %v3302
    %v3304 = vpop.f32.mrb[0].mxu0
    %v3305 = vadd.f32 0.0, %v3304
    %v3306 = vpop.f32.mrb[0].mxu0
    %v3307 = vadd.f32 0.0, %v3306
    %v3308 = vpop.f32.mrb[0].mxu0
    %v3309 = vadd.f32 0.0, %v3308
    %3310 = vmatprep.mubr.bf16.mxu0 %v3095
    %3311 = vmatmul.mubr.bf16.gmra.mrb[0].mxu0 %v3094
    %v3312 = vpop.f32.mrb[0].mxu0
    %v3313 = vadd.f32 0.0, %v3312
    %v3314 = vpop.f32.mrb[0].mxu0
    %v3315 = vadd.f32 0.0, %v3314
    %v3316 = vpop.f32.mrb[0].mxu0
    %v3317 = vadd.f32 0.0, %v3316
    %v3318 = vpop.f32.mrb[0].mxu0
    %v3319 = vadd.f32 0.0, %v3318
    %3320 = vmatprep.mubr.bf16.mxu0 %v3107
    %3321 = vmatmul.mubr.bf16.gmra.mrb[0].mxu0 %v3106
    %v3322 = vpop.f32.mrb[0].mxu0
    %v3323 = vadd.f32 0.0, %v3322
    %v3324 = vpop.f32.mrb[0].mxu0
    %v3325 = vadd.f32 0.0, %v3324
    %v3326 = vpop.f32.mrb[0].mxu0
    %v3327 = vadd.f32 0.0, %v3326
    %v3328 = vpop.f32.mrb[0].mxu0
    %v3329 = vadd.f32 0.0, %v3328
    %3330 = vmatprep.mubr.bf16.mxu0 %v3119
    %3331 = vmatmul.mubr.bf16.gmra.mrb[0].mxu0 %v3118
    %v3332 = vpop.f32.mrb[0].mxu0
    %v3333 = vadd.f32 0.0, %v3332
    %v3334 = vpop.f32.mrb[0].mxu0
    %v3335 = vadd.f32 0.0, %v3334
    %v3336 = vpop.f32.mrb[0].mxu0
    %v3337 = vadd.f32 0.0, %v3336
    %v3338 = vpop.f32.mrb[0].mxu0
    %v3339 = vadd.f32 0.0, %v3338
    %3340 = vmatprep.mubr.bf16.mxu0 %v3131
    %3341 = vmatmul.mubr.bf16.gmra.mrb[0].mxu0 %v3130
    %v3342 = vpop.f32.mrb[0].mxu0
    %v3343 = vadd.f32 0.0, %v3342
    %v3344 = vpop.f32.mrb[0].mxu0
    %v3345 = vadd.f32 0.0, %v3344
    %v3346 = vpop.f32.mrb[0].mxu0
    %v3347 = vadd.f32 0.0, %v3346
    %v3348 = vpop.f32.mrb[0].mxu0
    %v3349 = vadd.f32 0.0, %v3348
    %3350 = vdwg.mxu0
    %3351 = vmatprep.subr.bf16.mxu0 %v2279
    %3352 = vmatpush1.bf16.msra.mxu0 %v2278
    %3353 = vmatprep.subr.bf16.mxu0 %v2285
    %3354 = vmatpush1.bf16.msra.mxu0 %v2284
    %3355 = vmatprep.subr.bf16.mxu0 %v2291
    %3356 = vmatpush1.bf16.msra.mxu0 %v2290
    %3357 = vmatprep.subr.bf16.mxu0 %v2297
    %3358 = vmatpush1.bf16.msra.mxu0 %v2296
    %3359 = vmatprep.subr.bf16.mxu0 %v2303
    %3360 = vmatpush1.bf16.msra.mxu0 %v2302
    %3361 = vmatprep.subr.bf16.mxu0 %v2309
    %3362 = vmatpush1.bf16.msra.mxu0 %v2308
    %3363 = vmatprep.subr.bf16.mxu0 %v2315
    %3364 = vmatpush1.bf16.msra.mxu0 %v2314
    %3365 = vmatprep.subr.bf16.mxu0 %v2321
    %3366 = vmatpush1.bf16.msra.mxu0 %v2320
    %3367 = vmatprep.subr.bf16.mxu0 %v2327
    %3368 = vmatpush1.bf16.msra.mxu0 %v2326
    %3369 = vmatprep.subr.bf16.mxu0 %v2333
    %3370 = vmatpush1.bf16.msra.mxu0 %v2332
    %3371 = vmatprep.subr.bf16.mxu0 %v2339
    %3372 = vmatpush1.bf16.msra.mxu0 %v2338
    %3373 = vmatprep.subr.bf16.mxu0 %v2345
    %3374 = vmatpush1.bf16.msra.mxu0 %v2344
    %3375 = vmatprep.subr.bf16.mxu0 %v2351
    %3376 = vmatpush1.bf16.msra.mxu0 %v2350
    %3377 = vmatprep.subr.bf16.mxu0 %v2357
    %3378 = vmatpush1.bf16.msra.mxu0 %v2356
    %3379 = vmatprep.subr.bf16.mxu0 %v2363
    %3380 = vmatpush1.bf16.msra.mxu0 %v2362
    %3381 = vmatprep.subr.bf16.mxu0 %v2369
    %3382 = vmatpush1.bf16.msra.mxu0 %v2368
    %3383 = vmatprep.mubr.bf16.mxu0 %v3049
    %3384 = vmatmul.mubr.bf16.gmra.mrb[0].mxu0 %v3048
    %v3385 = vpop.f32.mrb[0].mxu0
    %v3386 = vadd.f32 %v3273, %v3385
    %v3387 = vpop.f32.mrb[0].mxu0
    %v3388 = vadd.f32 %v3275, %v3387
    %v3389 = vpop.f32.mrb[0].mxu0
    %v3390 = vadd.f32 %v3277, %v3389
    %v3391 = vpop.f32.mrb[0].mxu0
    %v3392 = vadd.f32 %v3279, %v3391
    %3393 = vmatprep.mubr.bf16.mxu0 %v3061
    %3394 = vmatmul.mubr.bf16.gmra.mrb[0].mxu0 %v3060
    %v3395 = vpop.f32.mrb[0].mxu0
    %v3396 = vadd.f32 %v3283, %v3395
    %v3397 = vpop.f32.mrb[0].mxu0
    %v3398 = vadd.f32 %v3285, %v3397
    %v3399 = vpop.f32.mrb[0].mxu0
    %v3400 = vadd.f32 %v3287, %v3399
    %v3401 = vpop.f32.mrb[0].mxu0
    %v3402 = vadd.f32 %v3289, %v3401
    %3403 = vmatprep.mubr.bf16.mxu0 %v3073
    %3404 = vmatmul.mubr.bf16.gmra.mrb[0].mxu0 %v3072
    %v3405 = vpop.f32.mrb[0].mxu0
    %v3406 = vadd.f32 %v3293, %v3405
    %v3407 = vpop.f32.mrb[0].mxu0
    %v3408 = vadd.f32 %v3295, %v3407
    %v3409 = vpop.f32.mrb[0].mxu0
    %v3410 = vadd.f32 %v3297, %v3409
    %v3411 = vpop.f32.mrb[0].mxu0
    %v3412 = vadd.f32 %v3299, %v3411
    %3413 = vmatprep.mubr.bf16.mxu0 %v3085
    %3414 = vmatmul.mubr.bf16.gmra.mrb[0].mxu0 %v3084
    %v3415 = vpop.f32.mrb[0].mxu0
    %v3416 = vadd.f32 %v3303, %v3415
    %v3417 = vpop.f32.mrb[0].mxu0
    %v3418 = vadd.f32 %v3305, %v3417
    %v3419 = vpop.f32.mrb[0].mxu0
    %v3420 = vadd.f32 %v3307, %v3419
    %v3421 = vpop.f32.mrb[0].mxu0
    %v3422 = vadd.f32 %v3309, %v3421
    %3423 = vmatprep.mubr.bf16.mxu0 %v3097
    %3424 = vmatmul.mubr.bf16.gmra.mrb[0].mxu0 %v3096
    %v3425 = vpop.f32.mrb[0].mxu0
    %v3426 = vadd.f32 %v3313, %v3425
    %v3427 = vpop.f32.mrb[0].mxu0
    %v3428 = vadd.f32 %v3315, %v3427
    %v3429 = vpop.f32.mrb[0].mxu0
    %v3430 = vadd.f32 %v3317, %v3429
    %v3431 = vpop.f32.mrb[0].mxu0
    %v3432 = vadd.f32 %v3319, %v3431
    %3433 = vmatprep.mubr.bf16.mxu0 %v3109
    %3434 = vmatmul.mubr.bf16.gmra.mrb[0].mxu0 %v3108
    %v3435 = vpop.f32.mrb[0].mxu0
    %v3436 = vadd.f32 %v3323, %v3435
    %v3437 = vpop.f32.mrb[0].mxu0
    %v3438 = vadd.f32 %v3325, %v3437
    %v3439 = vpop.f32.mrb[0].mxu0
    %v3440 = vadd.f32 %v3327, %v3439
    %v3441 = vpop.f32.mrb[0].mxu0
    %v3442 = vadd.f32 %v3329, %v3441
    %3443 = vmatprep.mubr.bf16.mxu0 %v3121
    %3444 = vmatmul.mubr.bf16.gmra.mrb[0].mxu0 %v3120
    %v3445 = vpop.f32.mrb[0].mxu0
    %v3446 = vadd.f32 %v3333, %v3445
    %v3447 = vpop.f32.mrb[0].mxu0
    %v3448 = vadd.f32 %v3335, %v3447
    %v3449 = vpop.f32.mrb[0].mxu0
    %v3450 = vadd.f32 %v3337, %v3449
    %v3451 = vpop.f32.mrb[0].mxu0
    %v3452 = vadd.f32 %v3339, %v3451
    %3453 = vmatprep.mubr.bf16.mxu0 %v3133
    %3454 = vmatmul.mubr.bf16.gmra.mrb[0].mxu0 %v3132
    %v3455 = vpop.f32.mrb[0].mxu0
    %v3456 = vadd.f32 %v3343, %v3455
    %v3457 = vpop.f32.mrb[0].mxu0
    %v3458 = vadd.f32 %v3345, %v3457
    %v3459 = vpop.f32.mrb[0].mxu0
    %v3460 = vadd.f32 %v3347, %v3459
    %v3461 = vpop.f32.mrb[0].mxu0
    %v3462 = vadd.f32 %v3349, %v3461
    %3463 = vdwg.mxu0
    %3464 = vmatprep.subr.bf16.mxu0 %v2375
    %3465 = vmatpush1.bf16.msra.mxu0 %v2374
    %3466 = vmatprep.subr.bf16.mxu0 %v2381
    %3467 = vmatpush1.bf16.msra.mxu0 %v2380
    %3468 = vmatprep.subr.bf16.mxu0 %v2387
    %3469 = vmatpush1.bf16.msra.mxu0 %v2386
    %3470 = vmatprep.subr.bf16.mxu0 %v2393
    %3471 = vmatpush1.bf16.msra.mxu0 %v2392
    %3472 = vmatprep.subr.bf16.mxu0 %v2399
    %3473 = vmatpush1.bf16.msra.mxu0 %v2398
    %3474 = vmatprep.subr.bf16.mxu0 %v2405
    %3475 = vmatpush1.bf16.msra.mxu0 %v2404
    %3476 = vmatprep.subr.bf16.mxu0 %v2411
    %3477 = vmatpush1.bf16.msra.mxu0 %v2410
    %3478 = vmatprep.subr.bf16.mxu0 %v2417
    %3479 = vmatpush1.bf16.msra.mxu0 %v2416
    %3480 = vmatprep.subr.bf16.mxu0 %v2423
    %3481 = vmatpush1.bf16.msra.mxu0 %v2422
    %3482 = vmatprep.subr.bf16.mxu0 %v2429
    %3483 = vmatpush1.bf16.msra.mxu0 %v2428
    %3484 = vmatprep.subr.bf16.mxu0 %v2435
    %3485 = vmatpush1.bf16.msra.mxu0 %v2434
    %3486 = vmatprep.subr.bf16.mxu0 %v2441
    %3487 = vmatpush1.bf16.msra.mxu0 %v2440
    %3488 = vmatprep.subr.bf16.mxu0 %v2447
    %3489 = vmatpush1.bf16.msra.mxu0 %v2446
    %3490 = vmatprep.subr.bf16.mxu0 %v2453
    %3491 = vmatpush1.bf16.msra.mxu0 %v2452
    %3492 = vmatprep.subr.bf16.mxu0 %v2459
    %3493 = vmatpush1.bf16.msra.mxu0 %v2458
    %3494 = vmatprep.subr.bf16.mxu0 %v2465
    %3495 = vmatpush1.bf16.msra.mxu0 %v2464
    %3496 = vmatprep.mubr.bf16.mxu0 %v3051
    %3497 = vmatmul.mubr.bf16.gmra.mrb[0].mxu0 %v3050
    %v3498 = vpop.f32.mrb[0].mxu0
    %v3499 = vadd.f32 %v3386, %v3498
    %v3500 = vpop.f32.mrb[0].mxu0
    %v3501 = vadd.f32 %v3388, %v3500
    %v3502 = vpop.f32.mrb[0].mxu0
    %v3503 = vadd.f32 %v3390, %v3502
    %v3504 = vpop.f32.mrb[0].mxu0
    %v3505 = vadd.f32 %v3392, %v3504
    %3506 = vmatprep.mubr.bf16.mxu0 %v3063
    %3507 = vmatmul.mubr.bf16.gmra.mrb[0].mxu0 %v3062
    %v3508 = vpop.f32.mrb[0].mxu0
    %v3509 = vadd.f32 %v3396, %v3508
    %v3510 = vpop.f32.mrb[0].mxu0
    %v3511 = vadd.f32 %v3398, %v3510
    %v3512 = vpop.f32.mrb[0].mxu0
    %v3513 = vadd.f32 %v3400, %v3512
    %v3514 = vpop.f32.mrb[0].mxu0
    %v3515 = vadd.f32 %v3402, %v3514
    %3516 = vmatprep.mubr.bf16.mxu0 %v3075
    %3517 = vmatmul.mubr.bf16.gmra.mrb[0].mxu0 %v3074
    %v3518 = vpop.f32.mrb[0].mxu0
    %v3519 = vadd.f32 %v3406, %v3518
    %v3520 = vpop.f32.mrb[0].mxu0
    %v3521 = vadd.f32 %v3408, %v3520
    %v3522 = vpop.f32.mrb[0].mxu0
    %v3523 = vadd.f32 %v3410, %v3522
    %v3524 = vpop.f32.mrb[0].mxu0
    %v3525 = vadd.f32 %v3412, %v3524
    %3526 = vmatprep.mubr.bf16.mxu0 %v3087
    %3527 = vmatmul.mubr.bf16.gmra.mrb[0].mxu0 %v3086
    %v3528 = vpop.f32.mrb[0].mxu0
    %v3529 = vadd.f32 %v3416, %v3528
    %v3530 = vpop.f32.mrb[0].mxu0
    %v3531 = vadd.f32 %v3418, %v3530
    %v3532 = vpop.f32.mrb[0].mxu0
    %v3533 = vadd.f32 %v3420, %v3532
    %v3534 = vpop.f32.mrb[0].mxu0
    %v3535 = vadd.f32 %v3422, %v3534
    %3536 = vmatprep.mubr.bf16.mxu0 %v3099
    %3537 = vmatmul.mubr.bf16.gmra.mrb[0].mxu0 %v3098
    %v3538 = vpop.f32.mrb[0].mxu0
    %v3539 = vadd.f32 %v3426, %v3538
    %v3540 = vpop.f32.mrb[0].mxu0
    %v3541 = vadd.f32 %v3428, %v3540
    %v3542 = vpop.f32.mrb[0].mxu0
    %v3543 = vadd.f32 %v3430, %v3542
    %v3544 = vpop.f32.mrb[0].mxu0
    %v3545 = vadd.f32 %v3432, %v3544
    %3546 = vmatprep.mubr.bf16.mxu0 %v3111
    %3547 = vmatmul.mubr.bf16.gmra.mrb[0].mxu0 %v3110
    %v3548 = vpop.f32.mrb[0].mxu0
    %v3549 = vadd.f32 %v3436, %v3548
    %v3550 = vpop.f32.mrb[0].mxu0
    %v3551 = vadd.f32 %v3438, %v3550
    %v3552 = vpop.f32.mrb[0].mxu0
    %v3553 = vadd.f32 %v3440, %v3552
    %v3554 = vpop.f32.mrb[0].mxu0
    %v3555 = vadd.f32 %v3442, %v3554
    %3556 = vmatprep.mubr.bf16.mxu0 %v3123
    %3557 = vmatmul.mubr.bf16.gmra.mrb[0].mxu0 %v3122
    %v3558 = vpop.f32.mrb[0].mxu0
    %v3559 = vadd.f32 %v3446, %v3558
    %v3560 = vpop.f32.mrb[0].mxu0
    %v3561 = vadd.f32 %v3448, %v3560
    %v3562 = vpop.f32.mrb[0].mxu0
    %v3563 = vadd.f32 %v3450, %v3562
    %v3564 = vpop.f32.mrb[0].mxu0
    %v3565 = vadd.f32 %v3452, %v3564
    %3566 = vmatprep.mubr.bf16.mxu0 %v3135
    %3567 = vmatmul.mubr.bf16.gmra.mrb[0].mxu0 %v3134
    %v3568 = vpop.f32.mrb[0].mxu0
    %v3569 = vadd.f32 %v3456, %v3568
    %v3570 = vpop.f32.mrb[0].mxu0
    %v3571 = vadd.f32 %v3458, %v3570
    %v3572 = vpop.f32.mrb[0].mxu0
    %v3573 = vadd.f32 %v3460, %v3572
    %v3574 = vpop.f32.mrb[0].mxu0
    %v3575 = vadd.f32 %v3462, %v3574
    %3576 = vdwg.mxu0
    %3577 = vmatprep.subr.bf16.mxu0 %v2471
    %3578 = vmatpush1.bf16.msra.mxu0 %v2470
    %3579 = vmatprep.subr.bf16.mxu0 %v2477
    %3580 = vmatpush1.bf16.msra.mxu0 %v2476
    %3581 = vmatprep.subr.bf16.mxu0 %v2483
    %3582 = vmatpush1.bf16.msra.mxu0 %v2482
    %3583 = vmatprep.subr.bf16.mxu0 %v2489
    %3584 = vmatpush1.bf16.msra.mxu0 %v2488
    %3585 = vmatprep.subr.bf16.mxu0 %v2495
    %3586 = vmatpush1.bf16.msra.mxu0 %v2494
    %3587 = vmatprep.subr.bf16.mxu0 %v2501
    %3588 = vmatpush1.bf16.msra.mxu0 %v2500
    %3589 = vmatprep.subr.bf16.mxu0 %v2507
    %3590 = vmatpush1.bf16.msra.mxu0 %v2506
    %3591 = vmatprep.subr.bf16.mxu0 %v2513
    %3592 = vmatpush1.bf16.msra.mxu0 %v2512
    %3593 = vmatprep.subr.bf16.mxu0 %v2519
    %3594 = vmatpush1.bf16.msra.mxu0 %v2518
    %3595 = vmatprep.subr.bf16.mxu0 %v2525
    %3596 = vmatpush1.bf16.msra.mxu0 %v2524
    %3597 = vmatprep.subr.bf16.mxu0 %v2531
    %3598 = vmatpush1.bf16.msra.mxu0 %v2530
    %3599 = vmatprep.subr.bf16.mxu0 %v2537
    %3600 = vmatpush1.bf16.msra.mxu0 %v2536
    %3601 = vmatprep.subr.bf16.mxu0 %v2543
    %3602 = vmatpush1.bf16.msra.mxu0 %v2542
    %3603 = vmatprep.subr.bf16.mxu0 %v2549
    %3604 = vmatpush1.bf16.msra.mxu0 %v2548
    %3605 = vmatprep.subr.bf16.mxu0 %v2555
    %3606 = vmatpush1.bf16.msra.mxu0 %v2554
    %3607 = vmatprep.subr.bf16.mxu0 %v2561
    %3608 = vmatpush1.bf16.msra.mxu0 %v2560
    %3609 = vmatprep.mubr.bf16.mxu0 %v3053
    %3610 = vmatmul.mubr.bf16.gmra.mrb[0].mxu0 %v3052
    %v3611 = vpop.f32.mrb[0].mxu0
    %v3612 = vadd.f32 %v3499, %v3611
    %v3613 = vpop.f32.mrb[0].mxu0
    %v3614 = vadd.f32 %v3501, %v3613
    %v3615 = vpop.f32.mrb[0].mxu0
    %v3616 = vadd.f32 %v3503, %v3615
    %v3617 = vpop.f32.mrb[0].mxu0
    %v3618 = vadd.f32 %v3505, %v3617
    %3619 = vmatprep.mubr.bf16.mxu0 %v3065
    %3620 = vmatmul.mubr.bf16.gmra.mrb[0].mxu0 %v3064
    %v3621 = vpop.f32.mrb[0].mxu0
    %v3622 = vadd.f32 %v3509, %v3621
    %v3623 = vpop.f32.mrb[0].mxu0
    %v3624 = vadd.f32 %v3511, %v3623
    %v3625 = vpop.f32.mrb[0].mxu0
    %v3626 = vadd.f32 %v3513, %v3625
    %v3627 = vpop.f32.mrb[0].mxu0
    %v3628 = vadd.f32 %v3515, %v3627
    %3629 = vmatprep.mubr.bf16.mxu0 %v3077
    %3630 = vmatmul.mubr.bf16.gmra.mrb[0].mxu0 %v3076
    %v3631 = vpop.f32.mrb[0].mxu0
    %v3632 = vadd.f32 %v3519, %v3631
    %v3633 = vpop.f32.mrb[0].mxu0
    %v3634 = vadd.f32 %v3521, %v3633
    %v3635 = vpop.f32.mrb[0].mxu0
    %v3636 = vadd.f32 %v3523, %v3635
    %v3637 = vpop.f32.mrb[0].mxu0
    %v3638 = vadd.f32 %v3525, %v3637
    %3639 = vmatprep.mubr.bf16.mxu0 %v3089
    %3640 = vmatmul.mubr.bf16.gmra.mrb[0].mxu0 %v3088
    %v3641 = vpop.f32.mrb[0].mxu0
    %v3642 = vadd.f32 %v3529, %v3641
    %v3643 = vpop.f32.mrb[0].mxu0
    %v3644 = vadd.f32 %v3531, %v3643
    %v3645 = vpop.f32.mrb[0].mxu0
    %v3646 = vadd.f32 %v3533, %v3645
    %v3647 = vpop.f32.mrb[0].mxu0
    %v3648 = vadd.f32 %v3535, %v3647
    %3649 = vmatprep.mubr.bf16.mxu0 %v3101
    %3650 = vmatmul.mubr.bf16.gmra.mrb[0].mxu0 %v3100
    %v3651 = vpop.f32.mrb[0].mxu0
    %v3652 = vadd.f32 %v3539, %v3651
    %v3653 = vpop.f32.mrb[0].mxu0
    %v3654 = vadd.f32 %v3541, %v3653
    %v3655 = vpop.f32.mrb[0].mxu0
    %v3656 = vadd.f32 %v3543, %v3655
    %v3657 = vpop.f32.mrb[0].mxu0
    %v3658 = vadd.f32 %v3545, %v3657
    %3659 = vmatprep.mubr.bf16.mxu0 %v3113
    %3660 = vmatmul.mubr.bf16.gmra.mrb[0].mxu0 %v3112
    %v3661 = vpop.f32.mrb[0].mxu0
    %v3662 = vadd.f32 %v3549, %v3661
    %v3663 = vpop.f32.mrb[0].mxu0
    %v3664 = vadd.f32 %v3551, %v3663
    %v3665 = vpop.f32.mrb[0].mxu0
    %v3666 = vadd.f32 %v3553, %v3665
    %v3667 = vpop.f32.mrb[0].mxu0
    %v3668 = vadd.f32 %v3555, %v3667
    %3669 = vmatprep.mubr.bf16.mxu0 %v3125
    %3670 = vmatmul.mubr.bf16.gmra.mrb[0].mxu0 %v3124
    %v3671 = vpop.f32.mrb[0].mxu0
    %v3672 = vadd.f32 %v3559, %v3671
    %v3673 = vpop.f32.mrb[0].mxu0
    %v3674 = vadd.f32 %v3561, %v3673
    %v3675 = vpop.f32.mrb[0].mxu0
    %v3676 = vadd.f32 %v3563, %v3675
    %v3677 = vpop.f32.mrb[0].mxu0
    %v3678 = vadd.f32 %v3565, %v3677
    %3679 = vmatprep.mubr.bf16.mxu0 %v3137
    %3680 = vmatmul.mubr.bf16.gmra.mrb[0].mxu0 %v3136
    %v3681 = vpop.f32.mrb[0].mxu0
    %v3682 = vadd.f32 %v3569, %v3681
    %v3683 = vpop.f32.mrb[0].mxu0
    %v3684 = vadd.f32 %v3571, %v3683
    %v3685 = vpop.f32.mrb[0].mxu0
    %v3686 = vadd.f32 %v3573, %v3685
    %v3687 = vpop.f32.mrb[0].mxu0
    %v3688 = vadd.f32 %v3575, %v3687
    %3689 = vdwg.mxu0
    %3690 = vmatprep.subr.bf16.mxu0 %v2567
    %3691 = vmatpush1.bf16.msra.mxu0 %v2566
    %3692 = vmatprep.subr.bf16.mxu0 %v2573
    %3693 = vmatpush1.bf16.msra.mxu0 %v2572
    %3694 = vmatprep.subr.bf16.mxu0 %v2579
    %3695 = vmatpush1.bf16.msra.mxu0 %v2578
    %3696 = vmatprep.subr.bf16.mxu0 %v2585
    %3697 = vmatpush1.bf16.msra.mxu0 %v2584
    %3698 = vmatprep.subr.bf16.mxu0 %v2591
    %3699 = vmatpush1.bf16.msra.mxu0 %v2590
    %3700 = vmatprep.subr.bf16.mxu0 %v2597
    %3701 = vmatpush1.bf16.msra.mxu0 %v2596
    %3702 = vmatprep.subr.bf16.mxu0 %v2603
    %3703 = vmatpush1.bf16.msra.mxu0 %v2602
    %3704 = vmatprep.subr.bf16.mxu0 %v2609
    %3705 = vmatpush1.bf16.msra.mxu0 %v2608
    %3706 = vmatprep.subr.bf16.mxu0 %v2615
    %3707 = vmatpush1.bf16.msra.mxu0 %v2614
    %3708 = vmatprep.subr.bf16.mxu0 %v2621
    %3709 = vmatpush1.bf16.msra.mxu0 %v2620
    %3710 = vmatprep.subr.bf16.mxu0 %v2627
    %3711 = vmatpush1.bf16.msra.mxu0 %v2626
    %3712 = vmatprep.subr.bf16.mxu0 %v2633
    %3713 = vmatpush1.bf16.msra.mxu0 %v2632
    %3714 = vmatprep.subr.bf16.mxu0 %v2639
    %3715 = vmatpush1.bf16.msra.mxu0 %v2638
    %3716 = vmatprep.subr.bf16.mxu0 %v2645
    %3717 = vmatpush1.bf16.msra.mxu0 %v2644
    %3718 = vmatprep.subr.bf16.mxu0 %v2651
    %3719 = vmatpush1.bf16.msra.mxu0 %v2650
    %3720 = vmatprep.subr.bf16.mxu0 %v2657
    %3721 = vmatpush1.bf16.msra.mxu0 %v2656
    %3722 = vmatprep.mubr.bf16.mxu0 %v3055
    %3723 = vmatmul.mubr.bf16.gmra.mrb[0].mxu0 %v3054
    %v3724 = vpop.f32.mrb[0].mxu0
    %v3725 = vadd.f32 %v3612, %v3724
    %v3726 = vpop.f32.mrb[0].mxu0
    %v3727 = vadd.f32 %v3614, %v3726
    %v3728 = vpop.f32.mrb[0].mxu0
    %v3729 = vadd.f32 %v3616, %v3728
    %v3730 = vpop.f32.mrb[0].mxu0
    %v3731 = vadd.f32 %v3618, %v3730
    %3732 = vmatprep.mubr.bf16.mxu0 %v3067
    %3733 = vmatmul.mubr.bf16.gmra.mrb[0].mxu0 %v3066
    %v3734 = vpop.f32.mrb[0].mxu0
    %v3735 = vadd.f32 %v3622, %v3734
    %v3736 = vpop.f32.mrb[0].mxu0
    %v3737 = vadd.f32 %v3624, %v3736
    %v3738 = vpop.f32.mrb[0].mxu0
    %v3739 = vadd.f32 %v3626, %v3738
    %v3740 = vpop.f32.mrb[0].mxu0
    %v3741 = vadd.f32 %v3628, %v3740
    %3742 = vmatprep.mubr.bf16.mxu0 %v3079
    %3743 = vmatmul.mubr.bf16.gmra.mrb[0].mxu0 %v3078
    %v3744 = vpop.f32.mrb[0].mxu0
    %v3745 = vadd.f32 %v3632, %v3744
    %v3746 = vpop.f32.mrb[0].mxu0
    %v3747 = vadd.f32 %v3634, %v3746
    %v3748 = vpop.f32.mrb[0].mxu0
    %v3749 = vadd.f32 %v3636, %v3748
    %v3750 = vpop.f32.mrb[0].mxu0
    %v3751 = vadd.f32 %v3638, %v3750
    %3752 = vmatprep.mubr.bf16.mxu0 %v3091
    %3753 = vmatmul.mubr.bf16.gmra.mrb[0].mxu0 %v3090
    %v3754 = vpop.f32.mrb[0].mxu0
    %v3755 = vadd.f32 %v3642, %v3754
    %v3756 = vpop.f32.mrb[0].mxu0
    %v3757 = vadd.f32 %v3644, %v3756
    %v3758 = vpop.f32.mrb[0].mxu0
    %v3759 = vadd.f32 %v3646, %v3758
    %v3760 = vpop.f32.mrb[0].mxu0
    %v3761 = vadd.f32 %v3648, %v3760
    %3762 = vmatprep.mubr.bf16.mxu0 %v3103
    %3763 = vmatmul.mubr.bf16.gmra.mrb[0].mxu0 %v3102
    %v3764 = vpop.f32.mrb[0].mxu0
    %v3765 = vadd.f32 %v3652, %v3764
    %v3766 = vpop.f32.mrb[0].mxu0
    %v3767 = vadd.f32 %v3654, %v3766
    %v3768 = vpop.f32.mrb[0].mxu0
    %v3769 = vadd.f32 %v3656, %v3768
    %v3770 = vpop.f32.mrb[0].mxu0
    %v3771 = vadd.f32 %v3658, %v3770
    %3772 = vmatprep.mubr.bf16.mxu0 %v3115
    %3773 = vmatmul.mubr.bf16.gmra.mrb[0].mxu0 %v3114
    %v3774 = vpop.f32.mrb[0].mxu0
    %v3775 = vadd.f32 %v3662, %v3774
    %v3776 = vpop.f32.mrb[0].mxu0
    %v3777 = vadd.f32 %v3664, %v3776
    %v3778 = vpop.f32.mrb[0].mxu0
    %v3779 = vadd.f32 %v3666, %v3778
    %v3780 = vpop.f32.mrb[0].mxu0
    %v3781 = vadd.f32 %v3668, %v3780
    %3782 = vmatprep.mubr.bf16.mxu0 %v3127
    %3783 = vmatmul.mubr.bf16.gmra.mrb[0].mxu0 %v3126
    %v3784 = vpop.f32.mrb[0].mxu0
    %v3785 = vadd.f32 %v3672, %v3784
    %v3786 = vpop.f32.mrb[0].mxu0
    %v3787 = vadd.f32 %v3674, %v3786
    %v3788 = vpop.f32.mrb[0].mxu0
    %v3789 = vadd.f32 %v3676, %v3788
    %v3790 = vpop.f32.mrb[0].mxu0
    %v3791 = vadd.f32 %v3678, %v3790
    %3792 = vmatprep.mubr.bf16.mxu0 %v3139
    %3793 = vmatmul.mubr.bf16.gmra.mrb[0].mxu0 %v3138
    %v3794 = vpop.f32.mrb[0].mxu0
    %v3795 = vadd.f32 %v3682, %v3794
    %v3796 = vpop.f32.mrb[0].mxu0
    %v3797 = vadd.f32 %v3684, %v3796
    %v3798 = vpop.f32.mrb[0].mxu0
    %v3799 = vadd.f32 %v3686, %v3798
    %v3800 = vpop.f32.mrb[0].mxu0
    %v3801 = vadd.f32 %v3688, %v3800
    %3802 = vdwg.mxu0
    %3803 = vmatprep.subr.bf16.mxu0 %v2663
    %3804 = vmatpush1.bf16.msra.mxu0 %v2662
    %3805 = vmatprep.subr.bf16.mxu0 %v2669
    %3806 = vmatpush1.bf16.msra.mxu0 %v2668
    %3807 = vmatprep.subr.bf16.mxu0 %v2675
    %3808 = vmatpush1.bf16.msra.mxu0 %v2674
    %3809 = vmatprep.subr.bf16.mxu0 %v2681
    %3810 = vmatpush1.bf16.msra.mxu0 %v2680
    %3811 = vmatprep.subr.bf16.mxu0 %v2687
    %3812 = vmatpush1.bf16.msra.mxu0 %v2686
    %3813 = vmatprep.subr.bf16.mxu0 %v2693
    %3814 = vmatpush1.bf16.msra.mxu0 %v2692
    %3815 = vmatprep.subr.bf16.mxu0 %v2699
    %3816 = vmatpush1.bf16.msra.mxu0 %v2698
    %3817 = vmatprep.subr.bf16.mxu0 %v2705
    %3818 = vmatpush1.bf16.msra.mxu0 %v2704
    %3819 = vmatprep.subr.bf16.mxu0 %v2711
    %3820 = vmatpush1.bf16.msra.mxu0 %v2710
    %3821 = vmatprep.subr.bf16.mxu0 %v2717
    %3822 = vmatpush1.bf16.msra.mxu0 %v2716
    %3823 = vmatprep.subr.bf16.mxu0 %v2723
    %3824 = vmatpush1.bf16.msra.mxu0 %v2722
    %3825 = vmatprep.subr.bf16.mxu0 %v2729
    %3826 = vmatpush1.bf16.msra.mxu0 %v2728
    %3827 = vmatprep.subr.bf16.mxu0 %v2735
    %3828 = vmatpush1.bf16.msra.mxu0 %v2734
    %3829 = vmatprep.subr.bf16.mxu0 %v2741
    %3830 = vmatpush1.bf16.msra.mxu0 %v2740
    %3831 = vmatprep.subr.bf16.mxu0 %v2747
    %3832 = vmatpush1.bf16.msra.mxu0 %v2746
    %3833 = vmatprep.subr.bf16.mxu0 %v2753
    %3834 = vmatpush1.bf16.msra.mxu0 %v2752
    %3835 = vmatprep.mubr.bf16.mxu0 %v3057
    %3836 = vmatmul.mubr.bf16.gmra.mrb[0].mxu0 %v3056
    %v3837 = vpop.f32.mrb[0].mxu0
    %v3838 = vadd.f32 %v3725, %v3837
    %v3839 = vpop.f32.mrb[0].mxu0
    %v3840 = vadd.f32 %v3727, %v3839
    %v3841 = vpop.f32.mrb[0].mxu0
    %v3842 = vadd.f32 %v3729, %v3841
    %v3843 = vpop.f32.mrb[0].mxu0
    %v3844 = vadd.f32 %v3731, %v3843
    %3845 = vmatprep.mubr.bf16.mxu0 %v3069
    %3846 = vmatmul.mubr.bf16.gmra.mrb[0].mxu0 %v3068
    %v3847 = vpop.f32.mrb[0].mxu0
    %v3848 = vadd.f32 %v3735, %v3847
    %v3849 = vpop.f32.mrb[0].mxu0
    %v3850 = vadd.f32 %v3737, %v3849
    %v3851 = vpop.f32.mrb[0].mxu0
    %v3852 = vadd.f32 %v3739, %v3851
    %v3853 = vpop.f32.mrb[0].mxu0
    %v3854 = vadd.f32 %v3741, %v3853
    %3855 = vmatprep.mubr.bf16.mxu0 %v3081
    %3856 = vmatmul.mubr.bf16.gmra.mrb[0].mxu0 %v3080
    %v3857 = vpop.f32.mrb[0].mxu0
    %v3858 = vadd.f32 %v3745, %v3857
    %v3859 = vpop.f32.mrb[0].mxu0
    %v3860 = vadd.f32 %v3747, %v3859
    %v3861 = vpop.f32.mrb[0].mxu0
    %v3862 = vadd.f32 %v3749, %v3861
    %v3863 = vpop.f32.mrb[0].mxu0
    %v3864 = vadd.f32 %v3751, %v3863
    %3865 = vmatprep.mubr.bf16.mxu0 %v3093
    %3866 = vmatmul.mubr.bf16.gmra.mrb[0].mxu0 %v3092
    %v3867 = vpop.f32.mrb[0].mxu0
    %v3868 = vadd.f32 %v3755, %v3867
    %v3869 = vpop.f32.mrb[0].mxu0
    %v3870 = vadd.f32 %v3757, %v3869
    %v3871 = vpop.f32.mrb[0].mxu0
    %v3872 = vadd.f32 %v3759, %v3871
    %v3873 = vpop.f32.mrb[0].mxu0
    %v3874 = vadd.f32 %v3761, %v3873
    %3875 = vmatprep.mubr.bf16.mxu0 %v3105
    %3876 = vmatmul.mubr.bf16.gmra.mrb[0].mxu0 %v3104
    %v3877 = vpop.f32.mrb[0].mxu0
    %v3878 = vadd.f32 %v3765, %v3877
    %v3879 = vpop.f32.mrb[0].mxu0
    %v3880 = vadd.f32 %v3767, %v3879
    %v3881 = vpop.f32.mrb[0].mxu0
    %v3882 = vadd.f32 %v3769, %v3881
    %v3883 = vpop.f32.mrb[0].mxu0
    %v3884 = vadd.f32 %v3771, %v3883
    %3885 = vmatprep.mubr.bf16.mxu0 %v3117
    %3886 = vmatmul.mubr.bf16.gmra.mrb[0].mxu0 %v3116
    %v3887 = vpop.f32.mrb[0].mxu0
    %v3888 = vadd.f32 %v3775, %v3887
    %v3889 = vpop.f32.mrb[0].mxu0
    %v3890 = vadd.f32 %v3777, %v3889
    %v3891 = vpop.f32.mrb[0].mxu0
    %v3892 = vadd.f32 %v3779, %v3891
    %v3893 = vpop.f32.mrb[0].mxu0
    %v3894 = vadd.f32 %v3781, %v3893
    %3895 = vmatprep.mubr.bf16.mxu0 %v3129
    %3896 = vmatmul.mubr.bf16.gmra.mrb[0].mxu0 %v3128
    %v3897 = vpop.f32.mrb[0].mxu0
    %v3898 = vadd.f32 %v3785, %v3897
    %v3899 = vpop.f32.mrb[0].mxu0
    %v3900 = vadd.f32 %v3787, %v3899
    %v3901 = vpop.f32.mrb[0].mxu0
    %v3902 = vadd.f32 %v3789, %v3901
    %v3903 = vpop.f32.mrb[0].mxu0
    %v3904 = vadd.f32 %v3791, %v3903
    %3905 = vmatprep.mubr.bf16.mxu0 %v3141
    %3906 = vmatmul.mubr.bf16.gmra.mrb[0].mxu0 %v3140
    %v3907 = vpop.f32.mrb[0].mxu0
    %v3908 = vadd.f32 %v3795, %v3907
    %v3909 = vpop.f32.mrb[0].mxu0
    %v3910 = vadd.f32 %v3797, %v3909
    %v3911 = vpop.f32.mrb[0].mxu0
    %v3912 = vadd.f32 %v3799, %v3911
    %v3913 = vpop.f32.mrb[0].mxu0
    %v3914 = vadd.f32 %v3801, %v3913
    %3915 = vdwg.mxu0
    %3916 = vmatprep.subr.bf16.mxu0 %v2185
    %3917 = vmatpush1.bf16.msra.mxu0 %v2184
    %3918 = vmatprep.subr.bf16.mxu0 %v2191
    %3919 = vmatpush1.bf16.msra.mxu0 %v2190
    %3920 = vmatprep.subr.bf16.mxu0 %v2197
    %3921 = vmatpush1.bf16.msra.mxu0 %v2196
    %3922 = vmatprep.subr.bf16.mxu0 %v2203
    %3923 = vmatpush1.bf16.msra.mxu0 %v2202
    %3924 = vmatprep.subr.bf16.mxu0 %v2209
    %3925 = vmatpush1.bf16.msra.mxu0 %v2208
    %3926 = vmatprep.subr.bf16.mxu0 %v2215
    %3927 = vmatpush1.bf16.msra.mxu0 %v2214
    %3928 = vmatprep.subr.bf16.mxu0 %v2221
    %3929 = vmatpush1.bf16.msra.mxu0 %v2220
    %3930 = vmatprep.subr.bf16.mxu0 %v2227
    %3931 = vmatpush1.bf16.msra.mxu0 %v2226
    %3932 = vmatprep.subr.bf16.mxu0 %v2233
    %3933 = vmatpush1.bf16.msra.mxu0 %v2232
    %3934 = vmatprep.subr.bf16.mxu0 %v2239
    %3935 = vmatpush1.bf16.msra.mxu0 %v2238
    %3936 = vmatprep.subr.bf16.mxu0 %v2245
    %3937 = vmatpush1.bf16.msra.mxu0 %v2244
    %3938 = vmatprep.subr.bf16.mxu0 %v2251
    %3939 = vmatpush1.bf16.msra.mxu0 %v2250
    %3940 = vmatprep.subr.bf16.mxu0 %v2257
    %3941 = vmatpush1.bf16.msra.mxu0 %v2256
    %3942 = vmatprep.subr.bf16.mxu0 %v2263
    %3943 = vmatpush1.bf16.msra.mxu0 %v2262
    %3944 = vmatprep.subr.bf16.mxu0 %v2269
    %3945 = vmatpush1.bf16.msra.mxu0 %v2268
    %3946 = vmatprep.subr.bf16.mxu0 %v2275
    %3947 = vmatpush1.bf16.msra.mxu0 %v2274
    %3948 = vmatprep.mubr.bf16.mxu0 %v3047
    %3949 = vmatmul.mubr.bf16.gmra.mrb[0].mxu0 %v3046
    %v3950 = vpop.f32.mrb[0].mxu0
    %v3951 = vadd.f32 0.0, %v3950
    %v3952 = vpop.f32.mrb[0].mxu0
    %v3953 = vadd.f32 0.0, %v3952
    %v3954 = vpop.f32.mrb[0].mxu0
    %v3955 = vadd.f32 0.0, %v3954
    %v3956 = vpop.f32.mrb[0].mxu0
    %v3957 = vadd.f32 0.0, %v3956
    %3958 = vmatprep.mubr.bf16.mxu0 %v3059
    %3959 = vmatmul.mubr.bf16.gmra.mrb[0].mxu0 %v3058
    %v3960 = vpop.f32.mrb[0].mxu0
    %v3961 = vadd.f32 0.0, %v3960
    %v3962 = vpop.f32.mrb[0].mxu0
    %v3963 = vadd.f32 0.0, %v3962
    %v3964 = vpop.f32.mrb[0].mxu0
    %v3965 = vadd.f32 0.0, %v3964
    %v3966 = vpop.f32.mrb[0].mxu0
    %v3967 = vadd.f32 0.0, %v3966
    %3968 = vmatprep.mubr.bf16.mxu0 %v3071
    %3969 = vmatmul.mubr.bf16.gmra.mrb[0].mxu0 %v3070
    %v3970 = vpop.f32.mrb[0].mxu0
    %v3971 = vadd.f32 0.0, %v3970
    %v3972 = vpop.f32.mrb[0].mxu0
    %v3973 = vadd.f32 0.0, %v3972
    %v3974 = vpop.f32.mrb[0].mxu0
    %v3975 = vadd.f32 0.0, %v3974
    %v3976 = vpop.f32.mrb[0].mxu0
    %v3977 = vadd.f32 0.0, %v3976
    %3978 = vmatprep.mubr.bf16.mxu0 %v3083
    %3979 = vmatmul.mubr.bf16.gmra.mrb[0].mxu0 %v3082
    %v3980 = vpop.f32.mrb[0].mxu0
    %v3981 = vadd.f32 0.0, %v3980
    %v3982 = vpop.f32.mrb[0].mxu0
    %v3983 = vadd.f32 0.0, %v3982
    %v3984 = vpop.f32.mrb[0].mxu0
    %v3985 = vadd.f32 0.0, %v3984
    %v3986 = vpop.f32.mrb[0].mxu0
    %v3987 = vadd.f32 0.0, %v3986
    %3988 = vmatprep.mubr.bf16.mxu0 %v3095
    %3989 = vmatmul.mubr.bf16.gmra.mrb[0].mxu0 %v3094
    %v3990 = vpop.f32.mrb[0].mxu0
    %v3991 = vadd.f32 0.0, %v3990
    %v3992 = vpop.f32.mrb[0].mxu0
    %v3993 = vadd.f32 0.0, %v3992
    %v3994 = vpop.f32.mrb[0].mxu0
    %v3995 = vadd.f32 0.0, %v3994
    %v3996 = vpop.f32.mrb[0].mxu0
    %v3997 = vadd.f32 0.0, %v3996
    %3998 = vmatprep.mubr.bf16.mxu0 %v3107
    %3999 = vmatmul.mubr.bf16.gmra.mrb[0].mxu0 %v3106
    %v4000 = vpop.f32.mrb[0].mxu0
    %v4001 = vadd.f32 0.0, %v4000
    %v4002 = vpop.f32.mrb[0].mxu0
    %v4003 = vadd.f32 0.0, %v4002
    %v4004 = vpop.f32.mrb[0].mxu0
    %v4005 = vadd.f32 0.0, %v4004
    %v4006 = vpop.f32.mrb[0].mxu0
    %v4007 = vadd.f32 0.0, %v4006
    %4008 = vmatprep.mubr.bf16.mxu0 %v3119
    %4009 = vmatmul.mubr.bf16.gmra.mrb[0].mxu0 %v3118
    %v4010 = vpop.f32.mrb[0].mxu0
    %v4011 = vadd.f32 0.0, %v4010
    %v4012 = vpop.f32.mrb[0].mxu0
    %v4013 = vadd.f32 0.0, %v4012
    %v4014 = vpop.f32.mrb[0].mxu0
    %v4015 = vadd.f32 0.0, %v4014
    %v4016 = vpop.f32.mrb[0].mxu0
    %v4017 = vadd.f32 0.0, %v4016
    %4018 = vmatprep.mubr.bf16.mxu0 %v3131
    %4019 = vmatmul.mubr.bf16.gmra.mrb[0].mxu0 %v3130
    %v4020 = vpop.f32.mrb[0].mxu0
    %v4021 = vadd.f32 0.0, %v4020
    %v4022 = vpop.f32.mrb[0].mxu0
    %v4023 = vadd.f32 0.0, %v4022
    %v4024 = vpop.f32.mrb[0].mxu0
    %v4025 = vadd.f32 0.0, %v4024
    %v4026 = vpop.f32.mrb[0].mxu0
    %v4027 = vadd.f32 0.0, %v4026
    %4028 = vdwg.mxu0
    %4029 = vmatprep.subr.bf16.mxu0 %v2281
    %4030 = vmatpush1.bf16.msra.mxu0 %v2280
    %4031 = vmatprep.subr.bf16.mxu0 %v2287
    %4032 = vmatpush1.bf16.msra.mxu0 %v2286
    %4033 = vmatprep.subr.bf16.mxu0 %v2293
    %4034 = vmatpush1.bf16.msra.mxu0 %v2292
    %4035 = vmatprep.subr.bf16.mxu0 %v2299
    %4036 = vmatpush1.bf16.msra.mxu0 %v2298
    %4037 = vmatprep.subr.bf16.mxu0 %v2305
    %4038 = vmatpush1.bf16.msra.mxu0 %v2304
    %4039 = vmatprep.subr.bf16.mxu0 %v2311
    %4040 = vmatpush1.bf16.msra.mxu0 %v2310
    %4041 = vmatprep.subr.bf16.mxu0 %v2317
    %4042 = vmatpush1.bf16.msra.mxu0 %v2316
    %4043 = vmatprep.subr.bf16.mxu0 %v2323
    %4044 = vmatpush1.bf16.msra.mxu0 %v2322
    %4045 = vmatprep.subr.bf16.mxu0 %v2329
    %4046 = vmatpush1.bf16.msra.mxu0 %v2328
    %4047 = vmatprep.subr.bf16.mxu0 %v2335
    %4048 = vmatpush1.bf16.msra.mxu0 %v2334
    %4049 = vmatprep.subr.bf16.mxu0 %v2341
    %4050 = vmatpush1.bf16.msra.mxu0 %v2340
    %4051 = vmatprep.subr.bf16.mxu0 %v2347
    %4052 = vmatpush1.bf16.msra.mxu0 %v2346
    %4053 = vmatprep.subr.bf16.mxu0 %v2353
    %4054 = vmatpush1.bf16.msra.mxu0 %v2352
    %4055 = vmatprep.subr.bf16.mxu0 %v2359
    %4056 = vmatpush1.bf16.msra.mxu0 %v2358
    %4057 = vmatprep.subr.bf16.mxu0 %v2365
    %4058 = vmatpush1.bf16.msra.mxu0 %v2364
    %4059 = vmatprep.subr.bf16.mxu0 %v2371
    %4060 = vmatpush1.bf16.msra.mxu0 %v2370
    %4061 = vmatprep.mubr.bf16.mxu0 %v3049
    %4062 = vmatmul.mubr.bf16.gmra.mrb[0].mxu0 %v3048
    %v4063 = vpop.f32.mrb[0].mxu0
    %v4064 = vadd.f32 %v3951, %v4063
    %v4065 = vpop.f32.mrb[0].mxu0
    %v4066 = vadd.f32 %v3953, %v4065
    %v4067 = vpop.f32.mrb[0].mxu0
    %v4068 = vadd.f32 %v3955, %v4067
    %v4069 = vpop.f32.mrb[0].mxu0
    %v4070 = vadd.f32 %v3957, %v4069
    %4071 = vmatprep.mubr.bf16.mxu0 %v3061
    %4072 = vmatmul.mubr.bf16.gmra.mrb[0].mxu0 %v3060
    %v4073 = vpop.f32.mrb[0].mxu0
    %v4074 = vadd.f32 %v3961, %v4073
    %v4075 = vpop.f32.mrb[0].mxu0
    %v4076 = vadd.f32 %v3963, %v4075
    %v4077 = vpop.f32.mrb[0].mxu0
    %v4078 = vadd.f32 %v3965, %v4077
    %v4079 = vpop.f32.mrb[0].mxu0
    %v4080 = vadd.f32 %v3967, %v4079
    %4081 = vmatprep.mubr.bf16.mxu0 %v3073
    %4082 = vmatmul.mubr.bf16.gmra.mrb[0].mxu0 %v3072
    %v4083 = vpop.f32.mrb[0].mxu0
    %v4084 = vadd.f32 %v3971, %v4083
    %v4085 = vpop.f32.mrb[0].mxu0
    %v4086 = vadd.f32 %v3973, %v4085
    %v4087 = vpop.f32.mrb[0].mxu0
    %v4088 = vadd.f32 %v3975, %v4087
    %v4089 = vpop.f32.mrb[0].mxu0
    %v4090 = vadd.f32 %v3977, %v4089
    %4091 = vmatprep.mubr.bf16.mxu0 %v3085
    %4092 = vmatmul.mubr.bf16.gmra.mrb[0].mxu0 %v3084
    %v4093 = vpop.f32.mrb[0].mxu0
    %v4094 = vadd.f32 %v3981, %v4093
    %v4095 = vpop.f32.mrb[0].mxu0
    %v4096 = vadd.f32 %v3983, %v4095
    %v4097 = vpop.f32.mrb[0].mxu0
    %v4098 = vadd.f32 %v3985, %v4097
    %v4099 = vpop.f32.mrb[0].mxu0
    %v4100 = vadd.f32 %v3987, %v4099
    %4101 = vmatprep.mubr.bf16.mxu0 %v3097
    %4102 = vmatmul.mubr.bf16.gmra.mrb[0].mxu0 %v3096
    %v4103 = vpop.f32.mrb[0].mxu0
    %v4104 = vadd.f32 %v3991, %v4103
    %v4105 = vpop.f32.mrb[0].mxu0
    %v4106 = vadd.f32 %v3993, %v4105
    %v4107 = vpop.f32.mrb[0].mxu0
    %v4108 = vadd.f32 %v3995, %v4107
    %v4109 = vpop.f32.mrb[0].mxu0
    %v4110 = vadd.f32 %v3997, %v4109
    %4111 = vmatprep.mubr.bf16.mxu0 %v3109
    %4112 = vmatmul.mubr.bf16.gmra.mrb[0].mxu0 %v3108
    %v4113 = vpop.f32.mrb[0].mxu0
    %v4114 = vadd.f32 %v4001, %v4113
    %v4115 = vpop.f32.mrb[0].mxu0
    %v4116 = vadd.f32 %v4003, %v4115
    %v4117 = vpop.f32.mrb[0].mxu0
    %v4118 = vadd.f32 %v4005, %v4117
    %v4119 = vpop.f32.mrb[0].mxu0
    %v4120 = vadd.f32 %v4007, %v4119
    %4121 = vmatprep.mubr.bf16.mxu0 %v3121
    %4122 = vmatmul.mubr.bf16.gmra.mrb[0].mxu0 %v3120
    %v4123 = vpop.f32.mrb[0].mxu0
    %v4124 = vadd.f32 %v4011, %v4123
    %v4125 = vpop.f32.mrb[0].mxu0
    %v4126 = vadd.f32 %v4013, %v4125
    %v4127 = vpop.f32.mrb[0].mxu0
    %v4128 = vadd.f32 %v4015, %v4127
    %v4129 = vpop.f32.mrb[0].mxu0
    %v4130 = vadd.f32 %v4017, %v4129
    %4131 = vmatprep.mubr.bf16.mxu0 %v3133
    %4132 = vmatmul.mubr.bf16.gmra.mrb[0].mxu0 %v3132
    %v4133 = vpop.f32.mrb[0].mxu0
    %v4134 = vadd.f32 %v4021, %v4133
    %v4135 = vpop.f32.mrb[0].mxu0
    %v4136 = vadd.f32 %v4023, %v4135
    %v4137 = vpop.f32.mrb[0].mxu0
    %v4138 = vadd.f32 %v4025, %v4137
    %v4139 = vpop.f32.mrb[0].mxu0
    %v4140 = vadd.f32 %v4027, %v4139
    %4141 = vdwg.mxu0
    %4142 = vmatprep.subr.bf16.mxu0 %v2377
    %4143 = vmatpush1.bf16.msra.mxu0 %v2376
    %4144 = vmatprep.subr.bf16.mxu0 %v2383
    %4145 = vmatpush1.bf16.msra.mxu0 %v2382
    %4146 = vmatprep.subr.bf16.mxu0 %v2389
    %4147 = vmatpush1.bf16.msra.mxu0 %v2388
    %4148 = vmatprep.subr.bf16.mxu0 %v2395
    %4149 = vmatpush1.bf16.msra.mxu0 %v2394
    %4150 = vmatprep.subr.bf16.mxu0 %v2401
    %4151 = vmatpush1.bf16.msra.mxu0 %v2400
    %4152 = vmatprep.subr.bf16.mxu0 %v2407
    %4153 = vmatpush1.bf16.msra.mxu0 %v2406
    %4154 = vmatprep.subr.bf16.mxu0 %v2413
    %4155 = vmatpush1.bf16.msra.mxu0 %v2412
    %4156 = vmatprep.subr.bf16.mxu0 %v2419
    %4157 = vmatpush1.bf16.msra.mxu0 %v2418
    %4158 = vmatprep.subr.bf16.mxu0 %v2425
    %4159 = vmatpush1.bf16.msra.mxu0 %v2424
    %4160 = vmatprep.subr.bf16.mxu0 %v2431
    %4161 = vmatpush1.bf16.msra.mxu0 %v2430
    %4162 = vmatprep.subr.bf16.mxu0 %v2437
    %4163 = vmatpush1.bf16.msra.mxu0 %v2436
    %4164 = vmatprep.subr.bf16.mxu0 %v2443
    %4165 = vmatpush1.bf16.msra.mxu0 %v2442
    %4166 = vmatprep.subr.bf16.mxu0 %v2449
    %4167 = vmatpush1.bf16.msra.mxu0 %v2448
    %4168 = vmatprep.subr.bf16.mxu0 %v2455
    %4169 = vmatpush1.bf16.msra.mxu0 %v2454
    %4170 = vmatprep.subr.bf16.mxu0 %v2461
    %4171 = vmatpush1.bf16.msra.mxu0 %v2460
    %4172 = vmatprep.subr.bf16.mxu0 %v2467
    %4173 = vmatpush1.bf16.msra.mxu0 %v2466
    %4174 = vmatprep.mubr.bf16.mxu0 %v3051
    %4175 = vmatmul.mubr.bf16.gmra.mrb[0].mxu0 %v3050
    %v4176 = vpop.f32.mrb[0].mxu0
    %v4177 = vadd.f32 %v4064, %v4176
    %v4178 = vpop.f32.mrb[0].mxu0
    %v4179 = vadd.f32 %v4066, %v4178
    %v4180 = vpop.f32.mrb[0].mxu0
    %v4181 = vadd.f32 %v4068, %v4180
    %v4182 = vpop.f32.mrb[0].mxu0
    %v4183 = vadd.f32 %v4070, %v4182
    %4184 = vmatprep.mubr.bf16.mxu0 %v3063
    %4185 = vmatmul.mubr.bf16.gmra.mrb[0].mxu0 %v3062
    %v4186 = vpop.f32.mrb[0].mxu0
    %v4187 = vadd.f32 %v4074, %v4186
    %v4188 = vpop.f32.mrb[0].mxu0
    %v4189 = vadd.f32 %v4076, %v4188
    %v4190 = vpop.f32.mrb[0].mxu0
    %v4191 = vadd.f32 %v4078, %v4190
    %v4192 = vpop.f32.mrb[0].mxu0
    %v4193 = vadd.f32 %v4080, %v4192
    %4194 = vmatprep.mubr.bf16.mxu0 %v3075
    %4195 = vmatmul.mubr.bf16.gmra.mrb[0].mxu0 %v3074
    %v4196 = vpop.f32.mrb[0].mxu0
    %v4197 = vadd.f32 %v4084, %v4196
    %v4198 = vpop.f32.mrb[0].mxu0
    %v4199 = vadd.f32 %v4086, %v4198
    %v4200 = vpop.f32.mrb[0].mxu0
    %v4201 = vadd.f32 %v4088, %v4200
    %v4202 = vpop.f32.mrb[0].mxu0
    %v4203 = vadd.f32 %v4090, %v4202
    %4204 = vmatprep.mubr.bf16.mxu0 %v3087
    %4205 = vmatmul.mubr.bf16.gmra.mrb[0].mxu0 %v3086
    %v4206 = vpop.f32.mrb[0].mxu0
    %v4207 = vadd.f32 %v4094, %v4206
    %v4208 = vpop.f32.mrb[0].mxu0
    %v4209 = vadd.f32 %v4096, %v4208
    %v4210 = vpop.f32.mrb[0].mxu0
    %v4211 = vadd.f32 %v4098, %v4210
    %v4212 = vpop.f32.mrb[0].mxu0
    %v4213 = vadd.f32 %v4100, %v4212
    %4214 = vmatprep.mubr.bf16.mxu0 %v3099
    %4215 = vmatmul.mubr.bf16.gmra.mrb[0].mxu0 %v3098
    %v4216 = vpop.f32.mrb[0].mxu0
    %v4217 = vadd.f32 %v4104, %v4216
    %v4218 = vpop.f32.mrb[0].mxu0
    %v4219 = vadd.f32 %v4106, %v4218
    %v4220 = vpop.f32.mrb[0].mxu0
    %v4221 = vadd.f32 %v4108, %v4220
    %v4222 = vpop.f32.mrb[0].mxu0
    %v4223 = vadd.f32 %v4110, %v4222
    %4224 = vmatprep.mubr.bf16.mxu0 %v3111
    %4225 = vmatmul.mubr.bf16.gmra.mrb[0].mxu0 %v3110
    %v4226 = vpop.f32.mrb[0].mxu0
    %v4227 = vadd.f32 %v4114, %v4226
    %v4228 = vpop.f32.mrb[0].mxu0
    %v4229 = vadd.f32 %v4116, %v4228
    %v4230 = vpop.f32.mrb[0].mxu0
    %v4231 = vadd.f32 %v4118, %v4230
    %v4232 = vpop.f32.mrb[0].mxu0
    %v4233 = vadd.f32 %v4120, %v4232
    %4234 = vmatprep.mubr.bf16.mxu0 %v3123
    %4235 = vmatmul.mubr.bf16.gmra.mrb[0].mxu0 %v3122
    %v4236 = vpop.f32.mrb[0].mxu0
    %v4237 = vadd.f32 %v4124, %v4236
    %v4238 = vpop.f32.mrb[0].mxu0
    %v4239 = vadd.f32 %v4126, %v4238
    %v4240 = vpop.f32.mrb[0].mxu0
    %v4241 = vadd.f32 %v4128, %v4240
    %v4242 = vpop.f32.mrb[0].mxu0
    %v4243 = vadd.f32 %v4130, %v4242
    %4244 = vmatprep.mubr.bf16.mxu0 %v3135
    %4245 = vmatmul.mubr.bf16.gmra.mrb[0].mxu0 %v3134
    %v4246 = vpop.f32.mrb[0].mxu0
    %v4247 = vadd.f32 %v4134, %v4246
    %v4248 = vpop.f32.mrb[0].mxu0
    %v4249 = vadd.f32 %v4136, %v4248
    %v4250 = vpop.f32.mrb[0].mxu0
    %v4251 = vadd.f32 %v4138, %v4250
    %v4252 = vpop.f32.mrb[0].mxu0
    %v4253 = vadd.f32 %v4140, %v4252
    %4254 = vdwg.mxu0
    %4255 = vmatprep.subr.bf16.mxu0 %v2473
    %4256 = vmatpush1.bf16.msra.mxu0 %v2472
    %4257 = vmatprep.subr.bf16.mxu0 %v2479
    %4258 = vmatpush1.bf16.msra.mxu0 %v2478
    %4259 = vmatprep.subr.bf16.mxu0 %v2485
    %4260 = vmatpush1.bf16.msra.mxu0 %v2484
    %4261 = vmatprep.subr.bf16.mxu0 %v2491
    %4262 = vmatpush1.bf16.msra.mxu0 %v2490
    %4263 = vmatprep.subr.bf16.mxu0 %v2497
    %4264 = vmatpush1.bf16.msra.mxu0 %v2496
    %4265 = vmatprep.subr.bf16.mxu0 %v2503
    %4266 = vmatpush1.bf16.msra.mxu0 %v2502
    %4267 = vmatprep.subr.bf16.mxu0 %v2509
    %4268 = vmatpush1.bf16.msra.mxu0 %v2508
    %4269 = vmatprep.subr.bf16.mxu0 %v2515
    %4270 = vmatpush1.bf16.msra.mxu0 %v2514
    %4271 = vmatprep.subr.bf16.mxu0 %v2521
    %4272 = vmatpush1.bf16.msra.mxu0 %v2520
    %4273 = vmatprep.subr.bf16.mxu0 %v2527
    %4274 = vmatpush1.bf16.msra.mxu0 %v2526
    %4275 = vmatprep.subr.bf16.mxu0 %v2533
    %4276 = vmatpush1.bf16.msra.mxu0 %v2532
    %4277 = vmatprep.subr.bf16.mxu0 %v2539
    %4278 = vmatpush1.bf16.msra.mxu0 %v2538
    %4279 = vmatprep.subr.bf16.mxu0 %v2545
    %4280 = vmatpush1.bf16.msra.mxu0 %v2544
    %4281 = vmatprep.subr.bf16.mxu0 %v2551
    %4282 = vmatpush1.bf16.msra.mxu0 %v2550
    %4283 = vmatprep.subr.bf16.mxu0 %v2557
    %4284 = vmatpush1.bf16.msra.mxu0 %v2556
    %4285 = vmatprep.subr.bf16.mxu0 %v2563
    %4286 = vmatpush1.bf16.msra.mxu0 %v2562
    %4287 = vmatprep.mubr.bf16.mxu0 %v3053
    %4288 = vmatmul.mubr.bf16.gmra.mrb[0].mxu0 %v3052
    %v4289 = vpop.f32.mrb[0].mxu0
    %v4290 = vadd.f32 %v4177, %v4289
    %v4291 = vpop.f32.mrb[0].mxu0
    %v4292 = vadd.f32 %v4179, %v4291
    %v4293 = vpop.f32.mrb[0].mxu0
    %v4294 = vadd.f32 %v4181, %v4293
    %v4295 = vpop.f32.mrb[0].mxu0
    %v4296 = vadd.f32 %v4183, %v4295
    %4297 = vmatprep.mubr.bf16.mxu0 %v3065
    %4298 = vmatmul.mubr.bf16.gmra.mrb[0].mxu0 %v3064
    %v4299 = vpop.f32.mrb[0].mxu0
    %v4300 = vadd.f32 %v4187, %v4299
    %v4301 = vpop.f32.mrb[0].mxu0
    %v4302 = vadd.f32 %v4189, %v4301
    %v4303 = vpop.f32.mrb[0].mxu0
    %v4304 = vadd.f32 %v4191, %v4303
    %v4305 = vpop.f32.mrb[0].mxu0
    %v4306 = vadd.f32 %v4193, %v4305
    %4307 = vmatprep.mubr.bf16.mxu0 %v3077
    %4308 = vmatmul.mubr.bf16.gmra.mrb[0].mxu0 %v3076
    %v4309 = vpop.f32.mrb[0].mxu0
    %v4310 = vadd.f32 %v4197, %v4309
    %v4311 = vpop.f32.mrb[0].mxu0
    %v4312 = vadd.f32 %v4199, %v4311
    %v4313 = vpop.f32.mrb[0].mxu0
    %v4314 = vadd.f32 %v4201, %v4313
    %v4315 = vpop.f32.mrb[0].mxu0
    %v4316 = vadd.f32 %v4203, %v4315
    %4317 = vmatprep.mubr.bf16.mxu0 %v3089
    %4318 = vmatmul.mubr.bf16.gmra.mrb[0].mxu0 %v3088
    %v4319 = vpop.f32.mrb[0].mxu0
    %v4320 = vadd.f32 %v4207, %v4319
    %v4321 = vpop.f32.mrb[0].mxu0
    %v4322 = vadd.f32 %v4209, %v4321
    %v4323 = vpop.f32.mrb[0].mxu0
    %v4324 = vadd.f32 %v4211, %v4323
    %v4325 = vpop.f32.mrb[0].mxu0
    %v4326 = vadd.f32 %v4213, %v4325
    %4327 = vmatprep.mubr.bf16.mxu0 %v3101
    %4328 = vmatmul.mubr.bf16.gmra.mrb[0].mxu0 %v3100
    %v4329 = vpop.f32.mrb[0].mxu0
    %v4330 = vadd.f32 %v4217, %v4329
    %v4331 = vpop.f32.mrb[0].mxu0
    %v4332 = vadd.f32 %v4219, %v4331
    %v4333 = vpop.f32.mrb[0].mxu0
    %v4334 = vadd.f32 %v4221, %v4333
    %v4335 = vpop.f32.mrb[0].mxu0
    %v4336 = vadd.f32 %v4223, %v4335
    %4337 = vmatprep.mubr.bf16.mxu0 %v3113
    %4338 = vmatmul.mubr.bf16.gmra.mrb[0].mxu0 %v3112
    %v4339 = vpop.f32.mrb[0].mxu0
    %v4340 = vadd.f32 %v4227, %v4339
    %v4341 = vpop.f32.mrb[0].mxu0
    %v4342 = vadd.f32 %v4229, %v4341
    %v4343 = vpop.f32.mrb[0].mxu0
    %v4344 = vadd.f32 %v4231, %v4343
    %v4345 = vpop.f32.mrb[0].mxu0
    %v4346 = vadd.f32 %v4233, %v4345
    %4347 = vmatprep.mubr.bf16.mxu0 %v3125
    %4348 = vmatmul.mubr.bf16.gmra.mrb[0].mxu0 %v3124
    %v4349 = vpop.f32.mrb[0].mxu0
    %v4350 = vadd.f32 %v4237, %v4349
    %v4351 = vpop.f32.mrb[0].mxu0
    %v4352 = vadd.f32 %v4239, %v4351
    %v4353 = vpop.f32.mrb[0].mxu0
    %v4354 = vadd.f32 %v4241, %v4353
    %v4355 = vpop.f32.mrb[0].mxu0
    %v4356 = vadd.f32 %v4243, %v4355
    %4357 = vmatprep.mubr.bf16.mxu0 %v3137
    %4358 = vmatmul.mubr.bf16.gmra.mrb[0].mxu0 %v3136
    %v4359 = vpop.f32.mrb[0].mxu0
    %v4360 = vadd.f32 %v4247, %v4359
    %v4361 = vpop.f32.mrb[0].mxu0
    %v4362 = vadd.f32 %v4249, %v4361
    %v4363 = vpop.f32.mrb[0].mxu0
    %v4364 = vadd.f32 %v4251, %v4363
    %v4365 = vpop.f32.mrb[0].mxu0
    %v4366 = vadd.f32 %v4253, %v4365
    %4367 = vdwg.mxu0
    %4368 = vmatprep.subr.bf16.mxu0 %v2569
    %4369 = vmatpush1.bf16.msra.mxu0 %v2568
    %4370 = vmatprep.subr.bf16.mxu0 %v2575
    %4371 = vmatpush1.bf16.msra.mxu0 %v2574
    %4372 = vmatprep.subr.bf16.mxu0 %v2581
    %4373 = vmatpush1.bf16.msra.mxu0 %v2580
    %4374 = vmatprep.subr.bf16.mxu0 %v2587
    %4375 = vmatpush1.bf16.msra.mxu0 %v2586
    %4376 = vmatprep.subr.bf16.mxu0 %v2593
    %4377 = vmatpush1.bf16.msra.mxu0 %v2592
    %4378 = vmatprep.subr.bf16.mxu0 %v2599
    %4379 = vmatpush1.bf16.msra.mxu0 %v2598
    %4380 = vmatprep.subr.bf16.mxu0 %v2605
    %4381 = vmatpush1.bf16.msra.mxu0 %v2604
    %4382 = vmatprep.subr.bf16.mxu0 %v2611
    %4383 = vmatpush1.bf16.msra.mxu0 %v2610
    %4384 = vmatprep.subr.bf16.mxu0 %v2617
    %4385 = vmatpush1.bf16.msra.mxu0 %v2616
    %4386 = vmatprep.subr.bf16.mxu0 %v2623
    %4387 = vmatpush1.bf16.msra.mxu0 %v2622
    %4388 = vmatprep.subr.bf16.mxu0 %v2629
    %4389 = vmatpush1.bf16.msra.mxu0 %v2628
    %4390 = vmatprep.subr.bf16.mxu0 %v2635
    %4391 = vmatpush1.bf16.msra.mxu0 %v2634
    %4392 = vmatprep.subr.bf16.mxu0 %v2641
    %4393 = vmatpush1.bf16.msra.mxu0 %v2640
    %4394 = vmatprep.subr.bf16.mxu0 %v2647
    %4395 = vmatpush1.bf16.msra.mxu0 %v2646
    %4396 = vmatprep.subr.bf16.mxu0 %v2653
    %4397 = vmatpush1.bf16.msra.mxu0 %v2652
    %4398 = vmatprep.subr.bf16.mxu0 %v2659
    %4399 = vmatpush1.bf16.msra.mxu0 %v2658
    %4400 = vmatprep.mubr.bf16.mxu0 %v3055
    %4401 = vmatmul.mubr.bf16.gmra.mrb[0].mxu0 %v3054
    %v4402 = vpop.f32.mrb[0].mxu0
    %v4403 = vadd.f32 %v4290, %v4402
    %v4404 = vpop.f32.mrb[0].mxu0
    %v4405 = vadd.f32 %v4292, %v4404
    %v4406 = vpop.f32.mrb[0].mxu0
    %v4407 = vadd.f32 %v4294, %v4406
    %v4408 = vpop.f32.mrb[0].mxu0
    %v4409 = vadd.f32 %v4296, %v4408
    %4410 = vmatprep.mubr.bf16.mxu0 %v3067
    %4411 = vmatmul.mubr.bf16.gmra.mrb[0].mxu0 %v3066
    %v4412 = vpop.f32.mrb[0].mxu0
    %v4413 = vadd.f32 %v4300, %v4412
    %v4414 = vpop.f32.mrb[0].mxu0
    %v4415 = vadd.f32 %v4302, %v4414
    %v4416 = vpop.f32.mrb[0].mxu0
    %v4417 = vadd.f32 %v4304, %v4416
    %v4418 = vpop.f32.mrb[0].mxu0
    %v4419 = vadd.f32 %v4306, %v4418
    %4420 = vmatprep.mubr.bf16.mxu0 %v3079
    %4421 = vmatmul.mubr.bf16.gmra.mrb[0].mxu0 %v3078
    %v4422 = vpop.f32.mrb[0].mxu0
    %v4423 = vadd.f32 %v4310, %v4422
    %v4424 = vpop.f32.mrb[0].mxu0
    %v4425 = vadd.f32 %v4312, %v4424
    %v4426 = vpop.f32.mrb[0].mxu0
    %v4427 = vadd.f32 %v4314, %v4426
    %v4428 = vpop.f32.mrb[0].mxu0
    %v4429 = vadd.f32 %v4316, %v4428
    %4430 = vmatprep.mubr.bf16.mxu0 %v3091
    %4431 = vmatmul.mubr.bf16.gmra.mrb[0].mxu0 %v3090
    %v4432 = vpop.f32.mrb[0].mxu0
    %v4433 = vadd.f32 %v4320, %v4432
    %v4434 = vpop.f32.mrb[0].mxu0
    %v4435 = vadd.f32 %v4322, %v4434
    %v4436 = vpop.f32.mrb[0].mxu0
    %v4437 = vadd.f32 %v4324, %v4436
    %v4438 = vpop.f32.mrb[0].mxu0
    %v4439 = vadd.f32 %v4326, %v4438
    %4440 = vmatprep.mubr.bf16.mxu0 %v3103
    %4441 = vmatmul.mubr.bf16.gmra.mrb[0].mxu0 %v3102
    %v4442 = vpop.f32.mrb[0].mxu0
    %v4443 = vadd.f32 %v4330, %v4442
    %v4444 = vpop.f32.mrb[0].mxu0
    %v4445 = vadd.f32 %v4332, %v4444
    %v4446 = vpop.f32.mrb[0].mxu0
    %v4447 = vadd.f32 %v4334, %v4446
    %v4448 = vpop.f32.mrb[0].mxu0
    %v4449 = vadd.f32 %v4336, %v4448
    %4450 = vmatprep.mubr.bf16.mxu0 %v3115
    %4451 = vmatmul.mubr.bf16.gmra.mrb[0].mxu0 %v3114
    %v4452 = vpop.f32.mrb[0].mxu0
    %v4453 = vadd.f32 %v4340, %v4452
    %v4454 = vpop.f32.mrb[0].mxu0
    %v4455 = vadd.f32 %v4342, %v4454
    %v4456 = vpop.f32.mrb[0].mxu0
    %v4457 = vadd.f32 %v4344, %v4456
    %v4458 = vpop.f32.mrb[0].mxu0
    %v4459 = vadd.f32 %v4346, %v4458
    %4460 = vmatprep.mubr.bf16.mxu0 %v3127
    %4461 = vmatmul.mubr.bf16.gmra.mrb[0].mxu0 %v3126
    %v4462 = vpop.f32.mrb[0].mxu0
    %v4463 = vadd.f32 %v4350, %v4462
    %v4464 = vpop.f32.mrb[0].mxu0
    %v4465 = vadd.f32 %v4352, %v4464
    %v4466 = vpop.f32.mrb[0].mxu0
    %v4467 = vadd.f32 %v4354, %v4466
    %v4468 = vpop.f32.mrb[0].mxu0
    %v4469 = vadd.f32 %v4356, %v4468
    %4470 = vmatprep.mubr.bf16.mxu0 %v3139
    %4471 = vmatmul.mubr.bf16.gmra.mrb[0].mxu0 %v3138
    %v4472 = vpop.f32.mrb[0].mxu0
    %v4473 = vadd.f32 %v4360, %v4472
    %v4474 = vpop.f32.mrb[0].mxu0
    %v4475 = vadd.f32 %v4362, %v4474
    %v4476 = vpop.f32.mrb[0].mxu0
    %v4477 = vadd.f32 %v4364, %v4476
    %v4478 = vpop.f32.mrb[0].mxu0
    %v4479 = vadd.f32 %v4366, %v4478
    %4480 = vdwg.mxu0
    %4481 = vmatprep.subr.bf16.mxu0 %v2665
    %4482 = vmatpush1.bf16.msra.mxu0 %v2664
    %4483 = vmatprep.subr.bf16.mxu0 %v2671
    %4484 = vmatpush1.bf16.msra.mxu0 %v2670
    %4485 = vmatprep.subr.bf16.mxu0 %v2677
    %4486 = vmatpush1.bf16.msra.mxu0 %v2676
    %4487 = vmatprep.subr.bf16.mxu0 %v2683
    %4488 = vmatpush1.bf16.msra.mxu0 %v2682
    %4489 = vmatprep.subr.bf16.mxu0 %v2689
    %4490 = vmatpush1.bf16.msra.mxu0 %v2688
    %4491 = vmatprep.subr.bf16.mxu0 %v2695
    %4492 = vmatpush1.bf16.msra.mxu0 %v2694
    %4493 = vmatprep.subr.bf16.mxu0 %v2701
    %4494 = vmatpush1.bf16.msra.mxu0 %v2700
    %4495 = vmatprep.subr.bf16.mxu0 %v2707
    %4496 = vmatpush1.bf16.msra.mxu0 %v2706
    %4497 = vmatprep.subr.bf16.mxu0 %v2713
    %4498 = vmatpush1.bf16.msra.mxu0 %v2712
    %4499 = vmatprep.subr.bf16.mxu0 %v2719
    %4500 = vmatpush1.bf16.msra.mxu0 %v2718
    %4501 = vmatprep.subr.bf16.mxu0 %v2725
    %4502 = vmatpush1.bf16.msra.mxu0 %v2724
    %4503 = vmatprep.subr.bf16.mxu0 %v2731
    %4504 = vmatpush1.bf16.msra.mxu0 %v2730
    %4505 = vmatprep.subr.bf16.mxu0 %v2737
    %4506 = vmatpush1.bf16.msra.mxu0 %v2736
    %4507 = vmatprep.subr.bf16.mxu0 %v2743
    %4508 = vmatpush1.bf16.msra.mxu0 %v2742
    %4509 = vmatprep.subr.bf16.mxu0 %v2749
    %4510 = vmatpush1.bf16.msra.mxu0 %v2748
    %4511 = vmatprep.subr.bf16.mxu0 %v2755
    %4512 = vmatpush1.bf16.msra.mxu0 %v2754
    %4513 = vmatprep.mubr.bf16.mxu0 %v3057
    %4514 = vmatmul.mubr.bf16.gmra.mrb[0].mxu0 %v3056
    %v4515 = vpop.f32.mrb[0].mxu0
    %v4516 = vadd.f32 %v4403, %v4515
    %v4517 = vpop.f32.mrb[0].mxu0
    %v4518 = vadd.f32 %v4405, %v4517
    %v4519 = vpop.f32.mrb[0].mxu0
    %v4520 = vadd.f32 %v4407, %v4519
    %v4521 = vpop.f32.mrb[0].mxu0
    %v4522 = vadd.f32 %v4409, %v4521
    %4523 = vmatprep.mubr.bf16.mxu0 %v3069
    %4524 = vmatmul.mubr.bf16.gmra.mrb[0].mxu0 %v3068
    %v4525 = vpop.f32.mrb[0].mxu0
    %v4526 = vadd.f32 %v4413, %v4525
    %v4527 = vpop.f32.mrb[0].mxu0
    %v4528 = vadd.f32 %v4415, %v4527
    %v4529 = vpop.f32.mrb[0].mxu0
    %v4530 = vadd.f32 %v4417, %v4529
    %v4531 = vpop.f32.mrb[0].mxu0
    %v4532 = vadd.f32 %v4419, %v4531
    %4533 = vmatprep.mubr.bf16.mxu0 %v3081
    %4534 = vmatmul.mubr.bf16.gmra.mrb[0].mxu0 %v3080
    %v4535 = vpop.f32.mrb[0].mxu0
    %v4536 = vadd.f32 %v4423, %v4535
    %v4537 = vpop.f32.mrb[0].mxu0
    %v4538 = vadd.f32 %v4425, %v4537
    %v4539 = vpop.f32.mrb[0].mxu0
    %v4540 = vadd.f32 %v4427, %v4539
    %v4541 = vpop.f32.mrb[0].mxu0
    %v4542 = vadd.f32 %v4429, %v4541
    %4543 = vmatprep.mubr.bf16.mxu0 %v3093
    %4544 = vmatmul.mubr.bf16.gmra.mrb[0].mxu0 %v3092
    %v4545 = vpop.f32.mrb[0].mxu0
    %v4546 = vadd.f32 %v4433, %v4545
    %v4547 = vpop.f32.mrb[0].mxu0
    %v4548 = vadd.f32 %v4435, %v4547
    %v4549 = vpop.f32.mrb[0].mxu0
    %v4550 = vadd.f32 %v4437, %v4549
    %v4551 = vpop.f32.mrb[0].mxu0
    %v4552 = vadd.f32 %v4439, %v4551
    %4553 = vmatprep.mubr.bf16.mxu0 %v3105
    %4554 = vmatmul.mubr.bf16.gmra.mrb[0].mxu0 %v3104
    %v4555 = vpop.f32.mrb[0].mxu0
    %v4556 = vadd.f32 %v4443, %v4555
    %v4557 = vpop.f32.mrb[0].mxu0
    %v4558 = vadd.f32 %v4445, %v4557
    %v4559 = vpop.f32.mrb[0].mxu0
    %v4560 = vadd.f32 %v4447, %v4559
    %v4561 = vpop.f32.mrb[0].mxu0
    %v4562 = vadd.f32 %v4449, %v4561
    %4563 = vmatprep.mubr.bf16.mxu0 %v3117
    %4564 = vmatmul.mubr.bf16.gmra.mrb[0].mxu0 %v3116
    %v4565 = vpop.f32.mrb[0].mxu0
    %v4566 = vadd.f32 %v4453, %v4565
    %v4567 = vpop.f32.mrb[0].mxu0
    %v4568 = vadd.f32 %v4455, %v4567
    %v4569 = vpop.f32.mrb[0].mxu0
    %v4570 = vadd.f32 %v4457, %v4569
    %v4571 = vpop.f32.mrb[0].mxu0
    %v4572 = vadd.f32 %v4459, %v4571
    %4573 = vmatprep.mubr.bf16.mxu0 %v3129
    %4574 = vmatmul.mubr.bf16.gmra.mrb[0].mxu0 %v3128
    %v4575 = vpop.f32.mrb[0].mxu0
    %v4576 = vadd.f32 %v4463, %v4575
    %v4577 = vpop.f32.mrb[0].mxu0
    %v4578 = vadd.f32 %v4465, %v4577
    %v4579 = vpop.f32.mrb[0].mxu0
    %v4580 = vadd.f32 %v4467, %v4579
    %v4581 = vpop.f32.mrb[0].mxu0
    %v4582 = vadd.f32 %v4469, %v4581
    %4583 = vmatprep.mubr.bf16.mxu0 %v3141
    %4584 = vmatmul.mubr.bf16.gmra.mrb[0].mxu0 %v3140
    %v4585 = vpop.f32.mrb[0].mxu0
    %v4586 = vadd.f32 %v4473, %v4585
    %v4587 = vpop.f32.mrb[0].mxu0
    %v4588 = vadd.f32 %v4475, %v4587
    %v4589 = vpop.f32.mrb[0].mxu0
    %v4590 = vadd.f32 %v4477, %v4589
    %v4591 = vpop.f32.mrb[0].mxu0
    %v4592 = vadd.f32 %v4479, %v4591
    %4593 = vdwg.mxu0
    %4594 = vmatprep.subr.bf16.mxu0 %v2187
    %4595 = vmatpush1.bf16.msra.mxu0 %v2186
    %4596 = vmatprep.subr.bf16.mxu0 %v2193
    %4597 = vmatpush1.bf16.msra.mxu0 %v2192
    %4598 = vmatprep.subr.bf16.mxu0 %v2199
    %4599 = vmatpush1.bf16.msra.mxu0 %v2198
    %4600 = vmatprep.subr.bf16.mxu0 %v2205
    %4601 = vmatpush1.bf16.msra.mxu0 %v2204
    %4602 = vmatprep.subr.bf16.mxu0 %v2211
    %4603 = vmatpush1.bf16.msra.mxu0 %v2210
    %4604 = vmatprep.subr.bf16.mxu0 %v2217
    %4605 = vmatpush1.bf16.msra.mxu0 %v2216
    %4606 = vmatprep.subr.bf16.mxu0 %v2223
    %4607 = vmatpush1.bf16.msra.mxu0 %v2222
    %4608 = vmatprep.subr.bf16.mxu0 %v2229
    %4609 = vmatpush1.bf16.msra.mxu0 %v2228
    %4610 = vmatprep.subr.bf16.mxu0 %v2235
    %4611 = vmatpush1.bf16.msra.mxu0 %v2234
    %4612 = vmatprep.subr.bf16.mxu0 %v2241
    %4613 = vmatpush1.bf16.msra.mxu0 %v2240
    %4614 = vmatprep.subr.bf16.mxu0 %v2247
    %4615 = vmatpush1.bf16.msra.mxu0 %v2246
    %4616 = vmatprep.subr.bf16.mxu0 %v2253
    %4617 = vmatpush1.bf16.msra.mxu0 %v2252
    %4618 = vmatprep.subr.bf16.mxu0 %v2259
    %4619 = vmatpush1.bf16.msra.mxu0 %v2258
    %4620 = vmatprep.subr.bf16.mxu0 %v2265
    %4621 = vmatpush1.bf16.msra.mxu0 %v2264
    %4622 = vmatprep.subr.bf16.mxu0 %v2271
    %4623 = vmatpush1.bf16.msra.mxu0 %v2270
    %4624 = vmatprep.subr.bf16.mxu0 %v2277
    %4625 = vmatpush1.bf16.msra.mxu0 %v2276
    %4626 = vmatprep.mubr.bf16.mxu0 %v3047
    %4627 = vmatmul.mubr.bf16.gmra.mrb[0].mxu0 %v3046
    %v4628 = vpop.f32.mrb[0].mxu0
    %v4629 = vadd.f32 0.0, %v4628
    %v4630 = vpop.f32.mrb[0].mxu0
    %v4631 = vadd.f32 0.0, %v4630
    %v4632 = vpop.f32.mrb[0].mxu0
    %v4633 = vadd.f32 0.0, %v4632
    %v4634 = vpop.f32.mrb[0].mxu0
    %v4635 = vadd.f32 0.0, %v4634
    %4636 = vmatprep.mubr.bf16.mxu0 %v3059
    %4637 = vmatmul.mubr.bf16.gmra.mrb[0].mxu0 %v3058
    %v4638 = vpop.f32.mrb[0].mxu0
    %v4639 = vadd.f32 0.0, %v4638
    %v4640 = vpop.f32.mrb[0].mxu0
    %v4641 = vadd.f32 0.0, %v4640
    %v4642 = vpop.f32.mrb[0].mxu0
    %v4643 = vadd.f32 0.0, %v4642
    %v4644 = vpop.f32.mrb[0].mxu0
    %v4645 = vadd.f32 0.0, %v4644
    %4646 = vmatprep.mubr.bf16.mxu0 %v3071
    %4647 = vmatmul.mubr.bf16.gmra.mrb[0].mxu0 %v3070
    %v4648 = vpop.f32.mrb[0].mxu0
    %v4649 = vadd.f32 0.0, %v4648
    %v4650 = vpop.f32.mrb[0].mxu0
    %v4651 = vadd.f32 0.0, %v4650
    %v4652 = vpop.f32.mrb[0].mxu0
    %v4653 = vadd.f32 0.0, %v4652
    %v4654 = vpop.f32.mrb[0].mxu0
    %v4655 = vadd.f32 0.0, %v4654
    %4656 = vmatprep.mubr.bf16.mxu0 %v3083
    %4657 = vmatmul.mubr.bf16.gmra.mrb[0].mxu0 %v3082
    %v4658 = vpop.f32.mrb[0].mxu0
    %v4659 = vadd.f32 0.0, %v4658
    %v4660 = vpop.f32.mrb[0].mxu0
    %v4661 = vadd.f32 0.0, %v4660
    %v4662 = vpop.f32.mrb[0].mxu0
    %v4663 = vadd.f32 0.0, %v4662
    %v4664 = vpop.f32.mrb[0].mxu0
    %v4665 = vadd.f32 0.0, %v4664
    %4666 = vmatprep.mubr.bf16.mxu0 %v3095
    %4667 = vmatmul.mubr.bf16.gmra.mrb[0].mxu0 %v3094
    %v4668 = vpop.f32.mrb[0].mxu0
    %v4669 = vadd.f32 0.0, %v4668
    %v4670 = vpop.f32.mrb[0].mxu0
    %v4671 = vadd.f32 0.0, %v4670
    %v4672 = vpop.f32.mrb[0].mxu0
    %v4673 = vadd.f32 0.0, %v4672
    %v4674 = vpop.f32.mrb[0].mxu0
    %v4675 = vadd.f32 0.0, %v4674
    %4676 = vmatprep.mubr.bf16.mxu0 %v3107
    %4677 = vmatmul.mubr.bf16.gmra.mrb[0].mxu0 %v3106
    %v4678 = vpop.f32.mrb[0].mxu0
    %v4679 = vadd.f32 0.0, %v4678
    %v4680 = vpop.f32.mrb[0].mxu0
    %v4681 = vadd.f32 0.0, %v4680
    %v4682 = vpop.f32.mrb[0].mxu0
    %v4683 = vadd.f32 0.0, %v4682
    %v4684 = vpop.f32.mrb[0].mxu0
    %v4685 = vadd.f32 0.0, %v4684
    %4686 = vmatprep.mubr.bf16.mxu0 %v3119
    %4687 = vmatmul.mubr.bf16.gmra.mrb[0].mxu0 %v3118
    %v4688 = vpop.f32.mrb[0].mxu0
    %v4689 = vadd.f32 0.0, %v4688
    %v4690 = vpop.f32.mrb[0].mxu0
    %v4691 = vadd.f32 0.0, %v4690
    %v4692 = vpop.f32.mrb[0].mxu0
    %v4693 = vadd.f32 0.0, %v4692
    %v4694 = vpop.f32.mrb[0].mxu0
    %v4695 = vadd.f32 0.0, %v4694
    %4696 = vmatprep.mubr.bf16.mxu0 %v3131
    %4697 = vmatmul.mubr.bf16.gmra.mrb[0].mxu0 %v3130
    %v4698 = vpop.f32.mrb[0].mxu0
    %v4699 = vadd.f32 0.0, %v4698
    %v4700 = vpop.f32.mrb[0].mxu0
    %v4701 = vadd.f32 0.0, %v4700
    %v4702 = vpop.f32.mrb[0].mxu0
    %v4703 = vadd.f32 0.0, %v4702
    %v4704 = vpop.f32.mrb[0].mxu0
    %v4705 = vadd.f32 0.0, %v4704
    %4706 = vdwg.mxu0
    %4707 = vmatprep.subr.bf16.mxu0 %v2283
    %4708 = vmatpush1.bf16.msra.mxu0 %v2282
    %4709 = vmatprep.subr.bf16.mxu0 %v2289
    %4710 = vmatpush1.bf16.msra.mxu0 %v2288
    %4711 = vmatprep.subr.bf16.mxu0 %v2295
    %4712 = vmatpush1.bf16.msra.mxu0 %v2294
    %4713 = vmatprep.subr.bf16.mxu0 %v2301
    %4714 = vmatpush1.bf16.msra.mxu0 %v2300
    %4715 = vmatprep.subr.bf16.mxu0 %v2307
    %4716 = vmatpush1.bf16.msra.mxu0 %v2306
    %4717 = vmatprep.subr.bf16.mxu0 %v2313
    %4718 = vmatpush1.bf16.msra.mxu0 %v2312
    %4719 = vmatprep.subr.bf16.mxu0 %v2319
    %4720 = vmatpush1.bf16.msra.mxu0 %v2318
    %4721 = vmatprep.subr.bf16.mxu0 %v2325
    %4722 = vmatpush1.bf16.msra.mxu0 %v2324
    %4723 = vmatprep.subr.bf16.mxu0 %v2331
    %4724 = vmatpush1.bf16.msra.mxu0 %v2330
    %4725 = vmatprep.subr.bf16.mxu0 %v2337
    %4726 = vmatpush1.bf16.msra.mxu0 %v2336
    %4727 = vmatprep.subr.bf16.mxu0 %v2343
    %4728 = vmatpush1.bf16.msra.mxu0 %v2342
    %4729 = vmatprep.subr.bf16.mxu0 %v2349
    %4730 = vmatpush1.bf16.msra.mxu0 %v2348
    %4731 = vmatprep.subr.bf16.mxu0 %v2355
    %4732 = vmatpush1.bf16.msra.mxu0 %v2354
    %4733 = vmatprep.subr.bf16.mxu0 %v2361
    %4734 = vmatpush1.bf16.msra.mxu0 %v2360
    %4735 = vmatprep.subr.bf16.mxu0 %v2367
    %4736 = vmatpush1.bf16.msra.mxu0 %v2366
    %4737 = vmatprep.subr.bf16.mxu0 %v2373
    %4738 = vmatpush1.bf16.msra.mxu0 %v2372
    %4739 = vmatprep.mubr.bf16.mxu0 %v3049
    %4740 = vmatmul.mubr.bf16.gmra.mrb[0].mxu0 %v3048
    %v4741 = vpop.f32.mrb[0].mxu0
    %v4742 = vadd.f32 %v4629, %v4741
    %v4743 = vpop.f32.mrb[0].mxu0
    %v4744 = vadd.f32 %v4631, %v4743
    %v4745 = vpop.f32.mrb[0].mxu0
    %v4746 = vadd.f32 %v4633, %v4745
    %v4747 = vpop.f32.mrb[0].mxu0
    %v4748 = vadd.f32 %v4635, %v4747
    %4749 = vmatprep.mubr.bf16.mxu0 %v3061
    %4750 = vmatmul.mubr.bf16.gmra.mrb[0].mxu0 %v3060
    %v4751 = vpop.f32.mrb[0].mxu0
    %v4752 = vadd.f32 %v4639, %v4751
    %v4753 = vpop.f32.mrb[0].mxu0
    %v4754 = vadd.f32 %v4641, %v4753
    %v4755 = vpop.f32.mrb[0].mxu0
    %v4756 = vadd.f32 %v4643, %v4755
    %v4757 = vpop.f32.mrb[0].mxu0
    %v4758 = vadd.f32 %v4645, %v4757
    %4759 = vmatprep.mubr.bf16.mxu0 %v3073
    %4760 = vmatmul.mubr.bf16.gmra.mrb[0].mxu0 %v3072
    %v4761 = vpop.f32.mrb[0].mxu0
    %v4762 = vadd.f32 %v4649, %v4761
    %v4763 = vpop.f32.mrb[0].mxu0
    %v4764 = vadd.f32 %v4651, %v4763
    %v4765 = vpop.f32.mrb[0].mxu0
    %v4766 = vadd.f32 %v4653, %v4765
    %v4767 = vpop.f32.mrb[0].mxu0
    %v4768 = vadd.f32 %v4655, %v4767
    %4769 = vmatprep.mubr.bf16.mxu0 %v3085
    %4770 = vmatmul.mubr.bf16.gmra.mrb[0].mxu0 %v3084
    %v4771 = vpop.f32.mrb[0].mxu0
    %v4772 = vadd.f32 %v4659, %v4771
    %v4773 = vpop.f32.mrb[0].mxu0
    %v4774 = vadd.f32 %v4661, %v4773
    %v4775 = vpop.f32.mrb[0].mxu0
    %v4776 = vadd.f32 %v4663, %v4775
    %v4777 = vpop.f32.mrb[0].mxu0
    %v4778 = vadd.f32 %v4665, %v4777
    %4779 = vmatprep.mubr.bf16.mxu0 %v3097
    %4780 = vmatmul.mubr.bf16.gmra.mrb[0].mxu0 %v3096
    %v4781 = vpop.f32.mrb[0].mxu0
    %v4782 = vadd.f32 %v4669, %v4781
    %v4783 = vpop.f32.mrb[0].mxu0
    %v4784 = vadd.f32 %v4671, %v4783
    %v4785 = vpop.f32.mrb[0].mxu0
    %v4786 = vadd.f32 %v4673, %v4785
    %v4787 = vpop.f32.mrb[0].mxu0
    %v4788 = vadd.f32 %v4675, %v4787
    %4789 = vmatprep.mubr.bf16.mxu0 %v3109
    %4790 = vmatmul.mubr.bf16.gmra.mrb[0].mxu0 %v3108
    %v4791 = vpop.f32.mrb[0].mxu0
    %v4792 = vadd.f32 %v4679, %v4791
    %v4793 = vpop.f32.mrb[0].mxu0
    %v4794 = vadd.f32 %v4681, %v4793
    %v4795 = vpop.f32.mrb[0].mxu0
    %v4796 = vadd.f32 %v4683, %v4795
    %v4797 = vpop.f32.mrb[0].mxu0
    %v4798 = vadd.f32 %v4685, %v4797
    %4799 = vmatprep.mubr.bf16.mxu0 %v3121
    %4800 = vmatmul.mubr.bf16.gmra.mrb[0].mxu0 %v3120
    %v4801 = vpop.f32.mrb[0].mxu0
    %v4802 = vadd.f32 %v4689, %v4801
    %v4803 = vpop.f32.mrb[0].mxu0
    %v4804 = vadd.f32 %v4691, %v4803
    %v4805 = vpop.f32.mrb[0].mxu0
    %v4806 = vadd.f32 %v4693, %v4805
    %v4807 = vpop.f32.mrb[0].mxu0
    %v4808 = vadd.f32 %v4695, %v4807
    %4809 = vmatprep.mubr.bf16.mxu0 %v3133
    %4810 = vmatmul.mubr.bf16.gmra.mrb[0].mxu0 %v3132
    %v4811 = vpop.f32.mrb[0].mxu0
    %v4812 = vadd.f32 %v4699, %v4811
    %v4813 = vpop.f32.mrb[0].mxu0
    %v4814 = vadd.f32 %v4701, %v4813
    %v4815 = vpop.f32.mrb[0].mxu0
    %v4816 = vadd.f32 %v4703, %v4815
    %v4817 = vpop.f32.mrb[0].mxu0
    %v4818 = vadd.f32 %v4705, %v4817
    %4819 = vdwg.mxu0
    %4820 = vmatprep.subr.bf16.mxu0 %v2379
    %4821 = vmatpush1.bf16.msra.mxu0 %v2378
    %4822 = vmatprep.subr.bf16.mxu0 %v2385
    %4823 = vmatpush1.bf16.msra.mxu0 %v2384
    %4824 = vmatprep.subr.bf16.mxu0 %v2391
    %4825 = vmatpush1.bf16.msra.mxu0 %v2390
    %4826 = vmatprep.subr.bf16.mxu0 %v2397
    %4827 = vmatpush1.bf16.msra.mxu0 %v2396
    %4828 = vmatprep.subr.bf16.mxu0 %v2403
    %4829 = vmatpush1.bf16.msra.mxu0 %v2402
    %4830 = vmatprep.subr.bf16.mxu0 %v2409
    %4831 = vmatpush1.bf16.msra.mxu0 %v2408
    %4832 = vmatprep.subr.bf16.mxu0 %v2415
    %4833 = vmatpush1.bf16.msra.mxu0 %v2414
    %4834 = vmatprep.subr.bf16.mxu0 %v2421
    %4835 = vmatpush1.bf16.msra.mxu0 %v2420
    %4836 = vmatprep.subr.bf16.mxu0 %v2427
    %4837 = vmatpush1.bf16.msra.mxu0 %v2426
    %4838 = vmatprep.subr.bf16.mxu0 %v2433
    %4839 = vmatpush1.bf16.msra.mxu0 %v2432
    %4840 = vmatprep.subr.bf16.mxu0 %v2439
    %4841 = vmatpush1.bf16.msra.mxu0 %v2438
    %4842 = vmatprep.subr.bf16.mxu0 %v2445
    %4843 = vmatpush1.bf16.msra.mxu0 %v2444
    %4844 = vmatprep.subr.bf16.mxu0 %v2451
    %4845 = vmatpush1.bf16.msra.mxu0 %v2450
    %4846 = vmatprep.subr.bf16.mxu0 %v2457
    %4847 = vmatpush1.bf16.msra.mxu0 %v2456
    %4848 = vmatprep.subr.bf16.mxu0 %v2463
    %4849 = vmatpush1.bf16.msra.mxu0 %v2462
    %4850 = vmatprep.subr.bf16.mxu0 %v2469
    %4851 = vmatpush1.bf16.msra.mxu0 %v2468
    %4852 = vmatprep.mubr.bf16.mxu0 %v3051
    %4853 = vmatmul.mubr.bf16.gmra.mrb[0].mxu0 %v3050
    %v4854 = vpop.f32.mrb[0].mxu0
    %v4855 = vadd.f32 %v4742, %v4854
    %v4856 = vpop.f32.mrb[0].mxu0
    %v4857 = vadd.f32 %v4744, %v4856
    %v4858 = vpop.f32.mrb[0].mxu0
    %v4859 = vadd.f32 %v4746, %v4858
    %v4860 = vpop.f32.mrb[0].mxu0
    %v4861 = vadd.f32 %v4748, %v4860
    %4862 = vmatprep.mubr.bf16.mxu0 %v3063
    %4863 = vmatmul.mubr.bf16.gmra.mrb[0].mxu0 %v3062
    %v4864 = vpop.f32.mrb[0].mxu0
    %v4865 = vadd.f32 %v4752, %v4864
    %v4866 = vpop.f32.mrb[0].mxu0
    %v4867 = vadd.f32 %v4754, %v4866
    %v4868 = vpop.f32.mrb[0].mxu0
    %v4869 = vadd.f32 %v4756, %v4868
    %v4870 = vpop.f32.mrb[0].mxu0
    %v4871 = vadd.f32 %v4758, %v4870
    %4872 = vmatprep.mubr.bf16.mxu0 %v3075
    %4873 = vmatmul.mubr.bf16.gmra.mrb[0].mxu0 %v3074
    %v4874 = vpop.f32.mrb[0].mxu0
    %v4875 = vadd.f32 %v4762, %v4874
    %v4876 = vpop.f32.mrb[0].mxu0
    %v4877 = vadd.f32 %v4764, %v4876
    %v4878 = vpop.f32.mrb[0].mxu0
    %v4879 = vadd.f32 %v4766, %v4878
    %v4880 = vpop.f32.mrb[0].mxu0
    %v4881 = vadd.f32 %v4768, %v4880
    %4882 = vmatprep.mubr.bf16.mxu0 %v3087
    %4883 = vmatmul.mubr.bf16.gmra.mrb[0].mxu0 %v3086
    %v4884 = vpop.f32.mrb[0].mxu0
    %v4885 = vadd.f32 %v4772, %v4884
    %v4886 = vpop.f32.mrb[0].mxu0
    %v4887 = vadd.f32 %v4774, %v4886
    %v4888 = vpop.f32.mrb[0].mxu0
    %v4889 = vadd.f32 %v4776, %v4888
    %v4890 = vpop.f32.mrb[0].mxu0
    %v4891 = vadd.f32 %v4778, %v4890
    %4892 = vmatprep.mubr.bf16.mxu0 %v3099
    %4893 = vmatmul.mubr.bf16.gmra.mrb[0].mxu0 %v3098
    %v4894 = vpop.f32.mrb[0].mxu0
    %v4895 = vadd.f32 %v4782, %v4894
    %v4896 = vpop.f32.mrb[0].mxu0
    %v4897 = vadd.f32 %v4784, %v4896
    %v4898 = vpop.f32.mrb[0].mxu0
    %v4899 = vadd.f32 %v4786, %v4898
    %v4900 = vpop.f32.mrb[0].mxu0
    %v4901 = vadd.f32 %v4788, %v4900
    %4902 = vmatprep.mubr.bf16.mxu0 %v3111
    %4903 = vmatmul.mubr.bf16.gmra.mrb[0].mxu0 %v3110
    %v4904 = vpop.f32.mrb[0].mxu0
    %v4905 = vadd.f32 %v4792, %v4904
    %v4906 = vpop.f32.mrb[0].mxu0
    %v4907 = vadd.f32 %v4794, %v4906
    %v4908 = vpop.f32.mrb[0].mxu0
    %v4909 = vadd.f32 %v4796, %v4908
    %v4910 = vpop.f32.mrb[0].mxu0
    %v4911 = vadd.f32 %v4798, %v4910
    %4912 = vmatprep.mubr.bf16.mxu0 %v3123
    %4913 = vmatmul.mubr.bf16.gmra.mrb[0].mxu0 %v3122
    %v4914 = vpop.f32.mrb[0].mxu0
    %v4915 = vadd.f32 %v4802, %v4914
    %v4916 = vpop.f32.mrb[0].mxu0
    %v4917 = vadd.f32 %v4804, %v4916
    %v4918 = vpop.f32.mrb[0].mxu0
    %v4919 = vadd.f32 %v4806, %v4918
    %v4920 = vpop.f32.mrb[0].mxu0
    %v4921 = vadd.f32 %v4808, %v4920
    %4922 = vmatprep.mubr.bf16.mxu0 %v3135
    %4923 = vmatmul.mubr.bf16.gmra.mrb[0].mxu0 %v3134
    %v4924 = vpop.f32.mrb[0].mxu0
    %v4925 = vadd.f32 %v4812, %v4924
    %v4926 = vpop.f32.mrb[0].mxu0
    %v4927 = vadd.f32 %v4814, %v4926
    %v4928 = vpop.f32.mrb[0].mxu0
    %v4929 = vadd.f32 %v4816, %v4928
    %v4930 = vpop.f32.mrb[0].mxu0
    %v4931 = vadd.f32 %v4818, %v4930
    %4932 = vdwg.mxu0
    %4933 = vmatprep.subr.bf16.mxu0 %v2475
    %4934 = vmatpush1.bf16.msra.mxu0 %v2474
    %4935 = vmatprep.subr.bf16.mxu0 %v2481
    %4936 = vmatpush1.bf16.msra.mxu0 %v2480
    %4937 = vmatprep.subr.bf16.mxu0 %v2487
    %4938 = vmatpush1.bf16.msra.mxu0 %v2486
    %4939 = vmatprep.subr.bf16.mxu0 %v2493
    %4940 = vmatpush1.bf16.msra.mxu0 %v2492
    %4941 = vmatprep.subr.bf16.mxu0 %v2499
    %4942 = vmatpush1.bf16.msra.mxu0 %v2498
    %4943 = vmatprep.subr.bf16.mxu0 %v2505
    %4944 = vmatpush1.bf16.msra.mxu0 %v2504
    %4945 = vmatprep.subr.bf16.mxu0 %v2511
    %4946 = vmatpush1.bf16.msra.mxu0 %v2510
    %4947 = vmatprep.subr.bf16.mxu0 %v2517
    %4948 = vmatpush1.bf16.msra.mxu0 %v2516
    %4949 = vmatprep.subr.bf16.mxu0 %v2523
    %4950 = vmatpush1.bf16.msra.mxu0 %v2522
    %4951 = vmatprep.subr.bf16.mxu0 %v2529
    %4952 = vmatpush1.bf16.msra.mxu0 %v2528
    %4953 = vmatprep.subr.bf16.mxu0 %v2535
    %4954 = vmatpush1.bf16.msra.mxu0 %v2534
    %4955 = vmatprep.subr.bf16.mxu0 %v2541
    %4956 = vmatpush1.bf16.msra.mxu0 %v2540
    %4957 = vmatprep.subr.bf16.mxu0 %v2547
    %4958 = vmatpush1.bf16.msra.mxu0 %v2546
    %4959 = vmatprep.subr.bf16.mxu0 %v2553
    %4960 = vmatpush1.bf16.msra.mxu0 %v2552
    %4961 = vmatprep.subr.bf16.mxu0 %v2559
    %4962 = vmatpush1.bf16.msra.mxu0 %v2558
    %4963 = vmatprep.subr.bf16.mxu0 %v2565
    %4964 = vmatpush1.bf16.msra.mxu0 %v2564
    %4965 = vmatprep.mubr.bf16.mxu0 %v3053
    %4966 = vmatmul.mubr.bf16.gmra.mrb[0].mxu0 %v3052
    %v4967 = vpop.f32.mrb[0].mxu0
    %v4968 = vadd.f32 %v4855, %v4967
    %v4969 = vpop.f32.mrb[0].mxu0
    %v4970 = vadd.f32 %v4857, %v4969
    %v4971 = vpop.f32.mrb[0].mxu0
    %v4972 = vadd.f32 %v4859, %v4971
    %v4973 = vpop.f32.mrb[0].mxu0
    %v4974 = vadd.f32 %v4861, %v4973
    %4975 = vmatprep.mubr.bf16.mxu0 %v3065
    %4976 = vmatmul.mubr.bf16.gmra.mrb[0].mxu0 %v3064
    %v4977 = vpop.f32.mrb[0].mxu0
    %v4978 = vadd.f32 %v4865, %v4977
    %v4979 = vpop.f32.mrb[0].mxu0
    %v4980 = vadd.f32 %v4867, %v4979
    %v4981 = vpop.f32.mrb[0].mxu0
    %v4982 = vadd.f32 %v4869, %v4981
    %v4983 = vpop.f32.mrb[0].mxu0
    %v4984 = vadd.f32 %v4871, %v4983
    %4985 = vmatprep.mubr.bf16.mxu0 %v3077
    %4986 = vmatmul.mubr.bf16.gmra.mrb[0].mxu0 %v3076
    %v4987 = vpop.f32.mrb[0].mxu0
    %v4988 = vadd.f32 %v4875, %v4987
    %v4989 = vpop.f32.mrb[0].mxu0
    %v4990 = vadd.f32 %v4877, %v4989
    %v4991 = vpop.f32.mrb[0].mxu0
    %v4992 = vadd.f32 %v4879, %v4991
    %v4993 = vpop.f32.mrb[0].mxu0
    %v4994 = vadd.f32 %v4881, %v4993
    %4995 = vmatprep.mubr.bf16.mxu0 %v3089
    %4996 = vmatmul.mubr.bf16.gmra.mrb[0].mxu0 %v3088
    %v4997 = vpop.f32.mrb[0].mxu0
    %v4998 = vadd.f32 %v4885, %v4997
    %v4999 = vpop.f32.mrb[0].mxu0
    %v5000 = vadd.f32 %v4887, %v4999
    %v5001 = vpop.f32.mrb[0].mxu0
    %v5002 = vadd.f32 %v4889, %v5001
    %v5003 = vpop.f32.mrb[0].mxu0
    %v5004 = vadd.f32 %v4891, %v5003
    %5005 = vmatprep.mubr.bf16.mxu0 %v3101
    %5006 = vmatmul.mubr.bf16.gmra.mrb[0].mxu0 %v3100
    %v5007 = vpop.f32.mrb[0].mxu0
    %v5008 = vadd.f32 %v4895, %v5007
    %v5009 = vpop.f32.mrb[0].mxu0
    %v5010 = vadd.f32 %v4897, %v5009
    %v5011 = vpop.f32.mrb[0].mxu0
    %v5012 = vadd.f32 %v4899, %v5011
    %v5013 = vpop.f32.mrb[0].mxu0
    %v5014 = vadd.f32 %v4901, %v5013
    %5015 = vmatprep.mubr.bf16.mxu0 %v3113
    %5016 = vmatmul.mubr.bf16.gmra.mrb[0].mxu0 %v3112
    %v5017 = vpop.f32.mrb[0].mxu0
    %v5018 = vadd.f32 %v4905, %v5017
    %v5019 = vpop.f32.mrb[0].mxu0
    %v5020 = vadd.f32 %v4907, %v5019
    %v5021 = vpop.f32.mrb[0].mxu0
    %v5022 = vadd.f32 %v4909, %v5021
    %v5023 = vpop.f32.mrb[0].mxu0
    %v5024 = vadd.f32 %v4911, %v5023
    %5025 = vmatprep.mubr.bf16.mxu0 %v3125
    %5026 = vmatmul.mubr.bf16.gmra.mrb[0].mxu0 %v3124
    %v5027 = vpop.f32.mrb[0].mxu0
    %v5028 = vadd.f32 %v4915, %v5027
    %v5029 = vpop.f32.mrb[0].mxu0
    %v5030 = vadd.f32 %v4917, %v5029
    %v5031 = vpop.f32.mrb[0].mxu0
    %v5032 = vadd.f32 %v4919, %v5031
    %v5033 = vpop.f32.mrb[0].mxu0
    %v5034 = vadd.f32 %v4921, %v5033
    %5035 = vmatprep.mubr.bf16.mxu0 %v3137
    %5036 = vmatmul.mubr.bf16.gmra.mrb[0].mxu0 %v3136
    %v5037 = vpop.f32.mrb[0].mxu0
    %v5038 = vadd.f32 %v4925, %v5037
    %v5039 = vpop.f32.mrb[0].mxu0
    %v5040 = vadd.f32 %v4927, %v5039
    %v5041 = vpop.f32.mrb[0].mxu0
    %v5042 = vadd.f32 %v4929, %v5041
    %v5043 = vpop.f32.mrb[0].mxu0
    %v5044 = vadd.f32 %v4931, %v5043
    %5045 = vdwg.mxu0
    %5046 = vmatprep.subr.bf16.mxu0 %v2571
    %5047 = vmatpush1.bf16.msra.mxu0 %v2570
    %5048 = vmatprep.subr.bf16.mxu0 %v2577
    %5049 = vmatpush1.bf16.msra.mxu0 %v2576
    %5050 = vmatprep.subr.bf16.mxu0 %v2583
    %5051 = vmatpush1.bf16.msra.mxu0 %v2582
    %5052 = vmatprep.subr.bf16.mxu0 %v2589
    %5053 = vmatpush1.bf16.msra.mxu0 %v2588
    %5054 = vmatprep.subr.bf16.mxu0 %v2595
    %5055 = vmatpush1.bf16.msra.mxu0 %v2594
    %5056 = vmatprep.subr.bf16.mxu0 %v2601
    %5057 = vmatpush1.bf16.msra.mxu0 %v2600
    %5058 = vmatprep.subr.bf16.mxu0 %v2607
    %5059 = vmatpush1.bf16.msra.mxu0 %v2606
    %5060 = vmatprep.subr.bf16.mxu0 %v2613
    %5061 = vmatpush1.bf16.msra.mxu0 %v2612
    %5062 = vmatprep.subr.bf16.mxu0 %v2619
    %5063 = vmatpush1.bf16.msra.mxu0 %v2618
    %5064 = vmatprep.subr.bf16.mxu0 %v2625
    %5065 = vmatpush1.bf16.msra.mxu0 %v2624
    %5066 = vmatprep.subr.bf16.mxu0 %v2631
    %5067 = vmatpush1.bf16.msra.mxu0 %v2630
    %5068 = vmatprep.subr.bf16.mxu0 %v2637
    %5069 = vmatpush1.bf16.msra.mxu0 %v2636
    %5070 = vmatprep.subr.bf16.mxu0 %v2643
    %5071 = vmatpush1.bf16.msra.mxu0 %v2642
    %5072 = vmatprep.subr.bf16.mxu0 %v2649
    %5073 = vmatpush1.bf16.msra.mxu0 %v2648
    %5074 = vmatprep.subr.bf16.mxu0 %v2655
    %5075 = vmatpush1.bf16.msra.mxu0 %v2654
    %5076 = vmatprep.subr.bf16.mxu0 %v2661
    %5077 = vmatpush1.bf16.msra.mxu0 %v2660
    %5078 = vmatprep.mubr.bf16.mxu0 %v3055
    %5079 = vmatmul.mubr.bf16.gmra.mrb[0].mxu0 %v3054
    %v5080 = vpop.f32.mrb[0].mxu0
    %v5081 = vadd.f32 %v4968, %v5080
    %v5082 = vpop.f32.mrb[0].mxu0
    %v5083 = vadd.f32 %v4970, %v5082
    %v5084 = vpop.f32.mrb[0].mxu0
    %v5085 = vadd.f32 %v4972, %v5084
    %v5086 = vpop.f32.mrb[0].mxu0
    %v5087 = vadd.f32 %v4974, %v5086
    %5088 = vmatprep.mubr.bf16.mxu0 %v3067
    %5089 = vmatmul.mubr.bf16.gmra.mrb[0].mxu0 %v3066
    %v5090 = vpop.f32.mrb[0].mxu0
    %v5091 = vadd.f32 %v4978, %v5090
    %v5092 = vpop.f32.mrb[0].mxu0
    %v5093 = vadd.f32 %v4980, %v5092
    %v5094 = vpop.f32.mrb[0].mxu0
    %v5095 = vadd.f32 %v4982, %v5094
    %v5096 = vpop.f32.mrb[0].mxu0
    %v5097 = vadd.f32 %v4984, %v5096
    %5098 = vmatprep.mubr.bf16.mxu0 %v3079
    %5099 = vmatmul.mubr.bf16.gmra.mrb[0].mxu0 %v3078
    %v5100 = vpop.f32.mrb[0].mxu0
    %v5101 = vadd.f32 %v4988, %v5100
    %v5102 = vpop.f32.mrb[0].mxu0
    %v5103 = vadd.f32 %v4990, %v5102
    %v5104 = vpop.f32.mrb[0].mxu0
    %v5105 = vadd.f32 %v4992, %v5104
    %v5106 = vpop.f32.mrb[0].mxu0
    %v5107 = vadd.f32 %v4994, %v5106
    %5108 = vmatprep.mubr.bf16.mxu0 %v3091
    %5109 = vmatmul.mubr.bf16.gmra.mrb[0].mxu0 %v3090
    %v5110 = vpop.f32.mrb[0].mxu0
    %v5111 = vadd.f32 %v4998, %v5110
    %v5112 = vpop.f32.mrb[0].mxu0
    %v5113 = vadd.f32 %v5000, %v5112
    %v5114 = vpop.f32.mrb[0].mxu0
    %v5115 = vadd.f32 %v5002, %v5114
    %v5116 = vpop.f32.mrb[0].mxu0
    %v5117 = vadd.f32 %v5004, %v5116
    %5118 = vmatprep.mubr.bf16.mxu0 %v3103
    %5119 = vmatmul.mubr.bf16.gmra.mrb[0].mxu0 %v3102
    %v5120 = vpop.f32.mrb[0].mxu0
    %v5121 = vadd.f32 %v5008, %v5120
    %v5122 = vpop.f32.mrb[0].mxu0
    %v5123 = vadd.f32 %v5010, %v5122
    %v5124 = vpop.f32.mrb[0].mxu0
    %v5125 = vadd.f32 %v5012, %v5124
    %v5126 = vpop.f32.mrb[0].mxu0
    %v5127 = vadd.f32 %v5014, %v5126
    %5128 = vmatprep.mubr.bf16.mxu0 %v3115
    %5129 = vmatmul.mubr.bf16.gmra.mrb[0].mxu0 %v3114
    %v5130 = vpop.f32.mrb[0].mxu0
    %v5131 = vadd.f32 %v5018, %v5130
    %v5132 = vpop.f32.mrb[0].mxu0
    %v5133 = vadd.f32 %v5020, %v5132
    %v5134 = vpop.f32.mrb[0].mxu0
    %v5135 = vadd.f32 %v5022, %v5134
    %v5136 = vpop.f32.mrb[0].mxu0
    %v5137 = vadd.f32 %v5024, %v5136
    %5138 = vmatprep.mubr.bf16.mxu0 %v3127
    %5139 = vmatmul.mubr.bf16.gmra.mrb[0].mxu0 %v3126
    %v5140 = vpop.f32.mrb[0].mxu0
    %v5141 = vadd.f32 %v5028, %v5140
    %v5142 = vpop.f32.mrb[0].mxu0
    %v5143 = vadd.f32 %v5030, %v5142
    %v5144 = vpop.f32.mrb[0].mxu0
    %v5145 = vadd.f32 %v5032, %v5144
    %v5146 = vpop.f32.mrb[0].mxu0
    %v5147 = vadd.f32 %v5034, %v5146
    %5148 = vmatprep.mubr.bf16.mxu0 %v3139
    %5149 = vmatmul.mubr.bf16.gmra.mrb[0].mxu0 %v3138
    %v5150 = vpop.f32.mrb[0].mxu0
    %v5151 = vadd.f32 %v5038, %v5150
    %v5152 = vpop.f32.mrb[0].mxu0
    %v5153 = vadd.f32 %v5040, %v5152
    %v5154 = vpop.f32.mrb[0].mxu0
    %v5155 = vadd.f32 %v5042, %v5154
    %v5156 = vpop.f32.mrb[0].mxu0
    %v5157 = vadd.f32 %v5044, %v5156
    %5158 = vdwg.mxu0
    %5159 = vmatprep.subr.bf16.mxu0 %v2667
    %5160 = vmatpush1.bf16.msra.mxu0 %v2666
    %5161 = vmatprep.subr.bf16.mxu0 %v2673
    %5162 = vmatpush1.bf16.msra.mxu0 %v2672
    %5163 = vmatprep.subr.bf16.mxu0 %v2679
    %5164 = vmatpush1.bf16.msra.mxu0 %v2678
    %5165 = vmatprep.subr.bf16.mxu0 %v2685
    %5166 = vmatpush1.bf16.msra.mxu0 %v2684
    %5167 = vmatprep.subr.bf16.mxu0 %v2691
    %5168 = vmatpush1.bf16.msra.mxu0 %v2690
    %5169 = vmatprep.subr.bf16.mxu0 %v2697
    %5170 = vmatpush1.bf16.msra.mxu0 %v2696
    %5171 = vmatprep.subr.bf16.mxu0 %v2703
    %5172 = vmatpush1.bf16.msra.mxu0 %v2702
    %5173 = vmatprep.subr.bf16.mxu0 %v2709
    %5174 = vmatpush1.bf16.msra.mxu0 %v2708
    %5175 = vmatprep.subr.bf16.mxu0 %v2715
    %5176 = vmatpush1.bf16.msra.mxu0 %v2714
    %5177 = vmatprep.subr.bf16.mxu0 %v2721
    %5178 = vmatpush1.bf16.msra.mxu0 %v2720
    %5179 = vmatprep.subr.bf16.mxu0 %v2727
    %5180 = vmatpush1.bf16.msra.mxu0 %v2726
    %5181 = vmatprep.subr.bf16.mxu0 %v2733
    %5182 = vmatpush1.bf16.msra.mxu0 %v2732
    %5183 = vmatprep.subr.bf16.mxu0 %v2739
    %5184 = vmatpush1.bf16.msra.mxu0 %v2738
    %5185 = vmatprep.subr.bf16.mxu0 %v2745
    %5186 = vmatpush1.bf16.msra.mxu0 %v2744
    %5187 = vmatprep.subr.bf16.mxu0 %v2751
    %5188 = vmatpush1.bf16.msra.mxu0 %v2750
    %5189 = vmatprep.subr.bf16.mxu0 %v2757
    %5190 = vmatpush1.bf16.msra.mxu0 %v2756
    %5191 = vmatprep.mubr.bf16.mxu0 %v3057
    %5192 = vmatmul.mubr.bf16.gmra.mrb[0].mxu0 %v3056
    %v5193 = vpop.f32.mrb[0].mxu0
    %v5194 = vadd.f32 %v5081, %v5193
    %v5195 = vpop.f32.mrb[0].mxu0
    %v5196 = vadd.f32 %v5083, %v5195
    %v5197 = vpop.f32.mrb[0].mxu0
    %v5198 = vadd.f32 %v5085, %v5197
    %v5199 = vpop.f32.mrb[0].mxu0
    %v5200 = vadd.f32 %v5087, %v5199
    %5201 = vmatprep.mubr.bf16.mxu0 %v3069
    %5202 = vmatmul.mubr.bf16.gmra.mrb[0].mxu0 %v3068
    %v5203 = vpop.f32.mrb[0].mxu0
    %v5204 = vadd.f32 %v5091, %v5203
    %v5205 = vpop.f32.mrb[0].mxu0
    %v5206 = vadd.f32 %v5093, %v5205
    %v5207 = vpop.f32.mrb[0].mxu0
    %v5208 = vadd.f32 %v5095, %v5207
    %v5209 = vpop.f32.mrb[0].mxu0
    %v5210 = vadd.f32 %v5097, %v5209
    %5211 = vmatprep.mubr.bf16.mxu0 %v3081
    %5212 = vmatmul.mubr.bf16.gmra.mrb[0].mxu0 %v3080
    %v5213 = vpop.f32.mrb[0].mxu0
    %v5214 = vadd.f32 %v5101, %v5213
    %v5215 = vpop.f32.mrb[0].mxu0
    %v5216 = vadd.f32 %v5103, %v5215
    %v5217 = vpop.f32.mrb[0].mxu0
    %v5218 = vadd.f32 %v5105, %v5217
    %v5219 = vpop.f32.mrb[0].mxu0
    %v5220 = vadd.f32 %v5107, %v5219
    %5221 = vmatprep.mubr.bf16.mxu0 %v3093
    %5222 = vmatmul.mubr.bf16.gmra.mrb[0].mxu0 %v3092
    %v5223 = vpop.f32.mrb[0].mxu0
    %v5224 = vadd.f32 %v5111, %v5223
    %v5225 = vpop.f32.mrb[0].mxu0
    %v5226 = vadd.f32 %v5113, %v5225
    %v5227 = vpop.f32.mrb[0].mxu0
    %v5228 = vadd.f32 %v5115, %v5227
    %v5229 = vpop.f32.mrb[0].mxu0
    %v5230 = vadd.f32 %v5117, %v5229
    %5231 = vmatprep.mubr.bf16.mxu0 %v3105
    %5232 = vmatmul.mubr.bf16.gmra.mrb[0].mxu0 %v3104
    %v5233 = vpop.f32.mrb[0].mxu0
    %v5234 = vadd.f32 %v5121, %v5233
    %v5235 = vpop.f32.mrb[0].mxu0
    %v5236 = vadd.f32 %v5123, %v5235
    %v5237 = vpop.f32.mrb[0].mxu0
    %v5238 = vadd.f32 %v5125, %v5237
    %v5239 = vpop.f32.mrb[0].mxu0
    %v5240 = vadd.f32 %v5127, %v5239
    %5241 = vmatprep.mubr.bf16.mxu0 %v3117
    %5242 = vmatmul.mubr.bf16.gmra.mrb[0].mxu0 %v3116
    %v5243 = vpop.f32.mrb[0].mxu0
    %v5244 = vadd.f32 %v5131, %v5243
    %v5245 = vpop.f32.mrb[0].mxu0
    %v5246 = vadd.f32 %v5133, %v5245
    %v5247 = vpop.f32.mrb[0].mxu0
    %v5248 = vadd.f32 %v5135, %v5247
    %v5249 = vpop.f32.mrb[0].mxu0
    %v5250 = vadd.f32 %v5137, %v5249
    %5251 = vmatprep.mubr.bf16.mxu0 %v3129
    %5252 = vmatmul.mubr.bf16.gmra.mrb[0].mxu0 %v3128
    %v5253 = vpop.f32.mrb[0].mxu0
    %v5254 = vadd.f32 %v5141, %v5253
    %v5255 = vpop.f32.mrb[0].mxu0
    %v5256 = vadd.f32 %v5143, %v5255
    %v5257 = vpop.f32.mrb[0].mxu0
    %v5258 = vadd.f32 %v5145, %v5257
    %v5259 = vpop.f32.mrb[0].mxu0
    %v5260 = vadd.f32 %v5147, %v5259
    %5261 = vmatprep.mubr.bf16.mxu0 %v3141
    %5262 = vmatmul.mubr.bf16.gmra.mrb[0].mxu0 %v3140
    %v5263 = vpop.f32.mrb[0].mxu0
    %v5264 = vadd.f32 %v5151, %v5263
    %v5265 = vpop.f32.mrb[0].mxu0
    %v5266 = vadd.f32 %v5153, %v5265
    %v5267 = vpop.f32.mrb[0].mxu0
    %v5268 = vadd.f32 %v5155, %v5267
    %v5269 = vpop.f32.mrb[0].mxu0
    %v5270 = vadd.f32 %v5157, %v5269
    %5271 = vdwg.mxu0
    %v5272 = vld [vmem:[#allocation6] sm:$0x3f]
    %v5274 = vlaneseq
    %v5275 = vshrl.u32 %v5274, 7
    %v5276 = vsub.s32 0, %v5275
    %v5277 = vrot.slane %v5272, %v5276
    %v5278 = vlaneseq
    %v5279 = vshrl.u32 %v5278, 7
    %v5280 = vsub.s32 1, %v5279
    %v5281 = vrot.slane %v5272, %v5280
    %v5282 = vlaneseq
    %v5283 = vshrl.u32 %v5282, 7
    %v5284 = vsub.s32 2, %v5283
    %v5285 = vrot.slane %v5272, %v5284
    %v5286 = vlaneseq
    %v5287 = vshrl.u32 %v5286, 7
    %v5288 = vsub.s32 3, %v5287
    %v5289 = vrot.slane %v5272, %v5288
    %v5290 = vlaneseq
    %v5291 = vshrl.u32 %v5290, 7
    %v5292 = vsub.s32 4, %v5291
    %v5293 = vrot.slane %v5272, %v5292
    %v5294 = vlaneseq
    %v5295 = vshrl.u32 %v5294, 7
    %v5296 = vsub.s32 5, %v5295
    %v5297 = vrot.slane %v5272, %v5296
    %v5304 = vmul.f32 %v3838, %v5277
    %v5305 = vmul.f32 %v3840, %v5281
    %v5306 = vmul.f32 %v4516, %v5285
    %v5307 = vmul.f32 %v4518, %v5289
    %v5308 = vmul.f32 %v5194, %v5293
    %v5309 = vmul.f32 %v5196, %v5297
    %v5310 = vmul.f32 %v3842, %v5277
    %v5311 = vmul.f32 %v3844, %v5281
    %v5312 = vmul.f32 %v4520, %v5285
    %v5313 = vmul.f32 %v4522, %v5289
    %v5314 = vmul.f32 %v5198, %v5293
    %v5315 = vmul.f32 %v5200, %v5297
    %v5316 = vmul.f32 %v3848, %v5277
    %v5317 = vmul.f32 %v3850, %v5281
    %v5318 = vmul.f32 %v4526, %v5285
    %v5319 = vmul.f32 %v4528, %v5289
    %v5320 = vmul.f32 %v5204, %v5293
    %v5321 = vmul.f32 %v5206, %v5297
    %v5322 = vmul.f32 %v3852, %v5277
    %v5323 = vmul.f32 %v3854, %v5281
    %v5324 = vmul.f32 %v4530, %v5285
    %v5325 = vmul.f32 %v4532, %v5289
    %v5326 = vmul.f32 %v5208, %v5293
    %v5327 = vmul.f32 %v5210, %v5297
    %v5328 = vmul.f32 %v3858, %v5277
    %v5329 = vmul.f32 %v3860, %v5281
    %v5330 = vmul.f32 %v4536, %v5285
    %v5331 = vmul.f32 %v4538, %v5289
    %v5332 = vmul.f32 %v5214, %v5293
    %v5333 = vmul.f32 %v5216, %v5297
    %v5334 = vmul.f32 %v3862, %v5277
    %v5335 = vmul.f32 %v3864, %v5281
    %v5336 = vmul.f32 %v4540, %v5285
    %v5337 = vmul.f32 %v4542, %v5289
    %v5338 = vmul.f32 %v5218, %v5293
    %v5339 = vmul.f32 %v5220, %v5297
    %v5340 = vmul.f32 %v3868, %v5277
    %v5341 = vmul.f32 %v3870, %v5281
    %v5342 = vmul.f32 %v4546, %v5285
    %v5343 = vmul.f32 %v4548, %v5289
    %v5344 = vmul.f32 %v5224, %v5293
    %v5345 = vmul.f32 %v5226, %v5297
    %v5346 = vmul.f32 %v3872, %v5277
    %v5347 = vmul.f32 %v3874, %v5281
    %v5348 = vmul.f32 %v4550, %v5285
    %v5349 = vmul.f32 %v4552, %v5289
    %v5350 = vmul.f32 %v5228, %v5293
    %v5351 = vmul.f32 %v5230, %v5297
    %v5352 = vmul.f32 %v3878, %v5277
    %v5353 = vmul.f32 %v3880, %v5281
    %v5354 = vmul.f32 %v4556, %v5285
    %v5355 = vmul.f32 %v4558, %v5289
    %v5356 = vmul.f32 %v5234, %v5293
    %v5357 = vmul.f32 %v5236, %v5297
    %v5358 = vmul.f32 %v3882, %v5277
    %v5359 = vmul.f32 %v3884, %v5281
    %v5360 = vmul.f32 %v4560, %v5285
    %v5361 = vmul.f32 %v4562, %v5289
    %v5362 = vmul.f32 %v5238, %v5293
    %v5363 = vmul.f32 %v5240, %v5297
    %v5364 = vmul.f32 %v3888, %v5277
    %v5365 = vmul.f32 %v3890, %v5281
    %v5366 = vmul.f32 %v4566, %v5285
    %v5367 = vmul.f32 %v4568, %v5289
    %v5368 = vmul.f32 %v5244, %v5293
    %v5369 = vmul.f32 %v5246, %v5297
    %v5370 = vmul.f32 %v3892, %v5277
    %v5371 = vmul.f32 %v3894, %v5281
    %v5372 = vmul.f32 %v4570, %v5285
    %v5373 = vmul.f32 %v4572, %v5289
    %v5374 = vmul.f32 %v5248, %v5293
    %v5375 = vmul.f32 %v5250, %v5297
    %v5376 = vmul.f32 %v3898, %v5277
    %v5377 = vmul.f32 %v3900, %v5281
    %v5378 = vmul.f32 %v4576, %v5285
    %v5379 = vmul.f32 %v4578, %v5289
    %v5380 = vmul.f32 %v5254, %v5293
    %v5381 = vmul.f32 %v5256, %v5297
    %v5382 = vmul.f32 %v3902, %v5277
    %v5383 = vmul.f32 %v3904, %v5281
    %v5384 = vmul.f32 %v4580, %v5285
    %v5385 = vmul.f32 %v4582, %v5289
    %v5386 = vmul.f32 %v5258, %v5293
    %v5387 = vmul.f32 %v5260, %v5297
    %v5388 = vmul.f32 %v3908, %v5277
    %v5389 = vmul.f32 %v3910, %v5281
    %v5390 = vmul.f32 %v4586, %v5285
    %v5391 = vmul.f32 %v4588, %v5289
    %v5392 = vmul.f32 %v5264, %v5293
    %v5393 = vmul.f32 %v5266, %v5297
    %v5394 = vmul.f32 %v3912, %v5277
    %v5395 = vmul.f32 %v3914, %v5281
    %v5396 = vmul.f32 %v4590, %v5285
    %v5397 = vmul.f32 %v4592, %v5289
    %v5398 = vmul.f32 %v5268, %v5293
    %v5399 = vmul.f32 %v5270, %v5297
    %v5400 = vld [vmem:[#allocation8] sm:$0x3f]
    %v5402 = vlaneseq
    %v5403 = vshrl.u32 %v5402, 7
    %v5404 = vsub.s32 0, %v5403
    %v5405 = vrot.slane %v5400, %v5404
    %v5406 = vlaneseq
    %v5407 = vshrl.u32 %v5406, 7
    %v5408 = vsub.s32 1, %v5407
    %v5409 = vrot.slane %v5400, %v5408
    %v5410 = vlaneseq
    %v5411 = vshrl.u32 %v5410, 7
    %v5412 = vsub.s32 2, %v5411
    %v5413 = vrot.slane %v5400, %v5412
    %v5414 = vlaneseq
    %v5415 = vshrl.u32 %v5414, 7
    %v5416 = vsub.s32 3, %v5415
    %v5417 = vrot.slane %v5400, %v5416
    %v5418 = vlaneseq
    %v5419 = vshrl.u32 %v5418, 7
    %v5420 = vsub.s32 4, %v5419
    %v5421 = vrot.slane %v5400, %v5420
    %v5422 = vlaneseq
    %v5423 = vshrl.u32 %v5422, 7
    %v5424 = vsub.s32 5, %v5423
    %v5425 = vrot.slane %v5400, %v5424
    %v5432 = vadd.f32 %v5304, %v5405
    %v5433 = vadd.f32 %v5305, %v5409
    %v5434 = vadd.f32 %v5306, %v5413
    %v5435 = vadd.f32 %v5307, %v5417
    %v5436 = vadd.f32 %v5308, %v5421
    %v5437 = vadd.f32 %v5309, %v5425
    %v5438 = vadd.f32 %v5310, %v5405
    %v5439 = vadd.f32 %v5311, %v5409
    %v5440 = vadd.f32 %v5312, %v5413
    %v5441 = vadd.f32 %v5313, %v5417
    %v5442 = vadd.f32 %v5314, %v5421
    %v5443 = vadd.f32 %v5315, %v5425
    %v5444 = vadd.f32 %v5316, %v5405
    %v5445 = vadd.f32 %v5317, %v5409
    %v5446 = vadd.f32 %v5318, %v5413
    %v5447 = vadd.f32 %v5319, %v5417
    %v5448 = vadd.f32 %v5320, %v5421
    %v5449 = vadd.f32 %v5321, %v5425
    %v5450 = vadd.f32 %v5322, %v5405
    %v5451 = vadd.f32 %v5323, %v5409
    %v5452 = vadd.f32 %v5324, %v5413
    %v5453 = vadd.f32 %v5325, %v5417
    %v5454 = vadd.f32 %v5326, %v5421
    %v5455 = vadd.f32 %v5327, %v5425
    %v5456 = vadd.f32 %v5328, %v5405
    %v5457 = vadd.f32 %v5329, %v5409
    %v5458 = vadd.f32 %v5330, %v5413
    %v5459 = vadd.f32 %v5331, %v5417
    %v5460 = vadd.f32 %v5332, %v5421
    %v5461 = vadd.f32 %v5333, %v5425
    %v5462 = vadd.f32 %v5334, %v5405
    %v5463 = vadd.f32 %v5335, %v5409
    %v5464 = vadd.f32 %v5336, %v5413
    %v5465 = vadd.f32 %v5337, %v5417
    %v5466 = vadd.f32 %v5338, %v5421
    %v5467 = vadd.f32 %v5339, %v5425
    %v5468 = vadd.f32 %v5340, %v5405
    %v5469 = vadd.f32 %v5341, %v5409
    %v5470 = vadd.f32 %v5342, %v5413
    %v5471 = vadd.f32 %v5343, %v5417
    %v5472 = vadd.f32 %v5344, %v5421
    %v5473 = vadd.f32 %v5345, %v5425
    %v5474 = vadd.f32 %v5346, %v5405
    %v5475 = vadd.f32 %v5347, %v5409
    %v5476 = vadd.f32 %v5348, %v5413
    %v5477 = vadd.f32 %v5349, %v5417
    %v5478 = vadd.f32 %v5350, %v5421
    %v5479 = vadd.f32 %v5351, %v5425
    %v5480 = vadd.f32 %v5352, %v5405
    %v5481 = vadd.f32 %v5353, %v5409
    %v5482 = vadd.f32 %v5354, %v5413
    %v5483 = vadd.f32 %v5355, %v5417
    %v5484 = vadd.f32 %v5356, %v5421
    %v5485 = vadd.f32 %v5357, %v5425
    %v5486 = vadd.f32 %v5358, %v5405
    %v5487 = vadd.f32 %v5359, %v5409
    %v5488 = vadd.f32 %v5360, %v5413
    %v5489 = vadd.f32 %v5361, %v5417
    %v5490 = vadd.f32 %v5362, %v5421
    %v5491 = vadd.f32 %v5363, %v5425
    %v5492 = vadd.f32 %v5364, %v5405
    %v5493 = vadd.f32 %v5365, %v5409
    %v5494 = vadd.f32 %v5366, %v5413
    %v5495 = vadd.f32 %v5367, %v5417
    %v5496 = vadd.f32 %v5368, %v5421
    %v5497 = vadd.f32 %v5369, %v5425
    %v5498 = vadd.f32 %v5370, %v5405
    %v5499 = vadd.f32 %v5371, %v5409
    %v5500 = vadd.f32 %v5372, %v5413
    %v5501 = vadd.f32 %v5373, %v5417
    %v5502 = vadd.f32 %v5374, %v5421
    %v5503 = vadd.f32 %v5375, %v5425
    %v5504 = vadd.f32 %v5376, %v5405
    %v5505 = vadd.f32 %v5377, %v5409
    %v5506 = vadd.f32 %v5378, %v5413
    %v5507 = vadd.f32 %v5379, %v5417
    %v5508 = vadd.f32 %v5380, %v5421
    %v5509 = vadd.f32 %v5381, %v5425
    %v5510 = vadd.f32 %v5382, %v5405
    %v5511 = vadd.f32 %v5383, %v5409
    %v5512 = vadd.f32 %v5384, %v5413
    %v5513 = vadd.f32 %v5385, %v5417
    %v5514 = vadd.f32 %v5386, %v5421
    %v5515 = vadd.f32 %v5387, %v5425
    %v5516 = vadd.f32 %v5388, %v5405
    %v5517 = vadd.f32 %v5389, %v5409
    %v5518 = vadd.f32 %v5390, %v5413
    %v5519 = vadd.f32 %v5391, %v5417
    %v5520 = vadd.f32 %v5392, %v5421
    %v5521 = vadd.f32 %v5393, %v5425
    %v5522 = vadd.f32 %v5394, %v5405
    %v5523 = vadd.f32 %v5395, %v5409
    %v5524 = vadd.f32 %v5396, %v5413
    %v5525 = vadd.f32 %v5397, %v5417
    %v5526 = vadd.f32 %v5398, %v5421
    %v5527 = vadd.f32 %v5399, %v5425
    %v5528 = vmax.f32 %v5432, 0.0
    %v5529 = vmax.f32 %v5433, 0.0
    %v5530 = vmax.f32 %v5434, 0.0
    %v5531 = vmax.f32 %v5435, 0.0
    %v5532 = vmax.f32 %v5436, 0.0
    %v5533 = vmax.f32 %v5437, 0.0
    %v5534 = vmax.f32 %v5438, 0.0
    %v5535 = vmax.f32 %v5439, 0.0
    %v5536 = vmax.f32 %v5440, 0.0
    %v5537 = vmax.f32 %v5441, 0.0
    %v5538 = vmax.f32 %v5442, 0.0
    %v5539 = vmax.f32 %v5443, 0.0
    %v5540 = vmax.f32 %v5444, 0.0
    %v5541 = vmax.f32 %v5445, 0.0
    %v5542 = vmax.f32 %v5446, 0.0
    %v5543 = vmax.f32 %v5447, 0.0
    %v5544 = vmax.f32 %v5448, 0.0
    %v5545 = vmax.f32 %v5449, 0.0
    %v5546 = vmax.f32 %v5450, 0.0
    %v5547 = vmax.f32 %v5451, 0.0
    %v5548 = vmax.f32 %v5452, 0.0
    %v5549 = vmax.f32 %v5453, 0.0
    %v5550 = vmax.f32 %v5454, 0.0
    %v5551 = vmax.f32 %v5455, 0.0
    %v5552 = vmax.f32 %v5456, 0.0
    %v5553 = vmax.f32 %v5457, 0.0
    %v5554 = vmax.f32 %v5458, 0.0
    %v5555 = vmax.f32 %v5459, 0.0
    %v5556 = vmax.f32 %v5460, 0.0
    %v5557 = vmax.f32 %v5461, 0.0
    %v5558 = vmax.f32 %v5462, 0.0
    %v5559 = vmax.f32 %v5463, 0.0
    %v5560 = vmax.f32 %v5464, 0.0
    %v5561 = vmax.f32 %v5465, 0.0
    %v5562 = vmax.f32 %v5466, 0.0
    %v5563 = vmax.f32 %v5467, 0.0
    %v5564 = vmax.f32 %v5468, 0.0
    %v5565 = vmax.f32 %v5469, 0.0
    %v5566 = vmax.f32 %v5470, 0.0
    %v5567 = vmax.f32 %v5471, 0.0
    %v5568 = vmax.f32 %v5472, 0.0
    %v5569 = vmax.f32 %v5473, 0.0
    %v5570 = vmax.f32 %v5474, 0.0
    %v5571 = vmax.f32 %v5475, 0.0
    %v5572 = vmax.f32 %v5476, 0.0
    %v5573 = vmax.f32 %v5477, 0.0
    %v5574 = vmax.f32 %v5478, 0.0
    %v5575 = vmax.f32 %v5479, 0.0
    %v5576 = vmax.f32 %v5480, 0.0
    %v5577 = vmax.f32 %v5481, 0.0
    %v5578 = vmax.f32 %v5482, 0.0
    %v5579 = vmax.f32 %v5483, 0.0
    %v5580 = vmax.f32 %v5484, 0.0
    %v5581 = vmax.f32 %v5485, 0.0
    %v5582 = vmax.f32 %v5486, 0.0
    %v5583 = vmax.f32 %v5487, 0.0
    %v5584 = vmax.f32 %v5488, 0.0
    %v5585 = vmax.f32 %v5489, 0.0
    %v5586 = vmax.f32 %v5490, 0.0
    %v5587 = vmax.f32 %v5491, 0.0
    %v5588 = vmax.f32 %v5492, 0.0
    %v5589 = vmax.f32 %v5493, 0.0
    %v5590 = vmax.f32 %v5494, 0.0
    %v5591 = vmax.f32 %v5495, 0.0
    %v5592 = vmax.f32 %v5496, 0.0
    %v5593 = vmax.f32 %v5497, 0.0
    %v5594 = vmax.f32 %v5498, 0.0
    %v5595 = vmax.f32 %v5499, 0.0
    %v5596 = vmax.f32 %v5500, 0.0
    %v5597 = vmax.f32 %v5501, 0.0
    %v5598 = vmax.f32 %v5502, 0.0
    %v5599 = vmax.f32 %v5503, 0.0
    %v5600 = vmax.f32 %v5504, 0.0
    %v5601 = vmax.f32 %v5505, 0.0
    %v5602 = vmax.f32 %v5506, 0.0
    %v5603 = vmax.f32 %v5507, 0.0
    %v5604 = vmax.f32 %v5508, 0.0
    %v5605 = vmax.f32 %v5509, 0.0
    %v5606 = vmax.f32 %v5510, 0.0
    %v5607 = vmax.f32 %v5511, 0.0
    %v5608 = vmax.f32 %v5512, 0.0
    %v5609 = vmax.f32 %v5513, 0.0
    %v5610 = vmax.f32 %v5514, 0.0
    %v5611 = vmax.f32 %v5515, 0.0
    %v5612 = vmax.f32 %v5516, 0.0
    %v5613 = vmax.f32 %v5517, 0.0
    %v5614 = vmax.f32 %v5518, 0.0
    %v5615 = vmax.f32 %v5519, 0.0
    %v5616 = vmax.f32 %v5520, 0.0
    %v5617 = vmax.f32 %v5521, 0.0
    %v5618 = vmax.f32 %v5522, 0.0
    %v5619 = vmax.f32 %v5523, 0.0
    %v5620 = vmax.f32 %v5524, 0.0
    %v5621 = vmax.f32 %v5525, 0.0
    %v5622 = vmax.f32 %v5526, 0.0
    %v5623 = vmax.f32 %v5527, 0.0
    %v5624 = vpack.c.bf16 %v5534, %v5528
    %v5625 = vpack.c.bf16 %v5535, %v5529
    %v5626 = vpack.c.bf16 %v5536, %v5530
    %v5627 = vpack.c.bf16 %v5537, %v5531
    %v5628 = vpack.c.bf16 %v5538, %v5532
    %v5629 = vpack.c.bf16 %v5539, %v5533
    %v5630 = vpack.c.bf16 %v5546, %v5540
    %v5631 = vpack.c.bf16 %v5547, %v5541
    %v5632 = vpack.c.bf16 %v5548, %v5542
    %v5633 = vpack.c.bf16 %v5549, %v5543
    %v5634 = vpack.c.bf16 %v5550, %v5544
    %v5635 = vpack.c.bf16 %v5551, %v5545
    %v5636 = vpack.c.bf16 %v5558, %v5552
    %v5637 = vpack.c.bf16 %v5559, %v5553
    %v5638 = vpack.c.bf16 %v5560, %v5554
    %v5639 = vpack.c.bf16 %v5561, %v5555
    %v5640 = vpack.c.bf16 %v5562, %v5556
    %v5641 = vpack.c.bf16 %v5563, %v5557
    %v5642 = vpack.c.bf16 %v5570, %v5564
    %v5643 = vpack.c.bf16 %v5571, %v5565
    %v5644 = vpack.c.bf16 %v5572, %v5566
    %v5645 = vpack.c.bf16 %v5573, %v5567
    %v5646 = vpack.c.bf16 %v5574, %v5568
    %v5647 = vpack.c.bf16 %v5575, %v5569
    %v5648 = vpack.c.bf16 %v5582, %v5576
    %v5649 = vpack.c.bf16 %v5583, %v5577
    %v5650 = vpack.c.bf16 %v5584, %v5578
    %v5651 = vpack.c.bf16 %v5585, %v5579
    %v5652 = vpack.c.bf16 %v5586, %v5580
    %v5653 = vpack.c.bf16 %v5587, %v5581
    %v5654 = vpack.c.bf16 %v5594, %v5588
    %v5655 = vpack.c.bf16 %v5595, %v5589
    %v5656 = vpack.c.bf16 %v5596, %v5590
    %v5657 = vpack.c.bf16 %v5597, %v5591
    %v5658 = vpack.c.bf16 %v5598, %v5592
    %v5659 = vpack.c.bf16 %v5599, %v5593
    %v5660 = vpack.c.bf16 %v5606, %v5600
    %v5661 = vpack.c.bf16 %v5607, %v5601
    %v5662 = vpack.c.bf16 %v5608, %v5602
    %v5663 = vpack.c.bf16 %v5609, %v5603
    %v5664 = vpack.c.bf16 %v5610, %v5604
    %v5665 = vpack.c.bf16 %v5611, %v5605
    %v5666 = vpack.c.bf16 %v5618, %v5612
    %v5667 = vpack.c.bf16 %v5619, %v5613
    %v5668 = vpack.c.bf16 %v5620, %v5614
    %v5669 = vpack.c.bf16 %v5621, %v5615
    %v5670 = vpack.c.bf16 %v5622, %v5616
    %v5671 = vpack.c.bf16 %v5623, %v5617
    %v5672 = vld [vmem:[#allocation3] sm:$0xff]
    %v5673 = vld [vmem:[#allocation3 + $0x8] sm:$0xff]
    %v5674 = vld [vmem:[#allocation3 + $0x10] sm:$0xff]
    %v5675 = vld [vmem:[#allocation3 + $0x18] sm:$0xff]
    %v5676 = vld [vmem:[#allocation3 + $0x20] sm:$0xff]
    %v5677 = vld [vmem:[#allocation3 + $0x28] sm:$0xff]
    %v5678 = vld [vmem:[#allocation3 + $0x30] sm:$0xff]
    %v5679 = vld [vmem:[#allocation3 + $0x38] sm:$0xff]
    %v5680 = vld [vmem:[#allocation3 + $0x40] sm:$0xff]
    %v5681 = vld [vmem:[#allocation3 + $0x48] sm:$0xff]
    %v5682 = vld [vmem:[#allocation3 + $0x50] sm:$0xff]
    %v5683 = vld [vmem:[#allocation3 + $0x58] sm:$0xff]
    %v5684 = vld [vmem:[#allocation3 + $0x60] sm:$0xff]
    %v5685 = vld [vmem:[#allocation3 + $0x68] sm:$0xff]
    %v5686 = vld [vmem:[#allocation3 + $0x70] sm:$0xff]
    %v5687 = vld [vmem:[#allocation3 + $0x78] sm:$0xff]
    %v5688 = vld [vmem:[#allocation3 + $0x80] sm:$0xff]
    %v5689 = vld [vmem:[#allocation3 + $0x88] sm:$0xff]
    %v5690 = vld [vmem:[#allocation3 + $0x90] sm:$0xff]
    %v5691 = vld [vmem:[#allocation3 + $0x98] sm:$0xff]
    %v5692 = vld [vmem:[#allocation3 + $0xa0] sm:$0xff]
    %v5693 = vld [vmem:[#allocation3 + $0xa8] sm:$0xff]
    %v5694 = vld [vmem:[#allocation3 + $0xb0] sm:$0xff]
    %v5695 = vld [vmem:[#allocation3 + $0xb8] sm:$0xff]
    %v5696 = vld [vmem:[#allocation3 + $0xc0] sm:$0xff]
    %v5697 = vld [vmem:[#allocation3 + $0xc8] sm:$0xff]
    %v5698 = vld [vmem:[#allocation3 + $0xd0] sm:$0xff]
    %v5699 = vld [vmem:[#allocation3 + $0xd8] sm:$0xff]
    %v5700 = vld [vmem:[#allocation3 + $0xe0] sm:$0xff]
    %v5701 = vld [vmem:[#allocation3 + $0xe8] sm:$0xff]
    %v5702 = vld [vmem:[#allocation3 + $0xf0] sm:$0xff]
    %v5703 = vld [vmem:[#allocation3 + $0xf8] sm:$0xff]
    %v5704 = vld [vmem:[#allocation3 + $0x100] sm:$0xff]
    %v5705 = vld [vmem:[#allocation3 + $0x108] sm:$0xff]
    %v5706 = vld [vmem:[#allocation3 + $0x110] sm:$0xff]
    %v5707 = vld [vmem:[#allocation3 + $0x118] sm:$0xff]
    %v5708 = vld [vmem:[#allocation3 + $0x120] sm:$0xff]
    %v5709 = vld [vmem:[#allocation3 + $0x128] sm:$0xff]
    %v5710 = vld [vmem:[#allocation3 + $0x130] sm:$0xff]
    %v5711 = vld [vmem:[#allocation3 + $0x138] sm:$0xff]
    %v5712 = vld [vmem:[#allocation3 + $0x140] sm:$0xff]
    %v5713 = vld [vmem:[#allocation3 + $0x148] sm:$0xff]
    %v5714 = vld [vmem:[#allocation3 + $0x150] sm:$0xff]
    %v5715 = vld [vmem:[#allocation3 + $0x158] sm:$0xff]
    %v5716 = vld [vmem:[#allocation3 + $0x160] sm:$0xff]
    %v5717 = vld [vmem:[#allocation3 + $0x168] sm:$0xff]
    %v5718 = vld [vmem:[#allocation3 + $0x170] sm:$0xff]
    %v5719 = vld [vmem:[#allocation3 + $0x178] sm:$0xff]
    %v5720 = vld [vmem:[#allocation3 + $0x180] sm:$0xff]
    %v5721 = vld [vmem:[#allocation3 + $0x188] sm:$0xff]
    %v5722 = vld [vmem:[#allocation3 + $0x190] sm:$0xff]
    %v5723 = vld [vmem:[#allocation3 + $0x198] sm:$0xff]
    %v5724 = vld [vmem:[#allocation3 + $0x1a0] sm:$0xff]
    %v5725 = vld [vmem:[#allocation3 + $0x1a8] sm:$0xff]
    %v5726 = vld [vmem:[#allocation3 + $0x1b0] sm:$0xff]
    %v5727 = vld [vmem:[#allocation3 + $0x1b8] sm:$0xff]
    %v5728 = vld [vmem:[#allocation3 + $0x1c0] sm:$0xff]
    %v5729 = vld [vmem:[#allocation3 + $0x1c8] sm:$0xff]
    %v5730 = vld [vmem:[#allocation3 + $0x1d0] sm:$0xff]
    %v5731 = vld [vmem:[#allocation3 + $0x1d8] sm:$0xff]
    %v5732 = vld [vmem:[#allocation3 + $0x1e0] sm:$0xff]
    %v5733 = vld [vmem:[#allocation3 + $0x1e8] sm:$0xff]
    %v5734 = vld [vmem:[#allocation3 + $0x1f0] sm:$0xff]
    %v5735 = vld [vmem:[#allocation3 + $0x1f8] sm:$0xff]
    %v5736 = vld [vmem:[#allocation3 + $0x200] sm:$0xff]
    %v5737 = vld [vmem:[#allocation3 + $0x208] sm:$0xff]
    %v5738 = vld [vmem:[#allocation3 + $0x210] sm:$0xff]
    %v5739 = vld [vmem:[#allocation3 + $0x218] sm:$0xff]
    %v5740 = vld [vmem:[#allocation3 + $0x220] sm:$0xff]
    %v5741 = vld [vmem:[#allocation3 + $0x228] sm:$0xff]
    %v5742 = vld [vmem:[#allocation3 + $0x230] sm:$0xff]
    %v5743 = vld [vmem:[#allocation3 + $0x238] sm:$0xff]
    %v5744 = vld [vmem:[#allocation3 + $0x240] sm:$0xff]
    %v5745 = vld [vmem:[#allocation3 + $0x248] sm:$0xff]
    %v5746 = vld [vmem:[#allocation3 + $0x250] sm:$0xff]
    %v5747 = vld [vmem:[#allocation3 + $0x258] sm:$0xff]
    %v5748 = vld [vmem:[#allocation3 + $0x260] sm:$0xff]
    %v5749 = vld [vmem:[#allocation3 + $0x268] sm:$0xff]
    %v5750 = vld [vmem:[#allocation3 + $0x270] sm:$0xff]
    %v5751 = vld [vmem:[#allocation3 + $0x278] sm:$0xff]
    %v5752 = vld [vmem:[#allocation3 + $0x280] sm:$0xff]
    %v5753 = vld [vmem:[#allocation3 + $0x288] sm:$0xff]
    %v5754 = vld [vmem:[#allocation3 + $0x290] sm:$0xff]
    %v5755 = vld [vmem:[#allocation3 + $0x298] sm:$0xff]
    %v5756 = vld [vmem:[#allocation3 + $0x2a0] sm:$0xff]
    %v5757 = vld [vmem:[#allocation3 + $0x2a8] sm:$0xff]
    %v5758 = vld [vmem:[#allocation3 + $0x2b0] sm:$0xff]
    %v5759 = vld [vmem:[#allocation3 + $0x2b8] sm:$0xff]
    %v5760 = vld [vmem:[#allocation3 + $0x2c0] sm:$0xff]
    %v5761 = vld [vmem:[#allocation3 + $0x2c8] sm:$0xff]
    %v5762 = vld [vmem:[#allocation3 + $0x2d0] sm:$0xff]
    %v5763 = vld [vmem:[#allocation3 + $0x2d8] sm:$0xff]
    %v5764 = vld [vmem:[#allocation3 + $0x2e0] sm:$0xff]
    %v5765 = vld [vmem:[#allocation3 + $0x2e8] sm:$0xff]
    %v5766 = vld [vmem:[#allocation3 + $0x2f0] sm:$0xff]
    %v5767 = vld [vmem:[#allocation3 + $0x2f8] sm:$0xff]
    %v5768 = vld [vmem:[#allocation3 + $0x300] sm:$0xff]
    %v5769 = vld [vmem:[#allocation3 + $0x308] sm:$0xff]
    %v5770 = vld [vmem:[#allocation3 + $0x310] sm:$0xff]
    %v5771 = vld [vmem:[#allocation3 + $0x318] sm:$0xff]
    %v5772 = vld [vmem:[#allocation3 + $0x320] sm:$0xff]
    %v5773 = vld [vmem:[#allocation3 + $0x328] sm:$0xff]
    %v5774 = vld [vmem:[#allocation3 + $0x330] sm:$0xff]
    %v5775 = vld [vmem:[#allocation3 + $0x338] sm:$0xff]
    %v5776 = vld [vmem:[#allocation3 + $0x340] sm:$0xff]
    %v5777 = vld [vmem:[#allocation3 + $0x348] sm:$0xff]
    %v5778 = vld [vmem:[#allocation3 + $0x350] sm:$0xff]
    %v5779 = vld [vmem:[#allocation3 + $0x358] sm:$0xff]
    %v5780 = vld [vmem:[#allocation3 + $0x360] sm:$0xff]
    %v5781 = vld [vmem:[#allocation3 + $0x368] sm:$0xff]
    %v5782 = vld [vmem:[#allocation3 + $0x370] sm:$0xff]
    %v5783 = vld [vmem:[#allocation3 + $0x378] sm:$0xff]
    %v5784 = vld [vmem:[#allocation3 + $0x380] sm:$0xff]
    %v5785 = vld [vmem:[#allocation3 + $0x388] sm:$0xff]
    %v5786 = vld [vmem:[#allocation3 + $0x390] sm:$0xff]
    %v5787 = vld [vmem:[#allocation3 + $0x398] sm:$0xff]
    %v5788 = vld [vmem:[#allocation3 + $0x3a0] sm:$0xff]
    %v5789 = vld [vmem:[#allocation3 + $0x3a8] sm:$0xff]
    %v5790 = vld [vmem:[#allocation3 + $0x3b0] sm:$0xff]
    %v5791 = vld [vmem:[#allocation3 + $0x3b8] sm:$0xff]
    %v5792 = vld [vmem:[#allocation3 + $0x3c0] sm:$0xff]
    %v5793 = vld [vmem:[#allocation3 + $0x3c8] sm:$0xff]
    %v5794 = vld [vmem:[#allocation3 + $0x3d0] sm:$0xff]
    %v5795 = vld [vmem:[#allocation3 + $0x3d8] sm:$0xff]
    %v5796 = vld [vmem:[#allocation3 + $0x3e0] sm:$0xff]
    %v5797 = vld [vmem:[#allocation3 + $0x3e8] sm:$0xff]
    %v5798 = vld [vmem:[#allocation3 + $0x3f0] sm:$0xff]
    %v5799 = vld [vmem:[#allocation3 + $0x3f8] sm:$0xff]
    %v5800 = vld [vmem:[#allocation3 + $0x400] sm:$0xff]
    %v5801 = vld [vmem:[#allocation3 + $0x408] sm:$0xff]
    %v5802 = vld [vmem:[#allocation3 + $0x410] sm:$0xff]
    %v5803 = vld [vmem:[#allocation3 + $0x418] sm:$0xff]
    %v5804 = vld [vmem:[#allocation3 + $0x420] sm:$0xff]
    %v5805 = vld [vmem:[#allocation3 + $0x428] sm:$0xff]
    %v5806 = vld [vmem:[#allocation3 + $0x430] sm:$0xff]
    %v5807 = vld [vmem:[#allocation3 + $0x438] sm:$0xff]
    %v5808 = vld [vmem:[#allocation3 + $0x440] sm:$0xff]
    %v5809 = vld [vmem:[#allocation3 + $0x448] sm:$0xff]
    %v5810 = vld [vmem:[#allocation3 + $0x450] sm:$0xff]
    %v5811 = vld [vmem:[#allocation3 + $0x458] sm:$0xff]
    %v5812 = vld [vmem:[#allocation3 + $0x460] sm:$0xff]
    %v5813 = vld [vmem:[#allocation3 + $0x468] sm:$0xff]
    %v5814 = vld [vmem:[#allocation3 + $0x470] sm:$0xff]
    %v5815 = vld [vmem:[#allocation3 + $0x478] sm:$0xff]
    %v5816 = vld [vmem:[#allocation3 + $0x480] sm:$0xff]
    %v5817 = vld [vmem:[#allocation3 + $0x488] sm:$0xff]
    %v5818 = vld [vmem:[#allocation3 + $0x490] sm:$0xff]
    %v5819 = vld [vmem:[#allocation3 + $0x498] sm:$0xff]
    %v5820 = vld [vmem:[#allocation3 + $0x4a0] sm:$0xff]
    %v5821 = vld [vmem:[#allocation3 + $0x4a8] sm:$0xff]
    %v5822 = vld [vmem:[#allocation3 + $0x4b0] sm:$0xff]
    %v5823 = vld [vmem:[#allocation3 + $0x4b8] sm:$0xff]
    %v5824 = vld [vmem:[#allocation3 + $0x4c0] sm:$0xff]
    %v5825 = vld [vmem:[#allocation3 + $0x4c8] sm:$0xff]
    %v5826 = vld [vmem:[#allocation3 + $0x4d0] sm:$0xff]
    %v5827 = vld [vmem:[#allocation3 + $0x4d8] sm:$0xff]
    %v5828 = vld [vmem:[#allocation3 + $0x4e0] sm:$0xff]
    %v5829 = vld [vmem:[#allocation3 + $0x4e8] sm:$0xff]
    %v5830 = vld [vmem:[#allocation3 + $0x4f0] sm:$0xff]
    %v5831 = vld [vmem:[#allocation3 + $0x4f8] sm:$0xff]
    %v5832 = vld [vmem:[#allocation3 + $0x500] sm:$0xff]
    %v5833 = vld [vmem:[#allocation3 + $0x508] sm:$0xff]
    %v5834 = vld [vmem:[#allocation3 + $0x510] sm:$0xff]
    %v5835 = vld [vmem:[#allocation3 + $0x518] sm:$0xff]
    %v5836 = vld [vmem:[#allocation3 + $0x520] sm:$0xff]
    %v5837 = vld [vmem:[#allocation3 + $0x528] sm:$0xff]
    %v5838 = vld [vmem:[#allocation3 + $0x530] sm:$0xff]
    %v5839 = vld [vmem:[#allocation3 + $0x538] sm:$0xff]
    %v5840 = vld [vmem:[#allocation3 + $0x540] sm:$0xff]
    %v5841 = vld [vmem:[#allocation3 + $0x548] sm:$0xff]
    %v5842 = vld [vmem:[#allocation3 + $0x550] sm:$0xff]
    %v5843 = vld [vmem:[#allocation3 + $0x558] sm:$0xff]
    %v5844 = vld [vmem:[#allocation3 + $0x560] sm:$0xff]
    %v5845 = vld [vmem:[#allocation3 + $0x568] sm:$0xff]
    %v5846 = vld [vmem:[#allocation3 + $0x570] sm:$0xff]
    %v5847 = vld [vmem:[#allocation3 + $0x578] sm:$0xff]
    %v5848 = vld [vmem:[#allocation3 + $0x580] sm:$0xff]
    %v5849 = vld [vmem:[#allocation3 + $0x588] sm:$0xff]
    %v5850 = vld [vmem:[#allocation3 + $0x590] sm:$0xff]
    %v5851 = vld [vmem:[#allocation3 + $0x598] sm:$0xff]
    %v5852 = vld [vmem:[#allocation3 + $0x5a0] sm:$0xff]
    %v5853 = vld [vmem:[#allocation3 + $0x5a8] sm:$0xff]
    %v5854 = vld [vmem:[#allocation3 + $0x5b0] sm:$0xff]
    %v5855 = vld [vmem:[#allocation3 + $0x5b8] sm:$0xff]
    %v5856 = vld [vmem:[#allocation3 + $0x5c0] sm:$0xff]
    %v5857 = vld [vmem:[#allocation3 + $0x5c8] sm:$0xff]
    %v5858 = vld [vmem:[#allocation3 + $0x5d0] sm:$0xff]
    %v5859 = vld [vmem:[#allocation3 + $0x5d8] sm:$0xff]
    %v5860 = vld [vmem:[#allocation3 + $0x5e0] sm:$0xff]
    %v5861 = vld [vmem:[#allocation3 + $0x5e8] sm:$0xff]
    %v5862 = vld [vmem:[#allocation3 + $0x5f0] sm:$0xff]
    %v5863 = vld [vmem:[#allocation3 + $0x5f8] sm:$0xff]
    %5864 = vmatprep.subr.bf16.mxu0 %v5673
    %5865 = vmatpush1.bf16.msra.mxu0 %v5672
    %5866 = vmatprep.subr.bf16.mxu0 %v5677
    %5867 = vmatpush1.bf16.msra.mxu0 %v5676
    %5868 = vmatprep.subr.bf16.mxu0 %v5681
    %5869 = vmatpush1.bf16.msra.mxu0 %v5680
    %5870 = vmatprep.subr.bf16.mxu0 %v5685
    %5871 = vmatpush1.bf16.msra.mxu0 %v5684
    %5872 = vmatprep.subr.bf16.mxu0 %v5689
    %5873 = vmatpush1.bf16.msra.mxu0 %v5688
    %5874 = vmatprep.subr.bf16.mxu0 %v5693
    %5875 = vmatpush1.bf16.msra.mxu0 %v5692
    %5876 = vmatprep.subr.bf16.mxu0 %v5697
    %5877 = vmatpush1.bf16.msra.mxu0 %v5696
    %5878 = vmatprep.subr.bf16.mxu0 %v5701
    %5879 = vmatpush1.bf16.msra.mxu0 %v5700
    %5880 = vmatprep.subr.bf16.mxu0 %v5705
    %5881 = vmatpush1.bf16.msra.mxu0 %v5704
    %5882 = vmatprep.subr.bf16.mxu0 %v5709
    %5883 = vmatpush1.bf16.msra.mxu0 %v5708
    %5884 = vmatprep.subr.bf16.mxu0 %v5713
    %5885 = vmatpush1.bf16.msra.mxu0 %v5712
    %5886 = vmatprep.subr.bf16.mxu0 %v5717
    %5887 = vmatpush1.bf16.msra.mxu0 %v5716
    %5888 = vmatprep.subr.bf16.mxu0 %v5721
    %5889 = vmatpush1.bf16.msra.mxu0 %v5720
    %5890 = vmatprep.subr.bf16.mxu0 %v5725
    %5891 = vmatpush1.bf16.msra.mxu0 %v5724
    %5892 = vmatprep.subr.bf16.mxu0 %v5729
    %5893 = vmatpush1.bf16.msra.mxu0 %v5728
    %5894 = vmatprep.subr.bf16.mxu0 %v5733
    %5895 = vmatpush1.bf16.msra.mxu0 %v5732
    %5896 = vmatprep.mubr.bf16.mxu0 %v5625
    %5897 = vmatmul.mubr.bf16.gmra.mrb[0].mxu0 %v5624
    %v5898 = vpop.f32.mrb[0].mxu0
    %v5899 = vadd.f32 0.0, %v5898
    %v5900 = vpop.f32.mrb[0].mxu0
    %v5901 = vadd.f32 0.0, %v5900
    %v5902 = vpop.f32.mrb[0].mxu0
    %v5903 = vadd.f32 0.0, %v5902
    %v5904 = vpop.f32.mrb[0].mxu0
    %v5905 = vadd.f32 0.0, %v5904
    %5906 = vmatprep.mubr.bf16.mxu0 %v5631
    %5907 = vmatmul.mubr.bf16.gmra.mrb[0].mxu0 %v5630
    %v5908 = vpop.f32.mrb[0].mxu0
    %v5909 = vadd.f32 0.0, %v5908
    %v5910 = vpop.f32.mrb[0].mxu0
    %v5911 = vadd.f32 0.0, %v5910
    %v5912 = vpop.f32.mrb[0].mxu0
    %v5913 = vadd.f32 0.0, %v5912
    %v5914 = vpop.f32.mrb[0].mxu0
    %v5915 = vadd.f32 0.0, %v5914
    %5916 = vmatprep.mubr.bf16.mxu0 %v5637
    %5917 = vmatmul.mubr.bf16.gmra.mrb[0].mxu0 %v5636
    %v5918 = vpop.f32.mrb[0].mxu0
    %v5919 = vadd.f32 0.0, %v5918
    %v5920 = vpop.f32.mrb[0].mxu0
    %v5921 = vadd.f32 0.0, %v5920
    %v5922 = vpop.f32.mrb[0].mxu0
    %v5923 = vadd.f32 0.0, %v5922
    %v5924 = vpop.f32.mrb[0].mxu0
    %v5925 = vadd.f32 0.0, %v5924
    %5926 = vmatprep.mubr.bf16.mxu0 %v5643
    %5927 = vmatmul.mubr.bf16.gmra.mrb[0].mxu0 %v5642
    %v5928 = vpop.f32.mrb[0].mxu0
    %v5929 = vadd.f32 0.0, %v5928
    %v5930 = vpop.f32.mrb[0].mxu0
    %v5931 = vadd.f32 0.0, %v5930
    %v5932 = vpop.f32.mrb[0].mxu0
    %v5933 = vadd.f32 0.0, %v5932
    %v5934 = vpop.f32.mrb[0].mxu0
    %v5935 = vadd.f32 0.0, %v5934
    %5936 = vmatprep.mubr.bf16.mxu0 %v5649
    %5937 = vmatmul.mubr.bf16.gmra.mrb[0].mxu0 %v5648
    %v5938 = vpop.f32.mrb[0].mxu0
    %v5939 = vadd.f32 0.0, %v5938
    %v5940 = vpop.f32.mrb[0].mxu0
    %v5941 = vadd.f32 0.0, %v5940
    %v5942 = vpop.f32.mrb[0].mxu0
    %v5943 = vadd.f32 0.0, %v5942
    %v5944 = vpop.f32.mrb[0].mxu0
    %v5945 = vadd.f32 0.0, %v5944
    %5946 = vmatprep.mubr.bf16.mxu0 %v5655
    %5947 = vmatmul.mubr.bf16.gmra.mrb[0].mxu0 %v5654
    %v5948 = vpop.f32.mrb[0].mxu0
    %v5949 = vadd.f32 0.0, %v5948
    %v5950 = vpop.f32.mrb[0].mxu0
    %v5951 = vadd.f32 0.0, %v5950
    %v5952 = vpop.f32.mrb[0].mxu0
    %v5953 = vadd.f32 0.0, %v5952
    %v5954 = vpop.f32.mrb[0].mxu0
    %v5955 = vadd.f32 0.0, %v5954
    %5956 = vmatprep.mubr.bf16.mxu0 %v5661
    %5957 = vmatmul.mubr.bf16.gmra.mrb[0].mxu0 %v5660
    %v5958 = vpop.f32.mrb[0].mxu0
    %v5959 = vadd.f32 0.0, %v5958
    %v5960 = vpop.f32.mrb[0].mxu0
    %v5961 = vadd.f32 0.0, %v5960
    %v5962 = vpop.f32.mrb[0].mxu0
    %v5963 = vadd.f32 0.0, %v5962
    %v5964 = vpop.f32.mrb[0].mxu0
    %v5965 = vadd.f32 0.0, %v5964
    %5966 = vmatprep.mubr.bf16.mxu0 %v5667
    %5967 = vmatmul.mubr.bf16.gmra.mrb[0].mxu0 %v5666
    %v5968 = vpop.f32.mrb[0].mxu0
    %v5969 = vadd.f32 0.0, %v5968
    %v5970 = vpop.f32.mrb[0].mxu0
    %v5971 = vadd.f32 0.0, %v5970
    %v5972 = vpop.f32.mrb[0].mxu0
    %v5973 = vadd.f32 0.0, %v5972
    %v5974 = vpop.f32.mrb[0].mxu0
    %v5975 = vadd.f32 0.0, %v5974
    %5976 = vdwg.mxu0
    %5977 = vmatprep.subr.bf16.mxu0 %v5737
    %5978 = vmatpush1.bf16.msra.mxu0 %v5736
    %5979 = vmatprep.subr.bf16.mxu0 %v5741
    %5980 = vmatpush1.bf16.msra.mxu0 %v5740
    %5981 = vmatprep.subr.bf16.mxu0 %v5745
    %5982 = vmatpush1.bf16.msra.mxu0 %v5744
    %5983 = vmatprep.subr.bf16.mxu0 %v5749
    %5984 = vmatpush1.bf16.msra.mxu0 %v5748
    %5985 = vmatprep.subr.bf16.mxu0 %v5753
    %5986 = vmatpush1.bf16.msra.mxu0 %v5752
    %5987 = vmatprep.subr.bf16.mxu0 %v5757
    %5988 = vmatpush1.bf16.msra.mxu0 %v5756
    %5989 = vmatprep.subr.bf16.mxu0 %v5761
    %5990 = vmatpush1.bf16.msra.mxu0 %v5760
    %5991 = vmatprep.subr.bf16.mxu0 %v5765
    %5992 = vmatpush1.bf16.msra.mxu0 %v5764
    %5993 = vmatprep.subr.bf16.mxu0 %v5769
    %5994 = vmatpush1.bf16.msra.mxu0 %v5768
    %5995 = vmatprep.subr.bf16.mxu0 %v5773
    %5996 = vmatpush1.bf16.msra.mxu0 %v5772
    %5997 = vmatprep.subr.bf16.mxu0 %v5777
    %5998 = vmatpush1.bf16.msra.mxu0 %v5776
    %5999 = vmatprep.subr.bf16.mxu0 %v5781
    %6000 = vmatpush1.bf16.msra.mxu0 %v5780
    %6001 = vmatprep.subr.bf16.mxu0 %v5785
    %6002 = vmatpush1.bf16.msra.mxu0 %v5784
    %6003 = vmatprep.subr.bf16.mxu0 %v5789
    %6004 = vmatpush1.bf16.msra.mxu0 %v5788
    %6005 = vmatprep.subr.bf16.mxu0 %v5793
    %6006 = vmatpush1.bf16.msra.mxu0 %v5792
    %6007 = vmatprep.subr.bf16.mxu0 %v5797
    %6008 = vmatpush1.bf16.msra.mxu0 %v5796
    %6009 = vmatprep.mubr.bf16.mxu0 %v5627
    %6010 = vmatmul.mubr.bf16.gmra.mrb[0].mxu0 %v5626
    %v6011 = vpop.f32.mrb[0].mxu0
    %v6012 = vadd.f32 %v5899, %v6011
    %v6013 = vpop.f32.mrb[0].mxu0
    %v6014 = vadd.f32 %v5901, %v6013
    %v6015 = vpop.f32.mrb[0].mxu0
    %v6016 = vadd.f32 %v5903, %v6015
    %v6017 = vpop.f32.mrb[0].mxu0
    %v6018 = vadd.f32 %v5905, %v6017
    %6019 = vmatprep.mubr.bf16.mxu0 %v5633
    %6020 = vmatmul.mubr.bf16.gmra.mrb[0].mxu0 %v5632
    %v6021 = vpop.f32.mrb[0].mxu0
    %v6022 = vadd.f32 %v5909, %v6021
    %v6023 = vpop.f32.mrb[0].mxu0
    %v6024 = vadd.f32 %v5911, %v6023
    %v6025 = vpop.f32.mrb[0].mxu0
    %v6026 = vadd.f32 %v5913, %v6025
    %v6027 = vpop.f32.mrb[0].mxu0
    %v6028 = vadd.f32 %v5915, %v6027
    %6029 = vmatprep.mubr.bf16.mxu0 %v5639
    %6030 = vmatmul.mubr.bf16.gmra.mrb[0].mxu0 %v5638
    %v6031 = vpop.f32.mrb[0].mxu0
    %v6032 = vadd.f32 %v5919, %v6031
    %v6033 = vpop.f32.mrb[0].mxu0
    %v6034 = vadd.f32 %v5921, %v6033
    %v6035 = vpop.f32.mrb[0].mxu0
    %v6036 = vadd.f32 %v5923, %v6035
    %v6037 = vpop.f32.mrb[0].mxu0
    %v6038 = vadd.f32 %v5925, %v6037
    %6039 = vmatprep.mubr.bf16.mxu0 %v5645
    %6040 = vmatmul.mubr.bf16.gmra.mrb[0].mxu0 %v5644
    %v6041 = vpop.f32.mrb[0].mxu0
    %v6042 = vadd.f32 %v5929, %v6041
    %v6043 = vpop.f32.mrb[0].mxu0
    %v6044 = vadd.f32 %v5931, %v6043
    %v6045 = vpop.f32.mrb[0].mxu0
    %v6046 = vadd.f32 %v5933, %v6045
    %v6047 = vpop.f32.mrb[0].mxu0
    %v6048 = vadd.f32 %v5935, %v6047
    %6049 = vmatprep.mubr.bf16.mxu0 %v5651
    %6050 = vmatmul.mubr.bf16.gmra.mrb[0].mxu0 %v5650
    %v6051 = vpop.f32.mrb[0].mxu0
    %v6052 = vadd.f32 %v5939, %v6051
    %v6053 = vpop.f32.mrb[0].mxu0
    %v6054 = vadd.f32 %v5941, %v6053
    %v6055 = vpop.f32.mrb[0].mxu0
    %v6056 = vadd.f32 %v5943, %v6055
    %v6057 = vpop.f32.mrb[0].mxu0
    %v6058 = vadd.f32 %v5945, %v6057
    %6059 = vmatprep.mubr.bf16.mxu0 %v5657
    %6060 = vmatmul.mubr.bf16.gmra.mrb[0].mxu0 %v5656
    %v6061 = vpop.f32.mrb[0].mxu0
    %v6062 = vadd.f32 %v5949, %v6061
    %v6063 = vpop.f32.mrb[0].mxu0
    %v6064 = vadd.f32 %v5951, %v6063
    %v6065 = vpop.f32.mrb[0].mxu0
    %v6066 = vadd.f32 %v5953, %v6065
    %v6067 = vpop.f32.mrb[0].mxu0
    %v6068 = vadd.f32 %v5955, %v6067
    %6069 = vmatprep.mubr.bf16.mxu0 %v5663
    %6070 = vmatmul.mubr.bf16.gmra.mrb[0].mxu0 %v5662
    %v6071 = vpop.f32.mrb[0].mxu0
    %v6072 = vadd.f32 %v5959, %v6071
    %v6073 = vpop.f32.mrb[0].mxu0
    %v6074 = vadd.f32 %v5961, %v6073
    %v6075 = vpop.f32.mrb[0].mxu0
    %v6076 = vadd.f32 %v5963, %v6075
    %v6077 = vpop.f32.mrb[0].mxu0
    %v6078 = vadd.f32 %v5965, %v6077
    %6079 = vmatprep.mubr.bf16.mxu0 %v5669
    %6080 = vmatmul.mubr.bf16.gmra.mrb[0].mxu0 %v5668
    %v6081 = vpop.f32.mrb[0].mxu0
    %v6082 = vadd.f32 %v5969, %v6081
    %v6083 = vpop.f32.mrb[0].mxu0
    %v6084 = vadd.f32 %v5971, %v6083
    %v6085 = vpop.f32.mrb[0].mxu0
    %v6086 = vadd.f32 %v5973, %v6085
    %v6087 = vpop.f32.mrb[0].mxu0
    %v6088 = vadd.f32 %v5975, %v6087
    %6089 = vdwg.mxu0
    %6090 = vmatprep.subr.bf16.mxu0 %v5801
    %6091 = vmatpush1.bf16.msra.mxu0 %v5800
    %6092 = vmatprep.subr.bf16.mxu0 %v5805
    %6093 = vmatpush1.bf16.msra.mxu0 %v5804
    %6094 = vmatprep.subr.bf16.mxu0 %v5809
    %6095 = vmatpush1.bf16.msra.mxu0 %v5808
    %6096 = vmatprep.subr.bf16.mxu0 %v5813
    %6097 = vmatpush1.bf16.msra.mxu0 %v5812
    %6098 = vmatprep.subr.bf16.mxu0 %v5817
    %6099 = vmatpush1.bf16.msra.mxu0 %v5816
    %6100 = vmatprep.subr.bf16.mxu0 %v5821
    %6101 = vmatpush1.bf16.msra.mxu0 %v5820
    %6102 = vmatprep.subr.bf16.mxu0 %v5825
    %6103 = vmatpush1.bf16.msra.mxu0 %v5824
    %6104 = vmatprep.subr.bf16.mxu0 %v5829
    %6105 = vmatpush1.bf16.msra.mxu0 %v5828
    %6106 = vmatprep.subr.bf16.mxu0 %v5833
    %6107 = vmatpush1.bf16.msra.mxu0 %v5832
    %6108 = vmatprep.subr.bf16.mxu0 %v5837
    %6109 = vmatpush1.bf16.msra.mxu0 %v5836
    %6110 = vmatprep.subr.bf16.mxu0 %v5841
    %6111 = vmatpush1.bf16.msra.mxu0 %v5840
    %6112 = vmatprep.subr.bf16.mxu0 %v5845
    %6113 = vmatpush1.bf16.msra.mxu0 %v5844
    %6114 = vmatprep.subr.bf16.mxu0 %v5849
    %6115 = vmatpush1.bf16.msra.mxu0 %v5848
    %6116 = vmatprep.subr.bf16.mxu0 %v5853
    %6117 = vmatpush1.bf16.msra.mxu0 %v5852
    %6118 = vmatprep.subr.bf16.mxu0 %v5857
    %6119 = vmatpush1.bf16.msra.mxu0 %v5856
    %6120 = vmatprep.subr.bf16.mxu0 %v5861
    %6121 = vmatpush1.bf16.msra.mxu0 %v5860
    %6122 = vmatprep.mubr.bf16.mxu0 %v5629
    %6123 = vmatmul.mubr.bf16.gmra.mrb[0].mxu0 %v5628
    %v6124 = vpop.f32.mrb[0].mxu0
    %v6125 = vadd.f32 %v6012, %v6124
    %v6126 = vpop.f32.mrb[0].mxu0
    %v6127 = vadd.f32 %v6014, %v6126
    %v6128 = vpop.f32.mrb[0].mxu0
    %v6129 = vadd.f32 %v6016, %v6128
    %v6130 = vpop.f32.mrb[0].mxu0
    %v6131 = vadd.f32 %v6018, %v6130
    %6132 = vmatprep.mubr.bf16.mxu0 %v5635
    %6133 = vmatmul.mubr.bf16.gmra.mrb[0].mxu0 %v5634
    %v6134 = vpop.f32.mrb[0].mxu0
    %v6135 = vadd.f32 %v6022, %v6134
    %v6136 = vpop.f32.mrb[0].mxu0
    %v6137 = vadd.f32 %v6024, %v6136
    %v6138 = vpop.f32.mrb[0].mxu0
    %v6139 = vadd.f32 %v6026, %v6138
    %v6140 = vpop.f32.mrb[0].mxu0
    %v6141 = vadd.f32 %v6028, %v6140
    %6142 = vmatprep.mubr.bf16.mxu0 %v5641
    %6143 = vmatmul.mubr.bf16.gmra.mrb[0].mxu0 %v5640
    %v6144 = vpop.f32.mrb[0].mxu0
    %v6145 = vadd.f32 %v6032, %v6144
    %v6146 = vpop.f32.mrb[0].mxu0
    %v6147 = vadd.f32 %v6034, %v6146
    %v6148 = vpop.f32.mrb[0].mxu0
    %v6149 = vadd.f32 %v6036, %v6148
    %v6150 = vpop.f32.mrb[0].mxu0
    %v6151 = vadd.f32 %v6038, %v6150
    %6152 = vmatprep.mubr.bf16.mxu0 %v5647
    %6153 = vmatmul.mubr.bf16.gmra.mrb[0].mxu0 %v5646
    %v6154 = vpop.f32.mrb[0].mxu0
    %v6155 = vadd.f32 %v6042, %v6154
    %v6156 = vpop.f32.mrb[0].mxu0
    %v6157 = vadd.f32 %v6044, %v6156
    %v6158 = vpop.f32.mrb[0].mxu0
    %v6159 = vadd.f32 %v6046, %v6158
    %v6160 = vpop.f32.mrb[0].mxu0
    %v6161 = vadd.f32 %v6048, %v6160
    %6162 = vmatprep.mubr.bf16.mxu0 %v5653
    %6163 = vmatmul.mubr.bf16.gmra.mrb[0].mxu0 %v5652
    %v6164 = vpop.f32.mrb[0].mxu0
    %v6165 = vadd.f32 %v6052, %v6164
    %v6166 = vpop.f32.mrb[0].mxu0
    %v6167 = vadd.f32 %v6054, %v6166
    %v6168 = vpop.f32.mrb[0].mxu0
    %v6169 = vadd.f32 %v6056, %v6168
    %v6170 = vpop.f32.mrb[0].mxu0
    %v6171 = vadd.f32 %v6058, %v6170
    %6172 = vmatprep.mubr.bf16.mxu0 %v5659
    %6173 = vmatmul.mubr.bf16.gmra.mrb[0].mxu0 %v5658
    %v6174 = vpop.f32.mrb[0].mxu0
    %v6175 = vadd.f32 %v6062, %v6174
    %v6176 = vpop.f32.mrb[0].mxu0
    %v6177 = vadd.f32 %v6064, %v6176
    %v6178 = vpop.f32.mrb[0].mxu0
    %v6179 = vadd.f32 %v6066, %v6178
    %v6180 = vpop.f32.mrb[0].mxu0
    %v6181 = vadd.f32 %v6068, %v6180
    %6182 = vmatprep.mubr.bf16.mxu0 %v5665
    %6183 = vmatmul.mubr.bf16.gmra.mrb[0].mxu0 %v5664
    %v6184 = vpop.f32.mrb[0].mxu0
    %v6185 = vadd.f32 %v6072, %v6184
    %v6186 = vpop.f32.mrb[0].mxu0
    %v6187 = vadd.f32 %v6074, %v6186
    %v6188 = vpop.f32.mrb[0].mxu0
    %v6189 = vadd.f32 %v6076, %v6188
    %v6190 = vpop.f32.mrb[0].mxu0
    %v6191 = vadd.f32 %v6078, %v6190
    %6192 = vmatprep.mubr.bf16.mxu0 %v5671
    %6193 = vmatmul.mubr.bf16.gmra.mrb[0].mxu0 %v5670
    %v6194 = vpop.f32.mrb[0].mxu0
    %v6195 = vadd.f32 %v6082, %v6194
    %v6196 = vpop.f32.mrb[0].mxu0
    %v6197 = vadd.f32 %v6084, %v6196
    %v6198 = vpop.f32.mrb[0].mxu0
    %v6199 = vadd.f32 %v6086, %v6198
    %v6200 = vpop.f32.mrb[0].mxu0
    %v6201 = vadd.f32 %v6088, %v6200
    %6202 = vdwg.mxu0
    %6203 = vmatprep.subr.bf16.mxu0 %v5675
    %6204 = vmatpush1.bf16.msra.mxu0 %v5674
    %6205 = vmatprep.subr.bf16.mxu0 %v5679
    %6206 = vmatpush1.bf16.msra.mxu0 %v5678
    %6207 = vmatprep.subr.bf16.mxu0 %v5683
    %6208 = vmatpush1.bf16.msra.mxu0 %v5682
    %6209 = vmatprep.subr.bf16.mxu0 %v5687
    %6210 = vmatpush1.bf16.msra.mxu0 %v5686
    %6211 = vmatprep.subr.bf16.mxu0 %v5691
    %6212 = vmatpush1.bf16.msra.mxu0 %v5690
    %6213 = vmatprep.subr.bf16.mxu0 %v5695
    %6214 = vmatpush1.bf16.msra.mxu0 %v5694
    %6215 = vmatprep.subr.bf16.mxu0 %v5699
    %6216 = vmatpush1.bf16.msra.mxu0 %v5698
    %6217 = vmatprep.subr.bf16.mxu0 %v5703
    %6218 = vmatpush1.bf16.msra.mxu0 %v5702
    %6219 = vmatprep.subr.bf16.mxu0 %v5707
    %6220 = vmatpush1.bf16.msra.mxu0 %v5706
    %6221 = vmatprep.subr.bf16.mxu0 %v5711
    %6222 = vmatpush1.bf16.msra.mxu0 %v5710
    %6223 = vmatprep.subr.bf16.mxu0 %v5715
    %6224 = vmatpush1.bf16.msra.mxu0 %v5714
    %6225 = vmatprep.subr.bf16.mxu0 %v5719
    %6226 = vmatpush1.bf16.msra.mxu0 %v5718
    %6227 = vmatprep.subr.bf16.mxu0 %v5723
    %6228 = vmatpush1.bf16.msra.mxu0 %v5722
    %6229 = vmatprep.subr.bf16.mxu0 %v5727
    %6230 = vmatpush1.bf16.msra.mxu0 %v5726
    %6231 = vmatprep.subr.bf16.mxu0 %v5731
    %6232 = vmatpush1.bf16.msra.mxu0 %v5730
    %6233 = vmatprep.subr.bf16.mxu0 %v5735
    %6234 = vmatpush1.bf16.msra.mxu0 %v5734
    %6235 = vmatprep.mubr.bf16.mxu0 %v5625
    %6236 = vmatmul.mubr.bf16.gmra.mrb[0].mxu0 %v5624
    %v6237 = vpop.f32.mrb[0].mxu0
    %v6238 = vadd.f32 0.0, %v6237
    %v6239 = vpop.f32.mrb[0].mxu0
    %v6240 = vadd.f32 0.0, %v6239
    %v6241 = vpop.f32.mrb[0].mxu0
    %v6242 = vadd.f32 0.0, %v6241
    %v6243 = vpop.f32.mrb[0].mxu0
    %v6244 = vadd.f32 0.0, %v6243
    %6245 = vmatprep.mubr.bf16.mxu0 %v5631
    %6246 = vmatmul.mubr.bf16.gmra.mrb[0].mxu0 %v5630
    %v6247 = vpop.f32.mrb[0].mxu0
    %v6248 = vadd.f32 0.0, %v6247
    %v6249 = vpop.f32.mrb[0].mxu0
    %v6250 = vadd.f32 0.0, %v6249
    %v6251 = vpop.f32.mrb[0].mxu0
    %v6252 = vadd.f32 0.0, %v6251
    %v6253 = vpop.f32.mrb[0].mxu0
    %v6254 = vadd.f32 0.0, %v6253
    %6255 = vmatprep.mubr.bf16.mxu0 %v5637
    %6256 = vmatmul.mubr.bf16.gmra.mrb[0].mxu0 %v5636
    %v6257 = vpop.f32.mrb[0].mxu0
    %v6258 = vadd.f32 0.0, %v6257
    %v6259 = vpop.f32.mrb[0].mxu0
    %v6260 = vadd.f32 0.0, %v6259
    %v6261 = vpop.f32.mrb[0].mxu0
    %v6262 = vadd.f32 0.0, %v6261
    %v6263 = vpop.f32.mrb[0].mxu0
    %v6264 = vadd.f32 0.0, %v6263
    %6265 = vmatprep.mubr.bf16.mxu0 %v5643
    %6266 = vmatmul.mubr.bf16.gmra.mrb[0].mxu0 %v5642
    %v6267 = vpop.f32.mrb[0].mxu0
    %v6268 = vadd.f32 0.0, %v6267
    %v6269 = vpop.f32.mrb[0].mxu0
    %v6270 = vadd.f32 0.0, %v6269
    %v6271 = vpop.f32.mrb[0].mxu0
    %v6272 = vadd.f32 0.0, %v6271
    %v6273 = vpop.f32.mrb[0].mxu0
    %v6274 = vadd.f32 0.0, %v6273
    %6275 = vmatprep.mubr.bf16.mxu0 %v5649
    %6276 = vmatmul.mubr.bf16.gmra.mrb[0].mxu0 %v5648
    %v6277 = vpop.f32.mrb[0].mxu0
    %v6278 = vadd.f32 0.0, %v6277
    %v6279 = vpop.f32.mrb[0].mxu0
    %v6280 = vadd.f32 0.0, %v6279
    %v6281 = vpop.f32.mrb[0].mxu0
    %v6282 = vadd.f32 0.0, %v6281
    %v6283 = vpop.f32.mrb[0].mxu0
    %v6284 = vadd.f32 0.0, %v6283
    %6285 = vmatprep.mubr.bf16.mxu0 %v5655
    %6286 = vmatmul.mubr.bf16.gmra.mrb[0].mxu0 %v5654
    %v6287 = vpop.f32.mrb[0].mxu0
    %v6288 = vadd.f32 0.0, %v6287
    %v6289 = vpop.f32.mrb[0].mxu0
    %v6290 = vadd.f32 0.0, %v6289
    %v6291 = vpop.f32.mrb[0].mxu0
    %v6292 = vadd.f32 0.0, %v6291
    %v6293 = vpop.f32.mrb[0].mxu0
    %v6294 = vadd.f32 0.0, %v6293
    %6295 = vmatprep.mubr.bf16.mxu0 %v5661
    %6296 = vmatmul.mubr.bf16.gmra.mrb[0].mxu0 %v5660
    %v6297 = vpop.f32.mrb[0].mxu0
    %v6298 = vadd.f32 0.0, %v6297
    %v6299 = vpop.f32.mrb[0].mxu0
    %v6300 = vadd.f32 0.0, %v6299
    %v6301 = vpop.f32.mrb[0].mxu0
    %v6302 = vadd.f32 0.0, %v6301
    %v6303 = vpop.f32.mrb[0].mxu0
    %v6304 = vadd.f32 0.0, %v6303
    %6305 = vmatprep.mubr.bf16.mxu0 %v5667
    %6306 = vmatmul.mubr.bf16.gmra.mrb[0].mxu0 %v5666
    %v6307 = vpop.f32.mrb[0].mxu0
    %v6308 = vadd.f32 0.0, %v6307
    %v6309 = vpop.f32.mrb[0].mxu0
    %v6310 = vadd.f32 0.0, %v6309
    %v6311 = vpop.f32.mrb[0].mxu0
    %v6312 = vadd.f32 0.0, %v6311
    %v6313 = vpop.f32.mrb[0].mxu0
    %v6314 = vadd.f32 0.0, %v6313
    %6315 = vdwg.mxu0
    %6316 = vmatprep.subr.bf16.mxu0 %v5739
    %6317 = vmatpush1.bf16.msra.mxu0 %v5738
    %6318 = vmatprep.subr.bf16.mxu0 %v5743
    %6319 = vmatpush1.bf16.msra.mxu0 %v5742
    %6320 = vmatprep.subr.bf16.mxu0 %v5747
    %6321 = vmatpush1.bf16.msra.mxu0 %v5746
    %6322 = vmatprep.subr.bf16.mxu0 %v5751
    %6323 = vmatpush1.bf16.msra.mxu0 %v5750
    %6324 = vmatprep.subr.bf16.mxu0 %v5755
    %6325 = vmatpush1.bf16.msra.mxu0 %v5754
    %6326 = vmatprep.subr.bf16.mxu0 %v5759
    %6327 = vmatpush1.bf16.msra.mxu0 %v5758
    %6328 = vmatprep.subr.bf16.mxu0 %v5763
    %6329 = vmatpush1.bf16.msra.mxu0 %v5762
    %6330 = vmatprep.subr.bf16.mxu0 %v5767
    %6331 = vmatpush1.bf16.msra.mxu0 %v5766
    %6332 = vmatprep.subr.bf16.mxu0 %v5771
    %6333 = vmatpush1.bf16.msra.mxu0 %v5770
    %6334 = vmatprep.subr.bf16.mxu0 %v5775
    %6335 = vmatpush1.bf16.msra.mxu0 %v5774
    %6336 = vmatprep.subr.bf16.mxu0 %v5779
    %6337 = vmatpush1.bf16.msra.mxu0 %v5778
    %6338 = vmatprep.subr.bf16.mxu0 %v5783
    %6339 = vmatpush1.bf16.msra.mxu0 %v5782
    %6340 = vmatprep.subr.bf16.mxu0 %v5787
    %6341 = vmatpush1.bf16.msra.mxu0 %v5786
    %6342 = vmatprep.subr.bf16.mxu0 %v5791
    %6343 = vmatpush1.bf16.msra.mxu0 %v5790
    %6344 = vmatprep.subr.bf16.mxu0 %v5795
    %6345 = vmatpush1.bf16.msra.mxu0 %v5794
    %6346 = vmatprep.subr.bf16.mxu0 %v5799
    %6347 = vmatpush1.bf16.msra.mxu0 %v5798
    %6348 = vmatprep.mubr.bf16.mxu0 %v5627
    %6349 = vmatmul.mubr.bf16.gmra.mrb[0].mxu0 %v5626
    %v6350 = vpop.f32.mrb[0].mxu0
    %v6351 = vadd.f32 %v6238, %v6350
    %v6352 = vpop.f32.mrb[0].mxu0
    %v6353 = vadd.f32 %v6240, %v6352
    %v6354 = vpop.f32.mrb[0].mxu0
    %v6355 = vadd.f32 %v6242, %v6354
    %v6356 = vpop.f32.mrb[0].mxu0
    %v6357 = vadd.f32 %v6244, %v6356
    %6358 = vmatprep.mubr.bf16.mxu0 %v5633
    %6359 = vmatmul.mubr.bf16.gmra.mrb[0].mxu0 %v5632
    %v6360 = vpop.f32.mrb[0].mxu0
    %v6361 = vadd.f32 %v6248, %v6360
    %v6362 = vpop.f32.mrb[0].mxu0
    %v6363 = vadd.f32 %v6250, %v6362
    %v6364 = vpop.f32.mrb[0].mxu0
    %v6365 = vadd.f32 %v6252, %v6364
    %v6366 = vpop.f32.mrb[0].mxu0
    %v6367 = vadd.f32 %v6254, %v6366
    %6368 = vmatprep.mubr.bf16.mxu0 %v5639
    %6369 = vmatmul.mubr.bf16.gmra.mrb[0].mxu0 %v5638
    %v6370 = vpop.f32.mrb[0].mxu0
    %v6371 = vadd.f32 %v6258, %v6370
    %v6372 = vpop.f32.mrb[0].mxu0
    %v6373 = vadd.f32 %v6260, %v6372
    %v6374 = vpop.f32.mrb[0].mxu0
    %v6375 = vadd.f32 %v6262, %v6374
    %v6376 = vpop.f32.mrb[0].mxu0
    %v6377 = vadd.f32 %v6264, %v6376
    %6378 = vmatprep.mubr.bf16.mxu0 %v5645
    %6379 = vmatmul.mubr.bf16.gmra.mrb[0].mxu0 %v5644
    %v6380 = vpop.f32.mrb[0].mxu0
    %v6381 = vadd.f32 %v6268, %v6380
    %v6382 = vpop.f32.mrb[0].mxu0
    %v6383 = vadd.f32 %v6270, %v6382
    %v6384 = vpop.f32.mrb[0].mxu0
    %v6385 = vadd.f32 %v6272, %v6384
    %v6386 = vpop.f32.mrb[0].mxu0
    %v6387 = vadd.f32 %v6274, %v6386
    %6388 = vmatprep.mubr.bf16.mxu0 %v5651
    %6389 = vmatmul.mubr.bf16.gmra.mrb[0].mxu0 %v5650
    %v6390 = vpop.f32.mrb[0].mxu0
    %v6391 = vadd.f32 %v6278, %v6390
    %v6392 = vpop.f32.mrb[0].mxu0
    %v6393 = vadd.f32 %v6280, %v6392
    %v6394 = vpop.f32.mrb[0].mxu0
    %v6395 = vadd.f32 %v6282, %v6394
    %v6396 = vpop.f32.mrb[0].mxu0
    %v6397 = vadd.f32 %v6284, %v6396
    %6398 = vmatprep.mubr.bf16.mxu0 %v5657
    %6399 = vmatmul.mubr.bf16.gmra.mrb[0].mxu0 %v5656
    %v6400 = vpop.f32.mrb[0].mxu0
    %v6401 = vadd.f32 %v6288, %v6400
    %v6402 = vpop.f32.mrb[0].mxu0
    %v6403 = vadd.f32 %v6290, %v6402
    %v6404 = vpop.f32.mrb[0].mxu0
    %v6405 = vadd.f32 %v6292, %v6404
    %v6406 = vpop.f32.mrb[0].mxu0
    %v6407 = vadd.f32 %v6294, %v6406
    %6408 = vmatprep.mubr.bf16.mxu0 %v5663
    %6409 = vmatmul.mubr.bf16.gmra.mrb[0].mxu0 %v5662
    %v6410 = vpop.f32.mrb[0].mxu0
    %v6411 = vadd.f32 %v6298, %v6410
    %v6412 = vpop.f32.mrb[0].mxu0
    %v6413 = vadd.f32 %v6300, %v6412
    %v6414 = vpop.f32.mrb[0].mxu0
    %v6415 = vadd.f32 %v6302, %v6414
    %v6416 = vpop.f32.mrb[0].mxu0
    %v6417 = vadd.f32 %v6304, %v6416
    %6418 = vmatprep.mubr.bf16.mxu0 %v5669
    %6419 = vmatmul.mubr.bf16.gmra.mrb[0].mxu0 %v5668
    %v6420 = vpop.f32.mrb[0].mxu0
    %v6421 = vadd.f32 %v6308, %v6420
    %v6422 = vpop.f32.mrb[0].mxu0
    %v6423 = vadd.f32 %v6310, %v6422
    %v6424 = vpop.f32.mrb[0].mxu0
    %v6425 = vadd.f32 %v6312, %v6424
    %v6426 = vpop.f32.mrb[0].mxu0
    %v6427 = vadd.f32 %v6314, %v6426
    %6428 = vdwg.mxu0
    %6429 = vmatprep.subr.bf16.mxu0 %v5803
    %6430 = vmatpush1.bf16.msra.mxu0 %v5802
    %6431 = vmatprep.subr.bf16.mxu0 %v5807
    %6432 = vmatpush1.bf16.msra.mxu0 %v5806
    %6433 = vmatprep.subr.bf16.mxu0 %v5811
    %6434 = vmatpush1.bf16.msra.mxu0 %v5810
    %6435 = vmatprep.subr.bf16.mxu0 %v5815
    %6436 = vmatpush1.bf16.msra.mxu0 %v5814
    %6437 = vmatprep.subr.bf16.mxu0 %v5819
    %6438 = vmatpush1.bf16.msra.mxu0 %v5818
    %6439 = vmatprep.subr.bf16.mxu0 %v5823
    %6440 = vmatpush1.bf16.msra.mxu0 %v5822
    %6441 = vmatprep.subr.bf16.mxu0 %v5827
    %6442 = vmatpush1.bf16.msra.mxu0 %v5826
    %6443 = vmatprep.subr.bf16.mxu0 %v5831
    %6444 = vmatpush1.bf16.msra.mxu0 %v5830
    %6445 = vmatprep.subr.bf16.mxu0 %v5835
    %6446 = vmatpush1.bf16.msra.mxu0 %v5834
    %6447 = vmatprep.subr.bf16.mxu0 %v5839
    %6448 = vmatpush1.bf16.msra.mxu0 %v5838
    %6449 = vmatprep.subr.bf16.mxu0 %v5843
    %6450 = vmatpush1.bf16.msra.mxu0 %v5842
    %6451 = vmatprep.subr.bf16.mxu0 %v5847
    %6452 = vmatpush1.bf16.msra.mxu0 %v5846
    %6453 = vmatprep.subr.bf16.mxu0 %v5851
    %6454 = vmatpush1.bf16.msra.mxu0 %v5850
    %6455 = vmatprep.subr.bf16.mxu0 %v5855
    %6456 = vmatpush1.bf16.msra.mxu0 %v5854
    %6457 = vmatprep.subr.bf16.mxu0 %v5859
    %6458 = vmatpush1.bf16.msra.mxu0 %v5858
    %6459 = vmatprep.subr.bf16.mxu0 %v5863
    %6460 = vmatpush1.bf16.msra.mxu0 %v5862
    %6461 = vmatprep.mubr.bf16.mxu0 %v5629
    %6462 = vmatmul.mubr.bf16.gmra.mrb[0].mxu0 %v5628
    %v6463 = vpop.f32.mrb[0].mxu0
    %v6464 = vadd.f32 %v6351, %v6463
    %v6465 = vpop.f32.mrb[0].mxu0
    %v6466 = vadd.f32 %v6353, %v6465
    %v6467 = vpop.f32.mrb[0].mxu0
    %v6468 = vadd.f32 %v6355, %v6467
    %v6469 = vpop.f32.mrb[0].mxu0
    %v6470 = vadd.f32 %v6357, %v6469
    %6471 = vmatprep.mubr.bf16.mxu0 %v5635
    %6472 = vmatmul.mubr.bf16.gmra.mrb[0].mxu0 %v5634
    %v6473 = vpop.f32.mrb[0].mxu0
    %v6474 = vadd.f32 %v6361, %v6473
    %v6475 = vpop.f32.mrb[0].mxu0
    %v6476 = vadd.f32 %v6363, %v6475
    %v6477 = vpop.f32.mrb[0].mxu0
    %v6478 = vadd.f32 %v6365, %v6477
    %v6479 = vpop.f32.mrb[0].mxu0
    %v6480 = vadd.f32 %v6367, %v6479
    %6481 = vmatprep.mubr.bf16.mxu0 %v5641
    %6482 = vmatmul.mubr.bf16.gmra.mrb[0].mxu0 %v5640
    %v6483 = vpop.f32.mrb[0].mxu0
    %v6484 = vadd.f32 %v6371, %v6483
    %v6485 = vpop.f32.mrb[0].mxu0
    %v6486 = vadd.f32 %v6373, %v6485
    %v6487 = vpop.f32.mrb[0].mxu0
    %v6488 = vadd.f32 %v6375, %v6487
    %v6489 = vpop.f32.mrb[0].mxu0
    %v6490 = vadd.f32 %v6377, %v6489
    %6491 = vmatprep.mubr.bf16.mxu0 %v5647
    %6492 = vmatmul.mubr.bf16.gmra.mrb[0].mxu0 %v5646
    %v6493 = vpop.f32.mrb[0].mxu0
    %v6494 = vadd.f32 %v6381, %v6493
    %v6495 = vpop.f32.mrb[0].mxu0
    %v6496 = vadd.f32 %v6383, %v6495
    %v6497 = vpop.f32.mrb[0].mxu0
    %v6498 = vadd.f32 %v6385, %v6497
    %v6499 = vpop.f32.mrb[0].mxu0
    %v6500 = vadd.f32 %v6387, %v6499
    %6501 = vmatprep.mubr.bf16.mxu0 %v5653
    %6502 = vmatmul.mubr.bf16.gmra.mrb[0].mxu0 %v5652
    %v6503 = vpop.f32.mrb[0].mxu0
    %v6504 = vadd.f32 %v6391, %v6503
    %v6505 = vpop.f32.mrb[0].mxu0
    %v6506 = vadd.f32 %v6393, %v6505
    %v6507 = vpop.f32.mrb[0].mxu0
    %v6508 = vadd.f32 %v6395, %v6507
    %v6509 = vpop.f32.mrb[0].mxu0
    %v6510 = vadd.f32 %v6397, %v6509
    %6511 = vmatprep.mubr.bf16.mxu0 %v5659
    %6512 = vmatmul.mubr.bf16.gmra.mrb[0].mxu0 %v5658
    %v6513 = vpop.f32.mrb[0].mxu0
    %v6514 = vadd.f32 %v6401, %v6513
    %v6515 = vpop.f32.mrb[0].mxu0
    %v6516 = vadd.f32 %v6403, %v6515
    %v6517 = vpop.f32.mrb[0].mxu0
    %v6518 = vadd.f32 %v6405, %v6517
    %v6519 = vpop.f32.mrb[0].mxu0
    %v6520 = vadd.f32 %v6407, %v6519
    %6521 = vmatprep.mubr.bf16.mxu0 %v5665
    %6522 = vmatmul.mubr.bf16.gmra.mrb[0].mxu0 %v5664
    %v6523 = vpop.f32.mrb[0].mxu0
    %v6524 = vadd.f32 %v6411, %v6523
    %v6525 = vpop.f32.mrb[0].mxu0
    %v6526 = vadd.f32 %v6413, %v6525
    %v6527 = vpop.f32.mrb[0].mxu0
    %v6528 = vadd.f32 %v6415, %v6527
    %v6529 = vpop.f32.mrb[0].mxu0
    %v6530 = vadd.f32 %v6417, %v6529
    %6531 = vmatprep.mubr.bf16.mxu0 %v5671
    %6532 = vmatmul.mubr.bf16.gmra.mrb[0].mxu0 %v5670
    %v6533 = vpop.f32.mrb[0].mxu0
    %v6534 = vadd.f32 %v6421, %v6533
    %v6535 = vpop.f32.mrb[0].mxu0
    %v6536 = vadd.f32 %v6423, %v6535
    %v6537 = vpop.f32.mrb[0].mxu0
    %v6538 = vadd.f32 %v6425, %v6537
    %v6539 = vpop.f32.mrb[0].mxu0
    %v6540 = vadd.f32 %v6427, %v6539
    %6541 = vdwg.mxu0
    %v6542 = vld [vmem:[#allocation11] sm:$0xf]
    %v6544 = vlaneseq
    %v6545 = vshrl.u32 %v6544, 7
    %v6546 = vsub.s32 0, %v6545
    %v6547 = vrot.slane %v6542, %v6546
    %v6548 = vlaneseq
    %v6549 = vshrl.u32 %v6548, 7
    %v6550 = vsub.s32 1, %v6549
    %v6551 = vrot.slane %v6542, %v6550
    %v6552 = vlaneseq
    %v6553 = vshrl.u32 %v6552, 7
    %v6554 = vsub.s32 2, %v6553
    %v6555 = vrot.slane %v6542, %v6554
    %v6556 = vlaneseq
    %v6557 = vshrl.u32 %v6556, 7
    %v6558 = vsub.s32 3, %v6557
    %v6559 = vrot.slane %v6542, %v6558
    %v6564 = vmul.f32 %v6125, %v6547
    %v6565 = vmul.f32 %v6127, %v6551
    %v6566 = vmul.f32 %v6464, %v6555
    %v6567 = vmul.f32 %v6466, %v6559
    %v6568 = vmul.f32 %v6129, %v6547
    %v6569 = vmul.f32 %v6131, %v6551
    %v6570 = vmul.f32 %v6468, %v6555
    %v6571 = vmul.f32 %v6470, %v6559
    %v6572 = vmul.f32 %v6135, %v6547
    %v6573 = vmul.f32 %v6137, %v6551
    %v6574 = vmul.f32 %v6474, %v6555
    %v6575 = vmul.f32 %v6476, %v6559
    %v6576 = vmul.f32 %v6139, %v6547
    %v6577 = vmul.f32 %v6141, %v6551
    %v6578 = vmul.f32 %v6478, %v6555
    %v6579 = vmul.f32 %v6480, %v6559
    %v6580 = vmul.f32 %v6145, %v6547
    %v6581 = vmul.f32 %v6147, %v6551
    %v6582 = vmul.f32 %v6484, %v6555
    %v6583 = vmul.f32 %v6486, %v6559
    %v6584 = vmul.f32 %v6149, %v6547
    %v6585 = vmul.f32 %v6151, %v6551
    %v6586 = vmul.f32 %v6488, %v6555
    %v6587 = vmul.f32 %v6490, %v6559
    %v6588 = vmul.f32 %v6155, %v6547
    %v6589 = vmul.f32 %v6157, %v6551
    %v6590 = vmul.f32 %v6494, %v6555
    %v6591 = vmul.f32 %v6496, %v6559
    %v6592 = vmul.f32 %v6159, %v6547
    %v6593 = vmul.f32 %v6161, %v6551
    %v6594 = vmul.f32 %v6498, %v6555
    %v6595 = vmul.f32 %v6500, %v6559
    %v6596 = vmul.f32 %v6165, %v6547
    %v6597 = vmul.f32 %v6167, %v6551
    %v6598 = vmul.f32 %v6504, %v6555
    %v6599 = vmul.f32 %v6506, %v6559
    %v6600 = vmul.f32 %v6169, %v6547
    %v6601 = vmul.f32 %v6171, %v6551
    %v6602 = vmul.f32 %v6508, %v6555
    %v6603 = vmul.f32 %v6510, %v6559
    %v6604 = vmul.f32 %v6175, %v6547
    %v6605 = vmul.f32 %v6177, %v6551
    %v6606 = vmul.f32 %v6514, %v6555
    %v6607 = vmul.f32 %v6516, %v6559
    %v6608 = vmul.f32 %v6179, %v6547
    %v6609 = vmul.f32 %v6181, %v6551
    %v6610 = vmul.f32 %v6518, %v6555
    %v6611 = vmul.f32 %v6520, %v6559
    %v6612 = vmul.f32 %v6185, %v6547
    %v6613 = vmul.f32 %v6187, %v6551
    %v6614 = vmul.f32 %v6524, %v6555
    %v6615 = vmul.f32 %v6526, %v6559
    %v6616 = vmul.f32 %v6189, %v6547
    %v6617 = vmul.f32 %v6191, %v6551
    %v6618 = vmul.f32 %v6528, %v6555
    %v6619 = vmul.f32 %v6530, %v6559
    %v6620 = vmul.f32 %v6195, %v6547
    %v6621 = vmul.f32 %v6197, %v6551
    %v6622 = vmul.f32 %v6534, %v6555
    %v6623 = vmul.f32 %v6536, %v6559
    %v6624 = vmul.f32 %v6199, %v6547
    %v6625 = vmul.f32 %v6201, %v6551
    %v6626 = vmul.f32 %v6538, %v6555
    %v6627 = vmul.f32 %v6540, %v6559
    %v6628 = vld [vmem:[#allocation12] sm:$0xf]
    %v6630 = vlaneseq
    %v6631 = vshrl.u32 %v6630, 7
    %v6632 = vsub.s32 0, %v6631
    %v6633 = vrot.slane %v6628, %v6632
    %v6634 = vlaneseq
    %v6635 = vshrl.u32 %v6634, 7
    %v6636 = vsub.s32 1, %v6635
    %v6637 = vrot.slane %v6628, %v6636
    %v6638 = vlaneseq
    %v6639 = vshrl.u32 %v6638, 7
    %v6640 = vsub.s32 2, %v6639
    %v6641 = vrot.slane %v6628, %v6640
    %v6642 = vlaneseq
    %v6643 = vshrl.u32 %v6642, 7
    %v6644 = vsub.s32 3, %v6643
    %v6645 = vrot.slane %v6628, %v6644
    %v6650 = vadd.f32 %v6564, %v6633
    %v6651 = vadd.f32 %v6565, %v6637
    %v6652 = vadd.f32 %v6566, %v6641
    %v6653 = vadd.f32 %v6567, %v6645
    %v6654 = vadd.f32 %v6568, %v6633
    %v6655 = vadd.f32 %v6569, %v6637
    %v6656 = vadd.f32 %v6570, %v6641
    %v6657 = vadd.f32 %v6571, %v6645
    %v6658 = vadd.f32 %v6572, %v6633
    %v6659 = vadd.f32 %v6573, %v6637
    %v6660 = vadd.f32 %v6574, %v6641
    %v6661 = vadd.f32 %v6575, %v6645
    %v6662 = vadd.f32 %v6576, %v6633
    %v6663 = vadd.f32 %v6577, %v6637
    %v6664 = vadd.f32 %v6578, %v6641
    %v6665 = vadd.f32 %v6579, %v6645
    %v6666 = vadd.f32 %v6580, %v6633
    %v6667 = vadd.f32 %v6581, %v6637
    %v6668 = vadd.f32 %v6582, %v6641
    %v6669 = vadd.f32 %v6583, %v6645
    %v6670 = vadd.f32 %v6584, %v6633
    %v6671 = vadd.f32 %v6585, %v6637
    %v6672 = vadd.f32 %v6586, %v6641
    %v6673 = vadd.f32 %v6587, %v6645
    %v6674 = vadd.f32 %v6588, %v6633
    %v6675 = vadd.f32 %v6589, %v6637
    %v6676 = vadd.f32 %v6590, %v6641
    %v6677 = vadd.f32 %v6591, %v6645
    %v6678 = vadd.f32 %v6592, %v6633
    %v6679 = vadd.f32 %v6593, %v6637
    %v6680 = vadd.f32 %v6594, %v6641
    %v6681 = vadd.f32 %v6595, %v6645
    %v6682 = vadd.f32 %v6596, %v6633
    %v6683 = vadd.f32 %v6597, %v6637
    %v6684 = vadd.f32 %v6598, %v6641
    %v6685 = vadd.f32 %v6599, %v6645
    %v6686 = vadd.f32 %v6600, %v6633
    %v6687 = vadd.f32 %v6601, %v6637
    %v6688 = vadd.f32 %v6602, %v6641
    %v6689 = vadd.f32 %v6603, %v6645
    %v6690 = vadd.f32 %v6604, %v6633
    %v6691 = vadd.f32 %v6605, %v6637
    %v6692 = vadd.f32 %v6606, %v6641
    %v6693 = vadd.f32 %v6607, %v6645
    %v6694 = vadd.f32 %v6608, %v6633
    %v6695 = vadd.f32 %v6609, %v6637
    %v6696 = vadd.f32 %v6610, %v6641
    %v6697 = vadd.f32 %v6611, %v6645
    %v6698 = vadd.f32 %v6612, %v6633
    %v6699 = vadd.f32 %v6613, %v6637
    %v6700 = vadd.f32 %v6614, %v6641
    %v6701 = vadd.f32 %v6615, %v6645
    %v6702 = vadd.f32 %v6616, %v6633
    %v6703 = vadd.f32 %v6617, %v6637
    %v6704 = vadd.f32 %v6618, %v6641
    %v6705 = vadd.f32 %v6619, %v6645
    %v6706 = vadd.f32 %v6620, %v6633
    %v6707 = vadd.f32 %v6621, %v6637
    %v6708 = vadd.f32 %v6622, %v6641
    %v6709 = vadd.f32 %v6623, %v6645
    %v6710 = vadd.f32 %v6624, %v6633
    %v6711 = vadd.f32 %v6625, %v6637
    %v6712 = vadd.f32 %v6626, %v6641
    %v6713 = vadd.f32 %v6627, %v6645
    %v6714 = vmax.f32 %v6650, 0.0
    %v6715 = vmax.f32 %v6651, 0.0
    %v6716 = vmax.f32 %v6652, 0.0
    %v6717 = vmax.f32 %v6653, 0.0
    %v6718 = vmax.f32 %v6654, 0.0
    %v6719 = vmax.f32 %v6655, 0.0
    %v6720 = vmax.f32 %v6656, 0.0
    %v6721 = vmax.f32 %v6657, 0.0
    %v6722 = vmax.f32 %v6658, 0.0
    %v6723 = vmax.f32 %v6659, 0.0
    %v6724 = vmax.f32 %v6660, 0.0
    %v6725 = vmax.f32 %v6661, 0.0
    %v6726 = vmax.f32 %v6662, 0.0
    %v6727 = vmax.f32 %v6663, 0.0
    %v6728 = vmax.f32 %v6664, 0.0
    %v6729 = vmax.f32 %v6665, 0.0
    %v6730 = vmax.f32 %v6666, 0.0
    %v6731 = vmax.f32 %v6667, 0.0
    %v6732 = vmax.f32 %v6668, 0.0
    %v6733 = vmax.f32 %v6669, 0.0
    %v6734 = vmax.f32 %v6670, 0.0
    %v6735 = vmax.f32 %v6671, 0.0
    %v6736 = vmax.f32 %v6672, 0.0
    %v6737 = vmax.f32 %v6673, 0.0
    %v6738 = vmax.f32 %v6674, 0.0
    %v6739 = vmax.f32 %v6675, 0.0
    %v6740 = vmax.f32 %v6676, 0.0
    %v6741 = vmax.f32 %v6677, 0.0
    %v6742 = vmax.f32 %v6678, 0.0
    %v6743 = vmax.f32 %v6679, 0.0
    %v6744 = vmax.f32 %v6680, 0.0
    %v6745 = vmax.f32 %v6681, 0.0
    %v6746 = vmax.f32 %v6682, 0.0
    %v6747 = vmax.f32 %v6683, 0.0
    %v6748 = vmax.f32 %v6684, 0.0
    %v6749 = vmax.f32 %v6685, 0.0
    %v6750 = vmax.f32 %v6686, 0.0
    %v6751 = vmax.f32 %v6687, 0.0
    %v6752 = vmax.f32 %v6688, 0.0
    %v6753 = vmax.f32 %v6689, 0.0
    %v6754 = vmax.f32 %v6690, 0.0
    %v6755 = vmax.f32 %v6691, 0.0
    %v6756 = vmax.f32 %v6692, 0.0
    %v6757 = vmax.f32 %v6693, 0.0
    %v6758 = vmax.f32 %v6694, 0.0
    %v6759 = vmax.f32 %v6695, 0.0
    %v6760 = vmax.f32 %v6696, 0.0
    %v6761 = vmax.f32 %v6697, 0.0
    %v6762 = vmax.f32 %v6698, 0.0
    %v6763 = vmax.f32 %v6699, 0.0
    %v6764 = vmax.f32 %v6700, 0.0
    %v6765 = vmax.f32 %v6701, 0.0
    %v6766 = vmax.f32 %v6702, 0.0
    %v6767 = vmax.f32 %v6703, 0.0
    %v6768 = vmax.f32 %v6704, 0.0
    %v6769 = vmax.f32 %v6705, 0.0
    %v6770 = vmax.f32 %v6706, 0.0
    %v6771 = vmax.f32 %v6707, 0.0
    %v6772 = vmax.f32 %v6708, 0.0
    %v6773 = vmax.f32 %v6709, 0.0
    %v6774 = vmax.f32 %v6710, 0.0
    %v6775 = vmax.f32 %v6711, 0.0
    %v6776 = vmax.f32 %v6712, 0.0
    %v6777 = vmax.f32 %v6713, 0.0
    %v6778 = vpack.c.bf16 %v6718, %v6714
    %v6779 = vpack.c.bf16 %v6719, %v6715
    %v6780 = vpack.c.bf16 %v6720, %v6716
    %v6781 = vpack.c.bf16 %v6721, %v6717
    %v6782 = vpack.c.bf16 %v6726, %v6722
    %v6783 = vpack.c.bf16 %v6727, %v6723
    %v6784 = vpack.c.bf16 %v6728, %v6724
    %v6785 = vpack.c.bf16 %v6729, %v6725
    %v6786 = vpack.c.bf16 %v6734, %v6730
    %v6787 = vpack.c.bf16 %v6735, %v6731
    %v6788 = vpack.c.bf16 %v6736, %v6732
    %v6789 = vpack.c.bf16 %v6737, %v6733
    %v6790 = vpack.c.bf16 %v6742, %v6738
    %v6791 = vpack.c.bf16 %v6743, %v6739
    %v6792 = vpack.c.bf16 %v6744, %v6740
    %v6793 = vpack.c.bf16 %v6745, %v6741
    %v6794 = vpack.c.bf16 %v6750, %v6746
    %v6795 = vpack.c.bf16 %v6751, %v6747
    %v6796 = vpack.c.bf16 %v6752, %v6748
    %v6797 = vpack.c.bf16 %v6753, %v6749
    %v6798 = vpack.c.bf16 %v6758, %v6754
    %v6799 = vpack.c.bf16 %v6759, %v6755
    %v6800 = vpack.c.bf16 %v6760, %v6756
    %v6801 = vpack.c.bf16 %v6761, %v6757
    %v6802 = vpack.c.bf16 %v6766, %v6762
    %v6803 = vpack.c.bf16 %v6767, %v6763
    %v6804 = vpack.c.bf16 %v6768, %v6764
    %v6805 = vpack.c.bf16 %v6769, %v6765
    %v6806 = vpack.c.bf16 %v6774, %v6770
    %v6807 = vpack.c.bf16 %v6775, %v6771
    %v6808 = vpack.c.bf16 %v6776, %v6772
    %v6809 = vpack.c.bf16 %v6777, %v6773
    %v6810 = vld [vmem:[#allocation14] sm:$0xff]
    %v6811 = vld [vmem:[#allocation14 + $0x8] sm:$0xff]
    %v6812 = vld [vmem:[#allocation14 + $0x10] sm:$0xff]
    %v6813 = vld [vmem:[#allocation14 + $0x18] sm:$0xff]
    %v6814 = vld [vmem:[#allocation14 + $0x20] sm:$0xff]
    %v6815 = vld [vmem:[#allocation14 + $0x28] sm:$0xff]
    %v6816 = vld [vmem:[#allocation14 + $0x30] sm:$0xff]
    %v6817 = vld [vmem:[#allocation14 + $0x38] sm:$0xff]
    %v6818 = vld [vmem:[#allocation14 + $0x40] sm:$0xff]
    %v6819 = vld [vmem:[#allocation14 + $0x48] sm:$0xff]
    %v6820 = vld [vmem:[#allocation14 + $0x50] sm:$0xff]
    %v6821 = vld [vmem:[#allocation14 + $0x58] sm:$0xff]
    %v6822 = vld [vmem:[#allocation14 + $0x60] sm:$0xff]
    %v6823 = vld [vmem:[#allocation14 + $0x68] sm:$0xff]
    %v6824 = vld [vmem:[#allocation14 + $0x70] sm:$0xff]
    %v6825 = vld [vmem:[#allocation14 + $0x78] sm:$0xff]
    %v6826 = vld [vmem:[#allocation14 + $0x80] sm:$0xff]
    %v6827 = vld [vmem:[#allocation14 + $0x88] sm:$0xff]
    %v6828 = vld [vmem:[#allocation14 + $0x90] sm:$0xff]
    %v6829 = vld [vmem:[#allocation14 + $0x98] sm:$0xff]
    %v6830 = vld [vmem:[#allocation14 + $0xa0] sm:$0xff]
    %v6831 = vld [vmem:[#allocation14 + $0xa8] sm:$0xff]
    %v6832 = vld [vmem:[#allocation14 + $0xb0] sm:$0xff]
    %v6833 = vld [vmem:[#allocation14 + $0xb8] sm:$0xff]
    %v6834 = vld [vmem:[#allocation14 + $0xc0] sm:$0xff]
    %v6835 = vld [vmem:[#allocation14 + $0xc8] sm:$0xff]
    %v6836 = vld [vmem:[#allocation14 + $0xd0] sm:$0xff]
    %v6837 = vld [vmem:[#allocation14 + $0xd8] sm:$0xff]
    %v6838 = vld [vmem:[#allocation14 + $0xe0] sm:$0xff]
    %v6839 = vld [vmem:[#allocation14 + $0xe8] sm:$0xff]
    %v6840 = vld [vmem:[#allocation14 + $0xf0] sm:$0xff]
    %v6841 = vld [vmem:[#allocation14 + $0xf8] sm:$0xff]
    %v6842 = vld [vmem:[#allocation14 + $0x100] sm:$0xff]
    %v6843 = vld [vmem:[#allocation14 + $0x108] sm:$0xff]
    %v6844 = vld [vmem:[#allocation14 + $0x110] sm:$0xff]
    %v6845 = vld [vmem:[#allocation14 + $0x118] sm:$0xff]
    %v6846 = vld [vmem:[#allocation14 + $0x120] sm:$0xff]
    %v6847 = vld [vmem:[#allocation14 + $0x128] sm:$0xff]
    %v6848 = vld [vmem:[#allocation14 + $0x130] sm:$0xff]
    %v6849 = vld [vmem:[#allocation14 + $0x138] sm:$0xff]
    %v6850 = vld [vmem:[#allocation14 + $0x140] sm:$0xff]
    %v6851 = vld [vmem:[#allocation14 + $0x148] sm:$0xff]
    %v6852 = vld [vmem:[#allocation14 + $0x150] sm:$0xff]
    %v6853 = vld [vmem:[#allocation14 + $0x158] sm:$0xff]
    %v6854 = vld [vmem:[#allocation14 + $0x160] sm:$0xff]
    %v6855 = vld [vmem:[#allocation14 + $0x168] sm:$0xff]
    %v6856 = vld [vmem:[#allocation14 + $0x170] sm:$0xff]
    %v6857 = vld [vmem:[#allocation14 + $0x178] sm:$0xff]
    %v6858 = vld [vmem:[#allocation14 + $0x180] sm:$0xff]
    %v6859 = vld [vmem:[#allocation14 + $0x188] sm:$0xff]
    %v6860 = vld [vmem:[#allocation14 + $0x190] sm:$0xff]
    %v6861 = vld [vmem:[#allocation14 + $0x198] sm:$0xff]
    %v6862 = vld [vmem:[#allocation14 + $0x1a0] sm:$0xff]
    %v6863 = vld [vmem:[#allocation14 + $0x1a8] sm:$0xff]
    %v6864 = vld [vmem:[#allocation14 + $0x1b0] sm:$0xff]
    %v6865 = vld [vmem:[#allocation14 + $0x1b8] sm:$0xff]
    %v6866 = vld [vmem:[#allocation14 + $0x1c0] sm:$0xff]
    %v6867 = vld [vmem:[#allocation14 + $0x1c8] sm:$0xff]
    %v6868 = vld [vmem:[#allocation14 + $0x1d0] sm:$0xff]
    %v6869 = vld [vmem:[#allocation14 + $0x1d8] sm:$0xff]
    %v6870 = vld [vmem:[#allocation14 + $0x1e0] sm:$0xff]
    %v6871 = vld [vmem:[#allocation14 + $0x1e8] sm:$0xff]
    %v6872 = vld [vmem:[#allocation14 + $0x1f0] sm:$0xff]
    %v6873 = vld [vmem:[#allocation14 + $0x1f8] sm:$0xff]
    %v6874 = vld [vmem:[#allocation15] sm:$0x3]
    %v6876 = vlaneseq
    %v6877 = vshrl.u32 %v6876, 7
    %v6878 = vsub.s32 0, %v6877
    %v6879 = vrot.slane %v6874, %v6878
    %v6880 = vlaneseq
    %v6881 = vshrl.u32 %v6880, 7
    %v6882 = vsub.s32 1, %v6881
    %v6883 = vrot.slane %v6874, %v6882
    %v6950 = vunpack.c.l.b16 %v6810
    %v6951 = vunpack.c.h.b16 %v6810
    %v6952 = vunpack.c.l.b16 %v6811
    %v6953 = vunpack.c.h.b16 %v6811
    %v6954 = vunpack.c.l.b16 %v6812
    %v6955 = vunpack.c.h.b16 %v6812
    %v6956 = vunpack.c.l.b16 %v6813
    %v6957 = vunpack.c.h.b16 %v6813
    %v6958 = vunpack.c.l.b16 %v6814
    %v6959 = vunpack.c.h.b16 %v6814
    %v6960 = vunpack.c.l.b16 %v6815
    %v6961 = vunpack.c.h.b16 %v6815
    %v6962 = vunpack.c.l.b16 %v6816
    %v6963 = vunpack.c.h.b16 %v6816
    %v6964 = vunpack.c.l.b16 %v6817
    %v6965 = vunpack.c.h.b16 %v6817
    %v6966 = vunpack.c.l.b16 %v6818
    %v6967 = vunpack.c.h.b16 %v6818
    %v6968 = vunpack.c.l.b16 %v6819
    %v6969 = vunpack.c.h.b16 %v6819
    %v6970 = vunpack.c.l.b16 %v6820
    %v6971 = vunpack.c.h.b16 %v6820
    %v6972 = vunpack.c.l.b16 %v6821
    %v6973 = vunpack.c.h.b16 %v6821
    %v6974 = vunpack.c.l.b16 %v6822
    %v6975 = vunpack.c.h.b16 %v6822
    %v6976 = vunpack.c.l.b16 %v6823
    %v6977 = vunpack.c.h.b16 %v6823
    %v6978 = vunpack.c.l.b16 %v6824
    %v6979 = vunpack.c.h.b16 %v6824
    %v6980 = vunpack.c.l.b16 %v6825
    %v6981 = vunpack.c.h.b16 %v6825
    %v6982 = vunpack.c.l.b16 %v6826
    %v6983 = vunpack.c.h.b16 %v6826
    %v6984 = vunpack.c.l.b16 %v6827
    %v6985 = vunpack.c.h.b16 %v6827
    %v6986 = vunpack.c.l.b16 %v6828
    %v6987 = vunpack.c.h.b16 %v6828
    %v6988 = vunpack.c.l.b16 %v6829
    %v6989 = vunpack.c.h.b16 %v6829
    %v6990 = vunpack.c.l.b16 %v6830
    %v6991 = vunpack.c.h.b16 %v6830
    %v6992 = vunpack.c.l.b16 %v6831
    %v6993 = vunpack.c.h.b16 %v6831
    %v6994 = vunpack.c.l.b16 %v6832
    %v6995 = vunpack.c.h.b16 %v6832
    %v6996 = vunpack.c.l.b16 %v6833
    %v6997 = vunpack.c.h.b16 %v6833
    %v6998 = vunpack.c.l.b16 %v6834
    %v6999 = vunpack.c.h.b16 %v6834
    %v7000 = vunpack.c.l.b16 %v6835
    %v7001 = vunpack.c.h.b16 %v6835
    %v7002 = vunpack.c.l.b16 %v6836
    %v7003 = vunpack.c.h.b16 %v6836
    %v7004 = vunpack.c.l.b16 %v6837
    %v7005 = vunpack.c.h.b16 %v6837
    %v7006 = vunpack.c.l.b16 %v6838
    %v7007 = vunpack.c.h.b16 %v6838
    %v7008 = vunpack.c.l.b16 %v6839
    %v7009 = vunpack.c.h.b16 %v6839
    %v7010 = vunpack.c.l.b16 %v6840
    %v7011 = vunpack.c.h.b16 %v6840
    %v7012 = vunpack.c.l.b16 %v6841
    %v7013 = vunpack.c.h.b16 %v6841
    %v7014 = vunpack.c.l.b16 %v6842
    %v7015 = vunpack.c.h.b16 %v6842
    %v7016 = vunpack.c.l.b16 %v6843
    %v7017 = vunpack.c.h.b16 %v6843
    %v7018 = vunpack.c.l.b16 %v6844
    %v7019 = vunpack.c.h.b16 %v6844
    %v7020 = vunpack.c.l.b16 %v6845
    %v7021 = vunpack.c.h.b16 %v6845
    %v7022 = vunpack.c.l.b16 %v6846
    %v7023 = vunpack.c.h.b16 %v6846
    %v7024 = vunpack.c.l.b16 %v6847
    %v7025 = vunpack.c.h.b16 %v6847
    %v7026 = vunpack.c.l.b16 %v6848
    %v7027 = vunpack.c.h.b16 %v6848
    %v7028 = vunpack.c.l.b16 %v6849
    %v7029 = vunpack.c.h.b16 %v6849
    %v7030 = vunpack.c.l.b16 %v6850
    %v7031 = vunpack.c.h.b16 %v6850
    %v7032 = vunpack.c.l.b16 %v6851
    %v7033 = vunpack.c.h.b16 %v6851
    %v7034 = vunpack.c.l.b16 %v6852
    %v7035 = vunpack.c.h.b16 %v6852
    %v7036 = vunpack.c.l.b16 %v6853
    %v7037 = vunpack.c.h.b16 %v6853
    %v7038 = vunpack.c.l.b16 %v6854
    %v7039 = vunpack.c.h.b16 %v6854
    %v7040 = vunpack.c.l.b16 %v6855
    %v7041 = vunpack.c.h.b16 %v6855
    %v7042 = vunpack.c.l.b16 %v6856
    %v7043 = vunpack.c.h.b16 %v6856
    %v7044 = vunpack.c.l.b16 %v6857
    %v7045 = vunpack.c.h.b16 %v6857
    %v7046 = vunpack.c.l.b16 %v6858
    %v7047 = vunpack.c.h.b16 %v6858
    %v7048 = vunpack.c.l.b16 %v6859
    %v7049 = vunpack.c.h.b16 %v6859
    %v7050 = vunpack.c.l.b16 %v6860
    %v7051 = vunpack.c.h.b16 %v6860
    %v7052 = vunpack.c.l.b16 %v6861
    %v7053 = vunpack.c.h.b16 %v6861
    %v7054 = vunpack.c.l.b16 %v6862
    %v7055 = vunpack.c.h.b16 %v6862
    %v7056 = vunpack.c.l.b16 %v6863
    %v7057 = vunpack.c.h.b16 %v6863
    %v7058 = vunpack.c.l.b16 %v6864
    %v7059 = vunpack.c.h.b16 %v6864
    %v7060 = vunpack.c.l.b16 %v6865
    %v7061 = vunpack.c.h.b16 %v6865
    %v7062 = vunpack.c.l.b16 %v6866
    %v7063 = vunpack.c.h.b16 %v6866
    %v7064 = vunpack.c.l.b16 %v6867
    %v7065 = vunpack.c.h.b16 %v6867
    %v7066 = vunpack.c.l.b16 %v6868
    %v7067 = vunpack.c.h.b16 %v6868
    %v7068 = vunpack.c.l.b16 %v6869
    %v7069 = vunpack.c.h.b16 %v6869
    %v7070 = vunpack.c.l.b16 %v6870
    %v7071 = vunpack.c.h.b16 %v6870
    %v7072 = vunpack.c.l.b16 %v6871
    %v7073 = vunpack.c.h.b16 %v6871
    %v7074 = vunpack.c.l.b16 %v6872
    %v7075 = vunpack.c.h.b16 %v6872
    %v7076 = vunpack.c.l.b16 %v6873
    %v7077 = vunpack.c.h.b16 %v6873
    %v7078 = vpack.c.b16 %v6952, %v6950
    %v7079 = vpack.c.b16 %v6953, %v6951
    %v7080 = vpack.c.b16 %v6956, %v6954
    %v7081 = vpack.c.b16 %v6957, %v6955
    %v7082 = vpack.c.b16 %v6960, %v6958
    %v7083 = vpack.c.b16 %v6961, %v6959
    %v7084 = vpack.c.b16 %v6964, %v6962
    %v7085 = vpack.c.b16 %v6965, %v6963
    %v7086 = vpack.c.b16 %v6968, %v6966
    %v7087 = vpack.c.b16 %v6969, %v6967
    %v7088 = vpack.c.b16 %v6972, %v6970
    %v7089 = vpack.c.b16 %v6973, %v6971
    %v7090 = vpack.c.b16 %v6976, %v6974
    %v7091 = vpack.c.b16 %v6977, %v6975
    %v7092 = vpack.c.b16 %v6980, %v6978
    %v7093 = vpack.c.b16 %v6981, %v6979
    %v7094 = vpack.c.b16 %v6984, %v6982
    %v7095 = vpack.c.b16 %v6985, %v6983
    %v7096 = vpack.c.b16 %v6988, %v6986
    %v7097 = vpack.c.b16 %v6989, %v6987
    %v7098 = vpack.c.b16 %v6992, %v6990
    %v7099 = vpack.c.b16 %v6993, %v6991
    %v7100 = vpack.c.b16 %v6996, %v6994
    %v7101 = vpack.c.b16 %v6997, %v6995
    %v7102 = vpack.c.b16 %v7000, %v6998
    %v7103 = vpack.c.b16 %v7001, %v6999
    %v7104 = vpack.c.b16 %v7004, %v7002
    %v7105 = vpack.c.b16 %v7005, %v7003
    %v7106 = vpack.c.b16 %v7008, %v7006
    %v7107 = vpack.c.b16 %v7009, %v7007
    %v7108 = vpack.c.b16 %v7012, %v7010
    %v7109 = vpack.c.b16 %v7013, %v7011
    %v7110 = vpack.c.b16 %v7016, %v7014
    %v7111 = vpack.c.b16 %v7017, %v7015
    %v7112 = vpack.c.b16 %v7020, %v7018
    %v7113 = vpack.c.b16 %v7021, %v7019
    %v7114 = vpack.c.b16 %v7024, %v7022
    %v7115 = vpack.c.b16 %v7025, %v7023
    %v7116 = vpack.c.b16 %v7028, %v7026
    %v7117 = vpack.c.b16 %v7029, %v7027
    %v7118 = vpack.c.b16 %v7032, %v7030
    %v7119 = vpack.c.b16 %v7033, %v7031
    %v7120 = vpack.c.b16 %v7036, %v7034
    %v7121 = vpack.c.b16 %v7037, %v7035
    %v7122 = vpack.c.b16 %v7040, %v7038
    %v7123 = vpack.c.b16 %v7041, %v7039
    %v7124 = vpack.c.b16 %v7044, %v7042
    %v7125 = vpack.c.b16 %v7045, %v7043
    %v7126 = vpack.c.b16 %v7048, %v7046
    %v7127 = vpack.c.b16 %v7049, %v7047
    %v7128 = vpack.c.b16 %v7052, %v7050
    %v7129 = vpack.c.b16 %v7053, %v7051
    %v7130 = vpack.c.b16 %v7056, %v7054
    %v7131 = vpack.c.b16 %v7057, %v7055
    %v7132 = vpack.c.b16 %v7060, %v7058
    %v7133 = vpack.c.b16 %v7061, %v7059
    %v7134 = vpack.c.b16 %v7064, %v7062
    %v7135 = vpack.c.b16 %v7065, %v7063
    %v7136 = vpack.c.b16 %v7068, %v7066
    %v7137 = vpack.c.b16 %v7069, %v7067
    %v7138 = vpack.c.b16 %v7072, %v7070
    %v7139 = vpack.c.b16 %v7073, %v7071
    %v7140 = vpack.c.b16 %v7076, %v7074
    %v7141 = vpack.c.b16 %v7077, %v7075
    %7206 = vmatprep.subr.bf16.mxu0 %v7079
    %7207 = vmatpush1.bf16.msra.mxu0 %v7078
    %7208 = vmatprep.subr.bf16.mxu0 %v7081
    %7209 = vmatpush1.bf16.msra.mxu0 %v7080
    %7210 = vmatprep.subr.bf16.mxu0 %v7083
    %7211 = vmatpush1.bf16.msra.mxu0 %v7082
    %7212 = vmatprep.subr.bf16.mxu0 %v7085
    %7213 = vmatpush1.bf16.msra.mxu0 %v7084
    %7214 = vmatprep.subr.bf16.mxu0 %v7087
    %7215 = vmatpush1.bf16.msra.mxu0 %v7086
    %7216 = vmatprep.subr.bf16.mxu0 %v7089
    %7217 = vmatpush1.bf16.msra.mxu0 %v7088
    %7218 = vmatprep.subr.bf16.mxu0 %v7091
    %7219 = vmatpush1.bf16.msra.mxu0 %v7090
    %7220 = vmatprep.subr.bf16.mxu0 %v7093
    %7221 = vmatpush1.bf16.msra.mxu0 %v7092
    %7222 = vmatprep.subr.bf16.mxu0 %v7095
    %7223 = vmatpush1.bf16.msra.mxu0 %v7094
    %7224 = vmatprep.subr.bf16.mxu0 %v7097
    %7225 = vmatpush1.bf16.msra.mxu0 %v7096
    %7226 = vmatprep.subr.bf16.mxu0 %v7099
    %7227 = vmatpush1.bf16.msra.mxu0 %v7098
    %7228 = vmatprep.subr.bf16.mxu0 %v7101
    %7229 = vmatpush1.bf16.msra.mxu0 %v7100
    %7230 = vmatprep.subr.bf16.mxu0 %v7103
    %7231 = vmatpush1.bf16.msra.mxu0 %v7102
    %7232 = vmatprep.subr.bf16.mxu0 %v7105
    %7233 = vmatpush1.bf16.msra.mxu0 %v7104
    %7234 = vmatprep.subr.bf16.mxu0 %v7107
    %7235 = vmatpush1.bf16.msra.mxu0 %v7106
    %7236 = vmatprep.subr.bf16.mxu0 %v7109
    %7237 = vmatpush1.bf16.msra.mxu0 %v7108
    %7238 = vmatprep.mubr.bf16.mxu0 %v6779
    %7239 = vmatmul.mubr.bf16.gmra.mrb[0].mxu0 %v6778
    %v7240 = vpop.f32.mrb[0].mxu0
    %v7241 = vadd.f32 %v6879, %v7240
    %v7242 = vpop.f32.mrb[0].mxu0
    %v7243 = vadd.f32 %v6883, %v7242
    %v7244 = vpop.f32.mrb[0].mxu0
    %v7245 = vadd.f32 %v6879, %v7244
    %v7246 = vpop.f32.mrb[0].mxu0
    %v7247 = vadd.f32 %v6883, %v7246
    %7248 = vmatprep.mubr.bf16.mxu0 %v6783
    %7249 = vmatmul.mubr.bf16.gmra.mrb[0].mxu0 %v6782
    %v7250 = vpop.f32.mrb[0].mxu0
    %v7251 = vadd.f32 %v6879, %v7250
    %v7252 = vpop.f32.mrb[0].mxu0
    %v7253 = vadd.f32 %v6883, %v7252
    %v7254 = vpop.f32.mrb[0].mxu0
    %v7255 = vadd.f32 %v6879, %v7254
    %v7256 = vpop.f32.mrb[0].mxu0
    %v7257 = vadd.f32 %v6883, %v7256
    %7258 = vmatprep.mubr.bf16.mxu0 %v6787
    %7259 = vmatmul.mubr.bf16.gmra.mrb[0].mxu0 %v6786
    %v7260 = vpop.f32.mrb[0].mxu0
    %v7261 = vadd.f32 %v6879, %v7260
    %v7262 = vpop.f32.mrb[0].mxu0
    %v7263 = vadd.f32 %v6883, %v7262
    %v7264 = vpop.f32.mrb[0].mxu0
    %v7265 = vadd.f32 %v6879, %v7264
    %v7266 = vpop.f32.mrb[0].mxu0
    %v7267 = vadd.f32 %v6883, %v7266
    %7268 = vmatprep.mubr.bf16.mxu0 %v6791
    %7269 = vmatmul.mubr.bf16.gmra.mrb[0].mxu0 %v6790
    %v7270 = vpop.f32.mrb[0].mxu0
    %v7271 = vadd.f32 %v6879, %v7270
    %v7272 = vpop.f32.mrb[0].mxu0
    %v7273 = vadd.f32 %v6883, %v7272
    %v7274 = vpop.f32.mrb[0].mxu0
    %v7275 = vadd.f32 %v6879, %v7274
    %v7276 = vpop.f32.mrb[0].mxu0
    %v7277 = vadd.f32 %v6883, %v7276
    %7278 = vmatprep.mubr.bf16.mxu0 %v6795
    %7279 = vmatmul.mubr.bf16.gmra.mrb[0].mxu0 %v6794
    %v7280 = vpop.f32.mrb[0].mxu0
    %v7281 = vadd.f32 %v6879, %v7280
    %v7282 = vpop.f32.mrb[0].mxu0
    %v7283 = vadd.f32 %v6883, %v7282
    %v7284 = vpop.f32.mrb[0].mxu0
    %v7285 = vadd.f32 %v6879, %v7284
    %v7286 = vpop.f32.mrb[0].mxu0
    %v7287 = vadd.f32 %v6883, %v7286
    %7288 = vmatprep.mubr.bf16.mxu0 %v6799
    %7289 = vmatmul.mubr.bf16.gmra.mrb[0].mxu0 %v6798
    %v7290 = vpop.f32.mrb[0].mxu0
    %v7291 = vadd.f32 %v6879, %v7290
    %v7292 = vpop.f32.mrb[0].mxu0
    %v7293 = vadd.f32 %v6883, %v7292
    %v7294 = vpop.f32.mrb[0].mxu0
    %v7295 = vadd.f32 %v6879, %v7294
    %v7296 = vpop.f32.mrb[0].mxu0
    %v7297 = vadd.f32 %v6883, %v7296
    %7298 = vmatprep.mubr.bf16.mxu0 %v6803
    %7299 = vmatmul.mubr.bf16.gmra.mrb[0].mxu0 %v6802
    %v7300 = vpop.f32.mrb[0].mxu0
    %v7301 = vadd.f32 %v6879, %v7300
    %v7302 = vpop.f32.mrb[0].mxu0
    %v7303 = vadd.f32 %v6883, %v7302
    %v7304 = vpop.f32.mrb[0].mxu0
    %v7305 = vadd.f32 %v6879, %v7304
    %v7306 = vpop.f32.mrb[0].mxu0
    %v7307 = vadd.f32 %v6883, %v7306
    %7308 = vmatprep.mubr.bf16.mxu0 %v6807
    %7309 = vmatmul.mubr.bf16.gmra.mrb[0].mxu0 %v6806
    %v7310 = vpop.f32.mrb[0].mxu0
    %v7311 = vadd.f32 %v6879, %v7310
    %v7312 = vpop.f32.mrb[0].mxu0
    %v7313 = vadd.f32 %v6883, %v7312
    %v7314 = vpop.f32.mrb[0].mxu0
    %v7315 = vadd.f32 %v6879, %v7314
    %v7316 = vpop.f32.mrb[0].mxu0
    %v7317 = vadd.f32 %v6883, %v7316
    %7318 = vdwg.mxu0
    %7319 = vmatprep.subr.bf16.mxu0 %v7111
    %7320 = vmatpush1.bf16.msra.mxu0 %v7110
    %7321 = vmatprep.subr.bf16.mxu0 %v7113
    %7322 = vmatpush1.bf16.msra.mxu0 %v7112
    %7323 = vmatprep.subr.bf16.mxu0 %v7115
    %7324 = vmatpush1.bf16.msra.mxu0 %v7114
    %7325 = vmatprep.subr.bf16.mxu0 %v7117
    %7326 = vmatpush1.bf16.msra.mxu0 %v7116
    %7327 = vmatprep.subr.bf16.mxu0 %v7119
    %7328 = vmatpush1.bf16.msra.mxu0 %v7118
    %7329 = vmatprep.subr.bf16.mxu0 %v7121
    %7330 = vmatpush1.bf16.msra.mxu0 %v7120
    %7331 = vmatprep.subr.bf16.mxu0 %v7123
    %7332 = vmatpush1.bf16.msra.mxu0 %v7122
    %7333 = vmatprep.subr.bf16.mxu0 %v7125
    %7334 = vmatpush1.bf16.msra.mxu0 %v7124
    %7335 = vmatprep.subr.bf16.mxu0 %v7127
    %7336 = vmatpush1.bf16.msra.mxu0 %v7126
    %7337 = vmatprep.subr.bf16.mxu0 %v7129
    %7338 = vmatpush1.bf16.msra.mxu0 %v7128
    %7339 = vmatprep.subr.bf16.mxu0 %v7131
    %7340 = vmatpush1.bf16.msra.mxu0 %v7130
    %7341 = vmatprep.subr.bf16.mxu0 %v7133
    %7342 = vmatpush1.bf16.msra.mxu0 %v7132
    %7343 = vmatprep.subr.bf16.mxu0 %v7135
    %7344 = vmatpush1.bf16.msra.mxu0 %v7134
    %7345 = vmatprep.subr.bf16.mxu0 %v7137
    %7346 = vmatpush1.bf16.msra.mxu0 %v7136
    %7347 = vmatprep.subr.bf16.mxu0 %v7139
    %7348 = vmatpush1.bf16.msra.mxu0 %v7138
    %7349 = vmatprep.subr.bf16.mxu0 %v7141
    %7350 = vmatpush1.bf16.msra.mxu0 %v7140
    %7351 = vmatprep.mubr.bf16.mxu0 %v6781
    %7352 = vmatmul.mubr.bf16.gmra.mrb[0].mxu0 %v6780
    %v7353 = vpop.f32.mrb[0].mxu0
    %v7354 = vadd.f32 %v7241, %v7353
    %v7355 = vpop.f32.mrb[0].mxu0
    %v7356 = vadd.f32 %v7243, %v7355
    %v7357 = vpop.f32.mrb[0].mxu0
    %v7358 = vadd.f32 %v7245, %v7357
    %v7359 = vpop.f32.mrb[0].mxu0
    %v7360 = vadd.f32 %v7247, %v7359
    %7361 = vmatprep.mubr.bf16.mxu0 %v6785
    %7362 = vmatmul.mubr.bf16.gmra.mrb[0].mxu0 %v6784
    %v7363 = vpop.f32.mrb[0].mxu0
    %v7364 = vadd.f32 %v7251, %v7363
    %v7365 = vpop.f32.mrb[0].mxu0
    %v7366 = vadd.f32 %v7253, %v7365
    %v7367 = vpop.f32.mrb[0].mxu0
    %v7368 = vadd.f32 %v7255, %v7367
    %v7369 = vpop.f32.mrb[0].mxu0
    %v7370 = vadd.f32 %v7257, %v7369
    %7371 = vmatprep.mubr.bf16.mxu0 %v6789
    %7372 = vmatmul.mubr.bf16.gmra.mrb[0].mxu0 %v6788
    %v7373 = vpop.f32.mrb[0].mxu0
    %v7374 = vadd.f32 %v7261, %v7373
    %v7375 = vpop.f32.mrb[0].mxu0
    %v7376 = vadd.f32 %v7263, %v7375
    %v7377 = vpop.f32.mrb[0].mxu0
    %v7378 = vadd.f32 %v7265, %v7377
    %v7379 = vpop.f32.mrb[0].mxu0
    %v7380 = vadd.f32 %v7267, %v7379
    %7381 = vmatprep.mubr.bf16.mxu0 %v6793
    %7382 = vmatmul.mubr.bf16.gmra.mrb[0].mxu0 %v6792
    %v7383 = vpop.f32.mrb[0].mxu0
    %v7384 = vadd.f32 %v7271, %v7383
    %v7385 = vpop.f32.mrb[0].mxu0
    %v7386 = vadd.f32 %v7273, %v7385
    %v7387 = vpop.f32.mrb[0].mxu0
    %v7388 = vadd.f32 %v7275, %v7387
    %v7389 = vpop.f32.mrb[0].mxu0
    %v7390 = vadd.f32 %v7277, %v7389
    %7391 = vmatprep.mubr.bf16.mxu0 %v6797
    %7392 = vmatmul.mubr.bf16.gmra.mrb[0].mxu0 %v6796
    %v7393 = vpop.f32.mrb[0].mxu0
    %v7394 = vadd.f32 %v7281, %v7393
    %v7395 = vpop.f32.mrb[0].mxu0
    %v7396 = vadd.f32 %v7283, %v7395
    %v7397 = vpop.f32.mrb[0].mxu0
    %v7398 = vadd.f32 %v7285, %v7397
    %v7399 = vpop.f32.mrb[0].mxu0
    %v7400 = vadd.f32 %v7287, %v7399
    %7401 = vmatprep.mubr.bf16.mxu0 %v6801
    %7402 = vmatmul.mubr.bf16.gmra.mrb[0].mxu0 %v6800
    %v7403 = vpop.f32.mrb[0].mxu0
    %v7404 = vadd.f32 %v7291, %v7403
    %v7405 = vpop.f32.mrb[0].mxu0
    %v7406 = vadd.f32 %v7293, %v7405
    %v7407 = vpop.f32.mrb[0].mxu0
    %v7408 = vadd.f32 %v7295, %v7407
    %v7409 = vpop.f32.mrb[0].mxu0
    %v7410 = vadd.f32 %v7297, %v7409
    %7411 = vmatprep.mubr.bf16.mxu0 %v6805
    %7412 = vmatmul.mubr.bf16.gmra.mrb[0].mxu0 %v6804
    %v7413 = vpop.f32.mrb[0].mxu0
    %v7414 = vadd.f32 %v7301, %v7413
    %v7415 = vpop.f32.mrb[0].mxu0
    %v7416 = vadd.f32 %v7303, %v7415
    %v7417 = vpop.f32.mrb[0].mxu0
    %v7418 = vadd.f32 %v7305, %v7417
    %v7419 = vpop.f32.mrb[0].mxu0
    %v7420 = vadd.f32 %v7307, %v7419
    %7421 = vmatprep.mubr.bf16.mxu0 %v6809
    %7422 = vmatmul.mubr.bf16.gmra.mrb[0].mxu0 %v6808
    %v7423 = vpop.f32.mrb[0].mxu0
    %v7424 = vadd.f32 %v7311, %v7423
    %v7425 = vpop.f32.mrb[0].mxu0
    %v7426 = vadd.f32 %v7313, %v7425
    %v7427 = vpop.f32.mrb[0].mxu0
    %v7428 = vadd.f32 %v7315, %v7427
    %v7429 = vpop.f32.mrb[0].mxu0
    %v7430 = vadd.f32 %v7317, %v7429
    %7431 = vdwg.mxu0
    %v7432 = vmax.f32 %v7354, 0.0
    %v7433 = vmax.f32 %v7356, 0.0
    %v7434 = vmax.f32 %v7358, 0.0
    %v7435 = vmax.f32 %v7360, 0.0
    %v7436 = vmax.f32 %v7364, 0.0
    %v7437 = vmax.f32 %v7366, 0.0
    %v7438 = vmax.f32 %v7368, 0.0
    %v7439 = vmax.f32 %v7370, 0.0
    %v7440 = vmax.f32 %v7374, 0.0
    %v7441 = vmax.f32 %v7376, 0.0
    %v7442 = vmax.f32 %v7378, 0.0
    %v7443 = vmax.f32 %v7380, 0.0
    %v7444 = vmax.f32 %v7384, 0.0
    %v7445 = vmax.f32 %v7386, 0.0
    %v7446 = vmax.f32 %v7388, 0.0
    %v7447 = vmax.f32 %v7390, 0.0
    %v7448 = vmax.f32 %v7394, 0.0
    %v7449 = vmax.f32 %v7396, 0.0
    %v7450 = vmax.f32 %v7398, 0.0
    %v7451 = vmax.f32 %v7400, 0.0
    %v7452 = vmax.f32 %v7404, 0.0
    %v7453 = vmax.f32 %v7406, 0.0
    %v7454 = vmax.f32 %v7408, 0.0
    %v7455 = vmax.f32 %v7410, 0.0
    %v7456 = vmax.f32 %v7414, 0.0
    %v7457 = vmax.f32 %v7416, 0.0
    %v7458 = vmax.f32 %v7418, 0.0
    %v7459 = vmax.f32 %v7420, 0.0
    %v7460 = vmax.f32 %v7424, 0.0
    %v7461 = vmax.f32 %v7426, 0.0
    %v7462 = vmax.f32 %v7428, 0.0
    %v7463 = vmax.f32 %v7430, 0.0
    %v7464 = vpack.c.bf16 %v7434, %v7432
    %v7465 = vpack.c.bf16 %v7435, %v7433
    %v7466 = vpack.c.bf16 %v7438, %v7436
    %v7467 = vpack.c.bf16 %v7439, %v7437
    %v7468 = vpack.c.bf16 %v7442, %v7440
    %v7469 = vpack.c.bf16 %v7443, %v7441
    %v7470 = vpack.c.bf16 %v7446, %v7444
    %v7471 = vpack.c.bf16 %v7447, %v7445
    %v7472 = vpack.c.bf16 %v7450, %v7448
    %v7473 = vpack.c.bf16 %v7451, %v7449
    %v7474 = vpack.c.bf16 %v7454, %v7452
    %v7475 = vpack.c.bf16 %v7455, %v7453
    %v7476 = vpack.c.bf16 %v7458, %v7456
    %v7477 = vpack.c.bf16 %v7459, %v7457
    %v7478 = vpack.c.bf16 %v7462, %v7460
    %v7479 = vpack.c.bf16 %v7463, %v7461
    %v7480 = vld [vmem:[#allocation17] sm:$0xff]
    %v7481 = vld [vmem:[#allocation17 + $0x8] sm:$0xff]
    %v7482 = vld [vmem:[#allocation17 + $0x10] sm:$0xff]
    %v7483 = vld [vmem:[#allocation17 + $0x18] sm:$0xff]
    %v7484 = vld [vmem:[#allocation17 + $0x20] sm:$0xff]
    %v7485 = vld [vmem:[#allocation17 + $0x28] sm:$0xff]
    %v7486 = vld [vmem:[#allocation17 + $0x30] sm:$0xff]
    %v7487 = vld [vmem:[#allocation17 + $0x38] sm:$0xff]
    %v7488 = vld [vmem:[#allocation17 + $0x40] sm:$0xff]
    %v7489 = vld [vmem:[#allocation17 + $0x48] sm:$0xff]
    %v7490 = vld [vmem:[#allocation17 + $0x50] sm:$0xff]
    %v7491 = vld [vmem:[#allocation17 + $0x58] sm:$0xff]
    %v7492 = vld [vmem:[#allocation17 + $0x60] sm:$0xff]
    %v7493 = vld [vmem:[#allocation17 + $0x68] sm:$0xff]
    %v7494 = vld [vmem:[#allocation17 + $0x70] sm:$0xff]
    %v7495 = vld [vmem:[#allocation17 + $0x78] sm:$0xff]
    %v7496 = vld [vmem:[#allocation17 + $0x80] sm:$0xff]
    %v7497 = vld [vmem:[#allocation17 + $0x88] sm:$0xff]
    %v7498 = vld [vmem:[#allocation17 + $0x90] sm:$0xff]
    %v7499 = vld [vmem:[#allocation17 + $0x98] sm:$0xff]
    %v7500 = vld [vmem:[#allocation17 + $0xa0] sm:$0xff]
    %v7501 = vld [vmem:[#allocation17 + $0xa8] sm:$0xff]
    %v7502 = vld [vmem:[#allocation17 + $0xb0] sm:$0xff]
    %v7503 = vld [vmem:[#allocation17 + $0xb8] sm:$0xff]
    %v7504 = vld [vmem:[#allocation17 + $0xc0] sm:$0xff]
    %v7505 = vld [vmem:[#allocation17 + $0xc8] sm:$0xff]
    %v7506 = vld [vmem:[#allocation17 + $0xd0] sm:$0xff]
    %v7507 = vld [vmem:[#allocation17 + $0xd8] sm:$0xff]
    %v7508 = vld [vmem:[#allocation17 + $0xe0] sm:$0xff]
    %v7509 = vld [vmem:[#allocation17 + $0xe8] sm:$0xff]
    %v7510 = vld [vmem:[#allocation17 + $0xf0] sm:$0xff]
    %v7511 = vld [vmem:[#allocation17 + $0xf8] sm:$0xff]
    %v7512 = vld [vmem:[#allocation18] sm:$0x3]
    %v7514 = vlaneseq
    %v7515 = vshrl.u32 %v7514, 7
    %v7516 = vsub.s32 0, %v7515
    %v7517 = vrot.slane %v7512, %v7516
    %v7518 = vlaneseq
    %v7519 = vshrl.u32 %v7518, 7
    %v7520 = vsub.s32 1, %v7519
    %v7521 = vrot.slane %v7512, %v7520
    %v7556 = vunpack.c.l.b16 %v7480
    %v7557 = vunpack.c.h.b16 %v7480
    %v7558 = vunpack.c.l.b16 %v7481
    %v7559 = vunpack.c.h.b16 %v7481
    %v7560 = vunpack.c.l.b16 %v7482
    %v7561 = vunpack.c.h.b16 %v7482
    %v7562 = vunpack.c.l.b16 %v7483
    %v7563 = vunpack.c.h.b16 %v7483
    %v7564 = vunpack.c.l.b16 %v7484
    %v7565 = vunpack.c.h.b16 %v7484
    %v7566 = vunpack.c.l.b16 %v7485
    %v7567 = vunpack.c.h.b16 %v7485
    %v7568 = vunpack.c.l.b16 %v7486
    %v7569 = vunpack.c.h.b16 %v7486
    %v7570 = vunpack.c.l.b16 %v7487
    %v7571 = vunpack.c.h.b16 %v7487
    %v7572 = vunpack.c.l.b16 %v7488
    %v7573 = vunpack.c.h.b16 %v7488
    %v7574 = vunpack.c.l.b16 %v7489
    %v7575 = vunpack.c.h.b16 %v7489
    %v7576 = vunpack.c.l.b16 %v7490
    %v7577 = vunpack.c.h.b16 %v7490
    %v7578 = vunpack.c.l.b16 %v7491
    %v7579 = vunpack.c.h.b16 %v7491
    %v7580 = vunpack.c.l.b16 %v7492
    %v7581 = vunpack.c.h.b16 %v7492
    %v7582 = vunpack.c.l.b16 %v7493
    %v7583 = vunpack.c.h.b16 %v7493
    %v7584 = vunpack.c.l.b16 %v7494
    %v7585 = vunpack.c.h.b16 %v7494
    %v7586 = vunpack.c.l.b16 %v7495
    %v7587 = vunpack.c.h.b16 %v7495
    %v7588 = vunpack.c.l.b16 %v7496
    %v7589 = vunpack.c.h.b16 %v7496
    %v7590 = vunpack.c.l.b16 %v7497
    %v7591 = vunpack.c.h.b16 %v7497
    %v7592 = vunpack.c.l.b16 %v7498
    %v7593 = vunpack.c.h.b16 %v7498
    %v7594 = vunpack.c.l.b16 %v7499
    %v7595 = vunpack.c.h.b16 %v7499
    %v7596 = vunpack.c.l.b16 %v7500
    %v7597 = vunpack.c.h.b16 %v7500
    %v7598 = vunpack.c.l.b16 %v7501
    %v7599 = vunpack.c.h.b16 %v7501
    %v7600 = vunpack.c.l.b16 %v7502
    %v7601 = vunpack.c.h.b16 %v7502
    %v7602 = vunpack.c.l.b16 %v7503
    %v7603 = vunpack.c.h.b16 %v7503
    %v7604 = vunpack.c.l.b16 %v7504
    %v7605 = vunpack.c.h.b16 %v7504
    %v7606 = vunpack.c.l.b16 %v7505
    %v7607 = vunpack.c.h.b16 %v7505
    %v7608 = vunpack.c.l.b16 %v7506
    %v7609 = vunpack.c.h.b16 %v7506
    %v7610 = vunpack.c.l.b16 %v7507
    %v7611 = vunpack.c.h.b16 %v7507
    %v7612 = vunpack.c.l.b16 %v7508
    %v7613 = vunpack.c.h.b16 %v7508
    %v7614 = vunpack.c.l.b16 %v7509
    %v7615 = vunpack.c.h.b16 %v7509
    %v7616 = vunpack.c.l.b16 %v7510
    %v7617 = vunpack.c.h.b16 %v7510
    %v7618 = vunpack.c.l.b16 %v7511
    %v7619 = vunpack.c.h.b16 %v7511
    %v7620 = vpack.c.b16 %v7558, %v7556
    %v7621 = vpack.c.b16 %v7559, %v7557
    %v7622 = vpack.c.b16 %v7562, %v7560
    %v7623 = vpack.c.b16 %v7563, %v7561
    %v7624 = vpack.c.b16 %v7566, %v7564
    %v7625 = vpack.c.b16 %v7567, %v7565
    %v7626 = vpack.c.b16 %v7570, %v7568
    %v7627 = vpack.c.b16 %v7571, %v7569
    %v7628 = vpack.c.b16 %v7574, %v7572
    %v7629 = vpack.c.b16 %v7575, %v7573
    %v7630 = vpack.c.b16 %v7578, %v7576
    %v7631 = vpack.c.b16 %v7579, %v7577
    %v7632 = vpack.c.b16 %v7582, %v7580
    %v7633 = vpack.c.b16 %v7583, %v7581
    %v7634 = vpack.c.b16 %v7586, %v7584
    %v7635 = vpack.c.b16 %v7587, %v7585
    %v7636 = vpack.c.b16 %v7590, %v7588
    %v7637 = vpack.c.b16 %v7591, %v7589
    %v7638 = vpack.c.b16 %v7594, %v7592
    %v7639 = vpack.c.b16 %v7595, %v7593
    %v7640 = vpack.c.b16 %v7598, %v7596
    %v7641 = vpack.c.b16 %v7599, %v7597
    %v7642 = vpack.c.b16 %v7602, %v7600
    %v7643 = vpack.c.b16 %v7603, %v7601
    %v7644 = vpack.c.b16 %v7606, %v7604
    %v7645 = vpack.c.b16 %v7607, %v7605
    %v7646 = vpack.c.b16 %v7610, %v7608
    %v7647 = vpack.c.b16 %v7611, %v7609
    %v7648 = vpack.c.b16 %v7614, %v7612
    %v7649 = vpack.c.b16 %v7615, %v7613
    %v7650 = vpack.c.b16 %v7618, %v7616
    %v7651 = vpack.c.b16 %v7619, %v7617
    %7684 = vmatprep.subr.bf16.mxu0 %v7621
    %7685 = vmatpush1.bf16.msra.mxu0 %v7620
    %7686 = vmatprep.subr.bf16.mxu0 %v7623
    %7687 = vmatpush1.bf16.msra.mxu0 %v7622
    %7688 = vmatprep.subr.bf16.mxu0 %v7625
    %7689 = vmatpush1.bf16.msra.mxu0 %v7624
    %7690 = vmatprep.subr.bf16.mxu0 %v7627
    %7691 = vmatpush1.bf16.msra.mxu0 %v7626
    %7692 = vmatprep.subr.bf16.mxu0 %v7629
    %7693 = vmatpush1.bf16.msra.mxu0 %v7628
    %7694 = vmatprep.subr.bf16.mxu0 %v7631
    %7695 = vmatpush1.bf16.msra.mxu0 %v7630
    %7696 = vmatprep.subr.bf16.mxu0 %v7633
    %7697 = vmatpush1.bf16.msra.mxu0 %v7632
    %7698 = vmatprep.subr.bf16.mxu0 %v7635
    %7699 = vmatpush1.bf16.msra.mxu0 %v7634
    %7700 = vmatprep.subr.bf16.mxu0 %v7637
    %7701 = vmatpush1.bf16.msra.mxu0 %v7636
    %7702 = vmatprep.subr.bf16.mxu0 %v7639
    %7703 = vmatpush1.bf16.msra.mxu0 %v7638
    %7704 = vmatprep.subr.bf16.mxu0 %v7641
    %7705 = vmatpush1.bf16.msra.mxu0 %v7640
    %7706 = vmatprep.subr.bf16.mxu0 %v7643
    %7707 = vmatpush1.bf16.msra.mxu0 %v7642
    %7708 = vmatprep.subr.bf16.mxu0 %v7645
    %7709 = vmatpush1.bf16.msra.mxu0 %v7644
    %7710 = vmatprep.subr.bf16.mxu0 %v7647
    %7711 = vmatpush1.bf16.msra.mxu0 %v7646
    %7712 = vmatprep.subr.bf16.mxu0 %v7649
    %7713 = vmatpush1.bf16.msra.mxu0 %v7648
    %7714 = vmatprep.subr.bf16.mxu0 %v7651
    %7715 = vmatpush1.bf16.msra.mxu0 %v7650
    %7716 = vmatprep.mubr.bf16.mxu0 %v7465
    %7717 = vmatmul.mubr.bf16.gmra.mrb[0].mxu0 %v7464
    %v7718 = vpop.f32.mrb[0].mxu0
    %v7719 = vadd.f32 %v7517, %v7718
    %v7720 = vpop.f32.mrb[0].mxu0
    %v7721 = vadd.f32 %v7521, %v7720
    %v7722 = vpop.f32.mrb[0].mxu0
    %v7723 = vadd.f32 %v7517, %v7722
    %v7724 = vpop.f32.mrb[0].mxu0
    %v7725 = vadd.f32 %v7521, %v7724
    %7726 = vmatprep.mubr.bf16.mxu0 %v7467
    %7727 = vmatmul.mubr.bf16.gmra.mrb[0].mxu0 %v7466
    %v7728 = vpop.f32.mrb[0].mxu0
    %v7729 = vadd.f32 %v7517, %v7728
    %v7730 = vpop.f32.mrb[0].mxu0
    %v7731 = vadd.f32 %v7521, %v7730
    %v7732 = vpop.f32.mrb[0].mxu0
    %v7733 = vadd.f32 %v7517, %v7732
    %v7734 = vpop.f32.mrb[0].mxu0
    %v7735 = vadd.f32 %v7521, %v7734
    %7736 = vmatprep.mubr.bf16.mxu0 %v7469
    %7737 = vmatmul.mubr.bf16.gmra.mrb[0].mxu0 %v7468
    %v7738 = vpop.f32.mrb[0].mxu0
    %v7739 = vadd.f32 %v7517, %v7738
    %v7740 = vpop.f32.mrb[0].mxu0
    %v7741 = vadd.f32 %v7521, %v7740
    %v7742 = vpop.f32.mrb[0].mxu0
    %v7743 = vadd.f32 %v7517, %v7742
    %v7744 = vpop.f32.mrb[0].mxu0
    %v7745 = vadd.f32 %v7521, %v7744
    %7746 = vmatprep.mubr.bf16.mxu0 %v7471
    %7747 = vmatmul.mubr.bf16.gmra.mrb[0].mxu0 %v7470
    %v7748 = vpop.f32.mrb[0].mxu0
    %v7749 = vadd.f32 %v7517, %v7748
    %v7750 = vpop.f32.mrb[0].mxu0
    %v7751 = vadd.f32 %v7521, %v7750
    %v7752 = vpop.f32.mrb[0].mxu0
    %v7753 = vadd.f32 %v7517, %v7752
    %v7754 = vpop.f32.mrb[0].mxu0
    %v7755 = vadd.f32 %v7521, %v7754
    %7756 = vmatprep.mubr.bf16.mxu0 %v7473
    %7757 = vmatmul.mubr.bf16.gmra.mrb[0].mxu0 %v7472
    %v7758 = vpop.f32.mrb[0].mxu0
    %v7759 = vadd.f32 %v7517, %v7758
    %v7760 = vpop.f32.mrb[0].mxu0
    %v7761 = vadd.f32 %v7521, %v7760
    %v7762 = vpop.f32.mrb[0].mxu0
    %v7763 = vadd.f32 %v7517, %v7762
    %v7764 = vpop.f32.mrb[0].mxu0
    %v7765 = vadd.f32 %v7521, %v7764
    %7766 = vmatprep.mubr.bf16.mxu0 %v7475
    %7767 = vmatmul.mubr.bf16.gmra.mrb[0].mxu0 %v7474
    %v7768 = vpop.f32.mrb[0].mxu0
    %v7769 = vadd.f32 %v7517, %v7768
    %v7770 = vpop.f32.mrb[0].mxu0
    %v7771 = vadd.f32 %v7521, %v7770
    %v7772 = vpop.f32.mrb[0].mxu0
    %v7773 = vadd.f32 %v7517, %v7772
    %v7774 = vpop.f32.mrb[0].mxu0
    %v7775 = vadd.f32 %v7521, %v7774
    %7776 = vmatprep.mubr.bf16.mxu0 %v7477
    %7777 = vmatmul.mubr.bf16.gmra.mrb[0].mxu0 %v7476
    %v7778 = vpop.f32.mrb[0].mxu0
    %v7779 = vadd.f32 %v7517, %v7778
    %v7780 = vpop.f32.mrb[0].mxu0
    %v7781 = vadd.f32 %v7521, %v7780
    %v7782 = vpop.f32.mrb[0].mxu0
    %v7783 = vadd.f32 %v7517, %v7782
    %v7784 = vpop.f32.mrb[0].mxu0
    %v7785 = vadd.f32 %v7521, %v7784
    %7786 = vmatprep.mubr.bf16.mxu0 %v7479
    %7787 = vmatmul.mubr.bf16.gmra.mrb[0].mxu0 %v7478
    %v7788 = vpop.f32.mrb[0].mxu0
    %v7789 = vadd.f32 %v7517, %v7788
    %v7790 = vpop.f32.mrb[0].mxu0
    %v7791 = vadd.f32 %v7521, %v7790
    %v7792 = vpop.f32.mrb[0].mxu0
    %v7793 = vadd.f32 %v7517, %v7792
    %v7794 = vpop.f32.mrb[0].mxu0
    %v7795 = vadd.f32 %v7521, %v7794
    %7796 = vdwg.mxu0
    %v7797 = vpack.c.bf16 %v7723, %v7719
    %v7798 = vpack.c.bf16 %v7725, %v7721
    %v7799 = vpack.c.bf16 %v7733, %v7729
    %v7800 = vpack.c.bf16 %v7735, %v7731
    %v7801 = vpack.c.bf16 %v7743, %v7739
    %v7802 = vpack.c.bf16 %v7745, %v7741
    %v7803 = vpack.c.bf16 %v7753, %v7749
    %v7804 = vpack.c.bf16 %v7755, %v7751
    %v7805 = vpack.c.bf16 %v7763, %v7759
    %v7806 = vpack.c.bf16 %v7765, %v7761
    %v7807 = vpack.c.bf16 %v7773, %v7769
    %v7808 = vpack.c.bf16 %v7775, %v7771
    %v7809 = vpack.c.bf16 %v7783, %v7779
    %v7810 = vpack.c.bf16 %v7785, %v7781
    %v7811 = vpack.c.bf16 %v7793, %v7789
    %v7812 = vpack.c.bf16 %v7795, %v7791
    %v7829 = vunpack.c.l.b16 %v7797
    %v7830 = vunpack.c.l.b16 %v7798
    %v7831 = vunpack.c.h.b16 %v7797
    %v7832 = vunpack.c.h.b16 %v7798
    %v7833 = vunpack.c.l.b16 %v7799
    %v7834 = vunpack.c.l.b16 %v7800
    %v7835 = vunpack.c.h.b16 %v7799
    %v7836 = vunpack.c.h.b16 %v7800
    %v7837 = vunpack.c.l.b16 %v7801
    %v7838 = vunpack.c.l.b16 %v7802
    %v7839 = vunpack.c.h.b16 %v7801
    %v7840 = vunpack.c.h.b16 %v7802
    %v7841 = vunpack.c.l.b16 %v7803
    %v7842 = vunpack.c.l.b16 %v7804
    %v7843 = vunpack.c.h.b16 %v7803
    %v7844 = vunpack.c.h.b16 %v7804
    %v7845 = vunpack.c.l.b16 %v7805
    %v7846 = vunpack.c.l.b16 %v7806
    %v7847 = vunpack.c.h.b16 %v7805
    %v7848 = vunpack.c.h.b16 %v7806
    %v7849 = vunpack.c.l.b16 %v7807
    %v7850 = vunpack.c.l.b16 %v7808
    %v7851 = vunpack.c.h.b16 %v7807
    %v7852 = vunpack.c.h.b16 %v7808
    %v7853 = vunpack.c.l.b16 %v7809
    %v7854 = vunpack.c.l.b16 %v7810
    %v7855 = vunpack.c.h.b16 %v7809
    %v7856 = vunpack.c.h.b16 %v7810
    %v7857 = vunpack.c.l.b16 %v7811
    %v7858 = vunpack.c.l.b16 %v7812
    %v7859 = vunpack.c.h.b16 %v7811
    %v7860 = vunpack.c.h.b16 %v7812
    %v7861 = vpack.c.b16 %v7830, %v7829
    %v7862 = vpack.c.b16 %v7832, %v7831
    %v7863 = vpack.c.b16 %v7834, %v7833
    %v7864 = vpack.c.b16 %v7836, %v7835
    %v7865 = vpack.c.b16 %v7838, %v7837
    %v7866 = vpack.c.b16 %v7840, %v7839
    %v7867 = vpack.c.b16 %v7842, %v7841
    %v7868 = vpack.c.b16 %v7844, %v7843
    %v7869 = vpack.c.b16 %v7846, %v7845
    %v7870 = vpack.c.b16 %v7848, %v7847
    %v7871 = vpack.c.b16 %v7850, %v7849
    %v7872 = vpack.c.b16 %v7852, %v7851
    %v7873 = vpack.c.b16 %v7854, %v7853
    %v7874 = vpack.c.b16 %v7856, %v7855
    %v7875 = vpack.c.b16 %v7858, %v7857
    %v7876 = vpack.c.b16 %v7860, %v7859
    %7893 = vst [vmem:[%s11] sm:$0xff] %v7861
    %7894 = vst [vmem:[%s11 + $0x8] sm:$0xff] %v7862
    %7895 = vst [vmem:[%s11 + $0x10] sm:$0xff] %v7863
    %7896 = vst [vmem:[%s11 + $0x18] sm:$0xff] %v7864
    %7897 = vst [vmem:[%s11 + $0x20] sm:$0xff] %v7865
    %7898 = vst [vmem:[%s11 + $0x28] sm:$0xff] %v7866
    %7899 = vst [vmem:[%s11 + $0x30] sm:$0xff] %v7867
    %7900 = vst [vmem:[%s11 + $0x38] sm:$0xff] %v7868
    %7901 = vst [vmem:[%s11 + $0x40] sm:$0xff] %v7869
    %7902 = vst [vmem:[%s11 + $0x48] sm:$0xff] %v7870
    %7903 = vst [vmem:[%s11 + $0x50] sm:$0xff] %v7871
    %7904 = vst [vmem:[%s11 + $0x58] sm:$0xff] %v7872
    %7905 = vst [vmem:[%s11 + $0x60] sm:$0xff] %v7873
    %7906 = vst [vmem:[%s11 + $0x68] sm:$0xff] %v7874
    %7907 = vst [vmem:[%s11 + $0x70] sm:$0xff] %v7875
    %7908 = vst [vmem:[%s11 + $0x78] sm:$0xff] %v7876
    // Predicated region
    $region90: #{my_model_forward.1} parent=1 // pred_check
      _
    $region91: #{my_model_forward.1} parent=1 // pred_check_branch
      %7910 = sbr.rel (0) target = $region93
    $region92: #{my_model_forward.1} parent=1 // pred_region
      _
    $region93: #{my_model_forward.1} parent=1 // pred_fallthru
      _
    // Predicated region
    $region94: #{my_model_forward.1} parent=1 // pred_check
      _
    $region95: #{my_model_forward.1} parent=1 // pred_check_branch
      %7912 = sbr.rel (0) target = $region97
    $region96: #{my_model_forward.1} parent=1 // pred_region
      _
    $region97: #{my_model_forward.1} parent=1 // pred_fallthru
      _
    %7913 = vsyncpa [#allocation5], 1
    %7914 = vsyncpa [#allocation7], 1
    %7915 = vsyncpa [#allocation10], 1
    %7916 = vsyncpa [#allocation13], 1
    %7917 = vsyncpa [#allocation16], 1
    %7918 = vsyncpa [#allocation19], 1

</llo_original>
